<compile_context>
chip_gen: v6e
topology: v6e:2x2x1
jax: 0.10.0
libtpu: 0.0.40
codegen_flags: <defaults>
</compile_context>

<pallas_src>
import functools
import math

import jax
import jax.numpy as jnp
from jax.experimental import pallas as pl
from jax.experimental.pallas import tpu as pltpu

BN_EPS = 1e-5
LANES = 128


def _round_up(x, m):
    return (x + m - 1) // m * m


# ------------------------------------------------------------------ Pallas kernel
def _fused_unet_block_kernel(xp_ref, w1_ref, b1_ref, w2_ref, b2_ref, mask_ref,
                             o_ref, y1_ref, *, H, W, KH, KW, P0):
    """One grid program = one batch element; both convs of the UNetBlock fused.

    xp_ref : (Tx, Cip)        f32 zero-padded input, rows = flattened (h, w)
    w1_ref : (KH*KW, Cip, Cp) f32, BN1 folded in
    b1_ref : (1, Cp)          f32 folded bias
    w2_ref : (KH*KW, Cp, Cp)  f32, BN2 folded in
    b2_ref : (1, Cp)          f32 folded bias
    mask_ref: (R, 1)          f32 1/0 mask of valid (non-wraparound) slab rows
    o_ref  : (R, Cp)          f32 output "slab" (KW-1 junk columns per row)
    y1_ref : (Ty, Cp)         f32 VMEM scratch: conv1 output, re-padded for conv2
    """
    Wp = W + KW - 1                    # padded width
    R = H * Wp                         # slab rows
    D = P0 - ((KH // 2) * Wp + (KW // 2))
    Cp = o_ref.shape[-1]

    def conv_taps(src_ref, w_ref, base):
        acc = jnp.zeros((R, Cp), jnp.float32)
        for dy in range(KH):
            for dx in range(KW):
                t = dy * KW + dx
                lhs = src_ref[pl.ds(base + dy * Wp + dx, R), :].astype(jnp.bfloat16)
                rhs = w_ref[t].astype(jnp.bfloat16)
                acc += jnp.dot(lhs, rhs, preferred_element_type=jnp.float32)
        return acc

    # ---- conv1 + folded BN1 + ReLU ----------------------------------------
    y1 = jnp.maximum(conv_taps(xp_ref, w1_ref, 0) + b1_ref[...], 0.0)
    # zero the wrap-around junk rows so they land as zeros on conv2's padding
    y1 = y1 * mask_ref[...]

    # conv1 result goes into a zero-initialised, re-padded VMEM buffer so conv2
    # can reuse the same contiguous-slab tap trick (intermediate stays in VMEM)
    y1_ref[...] = jnp.zeros_like(y1_ref)
    y1_ref[pl.ds(P0, R), :] = y1

    # ---- conv2 + folded BN2 + ReLU ----------------------------------------
    out = jnp.maximum(conv_taps(y1_ref, w2_ref, D) + b2_ref[...], 0.0)
    o_ref[...] = out.astype(o_ref.dtype)


# ------------------------------------------------------------------ wrapper
def _fold_bn(w, b, gamma, beta, mean, var):
    """Fold eval-mode BatchNorm into conv weight/bias: y = conv(x, w') + b'."""
    scale = gamma / jnp.sqrt(var + BN_EPS)
    return w * scale, (b - mean) * scale + beta


def unet_block_forward(params, x_nchw):
    """Eval-mode UNetBlock forward: (N, Cin, H, W) -> (N, Cout, H, W)."""
    w1, b1 = _fold_bn(params["w1"], params["b1"], params["bn1_gamma"],
                      params["bn1_beta"], params["bn1_mean"], params["bn1_var"])
    w2, b2 = _fold_bn(params["w2"], params["b2"], params["bn2_gamma"],
                      params["bn2_beta"], params["bn2_mean"], params["bn2_var"])

    KH, KW, Cin, Cout = w1.shape
    assert KH % 2 == 1 and KW % 2 == 1, "'same' conv assumes odd kernel sizes"
    N, _, H, W = x_nchw.shape
    ph, pw = KH // 2, KW // 2
    Wp = W + KW - 1                      # padded width
    R = H * Wp                           # rows of the output slab per image

    # channel padding: Cout -> multiple of 128 (lane-dense), Cin -> multiple of 8
    Cip = _round_up(Cin, 8)
    Cp = _round_up(Cout, LANES)
    w1k = jnp.pad(w1, ((0, 0), (0, 0), (0, Cip - Cin), (0, Cp - Cout))
                  ).reshape(KH * KW, Cip, Cp)
    w2k = jnp.pad(w2, ((0, 0), (0, 0), (0, Cp - Cout), (0, Cp - Cout))
                  ).reshape(KH * KW, Cp, Cp)
    b1k = jnp.pad(b1, ((0, Cp - Cout),)).reshape(1, Cp)
    b2k = jnp.pad(b2, ((0, Cp - Cout),)).reshape(1, Cp)

    # NCHW -> NHWC, zero 'same' padding, flatten (h, w) -> rows, plus a few
    # tail rows so the last tap's contiguous slab read stays in-bounds.
    x = jnp.transpose(x_nchw, (0, 2, 3, 1)).astype(jnp.float32)
    xp = jnp.pad(x, ((0, 0), (ph, ph), (pw, pw), (0, Cip - Cin)))
    flat_rows = (H + 2 * ph) * Wp
    Tx = _round_up(flat_rows + (KW - 1), 8)
    xp = jnp.pad(xp.reshape(N, flat_rows, Cip),
                 ((0, 0), (0, Tx - flat_rows), (0, 0)))

    # geometry of the conv2 input buffer (conv1 output re-padded inside VMEM)
    OFF = ph * Wp + pw                   # natural interior offset
    P0 = _round_up(OFF, 8)               # sublane-aligned write offset
    D = P0 - OFF
    Ty = _round_up(D + (KH - 1) * Wp + (KW - 1) + R, 8)

    # mask of valid (non-wraparound) columns per slab row
    mask = (jnp.arange(R, dtype=jnp.int32) % Wp < W).astype(jnp.float32)[:, None]

    kernel = functools.partial(_fused_unet_block_kernel,
                               H=H, W=W, KH=KH, KW=KW, P0=P0)
    out_slab = pl.pallas_call(
        kernel,
        out_shape=jax.ShapeDtypeStruct((N, R, Cp), jnp.float32),
        grid=(N,),
        in_specs=[
            pl.BlockSpec((None, Tx, Cip), lambda n: (n, 0, 0)),
            pl.BlockSpec((KH * KW, Cip, Cp), lambda n: (0, 0, 0)),
            pl.BlockSpec((1, Cp), lambda n: (0, 0)),
            pl.BlockSpec((KH * KW, Cp, Cp), lambda n: (0, 0, 0)),
            pl.BlockSpec((1, Cp), lambda n: (0, 0)),
            pl.BlockSpec((R, 1), lambda n: (0, 0)),
        ],
        out_specs=pl.BlockSpec((None, R, Cp), lambda n: (n, 0, 0)),
        scratch_shapes=[pltpu.VMEM((Ty, Cp), jnp.float32)],
        compiler_params=pltpu.CompilerParams(
            dimension_semantics=("parallel",),
            vmem_limit_bytes=48 * 1024 * 1024),
    )(xp, w1k, b1k, w2k, b2k, mask)

    # drop the (KW-1) wrap-around columns and the channel padding
    out = out_slab.reshape(N, H, Wp, Cp)[:, :, :W, :Cout]
    return jnp.transpose(out, (0, 3, 1, 2))        # NHWC -> NCHW


# ------------------------------------------------------------------ reference
def unet_block_reference(params, x_nchw):
    """Pure-XLA reference mirroring the kernel's bf16 quantisation points."""
    w1, b1 = _fold_bn(params["w1"], params["b1"], params["bn1_gamma"],
                      params["bn1_beta"], params["bn1_mean"], params["bn1_var"])
    w2, b2 = _fold_bn(params["w2"], params["b2"], params["bn2_gamma"],
                      params["bn2_beta"], params["bn2_mean"], params["bn2_var"])
    q = lambda a: a.astype(jnp.bfloat16).astype(jnp.float32)

    def conv_bn_relu(x, w, b):
        y = jax.lax.conv_general_dilated(
            q(x), q(w), (1, 1), "SAME",
            dimension_numbers=("NHWC", "HWIO", "NHWC"))
        return jnp.maximum(y + b, 0.0)

    x = jnp.transpose(x_nchw, (0, 2, 3, 1)).astype(jnp.float32)
    y = conv_bn_relu(x, w1, b1)
    y = conv_bn_relu(y, w2, b2)
    return jnp.transpose(y, (0, 3, 1, 2))


# ------------------------------------------------------------------ parameters
def unet_block_init(key, in_channels, out_channels):
    ks = jax.random.split(key, 12)

    def conv_init(kw_key, kb_key, cin, cout):
        fan_in = 3 * 3 * cin
        bound = 1.0 / math.sqrt(fan_in)
        w = jax.random.uniform(kw_key, (3, 3, cin, cout), jnp.float32, -bound, bound)
        b = jax.random.uniform(kb_key, (cout,), jnp.float32, -bound, bound)
        return w, b

    w1, b1 = conv_init(ks[0], ks[1], in_channels, out_channels)
    w2, b2 = conv_init(ks[2], ks[3], out_channels, out_channels)
    c = out_channels
    return dict(
        w1=w1, b1=b1, w2=w2, b2=b2,
        bn1_gamma=1.0 + 0.1 * jax.random.normal(ks[4], (c,), jnp.float32),
        bn1_beta=0.05 * jax.random.normal(ks[5], (c,), jnp.float32),
        bn1_mean=0.1 * jax.random.normal(ks[6], (c,), jnp.float32),
        bn1_var=1.0 + 0.2 * jax.random.uniform(ks[7], (c,), jnp.float32),
        bn2_gamma=1.0 + 0.1 * jax.random.normal(ks[8], (c,), jnp.float32),
        bn2_beta=0.05 * jax.random.normal(ks[9], (c,), jnp.float32),
        bn2_mean=0.1 * jax.random.normal(ks[10], (c,), jnp.float32),
        bn2_var=1.0 + 0.2 * jax.random.uniform(ks[11], (c,), jnp.float32),
    )


# ------------------------------------------------------------------ main
if __name__ == "__main__":
    key = jax.random.PRNGKey(0)
    k_params, k_x = jax.random.split(key)

    N, Cin, Cout, H, W = 2, 4, 32, 16, 16
    params = unet_block_init(k_params, Cin, Cout)
    x = jax.random.normal(k_x, (N, Cin, H, W), jnp.float32)

    fwd = jax.jit(unet_block_forward)
    out = jax.block_until_ready(fwd(params, x))

    assert out.shape == (N, Cout, H, W)
    assert bool(jnp.all(jnp.isfinite(out)))
    assert bool(jnp.all(out >= 0.0))          # ReLU output is non-negative

    ref = jax.block_until_ready(jax.jit(unet_block_reference)(params, x))
    err = float(jnp.max(jnp.abs(out - ref)))
    assert err < 1e-2, f"max abs error vs reference: {err}"

    print("KERNEL_OK")
</pallas_src>

<mosaic_0001>
module attributes {stable_mosaic.version = 11 : i64} {
  func.func @_fused_unet_block_kernel(%arg0: i32, %arg1: memref<1x328x8xf32, #tpu.memory_space<vmem>>, %arg2: memref<9x8x128xf32, #tpu.memory_space<vmem>>, %arg3: memref<1x128xf32, #tpu.memory_space<vmem>>, %arg4: memref<9x128x128xf32, #tpu.memory_space<vmem>>, %arg5: memref<1x128xf32, #tpu.memory_space<vmem>>, %arg6: memref<288x1xf32, #tpu.memory_space<vmem>>, %arg7: memref<1x288x128xf32, #tpu.memory_space<vmem>>, %arg8: memref<336x128xf32, #tpu.memory_space<vmem>>) attributes {dimension_semantics = [#tpu.dimension_semantics<parallel>], iteration_bounds = array<i64: 2>, scalar_prefetch = 0 : i64, scratch_operands = 1 : i64, tpu.core_type = #tpu.core_type<tc>, window_params = [{transform_indices = @transform_0, window_bounds = array<i64: 1, 328, 8>}, {pipeline_mode = #tpu.pipeline_mode<synchronous>, transform_indices = @transform_1, window_bounds = array<i64: 9, 8, 128>}, {pipeline_mode = #tpu.pipeline_mode<synchronous>, transform_indices = @transform_2, window_bounds = array<i64: 1, 128>}, {pipeline_mode = #tpu.pipeline_mode<synchronous>, transform_indices = @transform_3, window_bounds = array<i64: 9, 128, 128>}, {pipeline_mode = #tpu.pipeline_mode<synchronous>, transform_indices = @transform_4, window_bounds = array<i64: 1, 128>}, {pipeline_mode = #tpu.pipeline_mode<synchronous>, transform_indices = @transform_5, window_bounds = array<i64: 288, 1>}, {transform_indices = @transform_6, window_bounds = array<i64: 1, 288, 128>}]} {
    %cst = arith.constant 0.000000e+00 : f32
    %0 = vector.broadcast %cst : f32 to vector<288x128xf32>
    %c0 = arith.constant 0 : index
    %c0_0 = arith.constant 0 : index
    %c0_1 = arith.constant 0 : index
    %1 = vector.load %arg1[%c0, %c0_0, %c0_1] : memref<1x328x8xf32, #tpu.memory_space<vmem>>, vector<1x288x8xf32>
    %2 = vector.shape_cast %1 : vector<1x288x8xf32> to vector<288x8xf32>
    %3 = arith.truncf %2 : vector<288x8xf32> to vector<288x8xbf16>
    %c0_2 = arith.constant 0 : index
    %c0_3 = arith.constant 0 : index
    %c0_4 = arith.constant 0 : index
    %4 = vector.load %arg2[%c0_2, %c0_3, %c0_4] : memref<9x8x128xf32, #tpu.memory_space<vmem>>, vector<1x8x128xf32>
    %5 = vector.shape_cast %4 : vector<1x8x128xf32> to vector<8x128xf32>
    %6 = arith.truncf %5 : vector<8x128xf32> to vector<8x128xbf16>
    %cst_5 = arith.constant dense<0.000000e+00> : vector<288x128xf32>
    %7 = tpu.matmul %3, %6, %cst_5 {dimension_numbers = #tpu.dot_dimension_numbers<[1], [0], [0], [1], [0, 0, 1, 1], [], []>} : vector<288x8xbf16>, vector<8x128xbf16>, vector<288x128xf32> -> vector<288x128xf32>
    %8 = arith.addf %0, %7 : vector<288x128xf32>
    %c0_6 = arith.constant 0 : index
    %c1 = arith.constant 1 : index
    %c0_7 = arith.constant 0 : index
    %9 = vector.load %arg1[%c0_6, %c1, %c0_7] : memref<1x328x8xf32, #tpu.memory_space<vmem>>, vector<1x288x8xf32>
    %10 = vector.shape_cast %9 : vector<1x288x8xf32> to vector<288x8xf32>
    %11 = arith.truncf %10 : vector<288x8xf32> to vector<288x8xbf16>
    %c1_8 = arith.constant 1 : index
    %c0_9 = arith.constant 0 : index
    %c0_10 = arith.constant 0 : index
    %12 = vector.load %arg2[%c1_8, %c0_9, %c0_10] : memref<9x8x128xf32, #tpu.memory_space<vmem>>, vector<1x8x128xf32>
    %13 = vector.shape_cast %12 : vector<1x8x128xf32> to vector<8x128xf32>
    %14 = arith.truncf %13 : vector<8x128xf32> to vector<8x128xbf16>
    %cst_11 = arith.constant dense<0.000000e+00> : vector<288x128xf32>
    %15 = tpu.matmul %11, %14, %cst_11 {dimension_numbers = #tpu.dot_dimension_numbers<[1], [0], [0], [1], [0, 0, 1, 1], [], []>} : vector<288x8xbf16>, vector<8x128xbf16>, vector<288x128xf32> -> vector<288x128xf32>
    %16 = arith.addf %8, %15 : vector<288x128xf32>
    %c0_12 = arith.constant 0 : index
    %c2 = arith.constant 2 : index
    %c0_13 = arith.constant 0 : index
    %17 = vector.load %arg1[%c0_12, %c2, %c0_13] : memref<1x328x8xf32, #tpu.memory_space<vmem>>, vector<1x288x8xf32>
    %18 = vector.shape_cast %17 : vector<1x288x8xf32> to vector<288x8xf32>
    %19 = arith.truncf %18 : vector<288x8xf32> to vector<288x8xbf16>
    %c2_14 = arith.constant 2 : index
    %c0_15 = arith.constant 0 : index
    %c0_16 = arith.constant 0 : index
    %20 = vector.load %arg2[%c2_14, %c0_15, %c0_16] : memref<9x8x128xf32, #tpu.memory_space<vmem>>, vector<1x8x128xf32>
    %21 = vector.shape_cast %20 : vector<1x8x128xf32> to vector<8x128xf32>
    %22 = arith.truncf %21 : vector<8x128xf32> to vector<8x128xbf16>
    %cst_17 = arith.constant dense<0.000000e+00> : vector<288x128xf32>
    %23 = tpu.matmul %19, %22, %cst_17 {dimension_numbers = #tpu.dot_dimension_numbers<[1], [0], [0], [1], [0, 0, 1, 1], [], []>} : vector<288x8xbf16>, vector<8x128xbf16>, vector<288x128xf32> -> vector<288x128xf32>
    %24 = arith.addf %16, %23 : vector<288x128xf32>
    %c0_18 = arith.constant 0 : index
    %c18 = arith.constant 18 : index
    %c0_19 = arith.constant 0 : index
    %25 = vector.load %arg1[%c0_18, %c18, %c0_19] : memref<1x328x8xf32, #tpu.memory_space<vmem>>, vector<1x288x8xf32>
    %26 = vector.shape_cast %25 : vector<1x288x8xf32> to vector<288x8xf32>
    %27 = arith.truncf %26 : vector<288x8xf32> to vector<288x8xbf16>
    %c3 = arith.constant 3 : index
    %c0_20 = arith.constant 0 : index
    %c0_21 = arith.constant 0 : index
    %28 = vector.load %arg2[%c3, %c0_20, %c0_21] : memref<9x8x128xf32, #tpu.memory_space<vmem>>, vector<1x8x128xf32>
    %29 = vector.shape_cast %28 : vector<1x8x128xf32> to vector<8x128xf32>
    %30 = arith.truncf %29 : vector<8x128xf32> to vector<8x128xbf16>
    %cst_22 = arith.constant dense<0.000000e+00> : vector<288x128xf32>
    %31 = tpu.matmul %27, %30, %cst_22 {dimension_numbers = #tpu.dot_dimension_numbers<[1], [0], [0], [1], [0, 0, 1, 1], [], []>} : vector<288x8xbf16>, vector<8x128xbf16>, vector<288x128xf32> -> vector<288x128xf32>
    %32 = arith.addf %24, %31 : vector<288x128xf32>
    %c0_23 = arith.constant 0 : index
    %c19 = arith.constant 19 : index
    %c0_24 = arith.constant 0 : index
    %33 = vector.load %arg1[%c0_23, %c19, %c0_24] : memref<1x328x8xf32, #tpu.memory_space<vmem>>, vector<1x288x8xf32>
    %34 = vector.shape_cast %33 : vector<1x288x8xf32> to vector<288x8xf32>
    %35 = arith.truncf %34 : vector<288x8xf32> to vector<288x8xbf16>
    %c4 = arith.constant 4 : index
    %c0_25 = arith.constant 0 : index
    %c0_26 = arith.constant 0 : index
    %36 = vector.load %arg2[%c4, %c0_25, %c0_26] : memref<9x8x128xf32, #tpu.memory_space<vmem>>, vector<1x8x128xf32>
    %37 = vector.shape_cast %36 : vector<1x8x128xf32> to vector<8x128xf32>
    %38 = arith.truncf %37 : vector<8x128xf32> to vector<8x128xbf16>
    %cst_27 = arith.constant dense<0.000000e+00> : vector<288x128xf32>
    %39 = tpu.matmul %35, %38, %cst_27 {dimension_numbers = #tpu.dot_dimension_numbers<[1], [0], [0], [1], [0, 0, 1, 1], [], []>} : vector<288x8xbf16>, vector<8x128xbf16>, vector<288x128xf32> -> vector<288x128xf32>
    %40 = arith.addf %32, %39 : vector<288x128xf32>
    %c0_28 = arith.constant 0 : index
    %c20 = arith.constant 20 : index
    %c0_29 = arith.constant 0 : index
    %41 = vector.load %arg1[%c0_28, %c20, %c0_29] : memref<1x328x8xf32, #tpu.memory_space<vmem>>, vector<1x288x8xf32>
    %42 = vector.shape_cast %41 : vector<1x288x8xf32> to vector<288x8xf32>
    %43 = arith.truncf %42 : vector<288x8xf32> to vector<288x8xbf16>
    %c5 = arith.constant 5 : index
    %c0_30 = arith.constant 0 : index
    %c0_31 = arith.constant 0 : index
    %44 = vector.load %arg2[%c5, %c0_30, %c0_31] : memref<9x8x128xf32, #tpu.memory_space<vmem>>, vector<1x8x128xf32>
    %45 = vector.shape_cast %44 : vector<1x8x128xf32> to vector<8x128xf32>
    %46 = arith.truncf %45 : vector<8x128xf32> to vector<8x128xbf16>
    %cst_32 = arith.constant dense<0.000000e+00> : vector<288x128xf32>
    %47 = tpu.matmul %43, %46, %cst_32 {dimension_numbers = #tpu.dot_dimension_numbers<[1], [0], [0], [1], [0, 0, 1, 1], [], []>} : vector<288x8xbf16>, vector<8x128xbf16>, vector<288x128xf32> -> vector<288x128xf32>
    %48 = arith.addf %40, %47 : vector<288x128xf32>
    %c0_33 = arith.constant 0 : index
    %c36 = arith.constant 36 : index
    %c0_34 = arith.constant 0 : index
    %49 = vector.load %arg1[%c0_33, %c36, %c0_34] : memref<1x328x8xf32, #tpu.memory_space<vmem>>, vector<1x288x8xf32>
    %50 = vector.shape_cast %49 : vector<1x288x8xf32> to vector<288x8xf32>
    %51 = arith.truncf %50 : vector<288x8xf32> to vector<288x8xbf16>
    %c6 = arith.constant 6 : index
    %c0_35 = arith.constant 0 : index
    %c0_36 = arith.constant 0 : index
    %52 = vector.load %arg2[%c6, %c0_35, %c0_36] : memref<9x8x128xf32, #tpu.memory_space<vmem>>, vector<1x8x128xf32>
    %53 = vector.shape_cast %52 : vector<1x8x128xf32> to vector<8x128xf32>
    %54 = arith.truncf %53 : vector<8x128xf32> to vector<8x128xbf16>
    %cst_37 = arith.constant dense<0.000000e+00> : vector<288x128xf32>
    %55 = tpu.matmul %51, %54, %cst_37 {dimension_numbers = #tpu.dot_dimension_numbers<[1], [0], [0], [1], [0, 0, 1, 1], [], []>} : vector<288x8xbf16>, vector<8x128xbf16>, vector<288x128xf32> -> vector<288x128xf32>
    %56 = arith.addf %48, %55 : vector<288x128xf32>
    %c0_38 = arith.constant 0 : index
    %c37 = arith.constant 37 : index
    %c0_39 = arith.constant 0 : index
    %57 = vector.load %arg1[%c0_38, %c37, %c0_39] : memref<1x328x8xf32, #tpu.memory_space<vmem>>, vector<1x288x8xf32>
    %58 = vector.shape_cast %57 : vector<1x288x8xf32> to vector<288x8xf32>
    %59 = arith.truncf %58 : vector<288x8xf32> to vector<288x8xbf16>
    %c7 = arith.constant 7 : index
    %c0_40 = arith.constant 0 : index
    %c0_41 = arith.constant 0 : index
    %60 = vector.load %arg2[%c7, %c0_40, %c0_41] : memref<9x8x128xf32, #tpu.memory_space<vmem>>, vector<1x8x128xf32>
    %61 = vector.shape_cast %60 : vector<1x8x128xf32> to vector<8x128xf32>
    %62 = arith.truncf %61 : vector<8x128xf32> to vector<8x128xbf16>
    %cst_42 = arith.constant dense<0.000000e+00> : vector<288x128xf32>
    %63 = tpu.matmul %59, %62, %cst_42 {dimension_numbers = #tpu.dot_dimension_numbers<[1], [0], [0], [1], [0, 0, 1, 1], [], []>} : vector<288x8xbf16>, vector<8x128xbf16>, vector<288x128xf32> -> vector<288x128xf32>
    %64 = arith.addf %56, %63 : vector<288x128xf32>
    %c0_43 = arith.constant 0 : index
    %c38 = arith.constant 38 : index
    %c0_44 = arith.constant 0 : index
    %65 = vector.load %arg1[%c0_43, %c38, %c0_44] : memref<1x328x8xf32, #tpu.memory_space<vmem>>, vector<1x288x8xf32>
    %66 = vector.shape_cast %65 : vector<1x288x8xf32> to vector<288x8xf32>
    %67 = arith.truncf %66 : vector<288x8xf32> to vector<288x8xbf16>
    %c8 = arith.constant 8 : index
    %c0_45 = arith.constant 0 : index
    %c0_46 = arith.constant 0 : index
    %68 = vector.load %arg2[%c8, %c0_45, %c0_46] : memref<9x8x128xf32, #tpu.memory_space<vmem>>, vector<1x8x128xf32>
    %69 = vector.shape_cast %68 : vector<1x8x128xf32> to vector<8x128xf32>
    %70 = arith.truncf %69 : vector<8x128xf32> to vector<8x128xbf16>
    %cst_47 = arith.constant dense<0.000000e+00> : vector<288x128xf32>
    %71 = tpu.matmul %67, %70, %cst_47 {dimension_numbers = #tpu.dot_dimension_numbers<[1], [0], [0], [1], [0, 0, 1, 1], [], []>} : vector<288x8xbf16>, vector<8x128xbf16>, vector<288x128xf32> -> vector<288x128xf32>
    %72 = arith.addf %64, %71 : vector<288x128xf32>
    %c0_48 = arith.constant 0 : index
    %c0_49 = arith.constant 0 : index
    %73 = vector.load %arg3[%c0_48, %c0_49] : memref<1x128xf32, #tpu.memory_space<vmem>>, vector<1x128xf32>
    %74 = vector.broadcast %73 : vector<1x128xf32> to vector<288x128xf32>
    %75 = arith.addf %72, %74 : vector<288x128xf32>
    %cst_50 = arith.constant 0.000000e+00 : f32
    %76 = vector.broadcast %cst_50 : f32 to vector<288x128xf32>
    %77 = arith.maximumf %75, %76 : vector<288x128xf32>
    %c0_51 = arith.constant 0 : index
    %c0_52 = arith.constant 0 : index
    %78 = vector.load %arg6[%c0_51, %c0_52] : memref<288x1xf32, #tpu.memory_space<vmem>>, vector<288x1xf32>
    %79 = vector.broadcast %78 : vector<288x1xf32> to vector<288x128xf32>
    %80 = arith.mulf %77, %79 : vector<288x128xf32>
    %cst_53 = arith.constant 0.000000e+00 : f32
    %81 = vector.broadcast %cst_53 : f32 to vector<336x128xf32>
    %c0_54 = arith.constant 0 : index
    %c0_55 = arith.constant 0 : index
    %82 = vector.load %arg8[%c0_54, %c0_55] : memref<336x128xf32, #tpu.memory_space<vmem>>, vector<336x128xf32>
    tpu.vector_store %arg8[%c0_54, %c0_55], %81 {strides = array<i32>} : memref<336x128xf32, #tpu.memory_space<vmem>>, vector<336x128xf32>,
    %c24 = arith.constant 24 : index
    %c0_56 = arith.constant 0 : index
    %83 = vector.load %arg8[%c24, %c0_56] : memref<336x128xf32, #tpu.memory_space<vmem>>, vector<288x128xf32>
    tpu.vector_store %arg8[%c24, %c0_56], %80 {strides = array<i32>} : memref<336x128xf32, #tpu.memory_space<vmem>>, vector<288x128xf32>,
    %cst_57 = arith.constant 0.000000e+00 : f32
    %84 = vector.broadcast %cst_57 : f32 to vector<288x128xf32>
    %c5_58 = arith.constant 5 : index
    %c0_59 = arith.constant 0 : index
    %85 = vector.load %arg8[%c5_58, %c0_59] : memref<336x128xf32, #tpu.memory_space<vmem>>, vector<288x128xf32>
    %86 = arith.truncf %85 : vector<288x128xf32> to vector<288x128xbf16>
    %c0_60 = arith.constant 0 : index
    %c0_61 = arith.constant 0 : index
    %c0_62 = arith.constant 0 : index
    %87 = vector.load %arg4[%c0_60, %c0_61, %c0_62] : memref<9x128x128xf32, #tpu.memory_space<vmem>>, vector<1x128x128xf32>
    %88 = vector.shape_cast %87 : vector<1x128x128xf32> to vector<128x128xf32>
    %89 = arith.truncf %88 : vector<128x128xf32> to vector<128x128xbf16>
    %cst_63 = arith.constant dense<0.000000e+00> : vector<288x128xf32>
    %90 = tpu.matmul %86, %89, %cst_63 {dimension_numbers = #tpu.dot_dimension_numbers<[1], [0], [0], [1], [0, 0, 1, 1], [], []>} : vector<288x128xbf16>, vector<128x128xbf16>, vector<288x128xf32> -> vector<288x128xf32>
    %91 = arith.addf %84, %90 : vector<288x128xf32>
    %c6_64 = arith.constant 6 : index
    %c0_65 = arith.constant 0 : index
    %92 = vector.load %arg8[%c6_64, %c0_65] : memref<336x128xf32, #tpu.memory_space<vmem>>, vector<288x128xf32>
    %93 = arith.truncf %92 : vector<288x128xf32> to vector<288x128xbf16>
    %c1_66 = arith.constant 1 : index
    %c0_67 = arith.constant 0 : index
    %c0_68 = arith.constant 0 : index
    %94 = vector.load %arg4[%c1_66, %c0_67, %c0_68] : memref<9x128x128xf32, #tpu.memory_space<vmem>>, vector<1x128x128xf32>
    %95 = vector.shape_cast %94 : vector<1x128x128xf32> to vector<128x128xf32>
    %96 = arith.truncf %95 : vector<128x128xf32> to vector<128x128xbf16>
    %cst_69 = arith.constant dense<0.000000e+00> : vector<288x128xf32>
    %97 = tpu.matmul %93, %96, %cst_69 {dimension_numbers = #tpu.dot_dimension_numbers<[1], [0], [0], [1], [0, 0, 1, 1], [], []>} : vector<288x128xbf16>, vector<128x128xbf16>, vector<288x128xf32> -> vector<288x128xf32>
    %98 = arith.addf %91, %97 : vector<288x128xf32>
    %c7_70 = arith.constant 7 : index
    %c0_71 = arith.constant 0 : index
    %99 = vector.load %arg8[%c7_70, %c0_71] : memref<336x128xf32, #tpu.memory_space<vmem>>, vector<288x128xf32>
    %100 = arith.truncf %99 : vector<288x128xf32> to vector<288x128xbf16>
    %c2_72 = arith.constant 2 : index
    %c0_73 = arith.constant 0 : index
    %c0_74 = arith.constant 0 : index
    %101 = vector.load %arg4[%c2_72, %c0_73, %c0_74] : memref<9x128x128xf32, #tpu.memory_space<vmem>>, vector<1x128x128xf32>
    %102 = vector.shape_cast %101 : vector<1x128x128xf32> to vector<128x128xf32>
    %103 = arith.truncf %102 : vector<128x128xf32> to vector<128x128xbf16>
    %cst_75 = arith.constant dense<0.000000e+00> : vector<288x128xf32>
    %104 = tpu.matmul %100, %103, %cst_75 {dimension_numbers = #tpu.dot_dimension_numbers<[1], [0], [0], [1], [0, 0, 1, 1], [], []>} : vector<288x128xbf16>, vector<128x128xbf16>, vector<288x128xf32> -> vector<288x128xf32>
    %105 = arith.addf %98, %104 : vector<288x128xf32>
    %c23 = arith.constant 23 : index
    %c0_76 = arith.constant 0 : index
    %106 = vector.load %arg8[%c23, %c0_76] : memref<336x128xf32, #tpu.memory_space<vmem>>, vector<288x128xf32>
    %107 = arith.truncf %106 : vector<288x128xf32> to vector<288x128xbf16>
    %c3_77 = arith.constant 3 : index
    %c0_78 = arith.constant 0 : index
    %c0_79 = arith.constant 0 : index
    %108 = vector.load %arg4[%c3_77, %c0_78, %c0_79] : memref<9x128x128xf32, #tpu.memory_space<vmem>>, vector<1x128x128xf32>
    %109 = vector.shape_cast %108 : vector<1x128x128xf32> to vector<128x128xf32>
    %110 = arith.truncf %109 : vector<128x128xf32> to vector<128x128xbf16>
    %cst_80 = arith.constant dense<0.000000e+00> : vector<288x128xf32>
    %111 = tpu.matmul %107, %110, %cst_80 {dimension_numbers = #tpu.dot_dimension_numbers<[1], [0], [0], [1], [0, 0, 1, 1], [], []>} : vector<288x128xbf16>, vector<128x128xbf16>, vector<288x128xf32> -> vector<288x128xf32>
    %112 = arith.addf %105, %111 : vector<288x128xf32>
    %c24_81 = arith.constant 24 : index
    %c0_82 = arith.constant 0 : index
    %113 = vector.load %arg8[%c24_81, %c0_82] : memref<336x128xf32, #tpu.memory_space<vmem>>, vector<288x128xf32>
    %114 = arith.truncf %113 : vector<288x128xf32> to vector<288x128xbf16>
    %c4_83 = arith.constant 4 : index
    %c0_84 = arith.constant 0 : index
    %c0_85 = arith.constant 0 : index
    %115 = vector.load %arg4[%c4_83, %c0_84, %c0_85] : memref<9x128x128xf32, #tpu.memory_space<vmem>>, vector<1x128x128xf32>
    %116 = vector.shape_cast %115 : vector<1x128x128xf32> to vector<128x128xf32>
    %117 = arith.truncf %116 : vector<128x128xf32> to vector<128x128xbf16>
    %cst_86 = arith.constant dense<0.000000e+00> : vector<288x128xf32>
    %118 = tpu.matmul %114, %117, %cst_86 {dimension_numbers = #tpu.dot_dimension_numbers<[1], [0], [0], [1], [0, 0, 1, 1], [], []>} : vector<288x128xbf16>, vector<128x128xbf16>, vector<288x128xf32> -> vector<288x128xf32>
    %119 = arith.addf %112, %118 : vector<288x128xf32>
    %c25 = arith.constant 25 : index
    %c0_87 = arith.constant 0 : index
    %120 = vector.load %arg8[%c25, %c0_87] : memref<336x128xf32, #tpu.memory_space<vmem>>, vector<288x128xf32>
    %121 = arith.truncf %120 : vector<288x128xf32> to vector<288x128xbf16>
    %c5_88 = arith.constant 5 : index
    %c0_89 = arith.constant 0 : index
    %c0_90 = arith.constant 0 : index
    %122 = vector.load %arg4[%c5_88, %c0_89, %c0_90] : memref<9x128x128xf32, #tpu.memory_space<vmem>>, vector<1x128x128xf32>
    %123 = vector.shape_cast %122 : vector<1x128x128xf32> to vector<128x128xf32>
    %124 = arith.truncf %123 : vector<128x128xf32> to vector<128x128xbf16>
    %cst_91 = arith.constant dense<0.000000e+00> : vector<288x128xf32>
    %125 = tpu.matmul %121, %124, %cst_91 {dimension_numbers = #tpu.dot_dimension_numbers<[1], [0], [0], [1], [0, 0, 1, 1], [], []>} : vector<288x128xbf16>, vector<128x128xbf16>, vector<288x128xf32> -> vector<288x128xf32>
    %126 = arith.addf %119, %125 : vector<288x128xf32>
    %c41 = arith.constant 41 : index
    %c0_92 = arith.constant 0 : index
    %127 = vector.load %arg8[%c41, %c0_92] : memref<336x128xf32, #tpu.memory_space<vmem>>, vector<288x128xf32>
    %128 = arith.truncf %127 : vector<288x128xf32> to vector<288x128xbf16>
    %c6_93 = arith.constant 6 : index
    %c0_94 = arith.constant 0 : index
    %c0_95 = arith.constant 0 : index
    %129 = vector.load %arg4[%c6_93, %c0_94, %c0_95] : memref<9x128x128xf32, #tpu.memory_space<vmem>>, vector<1x128x128xf32>
    %130 = vector.shape_cast %129 : vector<1x128x128xf32> to vector<128x128xf32>
    %131 = arith.truncf %130 : vector<128x128xf32> to vector<128x128xbf16>
    %cst_96 = arith.constant dense<0.000000e+00> : vector<288x128xf32>
    %132 = tpu.matmul %128, %131, %cst_96 {dimension_numbers = #tpu.dot_dimension_numbers<[1], [0], [0], [1], [0, 0, 1, 1], [], []>} : vector<288x128xbf16>, vector<128x128xbf16>, vector<288x128xf32> -> vector<288x128xf32>
    %133 = arith.addf %126, %132 : vector<288x128xf32>
    %c42 = arith.constant 42 : index
    %c0_97 = arith.constant 0 : index
    %134 = vector.load %arg8[%c42, %c0_97] : memref<336x128xf32, #tpu.memory_space<vmem>>, vector<288x128xf32>
    %135 = arith.truncf %134 : vector<288x128xf32> to vector<288x128xbf16>
    %c7_98 = arith.constant 7 : index
    %c0_99 = arith.constant 0 : index
    %c0_100 = arith.constant 0 : index
    %136 = vector.load %arg4[%c7_98, %c0_99, %c0_100] : memref<9x128x128xf32, #tpu.memory_space<vmem>>, vector<1x128x128xf32>
    %137 = vector.shape_cast %136 : vector<1x128x128xf32> to vector<128x128xf32>
    %138 = arith.truncf %137 : vector<128x128xf32> to vector<128x128xbf16>
    %cst_101 = arith.constant dense<0.000000e+00> : vector<288x128xf32>
    %139 = tpu.matmul %135, %138, %cst_101 {dimension_numbers = #tpu.dot_dimension_numbers<[1], [0], [0], [1], [0, 0, 1, 1], [], []>} : vector<288x128xbf16>, vector<128x128xbf16>, vector<288x128xf32> -> vector<288x128xf32>
    %140 = arith.addf %133, %139 : vector<288x128xf32>
    %c43 = arith.constant 43 : index
    %c0_102 = arith.constant 0 : index
    %141 = vector.load %arg8[%c43, %c0_102] : memref<336x128xf32, #tpu.memory_space<vmem>>, vector<288x128xf32>
    %142 = arith.truncf %141 : vector<288x128xf32> to vector<288x128xbf16>
    %c8_103 = arith.constant 8 : index
    %c0_104 = arith.constant 0 : index
    %c0_105 = arith.constant 0 : index
    %143 = vector.load %arg4[%c8_103, %c0_104, %c0_105] : memref<9x128x128xf32, #tpu.memory_space<vmem>>, vector<1x128x128xf32>
    %144 = vector.shape_cast %143 : vector<1x128x128xf32> to vector<128x128xf32>
    %145 = arith.truncf %144 : vector<128x128xf32> to vector<128x128xbf16>
    %cst_106 = arith.constant dense<0.000000e+00> : vector<288x128xf32>
    %146 = tpu.matmul %142, %145, %cst_106 {dimension_numbers = #tpu.dot_dimension_numbers<[1], [0], [0], [1], [0, 0, 1, 1], [], []>} : vector<288x128xbf16>, vector<128x128xbf16>, vector<288x128xf32> -> vector<288x128xf32>
    %147 = arith.addf %140, %146 : vector<288x128xf32>
    %c0_107 = arith.constant 0 : index
    %c0_108 = arith.constant 0 : index
    %148 = vector.load %arg5[%c0_107, %c0_108] : memref<1x128xf32, #tpu.memory_space<vmem>>, vector<1x128xf32>
    %149 = vector.broadcast %148 : vector<1x128xf32> to vector<288x128xf32>
    %150 = arith.addf %147, %149 : vector<288x128xf32>
    %cst_109 = arith.constant 0.000000e+00 : f32
    %151 = vector.broadcast %cst_109 : f32 to vector<288x128xf32>
    %152 = arith.maximumf %150, %151 : vector<288x128xf32>
    %c0_110 = arith.constant 0 : index
    %c0_111 = arith.constant 0 : index
    %c0_112 = arith.constant 0 : index
    %153 = vector.load %arg7[%c0_110, %c0_111, %c0_112] : memref<1x288x128xf32, #tpu.memory_space<vmem>>, vector<1x288x128xf32>
    %154 = vector.shape_cast %153 : vector<1x288x128xf32> to vector<288x128xf32>
    %155 = vector.shape_cast %152 : vector<288x128xf32> to vector<1x288x128xf32>
    tpu.vector_store %arg7[%c0_110, %c0_111, %c0_112], %155 {strides = array<i32>} : memref<1x288x128xf32, #tpu.memory_space<vmem>>, vector<1x288x128xf32>,
    return
  }
  func.func @transform_0(%arg0: i32) -> (i32, i32, i32) {
    %c0_i32 = arith.constant 0 : i32
    %c0_i32_0 = arith.constant 0 : i32
    %c0_i32_1 = arith.constant 0 : i32
    return %arg0, %c0_i32, %c0_i32_0 : i32, i32, i32
  }
  func.func @transform_1(%arg0: i32) -> (i32, i32, i32) {
    %c0_i32 = arith.constant 0 : i32
    %c0_i32_0 = arith.constant 0 : i32
    %c0_i32_1 = arith.constant 0 : i32
    %c0_i32_2 = arith.constant 0 : i32
    return %c0_i32, %c0_i32_0, %c0_i32_1 : i32, i32, i32
  }
  func.func @transform_2(%arg0: i32) -> (i32, i32) {
    %c0_i32 = arith.constant 0 : i32
    %c0_i32_0 = arith.constant 0 : i32
    %c0_i32_1 = arith.constant 0 : i32
    return %c0_i32, %c0_i32_0 : i32, i32
  }
  func.func @transform_3(%arg0: i32) -> (i32, i32, i32) {
    %c0_i32 = arith.constant 0 : i32
    %c0_i32_0 = arith.constant 0 : i32
    %c0_i32_1 = arith.constant 0 : i32
    %c0_i32_2 = arith.constant 0 : i32
    return %c0_i32, %c0_i32_0, %c0_i32_1 : i32, i32, i32
  }
  func.func @transform_4(%arg0: i32) -> (i32, i32) {
    %c0_i32 = arith.constant 0 : i32
    %c0_i32_0 = arith.constant 0 : i32
    %c0_i32_1 = arith.constant 0 : i32
    return %c0_i32, %c0_i32_0 : i32, i32
  }
  func.func @transform_5(%arg0: i32) -> (i32, i32) {
    %c0_i32 = arith.constant 0 : i32
    %c0_i32_0 = arith.constant 0 : i32
    %c0_i32_1 = arith.constant 0 : i32
    return %c0_i32, %c0_i32_0 : i32, i32
  }
  func.func @transform_6(%arg0: i32) -> (i32, i32, i32) {
    %c0_i32 = arith.constant 0 : i32
    %c0_i32_0 = arith.constant 0 : i32
    %c0_i32_1 = arith.constant 0 : i32
    return %arg0, %c0_i32, %c0_i32_0 : i32, i32, i32
  }
}

</mosaic_0001>

<llo_original>
// kernel: unet_block_forward.1
$region0: #{unet_block_forward.1}
  #allocation0 [shape = 'u32[]', space=smem, size = 0x4, offset = 0x4, fixed_abs, tag = 'smem constant byte address 0x4 - core index']
  #allocation1 [shape = 'u32[144,128]{1,0:T(1,128)}', space=vmem, size = 0x12000, scoped, tag = 'internal scratch']
  #allocation2 [shape = 'f32[336,128]{1,0:T(8,128)}', space=vmem, size = 0x2a000, scoped, tag = 'scratch operand']
  %s0 = inlined_call_operand.vmem [shape: f32[2,328,8], index: 0, kind: input, shape index: {}]
  %s1 = inlined_call_operand.vmem [shape: f32[9,8,128], index: 1, kind: input, shape index: {}]
  %s2 = inlined_call_operand.vmem [shape: f32[1,128], index: 2, kind: input, shape index: {}]
  %s3 = inlined_call_operand.vmem [shape: f32[9,128,128], index: 3, kind: input, shape index: {}]
  %s4 = inlined_call_operand.vmem [shape: f32[1,128], index: 4, kind: input, shape index: {}]
  %s5 = inlined_call_operand.vmem [shape: f32[288,1], index: 5, kind: input, shape index: {}]
  %s6 = inlined_call_operand.vmem [shape: f32[2,288,128], index: 6, kind: output, shape index: {}]
  %s7 = sld [smem:[#allocation0]]
  $region57: #{unet_block_forward.1} parent=0
    _
  %s9 = ssub.s32 1, %s7
  %s10 = scalar_select 0, %s9, %s7
  loop: start=0, step=1, limit=4
  $region2: #{unet_block_forward.1} parent=0 // loop_pre_header
    _
  $region3: #{unet_block_forward.1} parent=0 // loop_header
    %s12 = sphi 0, %s16
    %p13 = scmp.ge.s32.totalorder %s12, 4
    %s22 = sphi 0, %s24
    %s25 = sphi 0, %s22
    %s26 = sphi 0, %s25
    %s42 = sphi 0, %s26
    %s46 = sphi 0, %s46
    %s48 = sphi 0, %s46
    %s49 = sphi 0, %s48
    %s63 = sphi 0, %s49
    %s67 = sphi 0, %s67
    %s69 = sphi 0, %s67
    %s70 = sphi 0, %s69
    %s84 = sphi 0, %s70
    %s88 = sphi 0, %s88
    %s90 = sphi 0, %s88
    %s91 = sphi 0, %s90
    %s105 = sphi 0, %s91
    %s109 = sphi 0, %s109
    %s111 = sphi 0, %s109
    %s112 = sphi 0, %s111
    %s126 = sphi 0, %s112
    %s130 = sphi 0, %s130
    %s132 = sphi 0, %s130
    %s133 = sphi 0, %s132
    %s147 = sphi 0, %s133
    %s153 = sphi 0, %s155
    %s156 = sphi 0, %s153
    %s157 = sphi 0, %s156
    %s173 = sphi 0, %s157
  $region4: #{unet_block_forward.1} parent=0 // loop_header_branch
    %15 = sbr.rel (%p13) target = $region8
  $region5: #{unet_block_forward.1} parent=0 // loop_body
    %s17 = ssub.s32 %s12, 1
    %s18 = ssub.s32 %s12, 2
    %s19 = sadd.s32 %s12, 1
    %s20 = ssub.s32 %s12, %s19
    %p21 = scmp.eq.s32.totalorder %s20, 0
    %s23 = sadd.s32 %s22, 1
    %s24 = scalar_select %p21, %s22, %s23
    %p27 = pneg %p21
    %p28 = scmp.eq.s32.totalorder %s12, 1
    %p29 = por %p27, %p28
    %p30 = scmp.ne.s32.totalorder %s22, %s25
    %p31 = scmp.eq.s32.totalorder %s12, 0
    %p32 = por %p30, %p31
    %p33 = scmp.ne.s32.totalorder %s22, %s25
    %p34 = scmp.eq.s32.totalorder %s17, 1
    %p35 = por %p33, %p34
    %p36 = scmp.ne.s32.totalorder %s25, %s26
    %p37 = scmp.eq.s32.totalorder %s17, 0
    %p38 = por %p36, %p37
    %p39 = scmp.ne.s32.totalorder %s25, %s26
    %p40 = scmp.eq.s32.totalorder %s18, 1
    %p41 = por %p39, %p40
    %p43 = scmp.ne.s32.totalorder %s26, %s42
    %p44 = scmp.eq.s32.totalorder %s18, 0
    %p45 = por %p43, %p44
    %s47 = sadd.s32 %s46, 1
    %p50 = scmp.eq.s32.totalorder %s12, 1
    %p51 = scmp.ne.s32.totalorder %s46, %s48
    %p52 = scmp.eq.s32.totalorder %s12, 0
    %p53 = por %p51, %p52
    %p54 = scmp.ne.s32.totalorder %s46, %s48
    %p55 = scmp.eq.s32.totalorder %s17, 1
    %p56 = por %p54, %p55
    %p57 = scmp.ne.s32.totalorder %s48, %s49
    %p58 = scmp.eq.s32.totalorder %s17, 0
    %p59 = por %p57, %p58
    %p60 = scmp.ne.s32.totalorder %s48, %s49
    %p61 = scmp.eq.s32.totalorder %s18, 1
    %p62 = por %p60, %p61
    %p64 = scmp.ne.s32.totalorder %s49, %s63
    %p65 = scmp.eq.s32.totalorder %s18, 0
    %p66 = por %p64, %p65
    %s68 = sadd.s32 %s67, 1
    %p71 = scmp.eq.s32.totalorder %s12, 1
    %p72 = scmp.ne.s32.totalorder %s67, %s69
    %p73 = scmp.eq.s32.totalorder %s12, 0
    %p74 = por %p72, %p73
    %p75 = scmp.ne.s32.totalorder %s67, %s69
    %p76 = scmp.eq.s32.totalorder %s17, 1
    %p77 = por %p75, %p76
    %p78 = scmp.ne.s32.totalorder %s69, %s70
    %p79 = scmp.eq.s32.totalorder %s17, 0
    %p80 = por %p78, %p79
    %p81 = scmp.ne.s32.totalorder %s69, %s70
    %p82 = scmp.eq.s32.totalorder %s18, 1
    %p83 = por %p81, %p82
    %p85 = scmp.ne.s32.totalorder %s70, %s84
    %p86 = scmp.eq.s32.totalorder %s18, 0
    %p87 = por %p85, %p86
    %s89 = sadd.s32 %s88, 1
    %p92 = scmp.eq.s32.totalorder %s12, 1
    %p93 = scmp.ne.s32.totalorder %s88, %s90
    %p94 = scmp.eq.s32.totalorder %s12, 0
    %p95 = por %p93, %p94
    %p96 = scmp.ne.s32.totalorder %s88, %s90
    %p97 = scmp.eq.s32.totalorder %s17, 1
    %p98 = por %p96, %p97
    %p99 = scmp.ne.s32.totalorder %s90, %s91
    %p100 = scmp.eq.s32.totalorder %s17, 0
    %p101 = por %p99, %p100
    %p102 = scmp.ne.s32.totalorder %s90, %s91
    %p103 = scmp.eq.s32.totalorder %s18, 1
    %p104 = por %p102, %p103
    %p106 = scmp.ne.s32.totalorder %s91, %s105
    %p107 = scmp.eq.s32.totalorder %s18, 0
    %p108 = por %p106, %p107
    %s110 = sadd.s32 %s109, 1
    %p113 = scmp.eq.s32.totalorder %s12, 1
    %p114 = scmp.ne.s32.totalorder %s109, %s111
    %p115 = scmp.eq.s32.totalorder %s12, 0
    %p116 = por %p114, %p115
    %p117 = scmp.ne.s32.totalorder %s109, %s111
    %p118 = scmp.eq.s32.totalorder %s17, 1
    %p119 = por %p117, %p118
    %p120 = scmp.ne.s32.totalorder %s111, %s112
    %p121 = scmp.eq.s32.totalorder %s17, 0
    %p122 = por %p120, %p121
    %p123 = scmp.ne.s32.totalorder %s111, %s112
    %p124 = scmp.eq.s32.totalorder %s18, 1
    %p125 = por %p123, %p124
    %p127 = scmp.ne.s32.totalorder %s112, %s126
    %p128 = scmp.eq.s32.totalorder %s18, 0
    %p129 = por %p127, %p128
    %s131 = sadd.s32 %s130, 1
    %p134 = scmp.eq.s32.totalorder %s12, 1
    %p135 = scmp.ne.s32.totalorder %s130, %s132
    %p136 = scmp.eq.s32.totalorder %s12, 0
    %p137 = por %p135, %p136
    %p138 = scmp.ne.s32.totalorder %s130, %s132
    %p139 = scmp.eq.s32.totalorder %s17, 1
    %p140 = por %p138, %p139
    %p141 = scmp.ne.s32.totalorder %s132, %s133
    %p142 = scmp.eq.s32.totalorder %s17, 0
    %p143 = por %p141, %p142
    %p144 = scmp.ne.s32.totalorder %s132, %s133
    %p145 = scmp.eq.s32.totalorder %s18, 1
    %p146 = por %p144, %p145
    %p148 = scmp.ne.s32.totalorder %s133, %s147
    %p149 = scmp.eq.s32.totalorder %s18, 0
    %p150 = por %p148, %p149
    %s151 = ssub.s32 %s12, %s19
    %p152 = scmp.eq.s32.totalorder %s151, 0
    %s154 = sadd.s32 %s153, 1
    %s155 = scalar_select %p152, %s153, %s154
    %p158 = pneg %p152
    %p159 = scmp.eq.s32.totalorder %s12, 1
    %p160 = por %p158, %p159
    %p161 = scmp.ne.s32.totalorder %s153, %s156
    %p162 = scmp.eq.s32.totalorder %s12, 0
    %p163 = por %p161, %p162
    %p164 = scmp.ne.s32.totalorder %s153, %s156
    %p165 = scmp.eq.s32.totalorder %s17, 1
    %p166 = por %p164, %p165
    %p167 = scmp.ne.s32.totalorder %s156, %s157
    %p168 = scmp.eq.s32.totalorder %s17, 0
    %p169 = por %p167, %p168
    %p170 = scmp.ne.s32.totalorder %s156, %s157
    %p171 = scmp.eq.s32.totalorder %s18, 1
    %p172 = por %p170, %p171
    %p174 = scmp.ne.s32.totalorder %s157, %s173
    %p175 = scmp.eq.s32.totalorder %s18, 0
    %p176 = por %p174, %p175
    %p177 = scmp.le.s32.totalorder 1, %s12
    %p178 = scmp.lt.s32.totalorder %s12, 3
    %p179 = pnand %p177, %p178
    %p180 = pneg %p179
    // Predicated region
    $region9: #{unet_block_forward.1} parent=5 // pred_check
      _
    $region10: #{unet_block_forward.1} parent=5 // pred_check_branch
      %182 = sbr.rel (%p179) target = $region12
    $region11: #{unet_block_forward.1} parent=5 // pred_region
      %s183 = ssub.s32 %s12, 1
      // Predicated region
      $region13: #{unet_block_forward.1} parent=11 // pred_check
        %p184 = pneg %p59
      $region14: #{unet_block_forward.1} parent=11 // pred_check_branch
        %186 = sbr.rel (%p184) target = $region16
      $region15: #{unet_block_forward.1} parent=11 // pred_region
        _
      $region16: #{unet_block_forward.1} parent=11 // pred_fallthru
        _
      // Predicated region
      $region17: #{unet_block_forward.1} parent=11 // pred_check
        %p187 = pneg %p80
      $region18: #{unet_block_forward.1} parent=11 // pred_check_branch
        %189 = sbr.rel (%p187) target = $region20
      $region19: #{unet_block_forward.1} parent=11 // pred_region
        _
      $region20: #{unet_block_forward.1} parent=11 // pred_fallthru
        _
      // Predicated region
      $region21: #{unet_block_forward.1} parent=11 // pred_check
        %p190 = pneg %p101
      $region22: #{unet_block_forward.1} parent=11 // pred_check_branch
        %192 = sbr.rel (%p190) target = $region24
      $region23: #{unet_block_forward.1} parent=11 // pred_region
        _
      $region24: #{unet_block_forward.1} parent=11 // pred_fallthru
        _
      // Predicated region
      $region25: #{unet_block_forward.1} parent=11 // pred_check
        %p193 = pneg %p122
      $region26: #{unet_block_forward.1} parent=11 // pred_check_branch
        %195 = sbr.rel (%p193) target = $region28
      $region27: #{unet_block_forward.1} parent=11 // pred_region
        _
      $region28: #{unet_block_forward.1} parent=11 // pred_fallthru
        _
      // Predicated region
      $region29: #{unet_block_forward.1} parent=11 // pred_check
        %p196 = pneg %p143
      $region30: #{unet_block_forward.1} parent=11 // pred_check_branch
        %198 = sbr.rel (%p196) target = $region32
      $region31: #{unet_block_forward.1} parent=11 // pred_region
        _
      $region32: #{unet_block_forward.1} parent=11 // pred_fallthru
        _
    $region12: #{unet_block_forward.1} parent=5 // pred_fallthru
      _
    %p199 = scmp.lt.s32.totalorder %s12, 2
    // Predicated region
    $region33: #{unet_block_forward.1} parent=5 // pred_check
      %p200 = pneg %p199
    $region34: #{unet_block_forward.1} parent=5 // pred_check_branch
      %202 = sbr.rel (%p200) target = $region36
    $region35: #{unet_block_forward.1} parent=5 // pred_region
      // Predicated region
      $region37: #{unet_block_forward.1} parent=35 // pred_check
        %p203 = pneg %p32
      $region38: #{unet_block_forward.1} parent=35 // pred_check_branch
        %205 = sbr.rel (%p203) target = $region40
      $region39: #{unet_block_forward.1} parent=35 // pred_region
        %p206 = scmp.lt.s32.totalorder %s12, 1
        %s207 = scalar_select %p206, %s12, 1
        %s208 = smul.addr %s207, 41
        %s209 = smul.addr %s208, 8
        %s210 = scalar_lea.vmem %s0, %s209
      $region40: #{unet_block_forward.1} parent=35 // pred_fallthru
        _
    $region36: #{unet_block_forward.1} parent=5 // pred_fallthru
      _
    %p211 = scmp.le.s32.totalorder 1, %s12
    %p212 = scmp.lt.s32.totalorder %s12, 3
    %p213 = pnand %p211, %p212
    %p214 = pneg %p213
    // Predicated region
    $region41: #{unet_block_forward.1} parent=5 // pred_check
      _
    $region42: #{unet_block_forward.1} parent=5 // pred_check_branch
      %216 = sbr.rel (%p213) target = $region44
    $region43: #{unet_block_forward.1} parent=5 // pred_region
      %s217 = ssub.s32 %s12, 1
      %p218 = scmp.lt.s32.totalorder %s17, 1
      %s219 = scalar_select %p218, %s17, 1
      %s220 = smul.addr %s219, 41
      %s221 = smul.addr %s220, 8
      %s222 = scalar_lea.vmem %s0, %s221
      %p223 = pneg %p38
      %p224 = pneg %p35
      %p225 = pneg %p59
      %p226 = pneg %p56
      %p227 = pneg %p80
      %p228 = pneg %p77
      %p229 = pneg %p101
      %p230 = pneg %p98
      %p231 = pneg %p122
      %p232 = pneg %p119
      %p233 = pneg %p143
      %p234 = pneg %p140
      %p235 = pneg %p169
      %p236 = pneg %p166
      %p237 = scmp.lt.s32.totalorder %s17, 1
      %s238 = scalar_select %p237, %s17, 1
      %s239 = smul.addr %s238, 36
      %s240 = smul.addr %s239, 8
      %s241 = scalar_lea.vmem %s6, %s240
      %p242 = scmp.lt.s32.totalorder %s17, 1
      %s243 = scalar_select %p242, %s17, 1
      %s244 = smul.addr %s243, 41
      %s245 = smul.addr %s244, 8
      %s246 = scalar_lea.vmem %s0, %s245
      %p247 = scmp.lt.s32.totalorder %s17, 1
      %s248 = scalar_select %p247, %s17, 1
      %s249 = smul.addr %s248, 36
      %s250 = smul.addr %s249, 8
      %s251 = scalar_lea.vmem %s6, %s250
      %v253 = vld [vmem:[%s246] sm:$0xff]
      %v254 = vld [vmem:[%s246 + $0x8] sm:$0xff]
      %v255 = vld [vmem:[%s246 + $0x10] sm:$0xff]
      %v256 = vld [vmem:[%s246 + $0x18] sm:$0xff]
      %v257 = vld [vmem:[%s246 + $0x20] sm:$0xff]
      %v258 = vld [vmem:[%s246 + $0x28] sm:$0xff]
      %v259 = vld [vmem:[%s246 + $0x30] sm:$0xff]
      %v260 = vld [vmem:[%s246 + $0x38] sm:$0xff]
      %v261 = vld [vmem:[%s246 + $0x40] sm:$0xff]
      %v262 = vld [vmem:[%s246 + $0x48] sm:$0xff]
      %v263 = vld [vmem:[%s246 + $0x50] sm:$0xff]
      %v264 = vld [vmem:[%s246 + $0x58] sm:$0xff]
      %v265 = vld [vmem:[%s246 + $0x60] sm:$0xff]
      %v266 = vld [vmem:[%s246 + $0x68] sm:$0xff]
      %v267 = vld [vmem:[%s246 + $0x70] sm:$0xff]
      %v268 = vld [vmem:[%s246 + $0x78] sm:$0xff]
      %v269 = vld [vmem:[%s246 + $0x80] sm:$0xff]
      %v270 = vld [vmem:[%s246 + $0x88] sm:$0xff]
      %v271 = vld [vmem:[%s246 + $0x90] sm:$0xff]
      %v272 = vld [vmem:[%s246 + $0x98] sm:$0xff]
      %v273 = vld [vmem:[%s246 + $0xa0] sm:$0xff]
      %v274 = vld [vmem:[%s246 + $0xa8] sm:$0xff]
      %v275 = vld [vmem:[%s246 + $0xb0] sm:$0xff]
      %v276 = vld [vmem:[%s246 + $0xb8] sm:$0xff]
      %v277 = vld [vmem:[%s246 + $0xc0] sm:$0xff]
      %v278 = vld [vmem:[%s246 + $0xc8] sm:$0xff]
      %v279 = vld [vmem:[%s246 + $0xd0] sm:$0xff]
      %v280 = vld [vmem:[%s246 + $0xd8] sm:$0xff]
      %v281 = vld [vmem:[%s246 + $0xe0] sm:$0xff]
      %v282 = vld [vmem:[%s246 + $0xe8] sm:$0xff]
      %v283 = vld [vmem:[%s246 + $0xf0] sm:$0xff]
      %v284 = vld [vmem:[%s246 + $0xf8] sm:$0xff]
      %v285 = vld [vmem:[%s246 + $0x100] sm:$0xff]
      %v286 = vld [vmem:[%s246 + $0x108] sm:$0xff]
      %v287 = vld [vmem:[%s246 + $0x110] sm:$0xff]
      %v288 = vld [vmem:[%s246 + $0x118] sm:$0xff]
      %v289 = vpack.c.bf16 %v254, %v253
      %v290 = vpack.c.bf16 %v256, %v255
      %v291 = vpack.c.bf16 %v258, %v257
      %v292 = vpack.c.bf16 %v260, %v259
      %v293 = vpack.c.bf16 %v262, %v261
      %v294 = vpack.c.bf16 %v264, %v263
      %v295 = vpack.c.bf16 %v266, %v265
      %v296 = vpack.c.bf16 %v268, %v267
      %v297 = vpack.c.bf16 %v270, %v269
      %v298 = vpack.c.bf16 %v272, %v271
      %v299 = vpack.c.bf16 %v274, %v273
      %v300 = vpack.c.bf16 %v276, %v275
      %v301 = vpack.c.bf16 %v278, %v277
      %v302 = vpack.c.bf16 %v280, %v279
      %v303 = vpack.c.bf16 %v282, %v281
      %v304 = vpack.c.bf16 %v284, %v283
      %v305 = vpack.c.bf16 %v286, %v285
      %v306 = vpack.c.bf16 %v288, %v287
      %v307 = vld [vmem:[%s1] sm:$0xff]
      %v308 = vpack.c.bf16 %v307, %v307
      %v309 = vld [vmem:[%s246 + $0x1] sm:$0xff]
      %v310 = vld [vmem:[%s246 + $0x9] sm:$0xff]
      %v311 = vld [vmem:[%s246 + $0x11] sm:$0xff]
      %v312 = vld [vmem:[%s246 + $0x19] sm:$0xff]
      %v313 = vld [vmem:[%s246 + $0x21] sm:$0xff]
      %v314 = vld [vmem:[%s246 + $0x29] sm:$0xff]
      %v315 = vld [vmem:[%s246 + $0x31] sm:$0xff]
      %v316 = vld [vmem:[%s246 + $0x39] sm:$0xff]
      %v317 = vld [vmem:[%s246 + $0x41] sm:$0xff]
      %v318 = vld [vmem:[%s246 + $0x49] sm:$0xff]
      %v319 = vld [vmem:[%s246 + $0x51] sm:$0xff]
      %v320 = vld [vmem:[%s246 + $0x59] sm:$0xff]
      %v321 = vld [vmem:[%s246 + $0x61] sm:$0xff]
      %v322 = vld [vmem:[%s246 + $0x69] sm:$0xff]
      %v323 = vld [vmem:[%s246 + $0x71] sm:$0xff]
      %v324 = vld [vmem:[%s246 + $0x79] sm:$0xff]
      %v325 = vld [vmem:[%s246 + $0x81] sm:$0xff]
      %v326 = vld [vmem:[%s246 + $0x89] sm:$0xff]
      %v327 = vld [vmem:[%s246 + $0x91] sm:$0xff]
      %v328 = vld [vmem:[%s246 + $0x99] sm:$0xff]
      %v329 = vld [vmem:[%s246 + $0xa1] sm:$0xff]
      %v330 = vld [vmem:[%s246 + $0xa9] sm:$0xff]
      %v331 = vld [vmem:[%s246 + $0xb1] sm:$0xff]
      %v332 = vld [vmem:[%s246 + $0xb9] sm:$0xff]
      %v333 = vld [vmem:[%s246 + $0xc1] sm:$0xff]
      %v334 = vld [vmem:[%s246 + $0xc9] sm:$0xff]
      %v335 = vld [vmem:[%s246 + $0xd1] sm:$0xff]
      %v336 = vld [vmem:[%s246 + $0xd9] sm:$0xff]
      %v337 = vld [vmem:[%s246 + $0xe1] sm:$0xff]
      %v338 = vld [vmem:[%s246 + $0xe9] sm:$0xff]
      %v339 = vld [vmem:[%s246 + $0xf1] sm:$0xff]
      %v340 = vld [vmem:[%s246 + $0xf9] sm:$0xff]
      %v341 = vld [vmem:[%s246 + $0x101] sm:$0xff]
      %v342 = vld [vmem:[%s246 + $0x109] sm:$0xff]
      %v343 = vld [vmem:[%s246 + $0x111] sm:$0xff]
      %v344 = vld [vmem:[%s246 + $0x119] sm:$0xff]
      %v345 = vpack.c.bf16 %v310, %v309
      %v346 = vpack.c.bf16 %v312, %v311
      %v347 = vpack.c.bf16 %v314, %v313
      %v348 = vpack.c.bf16 %v316, %v315
      %v349 = vpack.c.bf16 %v318, %v317
      %v350 = vpack.c.bf16 %v320, %v319
      %v351 = vpack.c.bf16 %v322, %v321
      %v352 = vpack.c.bf16 %v324, %v323
      %v353 = vpack.c.bf16 %v326, %v325
      %v354 = vpack.c.bf16 %v328, %v327
      %v355 = vpack.c.bf16 %v330, %v329
      %v356 = vpack.c.bf16 %v332, %v331
      %v357 = vpack.c.bf16 %v334, %v333
      %v358 = vpack.c.bf16 %v336, %v335
      %v359 = vpack.c.bf16 %v338, %v337
      %v360 = vpack.c.bf16 %v340, %v339
      %v361 = vpack.c.bf16 %v342, %v341
      %v362 = vpack.c.bf16 %v344, %v343
      %s363 = scalar_lea.vmem %s1, 8
      %v364 = vld [vmem:[%s363] sm:$0xff]
      %v365 = vpack.c.bf16 %v364, %v364
      %vm366 = vcmask 64512
      %v368 = vsel %vm366, %v345, 0
      %v371 = vsel %vm366, %v346, 0
      %v374 = vsel %vm366, %v347, 0
      %v377 = vsel %vm366, %v348, 0
      %v380 = vsel %vm366, %v349, 0
      %v383 = vsel %vm366, %v350, 0
      %v386 = vsel %vm366, %v351, 0
      %v389 = vsel %vm366, %v352, 0
      %v392 = vsel %vm366, %v353, 0
      %v395 = vsel %vm366, %v354, 0
      %v398 = vsel %vm366, %v355, 0
      %v401 = vsel %vm366, %v356, 0
      %v404 = vsel %vm366, %v357, 0
      %v407 = vsel %vm366, %v358, 0
      %v410 = vsel %vm366, %v359, 0
      %v413 = vsel %vm366, %v360, 0
      %v416 = vsel %vm366, %v361, 0
      %v419 = vsel %vm366, %v362, 0
      %vm421 = vcmask 1043456
      %v423 = vsel %vm421, %v365, 0
      %425 = vmatprep.subr.bf16.mxu0 0
      %426 = vmatpush1.bf16.msra.mxu0 0
      %427 = vmatprep.subr.bf16.mxu0 0
      %428 = vmatpush1.bf16.msra.mxu0 0
      %429 = vmatprep.subr.bf16.mxu0 0
      %430 = vmatpush1.bf16.msra.mxu0 0
      %431 = vmatprep.subr.bf16.mxu0 0
      %432 = vmatpush1.bf16.msra.mxu0 0
      %433 = vmatprep.subr.bf16.mxu0 0
      %434 = vmatpush1.bf16.msra.mxu0 0
      %435 = vmatprep.subr.bf16.mxu0 0
      %436 = vmatpush1.bf16.msra.mxu0 0
      %437 = vmatprep.subr.bf16.mxu0 0
      %438 = vmatpush1.bf16.msra.mxu0 0
      %439 = vmatprep.subr.bf16.mxu0 0
      %440 = vmatpush1.bf16.msra.mxu0 %v423
      %441 = vmatprep.subr.bf16.mxu0 0
      %442 = vmatpush2.bf16.msra.mxu0 0
      %443 = vmatprep.subr.bf16.mxu0 0
      %444 = vmatpush2.bf16.msra.mxu0 0
      %445 = vmatprep.subr.bf16.mxu0 0
      %446 = vmatpush2.bf16.msra.mxu0 0
      %447 = vmatprep.subr.bf16.mxu0 0
      %448 = vmatpush2.bf16.msra.mxu0 0
      %449 = vmatprep.subr.bf16.mxu0 0
      %450 = vmatpush2.bf16.msra.mxu0 0
      %451 = vmatprep.subr.bf16.mxu0 0
      %452 = vmatpush2.bf16.msra.mxu0 0
      %453 = vmatprep.subr.bf16.mxu0 0
      %454 = vmatpush2.bf16.msra.mxu0 0
      %455 = vmatprep.subr.bf16.mxu0 0
      %456 = vmatpush2.bf16.msra.mxu0 0
      %457 = vmatprep.mubr.bf16.mxu0 0
      %458 = vmatmul.mubr.bf16.gmra.mxu0 %v368
      %v459 = vpop.f32.mrf.mxu0
      %v460 = vadd.f32 0.0, %v459
      %v461 = vpop.f32.mrf.mxu0
      %v462 = vpop.f32.mrf.mxu0
      %v463 = vadd.f32 0.0, %v462
      %v464 = vpop.f32.mrf.mxu0
      %465 = vmatprep.mubr.bf16.mxu0 0
      %466 = vmatmul.mubr.bf16.gmra.mxu0 %v371
      %v467 = vpop.f32.mrf.mxu0
      %v468 = vadd.f32 0.0, %v467
      %v469 = vpop.f32.mrf.mxu0
      %v470 = vpop.f32.mrf.mxu0
      %v471 = vadd.f32 0.0, %v470
      %v472 = vpop.f32.mrf.mxu0
      %473 = vmatprep.mubr.bf16.mxu0 0
      %474 = vmatmul.mubr.bf16.gmra.mxu0 %v374
      %v475 = vpop.f32.mrf.mxu0
      %v476 = vadd.f32 0.0, %v475
      %v477 = vpop.f32.mrf.mxu0
      %v478 = vpop.f32.mrf.mxu0
      %v479 = vadd.f32 0.0, %v478
      %v480 = vpop.f32.mrf.mxu0
      %481 = vmatprep.mubr.bf16.mxu0 0
      %482 = vmatmul.mubr.bf16.gmra.mxu0 %v377
      %v483 = vpop.f32.mrf.mxu0
      %v484 = vadd.f32 0.0, %v483
      %v485 = vpop.f32.mrf.mxu0
      %v486 = vpop.f32.mrf.mxu0
      %v487 = vadd.f32 0.0, %v486
      %v488 = vpop.f32.mrf.mxu0
      %489 = vmatprep.mubr.bf16.mxu0 0
      %490 = vmatmul.mubr.bf16.gmra.mxu0 %v380
      %v491 = vpop.f32.mrf.mxu0
      %v492 = vadd.f32 0.0, %v491
      %v493 = vpop.f32.mrf.mxu0
      %v494 = vpop.f32.mrf.mxu0
      %v495 = vadd.f32 0.0, %v494
      %v496 = vpop.f32.mrf.mxu0
      %497 = vmatprep.mubr.bf16.mxu0 0
      %498 = vmatmul.mubr.bf16.gmra.mxu0 %v383
      %v499 = vpop.f32.mrf.mxu0
      %v500 = vadd.f32 0.0, %v499
      %v501 = vpop.f32.mrf.mxu0
      %v502 = vpop.f32.mrf.mxu0
      %v503 = vadd.f32 0.0, %v502
      %v504 = vpop.f32.mrf.mxu0
      %505 = vmatprep.mubr.bf16.mxu0 0
      %506 = vmatmul.mubr.bf16.gmra.mxu0 %v386
      %v507 = vpop.f32.mrf.mxu0
      %v508 = vadd.f32 0.0, %v507
      %v509 = vpop.f32.mrf.mxu0
      %v510 = vpop.f32.mrf.mxu0
      %v511 = vadd.f32 0.0, %v510
      %v512 = vpop.f32.mrf.mxu0
      %513 = vmatprep.mubr.bf16.mxu0 0
      %514 = vmatmul.mubr.bf16.gmra.mxu0 %v389
      %v515 = vpop.f32.mrf.mxu0
      %v516 = vadd.f32 0.0, %v515
      %v517 = vpop.f32.mrf.mxu0
      %v518 = vpop.f32.mrf.mxu0
      %v519 = vadd.f32 0.0, %v518
      %v520 = vpop.f32.mrf.mxu0
      %521 = vmatprep.mubr.bf16.mxu0 0
      %522 = vmatmul.mubr.bf16.gmra.mxu0 %v392
      %v523 = vpop.f32.mrf.mxu0
      %v524 = vadd.f32 0.0, %v523
      %v525 = vpop.f32.mrf.mxu0
      %v526 = vpop.f32.mrf.mxu0
      %v527 = vadd.f32 0.0, %v526
      %v528 = vpop.f32.mrf.mxu0
      %529 = vmatprep.mubr.bf16.mxu0 0
      %530 = vmatmul.mubr.bf16.gmra.mxu0 %v395
      %v531 = vpop.f32.mrf.mxu0
      %v532 = vadd.f32 0.0, %v531
      %v533 = vpop.f32.mrf.mxu0
      %v534 = vpop.f32.mrf.mxu0
      %v535 = vadd.f32 0.0, %v534
      %v536 = vpop.f32.mrf.mxu0
      %537 = vmatprep.mubr.bf16.mxu0 0
      %538 = vmatmul.mubr.bf16.gmra.mxu0 %v398
      %v539 = vpop.f32.mrf.mxu0
      %v540 = vadd.f32 0.0, %v539
      %v541 = vpop.f32.mrf.mxu0
      %v542 = vpop.f32.mrf.mxu0
      %v543 = vadd.f32 0.0, %v542
      %v544 = vpop.f32.mrf.mxu0
      %545 = vmatprep.mubr.bf16.mxu0 0
      %546 = vmatmul.mubr.bf16.gmra.mxu0 %v401
      %v547 = vpop.f32.mrf.mxu0
      %v548 = vadd.f32 0.0, %v547
      %v549 = vpop.f32.mrf.mxu0
      %v550 = vpop.f32.mrf.mxu0
      %v551 = vadd.f32 0.0, %v550
      %v552 = vpop.f32.mrf.mxu0
      %553 = vmatprep.mubr.bf16.mxu0 0
      %554 = vmatmul.mubr.bf16.gmra.mxu0 %v404
      %v555 = vpop.f32.mrf.mxu0
      %v556 = vadd.f32 0.0, %v555
      %v557 = vpop.f32.mrf.mxu0
      %v558 = vpop.f32.mrf.mxu0
      %v559 = vadd.f32 0.0, %v558
      %v560 = vpop.f32.mrf.mxu0
      %561 = vmatprep.mubr.bf16.mxu0 0
      %562 = vmatmul.mubr.bf16.gmra.mxu0 %v407
      %v563 = vpop.f32.mrf.mxu0
      %v564 = vadd.f32 0.0, %v563
      %v565 = vpop.f32.mrf.mxu0
      %v566 = vpop.f32.mrf.mxu0
      %v567 = vadd.f32 0.0, %v566
      %v568 = vpop.f32.mrf.mxu0
      %569 = vmatprep.mubr.bf16.mxu0 0
      %570 = vmatmul.mubr.bf16.gmra.mxu0 %v410
      %v571 = vpop.f32.mrf.mxu0
      %v572 = vadd.f32 0.0, %v571
      %v573 = vpop.f32.mrf.mxu0
      %v574 = vpop.f32.mrf.mxu0
      %v575 = vadd.f32 0.0, %v574
      %v576 = vpop.f32.mrf.mxu0
      %577 = vmatprep.mubr.bf16.mxu0 0
      %578 = vmatmul.mubr.bf16.gmra.mxu0 %v413
      %v579 = vpop.f32.mrf.mxu0
      %v580 = vadd.f32 0.0, %v579
      %v581 = vpop.f32.mrf.mxu0
      %v582 = vpop.f32.mrf.mxu0
      %v583 = vadd.f32 0.0, %v582
      %v584 = vpop.f32.mrf.mxu0
      %585 = vmatprep.mubr.bf16.mxu0 0
      %586 = vmatmul.mubr.bf16.gmra.mxu0 %v416
      %v587 = vpop.f32.mrf.mxu0
      %v588 = vadd.f32 0.0, %v587
      %v589 = vpop.f32.mrf.mxu0
      %v590 = vpop.f32.mrf.mxu0
      %v591 = vadd.f32 0.0, %v590
      %v592 = vpop.f32.mrf.mxu0
      %593 = vmatprep.mubr.bf16.mxu0 0
      %594 = vmatmul.mubr.bf16.gmra.mxu0 %v419
      %v595 = vpop.f32.mrf.mxu0
      %v596 = vadd.f32 0.0, %v595
      %v597 = vpop.f32.mrf.mxu0
      %v598 = vpop.f32.mrf.mxu0
      %v599 = vadd.f32 0.0, %v598
      %v600 = vpop.f32.mrf.mxu0
      %601 = vdwg.mxu0
      %v603 = vsel %vm366, %v289, 0
      %v606 = vsel %vm366, %v290, 0
      %v609 = vsel %vm366, %v291, 0
      %v612 = vsel %vm366, %v292, 0
      %v615 = vsel %vm366, %v293, 0
      %v618 = vsel %vm366, %v294, 0
      %v621 = vsel %vm366, %v295, 0
      %v624 = vsel %vm366, %v296, 0
      %v627 = vsel %vm366, %v297, 0
      %v630 = vsel %vm366, %v298, 0
      %v633 = vsel %vm366, %v299, 0
      %v636 = vsel %vm366, %v300, 0
      %v639 = vsel %vm366, %v301, 0
      %v642 = vsel %vm366, %v302, 0
      %v645 = vsel %vm366, %v303, 0
      %v648 = vsel %vm366, %v304, 0
      %v651 = vsel %vm366, %v305, 0
      %v654 = vsel %vm366, %v306, 0
      %v657 = vsel %vm421, %v308, 0
      %659 = vmatprep.subr.bf16.mxu0 0
      %660 = vmatpush1.bf16.msra.mxu0 0
      %661 = vmatprep.subr.bf16.mxu0 0
      %662 = vmatpush1.bf16.msra.mxu0 0
      %663 = vmatprep.subr.bf16.mxu0 0
      %664 = vmatpush1.bf16.msra.mxu0 0
      %665 = vmatprep.subr.bf16.mxu0 0
      %666 = vmatpush1.bf16.msra.mxu0 0
      %667 = vmatprep.subr.bf16.mxu0 0
      %668 = vmatpush1.bf16.msra.mxu0 0
      %669 = vmatprep.subr.bf16.mxu0 0
      %670 = vmatpush1.bf16.msra.mxu0 0
      %671 = vmatprep.subr.bf16.mxu0 0
      %672 = vmatpush1.bf16.msra.mxu0 0
      %673 = vmatprep.subr.bf16.mxu0 0
      %674 = vmatpush1.bf16.msra.mxu0 %v657
      %675 = vmatprep.subr.bf16.mxu0 0
      %676 = vmatpush2.bf16.msra.mxu0 0
      %677 = vmatprep.subr.bf16.mxu0 0
      %678 = vmatpush2.bf16.msra.mxu0 0
      %679 = vmatprep.subr.bf16.mxu0 0
      %680 = vmatpush2.bf16.msra.mxu0 0
      %681 = vmatprep.subr.bf16.mxu0 0
      %682 = vmatpush2.bf16.msra.mxu0 0
      %683 = vmatprep.subr.bf16.mxu0 0
      %684 = vmatpush2.bf16.msra.mxu0 0
      %685 = vmatprep.subr.bf16.mxu0 0
      %686 = vmatpush2.bf16.msra.mxu0 0
      %687 = vmatprep.subr.bf16.mxu0 0
      %688 = vmatpush2.bf16.msra.mxu0 0
      %689 = vmatprep.subr.bf16.mxu0 0
      %690 = vmatpush2.bf16.msra.mxu0 0
      %691 = vmatprep.mubr.bf16.mxu0 0
      %692 = vmatmul.mubr.bf16.gmra.mxu0 %v603
      %v693 = vpop.f32.mrf.mxu0
      %v694 = vadd.f32 %v460, %v693
      %v695 = vpop.f32.mrf.mxu0
      %v696 = vpop.f32.mrf.mxu0
      %v697 = vadd.f32 %v463, %v696
      %v698 = vpop.f32.mrf.mxu0
      %699 = vmatprep.mubr.bf16.mxu0 0
      %700 = vmatmul.mubr.bf16.gmra.mxu0 %v606
      %v701 = vpop.f32.mrf.mxu0
      %v702 = vadd.f32 %v468, %v701
      %v703 = vpop.f32.mrf.mxu0
      %v704 = vpop.f32.mrf.mxu0
      %v705 = vadd.f32 %v471, %v704
      %v706 = vpop.f32.mrf.mxu0
      %707 = vmatprep.mubr.bf16.mxu0 0
      %708 = vmatmul.mubr.bf16.gmra.mxu0 %v609
      %v709 = vpop.f32.mrf.mxu0
      %v710 = vadd.f32 %v476, %v709
      %v711 = vpop.f32.mrf.mxu0
      %v712 = vpop.f32.mrf.mxu0
      %v713 = vadd.f32 %v479, %v712
      %v714 = vpop.f32.mrf.mxu0
      %715 = vmatprep.mubr.bf16.mxu0 0
      %716 = vmatmul.mubr.bf16.gmra.mxu0 %v612
      %v717 = vpop.f32.mrf.mxu0
      %v718 = vadd.f32 %v484, %v717
      %v719 = vpop.f32.mrf.mxu0
      %v720 = vpop.f32.mrf.mxu0
      %v721 = vadd.f32 %v487, %v720
      %v722 = vpop.f32.mrf.mxu0
      %723 = vmatprep.mubr.bf16.mxu0 0
      %724 = vmatmul.mubr.bf16.gmra.mxu0 %v615
      %v725 = vpop.f32.mrf.mxu0
      %v726 = vadd.f32 %v492, %v725
      %v727 = vpop.f32.mrf.mxu0
      %v728 = vpop.f32.mrf.mxu0
      %v729 = vadd.f32 %v495, %v728
      %v730 = vpop.f32.mrf.mxu0
      %731 = vmatprep.mubr.bf16.mxu0 0
      %732 = vmatmul.mubr.bf16.gmra.mxu0 %v618
      %v733 = vpop.f32.mrf.mxu0
      %v734 = vadd.f32 %v500, %v733
      %v735 = vpop.f32.mrf.mxu0
      %v736 = vpop.f32.mrf.mxu0
      %v737 = vadd.f32 %v503, %v736
      %v738 = vpop.f32.mrf.mxu0
      %739 = vmatprep.mubr.bf16.mxu0 0
      %740 = vmatmul.mubr.bf16.gmra.mxu0 %v621
      %v741 = vpop.f32.mrf.mxu0
      %v742 = vadd.f32 %v508, %v741
      %v743 = vpop.f32.mrf.mxu0
      %v744 = vpop.f32.mrf.mxu0
      %v745 = vadd.f32 %v511, %v744
      %v746 = vpop.f32.mrf.mxu0
      %747 = vmatprep.mubr.bf16.mxu0 0
      %748 = vmatmul.mubr.bf16.gmra.mxu0 %v624
      %v749 = vpop.f32.mrf.mxu0
      %v750 = vadd.f32 %v516, %v749
      %v751 = vpop.f32.mrf.mxu0
      %v752 = vpop.f32.mrf.mxu0
      %v753 = vadd.f32 %v519, %v752
      %v754 = vpop.f32.mrf.mxu0
      %755 = vmatprep.mubr.bf16.mxu0 0
      %756 = vmatmul.mubr.bf16.gmra.mxu0 %v627
      %v757 = vpop.f32.mrf.mxu0
      %v758 = vadd.f32 %v524, %v757
      %v759 = vpop.f32.mrf.mxu0
      %v760 = vpop.f32.mrf.mxu0
      %v761 = vadd.f32 %v527, %v760
      %v762 = vpop.f32.mrf.mxu0
      %763 = vmatprep.mubr.bf16.mxu0 0
      %764 = vmatmul.mubr.bf16.gmra.mxu0 %v630
      %v765 = vpop.f32.mrf.mxu0
      %v766 = vadd.f32 %v532, %v765
      %v767 = vpop.f32.mrf.mxu0
      %v768 = vpop.f32.mrf.mxu0
      %v769 = vadd.f32 %v535, %v768
      %v770 = vpop.f32.mrf.mxu0
      %771 = vmatprep.mubr.bf16.mxu0 0
      %772 = vmatmul.mubr.bf16.gmra.mxu0 %v633
      %v773 = vpop.f32.mrf.mxu0
      %v774 = vadd.f32 %v540, %v773
      %v775 = vpop.f32.mrf.mxu0
      %v776 = vpop.f32.mrf.mxu0
      %v777 = vadd.f32 %v543, %v776
      %v778 = vpop.f32.mrf.mxu0
      %779 = vmatprep.mubr.bf16.mxu0 0
      %780 = vmatmul.mubr.bf16.gmra.mxu0 %v636
      %v781 = vpop.f32.mrf.mxu0
      %v782 = vadd.f32 %v548, %v781
      %v783 = vpop.f32.mrf.mxu0
      %v784 = vpop.f32.mrf.mxu0
      %v785 = vadd.f32 %v551, %v784
      %v786 = vpop.f32.mrf.mxu0
      %787 = vmatprep.mubr.bf16.mxu0 0
      %788 = vmatmul.mubr.bf16.gmra.mxu0 %v639
      %v789 = vpop.f32.mrf.mxu0
      %v790 = vadd.f32 %v556, %v789
      %v791 = vpop.f32.mrf.mxu0
      %v792 = vpop.f32.mrf.mxu0
      %v793 = vadd.f32 %v559, %v792
      %v794 = vpop.f32.mrf.mxu0
      %795 = vmatprep.mubr.bf16.mxu0 0
      %796 = vmatmul.mubr.bf16.gmra.mxu0 %v642
      %v797 = vpop.f32.mrf.mxu0
      %v798 = vadd.f32 %v564, %v797
      %v799 = vpop.f32.mrf.mxu0
      %v800 = vpop.f32.mrf.mxu0
      %v801 = vadd.f32 %v567, %v800
      %v802 = vpop.f32.mrf.mxu0
      %803 = vmatprep.mubr.bf16.mxu0 0
      %804 = vmatmul.mubr.bf16.gmra.mxu0 %v645
      %v805 = vpop.f32.mrf.mxu0
      %v806 = vadd.f32 %v572, %v805
      %v807 = vpop.f32.mrf.mxu0
      %v808 = vpop.f32.mrf.mxu0
      %v809 = vadd.f32 %v575, %v808
      %v810 = vpop.f32.mrf.mxu0
      %811 = vmatprep.mubr.bf16.mxu0 0
      %812 = vmatmul.mubr.bf16.gmra.mxu0 %v648
      %v813 = vpop.f32.mrf.mxu0
      %v814 = vadd.f32 %v580, %v813
      %v815 = vpop.f32.mrf.mxu0
      %v816 = vpop.f32.mrf.mxu0
      %v817 = vadd.f32 %v583, %v816
      %v818 = vpop.f32.mrf.mxu0
      %819 = vmatprep.mubr.bf16.mxu0 0
      %820 = vmatmul.mubr.bf16.gmra.mxu0 %v651
      %v821 = vpop.f32.mrf.mxu0
      %v822 = vadd.f32 %v588, %v821
      %v823 = vpop.f32.mrf.mxu0
      %v824 = vpop.f32.mrf.mxu0
      %v825 = vadd.f32 %v591, %v824
      %v826 = vpop.f32.mrf.mxu0
      %827 = vmatprep.mubr.bf16.mxu0 0
      %828 = vmatmul.mubr.bf16.gmra.mxu0 %v654
      %v829 = vpop.f32.mrf.mxu0
      %v830 = vadd.f32 %v596, %v829
      %v831 = vpop.f32.mrf.mxu0
      %v832 = vpop.f32.mrf.mxu0
      %v833 = vadd.f32 %v599, %v832
      %v834 = vpop.f32.mrf.mxu0
      %835 = vdwg.mxu0
      %v836 = vld [vmem:[%s246 + $0x2] sm:$0xff]
      %v837 = vld [vmem:[%s246 + $0xa] sm:$0xff]
      %v838 = vld [vmem:[%s246 + $0x12] sm:$0xff]
      %v839 = vld [vmem:[%s246 + $0x1a] sm:$0xff]
      %v840 = vld [vmem:[%s246 + $0x22] sm:$0xff]
      %v841 = vld [vmem:[%s246 + $0x2a] sm:$0xff]
      %v842 = vld [vmem:[%s246 + $0x32] sm:$0xff]
      %v843 = vld [vmem:[%s246 + $0x3a] sm:$0xff]
      %v844 = vld [vmem:[%s246 + $0x42] sm:$0xff]
      %v845 = vld [vmem:[%s246 + $0x4a] sm:$0xff]
      %v846 = vld [vmem:[%s246 + $0x52] sm:$0xff]
      %v847 = vld [vmem:[%s246 + $0x5a] sm:$0xff]
      %v848 = vld [vmem:[%s246 + $0x62] sm:$0xff]
      %v849 = vld [vmem:[%s246 + $0x6a] sm:$0xff]
      %v850 = vld [vmem:[%s246 + $0x72] sm:$0xff]
      %v851 = vld [vmem:[%s246 + $0x7a] sm:$0xff]
      %v852 = vld [vmem:[%s246 + $0x82] sm:$0xff]
      %v853 = vld [vmem:[%s246 + $0x8a] sm:$0xff]
      %v854 = vld [vmem:[%s246 + $0x92] sm:$0xff]
      %v855 = vld [vmem:[%s246 + $0x9a] sm:$0xff]
      %v856 = vld [vmem:[%s246 + $0xa2] sm:$0xff]
      %v857 = vld [vmem:[%s246 + $0xaa] sm:$0xff]
      %v858 = vld [vmem:[%s246 + $0xb2] sm:$0xff]
      %v859 = vld [vmem:[%s246 + $0xba] sm:$0xff]
      %v860 = vld [vmem:[%s246 + $0xc2] sm:$0xff]
      %v861 = vld [vmem:[%s246 + $0xca] sm:$0xff]
      %v862 = vld [vmem:[%s246 + $0xd2] sm:$0xff]
      %v863 = vld [vmem:[%s246 + $0xda] sm:$0xff]
      %v864 = vld [vmem:[%s246 + $0xe2] sm:$0xff]
      %v865 = vld [vmem:[%s246 + $0xea] sm:$0xff]
      %v866 = vld [vmem:[%s246 + $0xf2] sm:$0xff]
      %v867 = vld [vmem:[%s246 + $0xfa] sm:$0xff]
      %v868 = vld [vmem:[%s246 + $0x102] sm:$0xff]
      %v869 = vld [vmem:[%s246 + $0x10a] sm:$0xff]
      %v870 = vld [vmem:[%s246 + $0x112] sm:$0xff]
      %v871 = vld [vmem:[%s246 + $0x11a] sm:$0xff]
      %v872 = vpack.c.bf16 %v837, %v836
      %v873 = vpack.c.bf16 %v839, %v838
      %v874 = vpack.c.bf16 %v841, %v840
      %v875 = vpack.c.bf16 %v843, %v842
      %v876 = vpack.c.bf16 %v845, %v844
      %v877 = vpack.c.bf16 %v847, %v846
      %v878 = vpack.c.bf16 %v849, %v848
      %v879 = vpack.c.bf16 %v851, %v850
      %v880 = vpack.c.bf16 %v853, %v852
      %v881 = vpack.c.bf16 %v855, %v854
      %v882 = vpack.c.bf16 %v857, %v856
      %v883 = vpack.c.bf16 %v859, %v858
      %v884 = vpack.c.bf16 %v861, %v860
      %v885 = vpack.c.bf16 %v863, %v862
      %v886 = vpack.c.bf16 %v865, %v864
      %v887 = vpack.c.bf16 %v867, %v866
      %v888 = vpack.c.bf16 %v869, %v868
      %v889 = vpack.c.bf16 %v871, %v870
      %s890 = scalar_lea.vmem %s1, 16
      %v891 = vld [vmem:[%s890] sm:$0xff]
      %v892 = vpack.c.bf16 %v891, %v891
      %v894 = vsel %vm366, %v872, 0
      %v897 = vsel %vm366, %v873, 0
      %v900 = vsel %vm366, %v874, 0
      %v903 = vsel %vm366, %v875, 0
      %v906 = vsel %vm366, %v876, 0
      %v909 = vsel %vm366, %v877, 0
      %v912 = vsel %vm366, %v878, 0
      %v915 = vsel %vm366, %v879, 0
      %v918 = vsel %vm366, %v880, 0
      %v921 = vsel %vm366, %v881, 0
      %v924 = vsel %vm366, %v882, 0
      %v927 = vsel %vm366, %v883, 0
      %v930 = vsel %vm366, %v884, 0
      %v933 = vsel %vm366, %v885, 0
      %v936 = vsel %vm366, %v886, 0
      %v939 = vsel %vm366, %v887, 0
      %v942 = vsel %vm366, %v888, 0
      %v945 = vsel %vm366, %v889, 0
      %v948 = vsel %vm421, %v892, 0
      %950 = vmatprep.subr.bf16.mxu0 0
      %951 = vmatpush1.bf16.msra.mxu0 0
      %952 = vmatprep.subr.bf16.mxu0 0
      %953 = vmatpush1.bf16.msra.mxu0 0
      %954 = vmatprep.subr.bf16.mxu0 0
      %955 = vmatpush1.bf16.msra.mxu0 0
      %956 = vmatprep.subr.bf16.mxu0 0
      %957 = vmatpush1.bf16.msra.mxu0 0
      %958 = vmatprep.subr.bf16.mxu0 0
      %959 = vmatpush1.bf16.msra.mxu0 0
      %960 = vmatprep.subr.bf16.mxu0 0
      %961 = vmatpush1.bf16.msra.mxu0 0
      %962 = vmatprep.subr.bf16.mxu0 0
      %963 = vmatpush1.bf16.msra.mxu0 0
      %964 = vmatprep.subr.bf16.mxu0 0
      %965 = vmatpush1.bf16.msra.mxu0 %v948
      %966 = vmatprep.subr.bf16.mxu0 0
      %967 = vmatpush2.bf16.msra.mxu0 0
      %968 = vmatprep.subr.bf16.mxu0 0
      %969 = vmatpush2.bf16.msra.mxu0 0
      %970 = vmatprep.subr.bf16.mxu0 0
      %971 = vmatpush2.bf16.msra.mxu0 0
      %972 = vmatprep.subr.bf16.mxu0 0
      %973 = vmatpush2.bf16.msra.mxu0 0
      %974 = vmatprep.subr.bf16.mxu0 0
      %975 = vmatpush2.bf16.msra.mxu0 0
      %976 = vmatprep.subr.bf16.mxu0 0
      %977 = vmatpush2.bf16.msra.mxu0 0
      %978 = vmatprep.subr.bf16.mxu0 0
      %979 = vmatpush2.bf16.msra.mxu0 0
      %980 = vmatprep.subr.bf16.mxu0 0
      %981 = vmatpush2.bf16.msra.mxu0 0
      %982 = vmatprep.mubr.bf16.mxu0 0
      %983 = vmatmul.mubr.bf16.gmra.mxu0 %v894
      %v984 = vpop.f32.mrf.mxu0
      %v985 = vadd.f32 0.0, %v984
      %v986 = vpop.f32.mrf.mxu0
      %v987 = vpop.f32.mrf.mxu0
      %v988 = vadd.f32 0.0, %v987
      %v989 = vpop.f32.mrf.mxu0
      %990 = vmatprep.mubr.bf16.mxu0 0
      %991 = vmatmul.mubr.bf16.gmra.mxu0 %v897
      %v992 = vpop.f32.mrf.mxu0
      %v993 = vadd.f32 0.0, %v992
      %v994 = vpop.f32.mrf.mxu0
      %v995 = vpop.f32.mrf.mxu0
      %v996 = vadd.f32 0.0, %v995
      %v997 = vpop.f32.mrf.mxu0
      %998 = vmatprep.mubr.bf16.mxu0 0
      %999 = vmatmul.mubr.bf16.gmra.mxu0 %v900
      %v1000 = vpop.f32.mrf.mxu0
      %v1001 = vadd.f32 0.0, %v1000
      %v1002 = vpop.f32.mrf.mxu0
      %v1003 = vpop.f32.mrf.mxu0
      %v1004 = vadd.f32 0.0, %v1003
      %v1005 = vpop.f32.mrf.mxu0
      %1006 = vmatprep.mubr.bf16.mxu0 0
      %1007 = vmatmul.mubr.bf16.gmra.mxu0 %v903
      %v1008 = vpop.f32.mrf.mxu0
      %v1009 = vadd.f32 0.0, %v1008
      %v1010 = vpop.f32.mrf.mxu0
      %v1011 = vpop.f32.mrf.mxu0
      %v1012 = vadd.f32 0.0, %v1011
      %v1013 = vpop.f32.mrf.mxu0
      %1014 = vmatprep.mubr.bf16.mxu0 0
      %1015 = vmatmul.mubr.bf16.gmra.mxu0 %v906
      %v1016 = vpop.f32.mrf.mxu0
      %v1017 = vadd.f32 0.0, %v1016
      %v1018 = vpop.f32.mrf.mxu0
      %v1019 = vpop.f32.mrf.mxu0
      %v1020 = vadd.f32 0.0, %v1019
      %v1021 = vpop.f32.mrf.mxu0
      %1022 = vmatprep.mubr.bf16.mxu0 0
      %1023 = vmatmul.mubr.bf16.gmra.mxu0 %v909
      %v1024 = vpop.f32.mrf.mxu0
      %v1025 = vadd.f32 0.0, %v1024
      %v1026 = vpop.f32.mrf.mxu0
      %v1027 = vpop.f32.mrf.mxu0
      %v1028 = vadd.f32 0.0, %v1027
      %v1029 = vpop.f32.mrf.mxu0
      %1030 = vmatprep.mubr.bf16.mxu0 0
      %1031 = vmatmul.mubr.bf16.gmra.mxu0 %v912
      %v1032 = vpop.f32.mrf.mxu0
      %v1033 = vadd.f32 0.0, %v1032
      %v1034 = vpop.f32.mrf.mxu0
      %v1035 = vpop.f32.mrf.mxu0
      %v1036 = vadd.f32 0.0, %v1035
      %v1037 = vpop.f32.mrf.mxu0
      %1038 = vmatprep.mubr.bf16.mxu0 0
      %1039 = vmatmul.mubr.bf16.gmra.mxu0 %v915
      %v1040 = vpop.f32.mrf.mxu0
      %v1041 = vadd.f32 0.0, %v1040
      %v1042 = vpop.f32.mrf.mxu0
      %v1043 = vpop.f32.mrf.mxu0
      %v1044 = vadd.f32 0.0, %v1043
      %v1045 = vpop.f32.mrf.mxu0
      %1046 = vmatprep.mubr.bf16.mxu0 0
      %1047 = vmatmul.mubr.bf16.gmra.mxu0 %v918
      %v1048 = vpop.f32.mrf.mxu0
      %v1049 = vadd.f32 0.0, %v1048
      %v1050 = vpop.f32.mrf.mxu0
      %v1051 = vpop.f32.mrf.mxu0
      %v1052 = vadd.f32 0.0, %v1051
      %v1053 = vpop.f32.mrf.mxu0
      %1054 = vmatprep.mubr.bf16.mxu0 0
      %1055 = vmatmul.mubr.bf16.gmra.mxu0 %v921
      %v1056 = vpop.f32.mrf.mxu0
      %v1057 = vadd.f32 0.0, %v1056
      %v1058 = vpop.f32.mrf.mxu0
      %v1059 = vpop.f32.mrf.mxu0
      %v1060 = vadd.f32 0.0, %v1059
      %v1061 = vpop.f32.mrf.mxu0
      %1062 = vmatprep.mubr.bf16.mxu0 0
      %1063 = vmatmul.mubr.bf16.gmra.mxu0 %v924
      %v1064 = vpop.f32.mrf.mxu0
      %v1065 = vadd.f32 0.0, %v1064
      %v1066 = vpop.f32.mrf.mxu0
      %v1067 = vpop.f32.mrf.mxu0
      %v1068 = vadd.f32 0.0, %v1067
      %v1069 = vpop.f32.mrf.mxu0
      %1070 = vmatprep.mubr.bf16.mxu0 0
      %1071 = vmatmul.mubr.bf16.gmra.mxu0 %v927
      %v1072 = vpop.f32.mrf.mxu0
      %v1073 = vadd.f32 0.0, %v1072
      %v1074 = vpop.f32.mrf.mxu0
      %v1075 = vpop.f32.mrf.mxu0
      %v1076 = vadd.f32 0.0, %v1075
      %v1077 = vpop.f32.mrf.mxu0
      %1078 = vmatprep.mubr.bf16.mxu0 0
      %1079 = vmatmul.mubr.bf16.gmra.mxu0 %v930
      %v1080 = vpop.f32.mrf.mxu0
      %v1081 = vadd.f32 0.0, %v1080
      %v1082 = vpop.f32.mrf.mxu0
      %v1083 = vpop.f32.mrf.mxu0
      %v1084 = vadd.f32 0.0, %v1083
      %v1085 = vpop.f32.mrf.mxu0
      %1086 = vmatprep.mubr.bf16.mxu0 0
      %1087 = vmatmul.mubr.bf16.gmra.mxu0 %v933
      %v1088 = vpop.f32.mrf.mxu0
      %v1089 = vadd.f32 0.0, %v1088
      %v1090 = vpop.f32.mrf.mxu0
      %v1091 = vpop.f32.mrf.mxu0
      %v1092 = vadd.f32 0.0, %v1091
      %v1093 = vpop.f32.mrf.mxu0
      %1094 = vmatprep.mubr.bf16.mxu0 0
      %1095 = vmatmul.mubr.bf16.gmra.mxu0 %v936
      %v1096 = vpop.f32.mrf.mxu0
      %v1097 = vadd.f32 0.0, %v1096
      %v1098 = vpop.f32.mrf.mxu0
      %v1099 = vpop.f32.mrf.mxu0
      %v1100 = vadd.f32 0.0, %v1099
      %v1101 = vpop.f32.mrf.mxu0
      %1102 = vmatprep.mubr.bf16.mxu0 0
      %1103 = vmatmul.mubr.bf16.gmra.mxu0 %v939
      %v1104 = vpop.f32.mrf.mxu0
      %v1105 = vadd.f32 0.0, %v1104
      %v1106 = vpop.f32.mrf.mxu0
      %v1107 = vpop.f32.mrf.mxu0
      %v1108 = vadd.f32 0.0, %v1107
      %v1109 = vpop.f32.mrf.mxu0
      %1110 = vmatprep.mubr.bf16.mxu0 0
      %1111 = vmatmul.mubr.bf16.gmra.mxu0 %v942
      %v1112 = vpop.f32.mrf.mxu0
      %v1113 = vadd.f32 0.0, %v1112
      %v1114 = vpop.f32.mrf.mxu0
      %v1115 = vpop.f32.mrf.mxu0
      %v1116 = vadd.f32 0.0, %v1115
      %v1117 = vpop.f32.mrf.mxu0
      %1118 = vmatprep.mubr.bf16.mxu0 0
      %1119 = vmatmul.mubr.bf16.gmra.mxu0 %v945
      %v1120 = vpop.f32.mrf.mxu0
      %v1121 = vadd.f32 0.0, %v1120
      %v1122 = vpop.f32.mrf.mxu0
      %v1123 = vpop.f32.mrf.mxu0
      %v1124 = vadd.f32 0.0, %v1123
      %v1125 = vpop.f32.mrf.mxu0
      %1126 = vdwg.mxu0
      %v1127 = vadd.f32 %v694, %v985
      %v1128 = vadd.f32 %v697, %v988
      %v1129 = vadd.f32 %v702, %v993
      %v1130 = vadd.f32 %v705, %v996
      %v1131 = vadd.f32 %v710, %v1001
      %v1132 = vadd.f32 %v713, %v1004
      %v1133 = vadd.f32 %v718, %v1009
      %v1134 = vadd.f32 %v721, %v1012
      %v1135 = vadd.f32 %v726, %v1017
      %v1136 = vadd.f32 %v729, %v1020
      %v1137 = vadd.f32 %v734, %v1025
      %v1138 = vadd.f32 %v737, %v1028
      %v1139 = vadd.f32 %v742, %v1033
      %v1140 = vadd.f32 %v745, %v1036
      %v1141 = vadd.f32 %v750, %v1041
      %v1142 = vadd.f32 %v753, %v1044
      %v1143 = vadd.f32 %v758, %v1049
      %v1144 = vadd.f32 %v761, %v1052
      %v1145 = vadd.f32 %v766, %v1057
      %v1146 = vadd.f32 %v769, %v1060
      %v1147 = vadd.f32 %v774, %v1065
      %v1148 = vadd.f32 %v777, %v1068
      %v1149 = vadd.f32 %v782, %v1073
      %v1150 = vadd.f32 %v785, %v1076
      %v1151 = vadd.f32 %v790, %v1081
      %v1152 = vadd.f32 %v793, %v1084
      %v1153 = vadd.f32 %v798, %v1089
      %v1154 = vadd.f32 %v801, %v1092
      %v1155 = vadd.f32 %v806, %v1097
      %v1156 = vadd.f32 %v809, %v1100
      %v1157 = vadd.f32 %v814, %v1105
      %v1158 = vadd.f32 %v817, %v1108
      %v1159 = vadd.f32 %v822, %v1113
      %v1160 = vadd.f32 %v825, %v1116
      %v1161 = vadd.f32 %v830, %v1121
      %v1162 = vadd.f32 %v833, %v1124
      %v1163 = vld [vmem:[%s246 + $0x12] sm:$0xff]
      %v1164 = vld [vmem:[%s246 + $0x1a] sm:$0xff]
      %v1165 = vld [vmem:[%s246 + $0x22] sm:$0xff]
      %v1166 = vld [vmem:[%s246 + $0x2a] sm:$0xff]
      %v1167 = vld [vmem:[%s246 + $0x32] sm:$0xff]
      %v1168 = vld [vmem:[%s246 + $0x3a] sm:$0xff]
      %v1169 = vld [vmem:[%s246 + $0x42] sm:$0xff]
      %v1170 = vld [vmem:[%s246 + $0x4a] sm:$0xff]
      %v1171 = vld [vmem:[%s246 + $0x52] sm:$0xff]
      %v1172 = vld [vmem:[%s246 + $0x5a] sm:$0xff]
      %v1173 = vld [vmem:[%s246 + $0x62] sm:$0xff]
      %v1174 = vld [vmem:[%s246 + $0x6a] sm:$0xff]
      %v1175 = vld [vmem:[%s246 + $0x72] sm:$0xff]
      %v1176 = vld [vmem:[%s246 + $0x7a] sm:$0xff]
      %v1177 = vld [vmem:[%s246 + $0x82] sm:$0xff]
      %v1178 = vld [vmem:[%s246 + $0x8a] sm:$0xff]
      %v1179 = vld [vmem:[%s246 + $0x92] sm:$0xff]
      %v1180 = vld [vmem:[%s246 + $0x9a] sm:$0xff]
      %v1181 = vld [vmem:[%s246 + $0xa2] sm:$0xff]
      %v1182 = vld [vmem:[%s246 + $0xaa] sm:$0xff]
      %v1183 = vld [vmem:[%s246 + $0xb2] sm:$0xff]
      %v1184 = vld [vmem:[%s246 + $0xba] sm:$0xff]
      %v1185 = vld [vmem:[%s246 + $0xc2] sm:$0xff]
      %v1186 = vld [vmem:[%s246 + $0xca] sm:$0xff]
      %v1187 = vld [vmem:[%s246 + $0xd2] sm:$0xff]
      %v1188 = vld [vmem:[%s246 + $0xda] sm:$0xff]
      %v1189 = vld [vmem:[%s246 + $0xe2] sm:$0xff]
      %v1190 = vld [vmem:[%s246 + $0xea] sm:$0xff]
      %v1191 = vld [vmem:[%s246 + $0xf2] sm:$0xff]
      %v1192 = vld [vmem:[%s246 + $0xfa] sm:$0xff]
      %v1193 = vld [vmem:[%s246 + $0x102] sm:$0xff]
      %v1194 = vld [vmem:[%s246 + $0x10a] sm:$0xff]
      %v1195 = vld [vmem:[%s246 + $0x112] sm:$0xff]
      %v1196 = vld [vmem:[%s246 + $0x11a] sm:$0xff]
      %v1197 = vld [vmem:[%s246 + $0x122] sm:$0xff]
      %v1198 = vld [vmem:[%s246 + $0x12a] sm:$0xff]
      %v1199 = vpack.c.bf16 %v1164, %v1163
      %v1200 = vpack.c.bf16 %v1166, %v1165
      %v1201 = vpack.c.bf16 %v1168, %v1167
      %v1202 = vpack.c.bf16 %v1170, %v1169
      %v1203 = vpack.c.bf16 %v1172, %v1171
      %v1204 = vpack.c.bf16 %v1174, %v1173
      %v1205 = vpack.c.bf16 %v1176, %v1175
      %v1206 = vpack.c.bf16 %v1178, %v1177
      %v1207 = vpack.c.bf16 %v1180, %v1179
      %v1208 = vpack.c.bf16 %v1182, %v1181
      %v1209 = vpack.c.bf16 %v1184, %v1183
      %v1210 = vpack.c.bf16 %v1186, %v1185
      %v1211 = vpack.c.bf16 %v1188, %v1187
      %v1212 = vpack.c.bf16 %v1190, %v1189
      %v1213 = vpack.c.bf16 %v1192, %v1191
      %v1214 = vpack.c.bf16 %v1194, %v1193
      %v1215 = vpack.c.bf16 %v1196, %v1195
      %v1216 = vpack.c.bf16 %v1198, %v1197
      %s1217 = scalar_lea.vmem %s1, 24
      %v1218 = vld [vmem:[%s1217] sm:$0xff]
      %v1219 = vpack.c.bf16 %v1218, %v1218
      %v1221 = vsel %vm366, %v1199, 0
      %v1224 = vsel %vm366, %v1200, 0
      %v1227 = vsel %vm366, %v1201, 0
      %v1230 = vsel %vm366, %v1202, 0
      %v1233 = vsel %vm366, %v1203, 0
      %v1236 = vsel %vm366, %v1204, 0
      %v1239 = vsel %vm366, %v1205, 0
      %v1242 = vsel %vm366, %v1206, 0
      %v1245 = vsel %vm366, %v1207, 0
      %v1248 = vsel %vm366, %v1208, 0
      %v1251 = vsel %vm366, %v1209, 0
      %v1254 = vsel %vm366, %v1210, 0
      %v1257 = vsel %vm366, %v1211, 0
      %v1260 = vsel %vm366, %v1212, 0
      %v1263 = vsel %vm366, %v1213, 0
      %v1266 = vsel %vm366, %v1214, 0
      %v1269 = vsel %vm366, %v1215, 0
      %v1272 = vsel %vm366, %v1216, 0
      %v1275 = vsel %vm421, %v1219, 0
      %1277 = vmatprep.subr.bf16.mxu0 0
      %1278 = vmatpush1.bf16.msra.mxu0 0
      %1279 = vmatprep.subr.bf16.mxu0 0
      %1280 = vmatpush1.bf16.msra.mxu0 0
      %1281 = vmatprep.subr.bf16.mxu0 0
      %1282 = vmatpush1.bf16.msra.mxu0 0
      %1283 = vmatprep.subr.bf16.mxu0 0
      %1284 = vmatpush1.bf16.msra.mxu0 0
      %1285 = vmatprep.subr.bf16.mxu0 0
      %1286 = vmatpush1.bf16.msra.mxu0 0
      %1287 = vmatprep.subr.bf16.mxu0 0
      %1288 = vmatpush1.bf16.msra.mxu0 0
      %1289 = vmatprep.subr.bf16.mxu0 0
      %1290 = vmatpush1.bf16.msra.mxu0 0
      %1291 = vmatprep.subr.bf16.mxu0 0
      %1292 = vmatpush1.bf16.msra.mxu0 %v1275
      %1293 = vmatprep.subr.bf16.mxu0 0
      %1294 = vmatpush2.bf16.msra.mxu0 0
      %1295 = vmatprep.subr.bf16.mxu0 0
      %1296 = vmatpush2.bf16.msra.mxu0 0
      %1297 = vmatprep.subr.bf16.mxu0 0
      %1298 = vmatpush2.bf16.msra.mxu0 0
      %1299 = vmatprep.subr.bf16.mxu0 0
      %1300 = vmatpush2.bf16.msra.mxu0 0
      %1301 = vmatprep.subr.bf16.mxu0 0
      %1302 = vmatpush2.bf16.msra.mxu0 0
      %1303 = vmatprep.subr.bf16.mxu0 0
      %1304 = vmatpush2.bf16.msra.mxu0 0
      %1305 = vmatprep.subr.bf16.mxu0 0
      %1306 = vmatpush2.bf16.msra.mxu0 0
      %1307 = vmatprep.subr.bf16.mxu0 0
      %1308 = vmatpush2.bf16.msra.mxu0 0
      %1309 = vmatprep.mubr.bf16.mxu0 0
      %1310 = vmatmul.mubr.bf16.gmra.mxu0 %v1221
      %v1311 = vpop.f32.mrf.mxu0
      %v1312 = vadd.f32 0.0, %v1311
      %v1313 = vpop.f32.mrf.mxu0
      %v1314 = vpop.f32.mrf.mxu0
      %v1315 = vadd.f32 0.0, %v1314
      %v1316 = vpop.f32.mrf.mxu0
      %1317 = vmatprep.mubr.bf16.mxu0 0
      %1318 = vmatmul.mubr.bf16.gmra.mxu0 %v1224
      %v1319 = vpop.f32.mrf.mxu0
      %v1320 = vadd.f32 0.0, %v1319
      %v1321 = vpop.f32.mrf.mxu0
      %v1322 = vpop.f32.mrf.mxu0
      %v1323 = vadd.f32 0.0, %v1322
      %v1324 = vpop.f32.mrf.mxu0
      %1325 = vmatprep.mubr.bf16.mxu0 0
      %1326 = vmatmul.mubr.bf16.gmra.mxu0 %v1227
      %v1327 = vpop.f32.mrf.mxu0
      %v1328 = vadd.f32 0.0, %v1327
      %v1329 = vpop.f32.mrf.mxu0
      %v1330 = vpop.f32.mrf.mxu0
      %v1331 = vadd.f32 0.0, %v1330
      %v1332 = vpop.f32.mrf.mxu0
      %1333 = vmatprep.mubr.bf16.mxu0 0
      %1334 = vmatmul.mubr.bf16.gmra.mxu0 %v1230
      %v1335 = vpop.f32.mrf.mxu0
      %v1336 = vadd.f32 0.0, %v1335
      %v1337 = vpop.f32.mrf.mxu0
      %v1338 = vpop.f32.mrf.mxu0
      %v1339 = vadd.f32 0.0, %v1338
      %v1340 = vpop.f32.mrf.mxu0
      %1341 = vmatprep.mubr.bf16.mxu0 0
      %1342 = vmatmul.mubr.bf16.gmra.mxu0 %v1233
      %v1343 = vpop.f32.mrf.mxu0
      %v1344 = vadd.f32 0.0, %v1343
      %v1345 = vpop.f32.mrf.mxu0
      %v1346 = vpop.f32.mrf.mxu0
      %v1347 = vadd.f32 0.0, %v1346
      %v1348 = vpop.f32.mrf.mxu0
      %1349 = vmatprep.mubr.bf16.mxu0 0
      %1350 = vmatmul.mubr.bf16.gmra.mxu0 %v1236
      %v1351 = vpop.f32.mrf.mxu0
      %v1352 = vadd.f32 0.0, %v1351
      %v1353 = vpop.f32.mrf.mxu0
      %v1354 = vpop.f32.mrf.mxu0
      %v1355 = vadd.f32 0.0, %v1354
      %v1356 = vpop.f32.mrf.mxu0
      %1357 = vmatprep.mubr.bf16.mxu0 0
      %1358 = vmatmul.mubr.bf16.gmra.mxu0 %v1239
      %v1359 = vpop.f32.mrf.mxu0
      %v1360 = vadd.f32 0.0, %v1359
      %v1361 = vpop.f32.mrf.mxu0
      %v1362 = vpop.f32.mrf.mxu0
      %v1363 = vadd.f32 0.0, %v1362
      %v1364 = vpop.f32.mrf.mxu0
      %1365 = vmatprep.mubr.bf16.mxu0 0
      %1366 = vmatmul.mubr.bf16.gmra.mxu0 %v1242
      %v1367 = vpop.f32.mrf.mxu0
      %v1368 = vadd.f32 0.0, %v1367
      %v1369 = vpop.f32.mrf.mxu0
      %v1370 = vpop.f32.mrf.mxu0
      %v1371 = vadd.f32 0.0, %v1370
      %v1372 = vpop.f32.mrf.mxu0
      %1373 = vmatprep.mubr.bf16.mxu0 0
      %1374 = vmatmul.mubr.bf16.gmra.mxu0 %v1245
      %v1375 = vpop.f32.mrf.mxu0
      %v1376 = vadd.f32 0.0, %v1375
      %v1377 = vpop.f32.mrf.mxu0
      %v1378 = vpop.f32.mrf.mxu0
      %v1379 = vadd.f32 0.0, %v1378
      %v1380 = vpop.f32.mrf.mxu0
      %1381 = vmatprep.mubr.bf16.mxu0 0
      %1382 = vmatmul.mubr.bf16.gmra.mxu0 %v1248
      %v1383 = vpop.f32.mrf.mxu0
      %v1384 = vadd.f32 0.0, %v1383
      %v1385 = vpop.f32.mrf.mxu0
      %v1386 = vpop.f32.mrf.mxu0
      %v1387 = vadd.f32 0.0, %v1386
      %v1388 = vpop.f32.mrf.mxu0
      %1389 = vmatprep.mubr.bf16.mxu0 0
      %1390 = vmatmul.mubr.bf16.gmra.mxu0 %v1251
      %v1391 = vpop.f32.mrf.mxu0
      %v1392 = vadd.f32 0.0, %v1391
      %v1393 = vpop.f32.mrf.mxu0
      %v1394 = vpop.f32.mrf.mxu0
      %v1395 = vadd.f32 0.0, %v1394
      %v1396 = vpop.f32.mrf.mxu0
      %1397 = vmatprep.mubr.bf16.mxu0 0
      %1398 = vmatmul.mubr.bf16.gmra.mxu0 %v1254
      %v1399 = vpop.f32.mrf.mxu0
      %v1400 = vadd.f32 0.0, %v1399
      %v1401 = vpop.f32.mrf.mxu0
      %v1402 = vpop.f32.mrf.mxu0
      %v1403 = vadd.f32 0.0, %v1402
      %v1404 = vpop.f32.mrf.mxu0
      %1405 = vmatprep.mubr.bf16.mxu0 0
      %1406 = vmatmul.mubr.bf16.gmra.mxu0 %v1257
      %v1407 = vpop.f32.mrf.mxu0
      %v1408 = vadd.f32 0.0, %v1407
      %v1409 = vpop.f32.mrf.mxu0
      %v1410 = vpop.f32.mrf.mxu0
      %v1411 = vadd.f32 0.0, %v1410
      %v1412 = vpop.f32.mrf.mxu0
      %1413 = vmatprep.mubr.bf16.mxu0 0
      %1414 = vmatmul.mubr.bf16.gmra.mxu0 %v1260
      %v1415 = vpop.f32.mrf.mxu0
      %v1416 = vadd.f32 0.0, %v1415
      %v1417 = vpop.f32.mrf.mxu0
      %v1418 = vpop.f32.mrf.mxu0
      %v1419 = vadd.f32 0.0, %v1418
      %v1420 = vpop.f32.mrf.mxu0
      %1421 = vmatprep.mubr.bf16.mxu0 0
      %1422 = vmatmul.mubr.bf16.gmra.mxu0 %v1263
      %v1423 = vpop.f32.mrf.mxu0
      %v1424 = vadd.f32 0.0, %v1423
      %v1425 = vpop.f32.mrf.mxu0
      %v1426 = vpop.f32.mrf.mxu0
      %v1427 = vadd.f32 0.0, %v1426
      %v1428 = vpop.f32.mrf.mxu0
      %1429 = vmatprep.mubr.bf16.mxu0 0
      %1430 = vmatmul.mubr.bf16.gmra.mxu0 %v1266
      %v1431 = vpop.f32.mrf.mxu0
      %v1432 = vadd.f32 0.0, %v1431
      %v1433 = vpop.f32.mrf.mxu0
      %v1434 = vpop.f32.mrf.mxu0
      %v1435 = vadd.f32 0.0, %v1434
      %v1436 = vpop.f32.mrf.mxu0
      %1437 = vmatprep.mubr.bf16.mxu0 0
      %1438 = vmatmul.mubr.bf16.gmra.mxu0 %v1269
      %v1439 = vpop.f32.mrf.mxu0
      %v1440 = vadd.f32 0.0, %v1439
      %v1441 = vpop.f32.mrf.mxu0
      %v1442 = vpop.f32.mrf.mxu0
      %v1443 = vadd.f32 0.0, %v1442
      %v1444 = vpop.f32.mrf.mxu0
      %1445 = vmatprep.mubr.bf16.mxu0 0
      %1446 = vmatmul.mubr.bf16.gmra.mxu0 %v1272
      %v1447 = vpop.f32.mrf.mxu0
      %v1448 = vadd.f32 0.0, %v1447
      %v1449 = vpop.f32.mrf.mxu0
      %v1450 = vpop.f32.mrf.mxu0
      %v1451 = vadd.f32 0.0, %v1450
      %v1452 = vpop.f32.mrf.mxu0
      %1453 = vdwg.mxu0
      %v1454 = vadd.f32 %v1127, %v1312
      %v1455 = vadd.f32 %v1128, %v1315
      %v1456 = vadd.f32 %v1129, %v1320
      %v1457 = vadd.f32 %v1130, %v1323
      %v1458 = vadd.f32 %v1131, %v1328
      %v1459 = vadd.f32 %v1132, %v1331
      %v1460 = vadd.f32 %v1133, %v1336
      %v1461 = vadd.f32 %v1134, %v1339
      %v1462 = vadd.f32 %v1135, %v1344
      %v1463 = vadd.f32 %v1136, %v1347
      %v1464 = vadd.f32 %v1137, %v1352
      %v1465 = vadd.f32 %v1138, %v1355
      %v1466 = vadd.f32 %v1139, %v1360
      %v1467 = vadd.f32 %v1140, %v1363
      %v1468 = vadd.f32 %v1141, %v1368
      %v1469 = vadd.f32 %v1142, %v1371
      %v1470 = vadd.f32 %v1143, %v1376
      %v1471 = vadd.f32 %v1144, %v1379
      %v1472 = vadd.f32 %v1145, %v1384
      %v1473 = vadd.f32 %v1146, %v1387
      %v1474 = vadd.f32 %v1147, %v1392
      %v1475 = vadd.f32 %v1148, %v1395
      %v1476 = vadd.f32 %v1149, %v1400
      %v1477 = vadd.f32 %v1150, %v1403
      %v1478 = vadd.f32 %v1151, %v1408
      %v1479 = vadd.f32 %v1152, %v1411
      %v1480 = vadd.f32 %v1153, %v1416
      %v1481 = vadd.f32 %v1154, %v1419
      %v1482 = vadd.f32 %v1155, %v1424
      %v1483 = vadd.f32 %v1156, %v1427
      %v1484 = vadd.f32 %v1157, %v1432
      %v1485 = vadd.f32 %v1158, %v1435
      %v1486 = vadd.f32 %v1159, %v1440
      %v1487 = vadd.f32 %v1160, %v1443
      %v1488 = vadd.f32 %v1161, %v1448
      %v1489 = vadd.f32 %v1162, %v1451
      %v1490 = vld [vmem:[%s246 + $0x13] sm:$0xff]
      %v1491 = vld [vmem:[%s246 + $0x1b] sm:$0xff]
      %v1492 = vld [vmem:[%s246 + $0x23] sm:$0xff]
      %v1493 = vld [vmem:[%s246 + $0x2b] sm:$0xff]
      %v1494 = vld [vmem:[%s246 + $0x33] sm:$0xff]
      %v1495 = vld [vmem:[%s246 + $0x3b] sm:$0xff]
      %v1496 = vld [vmem:[%s246 + $0x43] sm:$0xff]
      %v1497 = vld [vmem:[%s246 + $0x4b] sm:$0xff]
      %v1498 = vld [vmem:[%s246 + $0x53] sm:$0xff]
      %v1499 = vld [vmem:[%s246 + $0x5b] sm:$0xff]
      %v1500 = vld [vmem:[%s246 + $0x63] sm:$0xff]
      %v1501 = vld [vmem:[%s246 + $0x6b] sm:$0xff]
      %v1502 = vld [vmem:[%s246 + $0x73] sm:$0xff]
      %v1503 = vld [vmem:[%s246 + $0x7b] sm:$0xff]
      %v1504 = vld [vmem:[%s246 + $0x83] sm:$0xff]
      %v1505 = vld [vmem:[%s246 + $0x8b] sm:$0xff]
      %v1506 = vld [vmem:[%s246 + $0x93] sm:$0xff]
      %v1507 = vld [vmem:[%s246 + $0x9b] sm:$0xff]
      %v1508 = vld [vmem:[%s246 + $0xa3] sm:$0xff]
      %v1509 = vld [vmem:[%s246 + $0xab] sm:$0xff]
      %v1510 = vld [vmem:[%s246 + $0xb3] sm:$0xff]
      %v1511 = vld [vmem:[%s246 + $0xbb] sm:$0xff]
      %v1512 = vld [vmem:[%s246 + $0xc3] sm:$0xff]
      %v1513 = vld [vmem:[%s246 + $0xcb] sm:$0xff]
      %v1514 = vld [vmem:[%s246 + $0xd3] sm:$0xff]
      %v1515 = vld [vmem:[%s246 + $0xdb] sm:$0xff]
      %v1516 = vld [vmem:[%s246 + $0xe3] sm:$0xff]
      %v1517 = vld [vmem:[%s246 + $0xeb] sm:$0xff]
      %v1518 = vld [vmem:[%s246 + $0xf3] sm:$0xff]
      %v1519 = vld [vmem:[%s246 + $0xfb] sm:$0xff]
      %v1520 = vld [vmem:[%s246 + $0x103] sm:$0xff]
      %v1521 = vld [vmem:[%s246 + $0x10b] sm:$0xff]
      %v1522 = vld [vmem:[%s246 + $0x113] sm:$0xff]
      %v1523 = vld [vmem:[%s246 + $0x11b] sm:$0xff]
      %v1524 = vld [vmem:[%s246 + $0x123] sm:$0xff]
      %v1525 = vld [vmem:[%s246 + $0x12b] sm:$0xff]
      %v1526 = vpack.c.bf16 %v1491, %v1490
      %v1527 = vpack.c.bf16 %v1493, %v1492
      %v1528 = vpack.c.bf16 %v1495, %v1494
      %v1529 = vpack.c.bf16 %v1497, %v1496
      %v1530 = vpack.c.bf16 %v1499, %v1498
      %v1531 = vpack.c.bf16 %v1501, %v1500
      %v1532 = vpack.c.bf16 %v1503, %v1502
      %v1533 = vpack.c.bf16 %v1505, %v1504
      %v1534 = vpack.c.bf16 %v1507, %v1506
      %v1535 = vpack.c.bf16 %v1509, %v1508
      %v1536 = vpack.c.bf16 %v1511, %v1510
      %v1537 = vpack.c.bf16 %v1513, %v1512
      %v1538 = vpack.c.bf16 %v1515, %v1514
      %v1539 = vpack.c.bf16 %v1517, %v1516
      %v1540 = vpack.c.bf16 %v1519, %v1518
      %v1541 = vpack.c.bf16 %v1521, %v1520
      %v1542 = vpack.c.bf16 %v1523, %v1522
      %v1543 = vpack.c.bf16 %v1525, %v1524
      %s1544 = scalar_lea.vmem %s1, 32
      %v1545 = vld [vmem:[%s1544] sm:$0xff]
      %v1546 = vpack.c.bf16 %v1545, %v1545
      %v1548 = vsel %vm366, %v1526, 0
      %v1551 = vsel %vm366, %v1527, 0
      %v1554 = vsel %vm366, %v1528, 0
      %v1557 = vsel %vm366, %v1529, 0
      %v1560 = vsel %vm366, %v1530, 0
      %v1563 = vsel %vm366, %v1531, 0
      %v1566 = vsel %vm366, %v1532, 0
      %v1569 = vsel %vm366, %v1533, 0
      %v1572 = vsel %vm366, %v1534, 0
      %v1575 = vsel %vm366, %v1535, 0
      %v1578 = vsel %vm366, %v1536, 0
      %v1581 = vsel %vm366, %v1537, 0
      %v1584 = vsel %vm366, %v1538, 0
      %v1587 = vsel %vm366, %v1539, 0
      %v1590 = vsel %vm366, %v1540, 0
      %v1593 = vsel %vm366, %v1541, 0
      %v1596 = vsel %vm366, %v1542, 0
      %v1599 = vsel %vm366, %v1543, 0
      %v1602 = vsel %vm421, %v1546, 0
      %1604 = vmatprep.subr.bf16.mxu0 0
      %1605 = vmatpush1.bf16.msra.mxu0 0
      %1606 = vmatprep.subr.bf16.mxu0 0
      %1607 = vmatpush1.bf16.msra.mxu0 0
      %1608 = vmatprep.subr.bf16.mxu0 0
      %1609 = vmatpush1.bf16.msra.mxu0 0
      %1610 = vmatprep.subr.bf16.mxu0 0
      %1611 = vmatpush1.bf16.msra.mxu0 0
      %1612 = vmatprep.subr.bf16.mxu0 0
      %1613 = vmatpush1.bf16.msra.mxu0 0
      %1614 = vmatprep.subr.bf16.mxu0 0
      %1615 = vmatpush1.bf16.msra.mxu0 0
      %1616 = vmatprep.subr.bf16.mxu0 0
      %1617 = vmatpush1.bf16.msra.mxu0 0
      %1618 = vmatprep.subr.bf16.mxu0 0
      %1619 = vmatpush1.bf16.msra.mxu0 %v1602
      %1620 = vmatprep.subr.bf16.mxu0 0
      %1621 = vmatpush2.bf16.msra.mxu0 0
      %1622 = vmatprep.subr.bf16.mxu0 0
      %1623 = vmatpush2.bf16.msra.mxu0 0
      %1624 = vmatprep.subr.bf16.mxu0 0
      %1625 = vmatpush2.bf16.msra.mxu0 0
      %1626 = vmatprep.subr.bf16.mxu0 0
      %1627 = vmatpush2.bf16.msra.mxu0 0
      %1628 = vmatprep.subr.bf16.mxu0 0
      %1629 = vmatpush2.bf16.msra.mxu0 0
      %1630 = vmatprep.subr.bf16.mxu0 0
      %1631 = vmatpush2.bf16.msra.mxu0 0
      %1632 = vmatprep.subr.bf16.mxu0 0
      %1633 = vmatpush2.bf16.msra.mxu0 0
      %1634 = vmatprep.subr.bf16.mxu0 0
      %1635 = vmatpush2.bf16.msra.mxu0 0
      %1636 = vmatprep.mubr.bf16.mxu0 0
      %1637 = vmatmul.mubr.bf16.gmra.mxu0 %v1548
      %v1638 = vpop.f32.mrf.mxu0
      %v1639 = vadd.f32 0.0, %v1638
      %v1640 = vpop.f32.mrf.mxu0
      %v1641 = vpop.f32.mrf.mxu0
      %v1642 = vadd.f32 0.0, %v1641
      %v1643 = vpop.f32.mrf.mxu0
      %1644 = vmatprep.mubr.bf16.mxu0 0
      %1645 = vmatmul.mubr.bf16.gmra.mxu0 %v1551
      %v1646 = vpop.f32.mrf.mxu0
      %v1647 = vadd.f32 0.0, %v1646
      %v1648 = vpop.f32.mrf.mxu0
      %v1649 = vpop.f32.mrf.mxu0
      %v1650 = vadd.f32 0.0, %v1649
      %v1651 = vpop.f32.mrf.mxu0
      %1652 = vmatprep.mubr.bf16.mxu0 0
      %1653 = vmatmul.mubr.bf16.gmra.mxu0 %v1554
      %v1654 = vpop.f32.mrf.mxu0
      %v1655 = vadd.f32 0.0, %v1654
      %v1656 = vpop.f32.mrf.mxu0
      %v1657 = vpop.f32.mrf.mxu0
      %v1658 = vadd.f32 0.0, %v1657
      %v1659 = vpop.f32.mrf.mxu0
      %1660 = vmatprep.mubr.bf16.mxu0 0
      %1661 = vmatmul.mubr.bf16.gmra.mxu0 %v1557
      %v1662 = vpop.f32.mrf.mxu0
      %v1663 = vadd.f32 0.0, %v1662
      %v1664 = vpop.f32.mrf.mxu0
      %v1665 = vpop.f32.mrf.mxu0
      %v1666 = vadd.f32 0.0, %v1665
      %v1667 = vpop.f32.mrf.mxu0
      %1668 = vmatprep.mubr.bf16.mxu0 0
      %1669 = vmatmul.mubr.bf16.gmra.mxu0 %v1560
      %v1670 = vpop.f32.mrf.mxu0
      %v1671 = vadd.f32 0.0, %v1670
      %v1672 = vpop.f32.mrf.mxu0
      %v1673 = vpop.f32.mrf.mxu0
      %v1674 = vadd.f32 0.0, %v1673
      %v1675 = vpop.f32.mrf.mxu0
      %1676 = vmatprep.mubr.bf16.mxu0 0
      %1677 = vmatmul.mubr.bf16.gmra.mxu0 %v1563
      %v1678 = vpop.f32.mrf.mxu0
      %v1679 = vadd.f32 0.0, %v1678
      %v1680 = vpop.f32.mrf.mxu0
      %v1681 = vpop.f32.mrf.mxu0
      %v1682 = vadd.f32 0.0, %v1681
      %v1683 = vpop.f32.mrf.mxu0
      %1684 = vmatprep.mubr.bf16.mxu0 0
      %1685 = vmatmul.mubr.bf16.gmra.mxu0 %v1566
      %v1686 = vpop.f32.mrf.mxu0
      %v1687 = vadd.f32 0.0, %v1686
      %v1688 = vpop.f32.mrf.mxu0
      %v1689 = vpop.f32.mrf.mxu0
      %v1690 = vadd.f32 0.0, %v1689
      %v1691 = vpop.f32.mrf.mxu0
      %1692 = vmatprep.mubr.bf16.mxu0 0
      %1693 = vmatmul.mubr.bf16.gmra.mxu0 %v1569
      %v1694 = vpop.f32.mrf.mxu0
      %v1695 = vadd.f32 0.0, %v1694
      %v1696 = vpop.f32.mrf.mxu0
      %v1697 = vpop.f32.mrf.mxu0
      %v1698 = vadd.f32 0.0, %v1697
      %v1699 = vpop.f32.mrf.mxu0
      %1700 = vmatprep.mubr.bf16.mxu0 0
      %1701 = vmatmul.mubr.bf16.gmra.mxu0 %v1572
      %v1702 = vpop.f32.mrf.mxu0
      %v1703 = vadd.f32 0.0, %v1702
      %v1704 = vpop.f32.mrf.mxu0
      %v1705 = vpop.f32.mrf.mxu0
      %v1706 = vadd.f32 0.0, %v1705
      %v1707 = vpop.f32.mrf.mxu0
      %1708 = vmatprep.mubr.bf16.mxu0 0
      %1709 = vmatmul.mubr.bf16.gmra.mxu0 %v1575
      %v1710 = vpop.f32.mrf.mxu0
      %v1711 = vadd.f32 0.0, %v1710
      %v1712 = vpop.f32.mrf.mxu0
      %v1713 = vpop.f32.mrf.mxu0
      %v1714 = vadd.f32 0.0, %v1713
      %v1715 = vpop.f32.mrf.mxu0
      %1716 = vmatprep.mubr.bf16.mxu0 0
      %1717 = vmatmul.mubr.bf16.gmra.mxu0 %v1578
      %v1718 = vpop.f32.mrf.mxu0
      %v1719 = vadd.f32 0.0, %v1718
      %v1720 = vpop.f32.mrf.mxu0
      %v1721 = vpop.f32.mrf.mxu0
      %v1722 = vadd.f32 0.0, %v1721
      %v1723 = vpop.f32.mrf.mxu0
      %1724 = vmatprep.mubr.bf16.mxu0 0
      %1725 = vmatmul.mubr.bf16.gmra.mxu0 %v1581
      %v1726 = vpop.f32.mrf.mxu0
      %v1727 = vadd.f32 0.0, %v1726
      %v1728 = vpop.f32.mrf.mxu0
      %v1729 = vpop.f32.mrf.mxu0
      %v1730 = vadd.f32 0.0, %v1729
      %v1731 = vpop.f32.mrf.mxu0
      %1732 = vmatprep.mubr.bf16.mxu0 0
      %1733 = vmatmul.mubr.bf16.gmra.mxu0 %v1584
      %v1734 = vpop.f32.mrf.mxu0
      %v1735 = vadd.f32 0.0, %v1734
      %v1736 = vpop.f32.mrf.mxu0
      %v1737 = vpop.f32.mrf.mxu0
      %v1738 = vadd.f32 0.0, %v1737
      %v1739 = vpop.f32.mrf.mxu0
      %1740 = vmatprep.mubr.bf16.mxu0 0
      %1741 = vmatmul.mubr.bf16.gmra.mxu0 %v1587
      %v1742 = vpop.f32.mrf.mxu0
      %v1743 = vadd.f32 0.0, %v1742
      %v1744 = vpop.f32.mrf.mxu0
      %v1745 = vpop.f32.mrf.mxu0
      %v1746 = vadd.f32 0.0, %v1745
      %v1747 = vpop.f32.mrf.mxu0
      %1748 = vmatprep.mubr.bf16.mxu0 0
      %1749 = vmatmul.mubr.bf16.gmra.mxu0 %v1590
      %v1750 = vpop.f32.mrf.mxu0
      %v1751 = vadd.f32 0.0, %v1750
      %v1752 = vpop.f32.mrf.mxu0
      %v1753 = vpop.f32.mrf.mxu0
      %v1754 = vadd.f32 0.0, %v1753
      %v1755 = vpop.f32.mrf.mxu0
      %1756 = vmatprep.mubr.bf16.mxu0 0
      %1757 = vmatmul.mubr.bf16.gmra.mxu0 %v1593
      %v1758 = vpop.f32.mrf.mxu0
      %v1759 = vadd.f32 0.0, %v1758
      %v1760 = vpop.f32.mrf.mxu0
      %v1761 = vpop.f32.mrf.mxu0
      %v1762 = vadd.f32 0.0, %v1761
      %v1763 = vpop.f32.mrf.mxu0
      %1764 = vmatprep.mubr.bf16.mxu0 0
      %1765 = vmatmul.mubr.bf16.gmra.mxu0 %v1596
      %v1766 = vpop.f32.mrf.mxu0
      %v1767 = vadd.f32 0.0, %v1766
      %v1768 = vpop.f32.mrf.mxu0
      %v1769 = vpop.f32.mrf.mxu0
      %v1770 = vadd.f32 0.0, %v1769
      %v1771 = vpop.f32.mrf.mxu0
      %1772 = vmatprep.mubr.bf16.mxu0 0
      %1773 = vmatmul.mubr.bf16.gmra.mxu0 %v1599
      %v1774 = vpop.f32.mrf.mxu0
      %v1775 = vadd.f32 0.0, %v1774
      %v1776 = vpop.f32.mrf.mxu0
      %v1777 = vpop.f32.mrf.mxu0
      %v1778 = vadd.f32 0.0, %v1777
      %v1779 = vpop.f32.mrf.mxu0
      %1780 = vdwg.mxu0
      %v1781 = vadd.f32 %v1454, %v1639
      %v1782 = vadd.f32 %v1455, %v1642
      %v1783 = vadd.f32 %v1456, %v1647
      %v1784 = vadd.f32 %v1457, %v1650
      %v1785 = vadd.f32 %v1458, %v1655
      %v1786 = vadd.f32 %v1459, %v1658
      %v1787 = vadd.f32 %v1460, %v1663
      %v1788 = vadd.f32 %v1461, %v1666
      %v1789 = vadd.f32 %v1462, %v1671
      %v1790 = vadd.f32 %v1463, %v1674
      %v1791 = vadd.f32 %v1464, %v1679
      %v1792 = vadd.f32 %v1465, %v1682
      %v1793 = vadd.f32 %v1466, %v1687
      %v1794 = vadd.f32 %v1467, %v1690
      %v1795 = vadd.f32 %v1468, %v1695
      %v1796 = vadd.f32 %v1469, %v1698
      %v1797 = vadd.f32 %v1470, %v1703
      %v1798 = vadd.f32 %v1471, %v1706
      %v1799 = vadd.f32 %v1472, %v1711
      %v1800 = vadd.f32 %v1473, %v1714
      %v1801 = vadd.f32 %v1474, %v1719
      %v1802 = vadd.f32 %v1475, %v1722
      %v1803 = vadd.f32 %v1476, %v1727
      %v1804 = vadd.f32 %v1477, %v1730
      %v1805 = vadd.f32 %v1478, %v1735
      %v1806 = vadd.f32 %v1479, %v1738
      %v1807 = vadd.f32 %v1480, %v1743
      %v1808 = vadd.f32 %v1481, %v1746
      %v1809 = vadd.f32 %v1482, %v1751
      %v1810 = vadd.f32 %v1483, %v1754
      %v1811 = vadd.f32 %v1484, %v1759
      %v1812 = vadd.f32 %v1485, %v1762
      %v1813 = vadd.f32 %v1486, %v1767
      %v1814 = vadd.f32 %v1487, %v1770
      %v1815 = vadd.f32 %v1488, %v1775
      %v1816 = vadd.f32 %v1489, %v1778
      %v1817 = vld [vmem:[%s246 + $0x14] sm:$0xff]
      %v1818 = vld [vmem:[%s246 + $0x1c] sm:$0xff]
      %v1819 = vld [vmem:[%s246 + $0x24] sm:$0xff]
      %v1820 = vld [vmem:[%s246 + $0x2c] sm:$0xff]
      %v1821 = vld [vmem:[%s246 + $0x34] sm:$0xff]
      %v1822 = vld [vmem:[%s246 + $0x3c] sm:$0xff]
      %v1823 = vld [vmem:[%s246 + $0x44] sm:$0xff]
      %v1824 = vld [vmem:[%s246 + $0x4c] sm:$0xff]
      %v1825 = vld [vmem:[%s246 + $0x54] sm:$0xff]
      %v1826 = vld [vmem:[%s246 + $0x5c] sm:$0xff]
      %v1827 = vld [vmem:[%s246 + $0x64] sm:$0xff]
      %v1828 = vld [vmem:[%s246 + $0x6c] sm:$0xff]
      %v1829 = vld [vmem:[%s246 + $0x74] sm:$0xff]
      %v1830 = vld [vmem:[%s246 + $0x7c] sm:$0xff]
      %v1831 = vld [vmem:[%s246 + $0x84] sm:$0xff]
      %v1832 = vld [vmem:[%s246 + $0x8c] sm:$0xff]
      %v1833 = vld [vmem:[%s246 + $0x94] sm:$0xff]
      %v1834 = vld [vmem:[%s246 + $0x9c] sm:$0xff]
      %v1835 = vld [vmem:[%s246 + $0xa4] sm:$0xff]
      %v1836 = vld [vmem:[%s246 + $0xac] sm:$0xff]
      %v1837 = vld [vmem:[%s246 + $0xb4] sm:$0xff]
      %v1838 = vld [vmem:[%s246 + $0xbc] sm:$0xff]
      %v1839 = vld [vmem:[%s246 + $0xc4] sm:$0xff]
      %v1840 = vld [vmem:[%s246 + $0xcc] sm:$0xff]
      %v1841 = vld [vmem:[%s246 + $0xd4] sm:$0xff]
      %v1842 = vld [vmem:[%s246 + $0xdc] sm:$0xff]
      %v1843 = vld [vmem:[%s246 + $0xe4] sm:$0xff]
      %v1844 = vld [vmem:[%s246 + $0xec] sm:$0xff]
      %v1845 = vld [vmem:[%s246 + $0xf4] sm:$0xff]
      %v1846 = vld [vmem:[%s246 + $0xfc] sm:$0xff]
      %v1847 = vld [vmem:[%s246 + $0x104] sm:$0xff]
      %v1848 = vld [vmem:[%s246 + $0x10c] sm:$0xff]
      %v1849 = vld [vmem:[%s246 + $0x114] sm:$0xff]
      %v1850 = vld [vmem:[%s246 + $0x11c] sm:$0xff]
      %v1851 = vld [vmem:[%s246 + $0x124] sm:$0xff]
      %v1852 = vld [vmem:[%s246 + $0x12c] sm:$0xff]
      %v1853 = vpack.c.bf16 %v1818, %v1817
      %v1854 = vpack.c.bf16 %v1820, %v1819
      %v1855 = vpack.c.bf16 %v1822, %v1821
      %v1856 = vpack.c.bf16 %v1824, %v1823
      %v1857 = vpack.c.bf16 %v1826, %v1825
      %v1858 = vpack.c.bf16 %v1828, %v1827
      %v1859 = vpack.c.bf16 %v1830, %v1829
      %v1860 = vpack.c.bf16 %v1832, %v1831
      %v1861 = vpack.c.bf16 %v1834, %v1833
      %v1862 = vpack.c.bf16 %v1836, %v1835
      %v1863 = vpack.c.bf16 %v1838, %v1837
      %v1864 = vpack.c.bf16 %v1840, %v1839
      %v1865 = vpack.c.bf16 %v1842, %v1841
      %v1866 = vpack.c.bf16 %v1844, %v1843
      %v1867 = vpack.c.bf16 %v1846, %v1845
      %v1868 = vpack.c.bf16 %v1848, %v1847
      %v1869 = vpack.c.bf16 %v1850, %v1849
      %v1870 = vpack.c.bf16 %v1852, %v1851
      %s1871 = scalar_lea.vmem %s1, 40
      %v1872 = vld [vmem:[%s1871] sm:$0xff]
      %v1873 = vpack.c.bf16 %v1872, %v1872
      %v1875 = vsel %vm366, %v1853, 0
      %v1878 = vsel %vm366, %v1854, 0
      %v1881 = vsel %vm366, %v1855, 0
      %v1884 = vsel %vm366, %v1856, 0
      %v1887 = vsel %vm366, %v1857, 0
      %v1890 = vsel %vm366, %v1858, 0
      %v1893 = vsel %vm366, %v1859, 0
      %v1896 = vsel %vm366, %v1860, 0
      %v1899 = vsel %vm366, %v1861, 0
      %v1902 = vsel %vm366, %v1862, 0
      %v1905 = vsel %vm366, %v1863, 0
      %v1908 = vsel %vm366, %v1864, 0
      %v1911 = vsel %vm366, %v1865, 0
      %v1914 = vsel %vm366, %v1866, 0
      %v1917 = vsel %vm366, %v1867, 0
      %v1920 = vsel %vm366, %v1868, 0
      %v1923 = vsel %vm366, %v1869, 0
      %v1926 = vsel %vm366, %v1870, 0
      %v1929 = vsel %vm421, %v1873, 0
      %1931 = vmatprep.subr.bf16.mxu0 0
      %1932 = vmatpush1.bf16.msra.mxu0 0
      %1933 = vmatprep.subr.bf16.mxu0 0
      %1934 = vmatpush1.bf16.msra.mxu0 0
      %1935 = vmatprep.subr.bf16.mxu0 0
      %1936 = vmatpush1.bf16.msra.mxu0 0
      %1937 = vmatprep.subr.bf16.mxu0 0
      %1938 = vmatpush1.bf16.msra.mxu0 0
      %1939 = vmatprep.subr.bf16.mxu0 0
      %1940 = vmatpush1.bf16.msra.mxu0 0
      %1941 = vmatprep.subr.bf16.mxu0 0
      %1942 = vmatpush1.bf16.msra.mxu0 0
      %1943 = vmatprep.subr.bf16.mxu0 0
      %1944 = vmatpush1.bf16.msra.mxu0 0
      %1945 = vmatprep.subr.bf16.mxu0 0
      %1946 = vmatpush1.bf16.msra.mxu0 %v1929
      %1947 = vmatprep.subr.bf16.mxu0 0
      %1948 = vmatpush2.bf16.msra.mxu0 0
      %1949 = vmatprep.subr.bf16.mxu0 0
      %1950 = vmatpush2.bf16.msra.mxu0 0
      %1951 = vmatprep.subr.bf16.mxu0 0
      %1952 = vmatpush2.bf16.msra.mxu0 0
      %1953 = vmatprep.subr.bf16.mxu0 0
      %1954 = vmatpush2.bf16.msra.mxu0 0
      %1955 = vmatprep.subr.bf16.mxu0 0
      %1956 = vmatpush2.bf16.msra.mxu0 0
      %1957 = vmatprep.subr.bf16.mxu0 0
      %1958 = vmatpush2.bf16.msra.mxu0 0
      %1959 = vmatprep.subr.bf16.mxu0 0
      %1960 = vmatpush2.bf16.msra.mxu0 0
      %1961 = vmatprep.subr.bf16.mxu0 0
      %1962 = vmatpush2.bf16.msra.mxu0 0
      %1963 = vmatprep.mubr.bf16.mxu0 0
      %1964 = vmatmul.mubr.bf16.gmra.mxu0 %v1875
      %v1965 = vpop.f32.mrf.mxu0
      %v1966 = vadd.f32 0.0, %v1965
      %v1967 = vpop.f32.mrf.mxu0
      %v1968 = vpop.f32.mrf.mxu0
      %v1969 = vadd.f32 0.0, %v1968
      %v1970 = vpop.f32.mrf.mxu0
      %1971 = vmatprep.mubr.bf16.mxu0 0
      %1972 = vmatmul.mubr.bf16.gmra.mxu0 %v1878
      %v1973 = vpop.f32.mrf.mxu0
      %v1974 = vadd.f32 0.0, %v1973
      %v1975 = vpop.f32.mrf.mxu0
      %v1976 = vpop.f32.mrf.mxu0
      %v1977 = vadd.f32 0.0, %v1976
      %v1978 = vpop.f32.mrf.mxu0
      %1979 = vmatprep.mubr.bf16.mxu0 0
      %1980 = vmatmul.mubr.bf16.gmra.mxu0 %v1881
      %v1981 = vpop.f32.mrf.mxu0
      %v1982 = vadd.f32 0.0, %v1981
      %v1983 = vpop.f32.mrf.mxu0
      %v1984 = vpop.f32.mrf.mxu0
      %v1985 = vadd.f32 0.0, %v1984
      %v1986 = vpop.f32.mrf.mxu0
      %1987 = vmatprep.mubr.bf16.mxu0 0
      %1988 = vmatmul.mubr.bf16.gmra.mxu0 %v1884
      %v1989 = vpop.f32.mrf.mxu0
      %v1990 = vadd.f32 0.0, %v1989
      %v1991 = vpop.f32.mrf.mxu0
      %v1992 = vpop.f32.mrf.mxu0
      %v1993 = vadd.f32 0.0, %v1992
      %v1994 = vpop.f32.mrf.mxu0
      %1995 = vmatprep.mubr.bf16.mxu0 0
      %1996 = vmatmul.mubr.bf16.gmra.mxu0 %v1887
      %v1997 = vpop.f32.mrf.mxu0
      %v1998 = vadd.f32 0.0, %v1997
      %v1999 = vpop.f32.mrf.mxu0
      %v2000 = vpop.f32.mrf.mxu0
      %v2001 = vadd.f32 0.0, %v2000
      %v2002 = vpop.f32.mrf.mxu0
      %2003 = vmatprep.mubr.bf16.mxu0 0
      %2004 = vmatmul.mubr.bf16.gmra.mxu0 %v1890
      %v2005 = vpop.f32.mrf.mxu0
      %v2006 = vadd.f32 0.0, %v2005
      %v2007 = vpop.f32.mrf.mxu0
      %v2008 = vpop.f32.mrf.mxu0
      %v2009 = vadd.f32 0.0, %v2008
      %v2010 = vpop.f32.mrf.mxu0
      %2011 = vmatprep.mubr.bf16.mxu0 0
      %2012 = vmatmul.mubr.bf16.gmra.mxu0 %v1893
      %v2013 = vpop.f32.mrf.mxu0
      %v2014 = vadd.f32 0.0, %v2013
      %v2015 = vpop.f32.mrf.mxu0
      %v2016 = vpop.f32.mrf.mxu0
      %v2017 = vadd.f32 0.0, %v2016
      %v2018 = vpop.f32.mrf.mxu0
      %2019 = vmatprep.mubr.bf16.mxu0 0
      %2020 = vmatmul.mubr.bf16.gmra.mxu0 %v1896
      %v2021 = vpop.f32.mrf.mxu0
      %v2022 = vadd.f32 0.0, %v2021
      %v2023 = vpop.f32.mrf.mxu0
      %v2024 = vpop.f32.mrf.mxu0
      %v2025 = vadd.f32 0.0, %v2024
      %v2026 = vpop.f32.mrf.mxu0
      %2027 = vmatprep.mubr.bf16.mxu0 0
      %2028 = vmatmul.mubr.bf16.gmra.mxu0 %v1899
      %v2029 = vpop.f32.mrf.mxu0
      %v2030 = vadd.f32 0.0, %v2029
      %v2031 = vpop.f32.mrf.mxu0
      %v2032 = vpop.f32.mrf.mxu0
      %v2033 = vadd.f32 0.0, %v2032
      %v2034 = vpop.f32.mrf.mxu0
      %2035 = vmatprep.mubr.bf16.mxu0 0
      %2036 = vmatmul.mubr.bf16.gmra.mxu0 %v1902
      %v2037 = vpop.f32.mrf.mxu0
      %v2038 = vadd.f32 0.0, %v2037
      %v2039 = vpop.f32.mrf.mxu0
      %v2040 = vpop.f32.mrf.mxu0
      %v2041 = vadd.f32 0.0, %v2040
      %v2042 = vpop.f32.mrf.mxu0
      %2043 = vmatprep.mubr.bf16.mxu0 0
      %2044 = vmatmul.mubr.bf16.gmra.mxu0 %v1905
      %v2045 = vpop.f32.mrf.mxu0
      %v2046 = vadd.f32 0.0, %v2045
      %v2047 = vpop.f32.mrf.mxu0
      %v2048 = vpop.f32.mrf.mxu0
      %v2049 = vadd.f32 0.0, %v2048
      %v2050 = vpop.f32.mrf.mxu0
      %2051 = vmatprep.mubr.bf16.mxu0 0
      %2052 = vmatmul.mubr.bf16.gmra.mxu0 %v1908
      %v2053 = vpop.f32.mrf.mxu0
      %v2054 = vadd.f32 0.0, %v2053
      %v2055 = vpop.f32.mrf.mxu0
      %v2056 = vpop.f32.mrf.mxu0
      %v2057 = vadd.f32 0.0, %v2056
      %v2058 = vpop.f32.mrf.mxu0
      %2059 = vmatprep.mubr.bf16.mxu0 0
      %2060 = vmatmul.mubr.bf16.gmra.mxu0 %v1911
      %v2061 = vpop.f32.mrf.mxu0
      %v2062 = vadd.f32 0.0, %v2061
      %v2063 = vpop.f32.mrf.mxu0
      %v2064 = vpop.f32.mrf.mxu0
      %v2065 = vadd.f32 0.0, %v2064
      %v2066 = vpop.f32.mrf.mxu0
      %2067 = vmatprep.mubr.bf16.mxu0 0
      %2068 = vmatmul.mubr.bf16.gmra.mxu0 %v1914
      %v2069 = vpop.f32.mrf.mxu0
      %v2070 = vadd.f32 0.0, %v2069
      %v2071 = vpop.f32.mrf.mxu0
      %v2072 = vpop.f32.mrf.mxu0
      %v2073 = vadd.f32 0.0, %v2072
      %v2074 = vpop.f32.mrf.mxu0
      %2075 = vmatprep.mubr.bf16.mxu0 0
      %2076 = vmatmul.mubr.bf16.gmra.mxu0 %v1917
      %v2077 = vpop.f32.mrf.mxu0
      %v2078 = vadd.f32 0.0, %v2077
      %v2079 = vpop.f32.mrf.mxu0
      %v2080 = vpop.f32.mrf.mxu0
      %v2081 = vadd.f32 0.0, %v2080
      %v2082 = vpop.f32.mrf.mxu0
      %2083 = vmatprep.mubr.bf16.mxu0 0
      %2084 = vmatmul.mubr.bf16.gmra.mxu0 %v1920
      %v2085 = vpop.f32.mrf.mxu0
      %v2086 = vadd.f32 0.0, %v2085
      %v2087 = vpop.f32.mrf.mxu0
      %v2088 = vpop.f32.mrf.mxu0
      %v2089 = vadd.f32 0.0, %v2088
      %v2090 = vpop.f32.mrf.mxu0
      %2091 = vmatprep.mubr.bf16.mxu0 0
      %2092 = vmatmul.mubr.bf16.gmra.mxu0 %v1923
      %v2093 = vpop.f32.mrf.mxu0
      %v2094 = vadd.f32 0.0, %v2093
      %v2095 = vpop.f32.mrf.mxu0
      %v2096 = vpop.f32.mrf.mxu0
      %v2097 = vadd.f32 0.0, %v2096
      %v2098 = vpop.f32.mrf.mxu0
      %2099 = vmatprep.mubr.bf16.mxu0 0
      %2100 = vmatmul.mubr.bf16.gmra.mxu0 %v1926
      %v2101 = vpop.f32.mrf.mxu0
      %v2102 = vadd.f32 0.0, %v2101
      %v2103 = vpop.f32.mrf.mxu0
      %v2104 = vpop.f32.mrf.mxu0
      %v2105 = vadd.f32 0.0, %v2104
      %v2106 = vpop.f32.mrf.mxu0
      %2107 = vdwg.mxu0
      %v2108 = vadd.f32 %v1781, %v1966
      %v2109 = vadd.f32 %v1782, %v1969
      %v2110 = vadd.f32 %v1783, %v1974
      %v2111 = vadd.f32 %v1784, %v1977
      %v2112 = vadd.f32 %v1785, %v1982
      %v2113 = vadd.f32 %v1786, %v1985
      %v2114 = vadd.f32 %v1787, %v1990
      %v2115 = vadd.f32 %v1788, %v1993
      %v2116 = vadd.f32 %v1789, %v1998
      %v2117 = vadd.f32 %v1790, %v2001
      %v2118 = vadd.f32 %v1791, %v2006
      %v2119 = vadd.f32 %v1792, %v2009
      %v2120 = vadd.f32 %v1793, %v2014
      %v2121 = vadd.f32 %v1794, %v2017
      %v2122 = vadd.f32 %v1795, %v2022
      %v2123 = vadd.f32 %v1796, %v2025
      %v2124 = vadd.f32 %v1797, %v2030
      %v2125 = vadd.f32 %v1798, %v2033
      %v2126 = vadd.f32 %v1799, %v2038
      %v2127 = vadd.f32 %v1800, %v2041
      %v2128 = vadd.f32 %v1801, %v2046
      %v2129 = vadd.f32 %v1802, %v2049
      %v2130 = vadd.f32 %v1803, %v2054
      %v2131 = vadd.f32 %v1804, %v2057
      %v2132 = vadd.f32 %v1805, %v2062
      %v2133 = vadd.f32 %v1806, %v2065
      %v2134 = vadd.f32 %v1807, %v2070
      %v2135 = vadd.f32 %v1808, %v2073
      %v2136 = vadd.f32 %v1809, %v2078
      %v2137 = vadd.f32 %v1810, %v2081
      %v2138 = vadd.f32 %v1811, %v2086
      %v2139 = vadd.f32 %v1812, %v2089
      %v2140 = vadd.f32 %v1813, %v2094
      %v2141 = vadd.f32 %v1814, %v2097
      %v2142 = vadd.f32 %v1815, %v2102
      %v2143 = vadd.f32 %v1816, %v2105
      %v2144 = vld [vmem:[%s246 + $0x24] sm:$0xff]
      %v2145 = vld [vmem:[%s246 + $0x2c] sm:$0xff]
      %v2146 = vld [vmem:[%s246 + $0x34] sm:$0xff]
      %v2147 = vld [vmem:[%s246 + $0x3c] sm:$0xff]
      %v2148 = vld [vmem:[%s246 + $0x44] sm:$0xff]
      %v2149 = vld [vmem:[%s246 + $0x4c] sm:$0xff]
      %v2150 = vld [vmem:[%s246 + $0x54] sm:$0xff]
      %v2151 = vld [vmem:[%s246 + $0x5c] sm:$0xff]
      %v2152 = vld [vmem:[%s246 + $0x64] sm:$0xff]
      %v2153 = vld [vmem:[%s246 + $0x6c] sm:$0xff]
      %v2154 = vld [vmem:[%s246 + $0x74] sm:$0xff]
      %v2155 = vld [vmem:[%s246 + $0x7c] sm:$0xff]
      %v2156 = vld [vmem:[%s246 + $0x84] sm:$0xff]
      %v2157 = vld [vmem:[%s246 + $0x8c] sm:$0xff]
      %v2158 = vld [vmem:[%s246 + $0x94] sm:$0xff]
      %v2159 = vld [vmem:[%s246 + $0x9c] sm:$0xff]
      %v2160 = vld [vmem:[%s246 + $0xa4] sm:$0xff]
      %v2161 = vld [vmem:[%s246 + $0xac] sm:$0xff]
      %v2162 = vld [vmem:[%s246 + $0xb4] sm:$0xff]
      %v2163 = vld [vmem:[%s246 + $0xbc] sm:$0xff]
      %v2164 = vld [vmem:[%s246 + $0xc4] sm:$0xff]
      %v2165 = vld [vmem:[%s246 + $0xcc] sm:$0xff]
      %v2166 = vld [vmem:[%s246 + $0xd4] sm:$0xff]
      %v2167 = vld [vmem:[%s246 + $0xdc] sm:$0xff]
      %v2168 = vld [vmem:[%s246 + $0xe4] sm:$0xff]
      %v2169 = vld [vmem:[%s246 + $0xec] sm:$0xff]
      %v2170 = vld [vmem:[%s246 + $0xf4] sm:$0xff]
      %v2171 = vld [vmem:[%s246 + $0xfc] sm:$0xff]
      %v2172 = vld [vmem:[%s246 + $0x104] sm:$0xff]
      %v2173 = vld [vmem:[%s246 + $0x10c] sm:$0xff]
      %v2174 = vld [vmem:[%s246 + $0x114] sm:$0xff]
      %v2175 = vld [vmem:[%s246 + $0x11c] sm:$0xff]
      %v2176 = vld [vmem:[%s246 + $0x124] sm:$0xff]
      %v2177 = vld [vmem:[%s246 + $0x12c] sm:$0xff]
      %v2178 = vld [vmem:[%s246 + $0x134] sm:$0xff]
      %v2179 = vld [vmem:[%s246 + $0x13c] sm:$0xff]
      %v2180 = vpack.c.bf16 %v2145, %v2144
      %v2181 = vpack.c.bf16 %v2147, %v2146
      %v2182 = vpack.c.bf16 %v2149, %v2148
      %v2183 = vpack.c.bf16 %v2151, %v2150
      %v2184 = vpack.c.bf16 %v2153, %v2152
      %v2185 = vpack.c.bf16 %v2155, %v2154
      %v2186 = vpack.c.bf16 %v2157, %v2156
      %v2187 = vpack.c.bf16 %v2159, %v2158
      %v2188 = vpack.c.bf16 %v2161, %v2160
      %v2189 = vpack.c.bf16 %v2163, %v2162
      %v2190 = vpack.c.bf16 %v2165, %v2164
      %v2191 = vpack.c.bf16 %v2167, %v2166
      %v2192 = vpack.c.bf16 %v2169, %v2168
      %v2193 = vpack.c.bf16 %v2171, %v2170
      %v2194 = vpack.c.bf16 %v2173, %v2172
      %v2195 = vpack.c.bf16 %v2175, %v2174
      %v2196 = vpack.c.bf16 %v2177, %v2176
      %v2197 = vpack.c.bf16 %v2179, %v2178
      %s2198 = scalar_lea.vmem %s1, 48
      %v2199 = vld [vmem:[%s2198] sm:$0xff]
      %v2200 = vpack.c.bf16 %v2199, %v2199
      %v2202 = vsel %vm366, %v2180, 0
      %v2205 = vsel %vm366, %v2181, 0
      %v2208 = vsel %vm366, %v2182, 0
      %v2211 = vsel %vm366, %v2183, 0
      %v2214 = vsel %vm366, %v2184, 0
      %v2217 = vsel %vm366, %v2185, 0
      %v2220 = vsel %vm366, %v2186, 0
      %v2223 = vsel %vm366, %v2187, 0
      %v2226 = vsel %vm366, %v2188, 0
      %v2229 = vsel %vm366, %v2189, 0
      %v2232 = vsel %vm366, %v2190, 0
      %v2235 = vsel %vm366, %v2191, 0
      %v2238 = vsel %vm366, %v2192, 0
      %v2241 = vsel %vm366, %v2193, 0
      %v2244 = vsel %vm366, %v2194, 0
      %v2247 = vsel %vm366, %v2195, 0
      %v2250 = vsel %vm366, %v2196, 0
      %v2253 = vsel %vm366, %v2197, 0
      %v2256 = vsel %vm421, %v2200, 0
      %2258 = vmatprep.subr.bf16.mxu0 0
      %2259 = vmatpush1.bf16.msra.mxu0 0
      %2260 = vmatprep.subr.bf16.mxu0 0
      %2261 = vmatpush1.bf16.msra.mxu0 0
      %2262 = vmatprep.subr.bf16.mxu0 0
      %2263 = vmatpush1.bf16.msra.mxu0 0
      %2264 = vmatprep.subr.bf16.mxu0 0
      %2265 = vmatpush1.bf16.msra.mxu0 0
      %2266 = vmatprep.subr.bf16.mxu0 0
      %2267 = vmatpush1.bf16.msra.mxu0 0
      %2268 = vmatprep.subr.bf16.mxu0 0
      %2269 = vmatpush1.bf16.msra.mxu0 0
      %2270 = vmatprep.subr.bf16.mxu0 0
      %2271 = vmatpush1.bf16.msra.mxu0 0
      %2272 = vmatprep.subr.bf16.mxu0 0
      %2273 = vmatpush1.bf16.msra.mxu0 %v2256
      %2274 = vmatprep.subr.bf16.mxu0 0
      %2275 = vmatpush2.bf16.msra.mxu0 0
      %2276 = vmatprep.subr.bf16.mxu0 0
      %2277 = vmatpush2.bf16.msra.mxu0 0
      %2278 = vmatprep.subr.bf16.mxu0 0
      %2279 = vmatpush2.bf16.msra.mxu0 0
      %2280 = vmatprep.subr.bf16.mxu0 0
      %2281 = vmatpush2.bf16.msra.mxu0 0
      %2282 = vmatprep.subr.bf16.mxu0 0
      %2283 = vmatpush2.bf16.msra.mxu0 0
      %2284 = vmatprep.subr.bf16.mxu0 0
      %2285 = vmatpush2.bf16.msra.mxu0 0
      %2286 = vmatprep.subr.bf16.mxu0 0
      %2287 = vmatpush2.bf16.msra.mxu0 0
      %2288 = vmatprep.subr.bf16.mxu0 0
      %2289 = vmatpush2.bf16.msra.mxu0 0
      %2290 = vmatprep.mubr.bf16.mxu0 0
      %2291 = vmatmul.mubr.bf16.gmra.mxu0 %v2202
      %v2292 = vpop.f32.mrf.mxu0
      %v2293 = vadd.f32 0.0, %v2292
      %v2294 = vpop.f32.mrf.mxu0
      %v2295 = vpop.f32.mrf.mxu0
      %v2296 = vadd.f32 0.0, %v2295
      %v2297 = vpop.f32.mrf.mxu0
      %2298 = vmatprep.mubr.bf16.mxu0 0
      %2299 = vmatmul.mubr.bf16.gmra.mxu0 %v2205
      %v2300 = vpop.f32.mrf.mxu0
      %v2301 = vadd.f32 0.0, %v2300
      %v2302 = vpop.f32.mrf.mxu0
      %v2303 = vpop.f32.mrf.mxu0
      %v2304 = vadd.f32 0.0, %v2303
      %v2305 = vpop.f32.mrf.mxu0
      %2306 = vmatprep.mubr.bf16.mxu0 0
      %2307 = vmatmul.mubr.bf16.gmra.mxu0 %v2208
      %v2308 = vpop.f32.mrf.mxu0
      %v2309 = vadd.f32 0.0, %v2308
      %v2310 = vpop.f32.mrf.mxu0
      %v2311 = vpop.f32.mrf.mxu0
      %v2312 = vadd.f32 0.0, %v2311
      %v2313 = vpop.f32.mrf.mxu0
      %2314 = vmatprep.mubr.bf16.mxu0 0
      %2315 = vmatmul.mubr.bf16.gmra.mxu0 %v2211
      %v2316 = vpop.f32.mrf.mxu0
      %v2317 = vadd.f32 0.0, %v2316
      %v2318 = vpop.f32.mrf.mxu0
      %v2319 = vpop.f32.mrf.mxu0
      %v2320 = vadd.f32 0.0, %v2319
      %v2321 = vpop.f32.mrf.mxu0
      %2322 = vmatprep.mubr.bf16.mxu0 0
      %2323 = vmatmul.mubr.bf16.gmra.mxu0 %v2214
      %v2324 = vpop.f32.mrf.mxu0
      %v2325 = vadd.f32 0.0, %v2324
      %v2326 = vpop.f32.mrf.mxu0
      %v2327 = vpop.f32.mrf.mxu0
      %v2328 = vadd.f32 0.0, %v2327
      %v2329 = vpop.f32.mrf.mxu0
      %2330 = vmatprep.mubr.bf16.mxu0 0
      %2331 = vmatmul.mubr.bf16.gmra.mxu0 %v2217
      %v2332 = vpop.f32.mrf.mxu0
      %v2333 = vadd.f32 0.0, %v2332
      %v2334 = vpop.f32.mrf.mxu0
      %v2335 = vpop.f32.mrf.mxu0
      %v2336 = vadd.f32 0.0, %v2335
      %v2337 = vpop.f32.mrf.mxu0
      %2338 = vmatprep.mubr.bf16.mxu0 0
      %2339 = vmatmul.mubr.bf16.gmra.mxu0 %v2220
      %v2340 = vpop.f32.mrf.mxu0
      %v2341 = vadd.f32 0.0, %v2340
      %v2342 = vpop.f32.mrf.mxu0
      %v2343 = vpop.f32.mrf.mxu0
      %v2344 = vadd.f32 0.0, %v2343
      %v2345 = vpop.f32.mrf.mxu0
      %2346 = vmatprep.mubr.bf16.mxu0 0
      %2347 = vmatmul.mubr.bf16.gmra.mxu0 %v2223
      %v2348 = vpop.f32.mrf.mxu0
      %v2349 = vadd.f32 0.0, %v2348
      %v2350 = vpop.f32.mrf.mxu0
      %v2351 = vpop.f32.mrf.mxu0
      %v2352 = vadd.f32 0.0, %v2351
      %v2353 = vpop.f32.mrf.mxu0
      %2354 = vmatprep.mubr.bf16.mxu0 0
      %2355 = vmatmul.mubr.bf16.gmra.mxu0 %v2226
      %v2356 = vpop.f32.mrf.mxu0
      %v2357 = vadd.f32 0.0, %v2356
      %v2358 = vpop.f32.mrf.mxu0
      %v2359 = vpop.f32.mrf.mxu0
      %v2360 = vadd.f32 0.0, %v2359
      %v2361 = vpop.f32.mrf.mxu0
      %2362 = vmatprep.mubr.bf16.mxu0 0
      %2363 = vmatmul.mubr.bf16.gmra.mxu0 %v2229
      %v2364 = vpop.f32.mrf.mxu0
      %v2365 = vadd.f32 0.0, %v2364
      %v2366 = vpop.f32.mrf.mxu0
      %v2367 = vpop.f32.mrf.mxu0
      %v2368 = vadd.f32 0.0, %v2367
      %v2369 = vpop.f32.mrf.mxu0
      %2370 = vmatprep.mubr.bf16.mxu0 0
      %2371 = vmatmul.mubr.bf16.gmra.mxu0 %v2232
      %v2372 = vpop.f32.mrf.mxu0
      %v2373 = vadd.f32 0.0, %v2372
      %v2374 = vpop.f32.mrf.mxu0
      %v2375 = vpop.f32.mrf.mxu0
      %v2376 = vadd.f32 0.0, %v2375
      %v2377 = vpop.f32.mrf.mxu0
      %2378 = vmatprep.mubr.bf16.mxu0 0
      %2379 = vmatmul.mubr.bf16.gmra.mxu0 %v2235
      %v2380 = vpop.f32.mrf.mxu0
      %v2381 = vadd.f32 0.0, %v2380
      %v2382 = vpop.f32.mrf.mxu0
      %v2383 = vpop.f32.mrf.mxu0
      %v2384 = vadd.f32 0.0, %v2383
      %v2385 = vpop.f32.mrf.mxu0
      %2386 = vmatprep.mubr.bf16.mxu0 0
      %2387 = vmatmul.mubr.bf16.gmra.mxu0 %v2238
      %v2388 = vpop.f32.mrf.mxu0
      %v2389 = vadd.f32 0.0, %v2388
      %v2390 = vpop.f32.mrf.mxu0
      %v2391 = vpop.f32.mrf.mxu0
      %v2392 = vadd.f32 0.0, %v2391
      %v2393 = vpop.f32.mrf.mxu0
      %2394 = vmatprep.mubr.bf16.mxu0 0
      %2395 = vmatmul.mubr.bf16.gmra.mxu0 %v2241
      %v2396 = vpop.f32.mrf.mxu0
      %v2397 = vadd.f32 0.0, %v2396
      %v2398 = vpop.f32.mrf.mxu0
      %v2399 = vpop.f32.mrf.mxu0
      %v2400 = vadd.f32 0.0, %v2399
      %v2401 = vpop.f32.mrf.mxu0
      %2402 = vmatprep.mubr.bf16.mxu0 0
      %2403 = vmatmul.mubr.bf16.gmra.mxu0 %v2244
      %v2404 = vpop.f32.mrf.mxu0
      %v2405 = vadd.f32 0.0, %v2404
      %v2406 = vpop.f32.mrf.mxu0
      %v2407 = vpop.f32.mrf.mxu0
      %v2408 = vadd.f32 0.0, %v2407
      %v2409 = vpop.f32.mrf.mxu0
      %2410 = vmatprep.mubr.bf16.mxu0 0
      %2411 = vmatmul.mubr.bf16.gmra.mxu0 %v2247
      %v2412 = vpop.f32.mrf.mxu0
      %v2413 = vadd.f32 0.0, %v2412
      %v2414 = vpop.f32.mrf.mxu0
      %v2415 = vpop.f32.mrf.mxu0
      %v2416 = vadd.f32 0.0, %v2415
      %v2417 = vpop.f32.mrf.mxu0
      %2418 = vmatprep.mubr.bf16.mxu0 0
      %2419 = vmatmul.mubr.bf16.gmra.mxu0 %v2250
      %v2420 = vpop.f32.mrf.mxu0
      %v2421 = vadd.f32 0.0, %v2420
      %v2422 = vpop.f32.mrf.mxu0
      %v2423 = vpop.f32.mrf.mxu0
      %v2424 = vadd.f32 0.0, %v2423
      %v2425 = vpop.f32.mrf.mxu0
      %2426 = vmatprep.mubr.bf16.mxu0 0
      %2427 = vmatmul.mubr.bf16.gmra.mxu0 %v2253
      %v2428 = vpop.f32.mrf.mxu0
      %v2429 = vadd.f32 0.0, %v2428
      %v2430 = vpop.f32.mrf.mxu0
      %v2431 = vpop.f32.mrf.mxu0
      %v2432 = vadd.f32 0.0, %v2431
      %v2433 = vpop.f32.mrf.mxu0
      %2434 = vdwg.mxu0
      %v2435 = vadd.f32 %v2108, %v2293
      %v2436 = vadd.f32 %v2109, %v2296
      %v2437 = vadd.f32 %v2110, %v2301
      %v2438 = vadd.f32 %v2111, %v2304
      %v2439 = vadd.f32 %v2112, %v2309
      %v2440 = vadd.f32 %v2113, %v2312
      %v2441 = vadd.f32 %v2114, %v2317
      %v2442 = vadd.f32 %v2115, %v2320
      %v2443 = vadd.f32 %v2116, %v2325
      %v2444 = vadd.f32 %v2117, %v2328
      %v2445 = vadd.f32 %v2118, %v2333
      %v2446 = vadd.f32 %v2119, %v2336
      %v2447 = vadd.f32 %v2120, %v2341
      %v2448 = vadd.f32 %v2121, %v2344
      %v2449 = vadd.f32 %v2122, %v2349
      %v2450 = vadd.f32 %v2123, %v2352
      %v2451 = vadd.f32 %v2124, %v2357
      %v2452 = vadd.f32 %v2125, %v2360
      %v2453 = vadd.f32 %v2126, %v2365
      %v2454 = vadd.f32 %v2127, %v2368
      %v2455 = vadd.f32 %v2128, %v2373
      %v2456 = vadd.f32 %v2129, %v2376
      %v2457 = vadd.f32 %v2130, %v2381
      %v2458 = vadd.f32 %v2131, %v2384
      %v2459 = vadd.f32 %v2132, %v2389
      %v2460 = vadd.f32 %v2133, %v2392
      %v2461 = vadd.f32 %v2134, %v2397
      %v2462 = vadd.f32 %v2135, %v2400
      %v2463 = vadd.f32 %v2136, %v2405
      %v2464 = vadd.f32 %v2137, %v2408
      %v2465 = vadd.f32 %v2138, %v2413
      %v2466 = vadd.f32 %v2139, %v2416
      %v2467 = vadd.f32 %v2140, %v2421
      %v2468 = vadd.f32 %v2141, %v2424
      %v2469 = vadd.f32 %v2142, %v2429
      %v2470 = vadd.f32 %v2143, %v2432
      %v2471 = vld [vmem:[%s246 + $0x25] sm:$0xff]
      %v2472 = vld [vmem:[%s246 + $0x2d] sm:$0xff]
      %v2473 = vld [vmem:[%s246 + $0x35] sm:$0xff]
      %v2474 = vld [vmem:[%s246 + $0x3d] sm:$0xff]
      %v2475 = vld [vmem:[%s246 + $0x45] sm:$0xff]
      %v2476 = vld [vmem:[%s246 + $0x4d] sm:$0xff]
      %v2477 = vld [vmem:[%s246 + $0x55] sm:$0xff]
      %v2478 = vld [vmem:[%s246 + $0x5d] sm:$0xff]
      %v2479 = vld [vmem:[%s246 + $0x65] sm:$0xff]
      %v2480 = vld [vmem:[%s246 + $0x6d] sm:$0xff]
      %v2481 = vld [vmem:[%s246 + $0x75] sm:$0xff]
      %v2482 = vld [vmem:[%s246 + $0x7d] sm:$0xff]
      %v2483 = vld [vmem:[%s246 + $0x85] sm:$0xff]
      %v2484 = vld [vmem:[%s246 + $0x8d] sm:$0xff]
      %v2485 = vld [vmem:[%s246 + $0x95] sm:$0xff]
      %v2486 = vld [vmem:[%s246 + $0x9d] sm:$0xff]
      %v2487 = vld [vmem:[%s246 + $0xa5] sm:$0xff]
      %v2488 = vld [vmem:[%s246 + $0xad] sm:$0xff]
      %v2489 = vld [vmem:[%s246 + $0xb5] sm:$0xff]
      %v2490 = vld [vmem:[%s246 + $0xbd] sm:$0xff]
      %v2491 = vld [vmem:[%s246 + $0xc5] sm:$0xff]
      %v2492 = vld [vmem:[%s246 + $0xcd] sm:$0xff]
      %v2493 = vld [vmem:[%s246 + $0xd5] sm:$0xff]
      %v2494 = vld [vmem:[%s246 + $0xdd] sm:$0xff]
      %v2495 = vld [vmem:[%s246 + $0xe5] sm:$0xff]
      %v2496 = vld [vmem:[%s246 + $0xed] sm:$0xff]
      %v2497 = vld [vmem:[%s246 + $0xf5] sm:$0xff]
      %v2498 = vld [vmem:[%s246 + $0xfd] sm:$0xff]
      %v2499 = vld [vmem:[%s246 + $0x105] sm:$0xff]
      %v2500 = vld [vmem:[%s246 + $0x10d] sm:$0xff]
      %v2501 = vld [vmem:[%s246 + $0x115] sm:$0xff]
      %v2502 = vld [vmem:[%s246 + $0x11d] sm:$0xff]
      %v2503 = vld [vmem:[%s246 + $0x125] sm:$0xff]
      %v2504 = vld [vmem:[%s246 + $0x12d] sm:$0xff]
      %v2505 = vld [vmem:[%s246 + $0x135] sm:$0xff]
      %v2506 = vld [vmem:[%s246 + $0x13d] sm:$0xff]
      %v2507 = vpack.c.bf16 %v2472, %v2471
      %v2508 = vpack.c.bf16 %v2474, %v2473
      %v2509 = vpack.c.bf16 %v2476, %v2475
      %v2510 = vpack.c.bf16 %v2478, %v2477
      %v2511 = vpack.c.bf16 %v2480, %v2479
      %v2512 = vpack.c.bf16 %v2482, %v2481
      %v2513 = vpack.c.bf16 %v2484, %v2483
      %v2514 = vpack.c.bf16 %v2486, %v2485
      %v2515 = vpack.c.bf16 %v2488, %v2487
      %v2516 = vpack.c.bf16 %v2490, %v2489
      %v2517 = vpack.c.bf16 %v2492, %v2491
      %v2518 = vpack.c.bf16 %v2494, %v2493
      %v2519 = vpack.c.bf16 %v2496, %v2495
      %v2520 = vpack.c.bf16 %v2498, %v2497
      %v2521 = vpack.c.bf16 %v2500, %v2499
      %v2522 = vpack.c.bf16 %v2502, %v2501
      %v2523 = vpack.c.bf16 %v2504, %v2503
      %v2524 = vpack.c.bf16 %v2506, %v2505
      %s2525 = scalar_lea.vmem %s1, 56
      %v2526 = vld [vmem:[%s2525] sm:$0xff]
      %v2527 = vpack.c.bf16 %v2526, %v2526
      %v2529 = vsel %vm366, %v2507, 0
      %v2532 = vsel %vm366, %v2508, 0
      %v2535 = vsel %vm366, %v2509, 0
      %v2538 = vsel %vm366, %v2510, 0
      %v2541 = vsel %vm366, %v2511, 0
      %v2544 = vsel %vm366, %v2512, 0
      %v2547 = vsel %vm366, %v2513, 0
      %v2550 = vsel %vm366, %v2514, 0
      %v2553 = vsel %vm366, %v2515, 0
      %v2556 = vsel %vm366, %v2516, 0
      %v2559 = vsel %vm366, %v2517, 0
      %v2562 = vsel %vm366, %v2518, 0
      %v2565 = vsel %vm366, %v2519, 0
      %v2568 = vsel %vm366, %v2520, 0
      %v2571 = vsel %vm366, %v2521, 0
      %v2574 = vsel %vm366, %v2522, 0
      %v2577 = vsel %vm366, %v2523, 0
      %v2580 = vsel %vm366, %v2524, 0
      %v2583 = vsel %vm421, %v2527, 0
      %2585 = vmatprep.subr.bf16.mxu0 0
      %2586 = vmatpush1.bf16.msra.mxu0 0
      %2587 = vmatprep.subr.bf16.mxu0 0
      %2588 = vmatpush1.bf16.msra.mxu0 0
      %2589 = vmatprep.subr.bf16.mxu0 0
      %2590 = vmatpush1.bf16.msra.mxu0 0
      %2591 = vmatprep.subr.bf16.mxu0 0
      %2592 = vmatpush1.bf16.msra.mxu0 0
      %2593 = vmatprep.subr.bf16.mxu0 0
      %2594 = vmatpush1.bf16.msra.mxu0 0
      %2595 = vmatprep.subr.bf16.mxu0 0
      %2596 = vmatpush1.bf16.msra.mxu0 0
      %2597 = vmatprep.subr.bf16.mxu0 0
      %2598 = vmatpush1.bf16.msra.mxu0 0
      %2599 = vmatprep.subr.bf16.mxu0 0
      %2600 = vmatpush1.bf16.msra.mxu0 %v2583
      %2601 = vmatprep.subr.bf16.mxu0 0
      %2602 = vmatpush2.bf16.msra.mxu0 0
      %2603 = vmatprep.subr.bf16.mxu0 0
      %2604 = vmatpush2.bf16.msra.mxu0 0
      %2605 = vmatprep.subr.bf16.mxu0 0
      %2606 = vmatpush2.bf16.msra.mxu0 0
      %2607 = vmatprep.subr.bf16.mxu0 0
      %2608 = vmatpush2.bf16.msra.mxu0 0
      %2609 = vmatprep.subr.bf16.mxu0 0
      %2610 = vmatpush2.bf16.msra.mxu0 0
      %2611 = vmatprep.subr.bf16.mxu0 0
      %2612 = vmatpush2.bf16.msra.mxu0 0
      %2613 = vmatprep.subr.bf16.mxu0 0
      %2614 = vmatpush2.bf16.msra.mxu0 0
      %2615 = vmatprep.subr.bf16.mxu0 0
      %2616 = vmatpush2.bf16.msra.mxu0 0
      %2617 = vmatprep.mubr.bf16.mxu0 0
      %2618 = vmatmul.mubr.bf16.gmra.mxu0 %v2529
      %v2619 = vpop.f32.mrf.mxu0
      %v2620 = vadd.f32 0.0, %v2619
      %v2621 = vpop.f32.mrf.mxu0
      %v2622 = vpop.f32.mrf.mxu0
      %v2623 = vadd.f32 0.0, %v2622
      %v2624 = vpop.f32.mrf.mxu0
      %2625 = vmatprep.mubr.bf16.mxu0 0
      %2626 = vmatmul.mubr.bf16.gmra.mxu0 %v2532
      %v2627 = vpop.f32.mrf.mxu0
      %v2628 = vadd.f32 0.0, %v2627
      %v2629 = vpop.f32.mrf.mxu0
      %v2630 = vpop.f32.mrf.mxu0
      %v2631 = vadd.f32 0.0, %v2630
      %v2632 = vpop.f32.mrf.mxu0
      %2633 = vmatprep.mubr.bf16.mxu0 0
      %2634 = vmatmul.mubr.bf16.gmra.mxu0 %v2535
      %v2635 = vpop.f32.mrf.mxu0
      %v2636 = vadd.f32 0.0, %v2635
      %v2637 = vpop.f32.mrf.mxu0
      %v2638 = vpop.f32.mrf.mxu0
      %v2639 = vadd.f32 0.0, %v2638
      %v2640 = vpop.f32.mrf.mxu0
      %2641 = vmatprep.mubr.bf16.mxu0 0
      %2642 = vmatmul.mubr.bf16.gmra.mxu0 %v2538
      %v2643 = vpop.f32.mrf.mxu0
      %v2644 = vadd.f32 0.0, %v2643
      %v2645 = vpop.f32.mrf.mxu0
      %v2646 = vpop.f32.mrf.mxu0
      %v2647 = vadd.f32 0.0, %v2646
      %v2648 = vpop.f32.mrf.mxu0
      %2649 = vmatprep.mubr.bf16.mxu0 0
      %2650 = vmatmul.mubr.bf16.gmra.mxu0 %v2541
      %v2651 = vpop.f32.mrf.mxu0
      %v2652 = vadd.f32 0.0, %v2651
      %v2653 = vpop.f32.mrf.mxu0
      %v2654 = vpop.f32.mrf.mxu0
      %v2655 = vadd.f32 0.0, %v2654
      %v2656 = vpop.f32.mrf.mxu0
      %2657 = vmatprep.mubr.bf16.mxu0 0
      %2658 = vmatmul.mubr.bf16.gmra.mxu0 %v2544
      %v2659 = vpop.f32.mrf.mxu0
      %v2660 = vadd.f32 0.0, %v2659
      %v2661 = vpop.f32.mrf.mxu0
      %v2662 = vpop.f32.mrf.mxu0
      %v2663 = vadd.f32 0.0, %v2662
      %v2664 = vpop.f32.mrf.mxu0
      %2665 = vmatprep.mubr.bf16.mxu0 0
      %2666 = vmatmul.mubr.bf16.gmra.mxu0 %v2547
      %v2667 = vpop.f32.mrf.mxu0
      %v2668 = vadd.f32 0.0, %v2667
      %v2669 = vpop.f32.mrf.mxu0
      %v2670 = vpop.f32.mrf.mxu0
      %v2671 = vadd.f32 0.0, %v2670
      %v2672 = vpop.f32.mrf.mxu0
      %2673 = vmatprep.mubr.bf16.mxu0 0
      %2674 = vmatmul.mubr.bf16.gmra.mxu0 %v2550
      %v2675 = vpop.f32.mrf.mxu0
      %v2676 = vadd.f32 0.0, %v2675
      %v2677 = vpop.f32.mrf.mxu0
      %v2678 = vpop.f32.mrf.mxu0
      %v2679 = vadd.f32 0.0, %v2678
      %v2680 = vpop.f32.mrf.mxu0
      %2681 = vmatprep.mubr.bf16.mxu0 0
      %2682 = vmatmul.mubr.bf16.gmra.mxu0 %v2553
      %v2683 = vpop.f32.mrf.mxu0
      %v2684 = vadd.f32 0.0, %v2683
      %v2685 = vpop.f32.mrf.mxu0
      %v2686 = vpop.f32.mrf.mxu0
      %v2687 = vadd.f32 0.0, %v2686
      %v2688 = vpop.f32.mrf.mxu0
      %2689 = vmatprep.mubr.bf16.mxu0 0
      %2690 = vmatmul.mubr.bf16.gmra.mxu0 %v2556
      %v2691 = vpop.f32.mrf.mxu0
      %v2692 = vadd.f32 0.0, %v2691
      %v2693 = vpop.f32.mrf.mxu0
      %v2694 = vpop.f32.mrf.mxu0
      %v2695 = vadd.f32 0.0, %v2694
      %v2696 = vpop.f32.mrf.mxu0
      %2697 = vmatprep.mubr.bf16.mxu0 0
      %2698 = vmatmul.mubr.bf16.gmra.mxu0 %v2559
      %v2699 = vpop.f32.mrf.mxu0
      %v2700 = vadd.f32 0.0, %v2699
      %v2701 = vpop.f32.mrf.mxu0
      %v2702 = vpop.f32.mrf.mxu0
      %v2703 = vadd.f32 0.0, %v2702
      %v2704 = vpop.f32.mrf.mxu0
      %2705 = vmatprep.mubr.bf16.mxu0 0
      %2706 = vmatmul.mubr.bf16.gmra.mxu0 %v2562
      %v2707 = vpop.f32.mrf.mxu0
      %v2708 = vadd.f32 0.0, %v2707
      %v2709 = vpop.f32.mrf.mxu0
      %v2710 = vpop.f32.mrf.mxu0
      %v2711 = vadd.f32 0.0, %v2710
      %v2712 = vpop.f32.mrf.mxu0
      %2713 = vmatprep.mubr.bf16.mxu0 0
      %2714 = vmatmul.mubr.bf16.gmra.mxu0 %v2565
      %v2715 = vpop.f32.mrf.mxu0
      %v2716 = vadd.f32 0.0, %v2715
      %v2717 = vpop.f32.mrf.mxu0
      %v2718 = vpop.f32.mrf.mxu0
      %v2719 = vadd.f32 0.0, %v2718
      %v2720 = vpop.f32.mrf.mxu0
      %2721 = vmatprep.mubr.bf16.mxu0 0
      %2722 = vmatmul.mubr.bf16.gmra.mxu0 %v2568
      %v2723 = vpop.f32.mrf.mxu0
      %v2724 = vadd.f32 0.0, %v2723
      %v2725 = vpop.f32.mrf.mxu0
      %v2726 = vpop.f32.mrf.mxu0
      %v2727 = vadd.f32 0.0, %v2726
      %v2728 = vpop.f32.mrf.mxu0
      %2729 = vmatprep.mubr.bf16.mxu0 0
      %2730 = vmatmul.mubr.bf16.gmra.mxu0 %v2571
      %v2731 = vpop.f32.mrf.mxu0
      %v2732 = vadd.f32 0.0, %v2731
      %v2733 = vpop.f32.mrf.mxu0
      %v2734 = vpop.f32.mrf.mxu0
      %v2735 = vadd.f32 0.0, %v2734
      %v2736 = vpop.f32.mrf.mxu0
      %2737 = vmatprep.mubr.bf16.mxu0 0
      %2738 = vmatmul.mubr.bf16.gmra.mxu0 %v2574
      %v2739 = vpop.f32.mrf.mxu0
      %v2740 = vadd.f32 0.0, %v2739
      %v2741 = vpop.f32.mrf.mxu0
      %v2742 = vpop.f32.mrf.mxu0
      %v2743 = vadd.f32 0.0, %v2742
      %v2744 = vpop.f32.mrf.mxu0
      %2745 = vmatprep.mubr.bf16.mxu0 0
      %2746 = vmatmul.mubr.bf16.gmra.mxu0 %v2577
      %v2747 = vpop.f32.mrf.mxu0
      %v2748 = vadd.f32 0.0, %v2747
      %v2749 = vpop.f32.mrf.mxu0
      %v2750 = vpop.f32.mrf.mxu0
      %v2751 = vadd.f32 0.0, %v2750
      %v2752 = vpop.f32.mrf.mxu0
      %2753 = vmatprep.mubr.bf16.mxu0 0
      %2754 = vmatmul.mubr.bf16.gmra.mxu0 %v2580
      %v2755 = vpop.f32.mrf.mxu0
      %v2756 = vadd.f32 0.0, %v2755
      %v2757 = vpop.f32.mrf.mxu0
      %v2758 = vpop.f32.mrf.mxu0
      %v2759 = vadd.f32 0.0, %v2758
      %v2760 = vpop.f32.mrf.mxu0
      %2761 = vdwg.mxu0
      %v2762 = vadd.f32 %v2435, %v2620
      %v2763 = vadd.f32 %v2436, %v2623
      %v2764 = vadd.f32 %v2437, %v2628
      %v2765 = vadd.f32 %v2438, %v2631
      %v2766 = vadd.f32 %v2439, %v2636
      %v2767 = vadd.f32 %v2440, %v2639
      %v2768 = vadd.f32 %v2441, %v2644
      %v2769 = vadd.f32 %v2442, %v2647
      %v2770 = vadd.f32 %v2443, %v2652
      %v2771 = vadd.f32 %v2444, %v2655
      %v2772 = vadd.f32 %v2445, %v2660
      %v2773 = vadd.f32 %v2446, %v2663
      %v2774 = vadd.f32 %v2447, %v2668
      %v2775 = vadd.f32 %v2448, %v2671
      %v2776 = vadd.f32 %v2449, %v2676
      %v2777 = vadd.f32 %v2450, %v2679
      %v2778 = vadd.f32 %v2451, %v2684
      %v2779 = vadd.f32 %v2452, %v2687
      %v2780 = vadd.f32 %v2453, %v2692
      %v2781 = vadd.f32 %v2454, %v2695
      %v2782 = vadd.f32 %v2455, %v2700
      %v2783 = vadd.f32 %v2456, %v2703
      %v2784 = vadd.f32 %v2457, %v2708
      %v2785 = vadd.f32 %v2458, %v2711
      %v2786 = vadd.f32 %v2459, %v2716
      %v2787 = vadd.f32 %v2460, %v2719
      %v2788 = vadd.f32 %v2461, %v2724
      %v2789 = vadd.f32 %v2462, %v2727
      %v2790 = vadd.f32 %v2463, %v2732
      %v2791 = vadd.f32 %v2464, %v2735
      %v2792 = vadd.f32 %v2465, %v2740
      %v2793 = vadd.f32 %v2466, %v2743
      %v2794 = vadd.f32 %v2467, %v2748
      %v2795 = vadd.f32 %v2468, %v2751
      %v2796 = vadd.f32 %v2469, %v2756
      %v2797 = vadd.f32 %v2470, %v2759
      %v2798 = vld [vmem:[%s246 + $0x26] sm:$0xff]
      %v2799 = vld [vmem:[%s246 + $0x2e] sm:$0xff]
      %v2800 = vld [vmem:[%s246 + $0x36] sm:$0xff]
      %v2801 = vld [vmem:[%s246 + $0x3e] sm:$0xff]
      %v2802 = vld [vmem:[%s246 + $0x46] sm:$0xff]
      %v2803 = vld [vmem:[%s246 + $0x4e] sm:$0xff]
      %v2804 = vld [vmem:[%s246 + $0x56] sm:$0xff]
      %v2805 = vld [vmem:[%s246 + $0x5e] sm:$0xff]
      %v2806 = vld [vmem:[%s246 + $0x66] sm:$0xff]
      %v2807 = vld [vmem:[%s246 + $0x6e] sm:$0xff]
      %v2808 = vld [vmem:[%s246 + $0x76] sm:$0xff]
      %v2809 = vld [vmem:[%s246 + $0x7e] sm:$0xff]
      %v2810 = vld [vmem:[%s246 + $0x86] sm:$0xff]
      %v2811 = vld [vmem:[%s246 + $0x8e] sm:$0xff]
      %v2812 = vld [vmem:[%s246 + $0x96] sm:$0xff]
      %v2813 = vld [vmem:[%s246 + $0x9e] sm:$0xff]
      %v2814 = vld [vmem:[%s246 + $0xa6] sm:$0xff]
      %v2815 = vld [vmem:[%s246 + $0xae] sm:$0xff]
      %v2816 = vld [vmem:[%s246 + $0xb6] sm:$0xff]
      %v2817 = vld [vmem:[%s246 + $0xbe] sm:$0xff]
      %v2818 = vld [vmem:[%s246 + $0xc6] sm:$0xff]
      %v2819 = vld [vmem:[%s246 + $0xce] sm:$0xff]
      %v2820 = vld [vmem:[%s246 + $0xd6] sm:$0xff]
      %v2821 = vld [vmem:[%s246 + $0xde] sm:$0xff]
      %v2822 = vld [vmem:[%s246 + $0xe6] sm:$0xff]
      %v2823 = vld [vmem:[%s246 + $0xee] sm:$0xff]
      %v2824 = vld [vmem:[%s246 + $0xf6] sm:$0xff]
      %v2825 = vld [vmem:[%s246 + $0xfe] sm:$0xff]
      %v2826 = vld [vmem:[%s246 + $0x106] sm:$0xff]
      %v2827 = vld [vmem:[%s246 + $0x10e] sm:$0xff]
      %v2828 = vld [vmem:[%s246 + $0x116] sm:$0xff]
      %v2829 = vld [vmem:[%s246 + $0x11e] sm:$0xff]
      %v2830 = vld [vmem:[%s246 + $0x126] sm:$0xff]
      %v2831 = vld [vmem:[%s246 + $0x12e] sm:$0xff]
      %v2832 = vld [vmem:[%s246 + $0x136] sm:$0xff]
      %v2833 = vld [vmem:[%s246 + $0x13e] sm:$0xff]
      %v2834 = vpack.c.bf16 %v2799, %v2798
      %v2835 = vpack.c.bf16 %v2801, %v2800
      %v2836 = vpack.c.bf16 %v2803, %v2802
      %v2837 = vpack.c.bf16 %v2805, %v2804
      %v2838 = vpack.c.bf16 %v2807, %v2806
      %v2839 = vpack.c.bf16 %v2809, %v2808
      %v2840 = vpack.c.bf16 %v2811, %v2810
      %v2841 = vpack.c.bf16 %v2813, %v2812
      %v2842 = vpack.c.bf16 %v2815, %v2814
      %v2843 = vpack.c.bf16 %v2817, %v2816
      %v2844 = vpack.c.bf16 %v2819, %v2818
      %v2845 = vpack.c.bf16 %v2821, %v2820
      %v2846 = vpack.c.bf16 %v2823, %v2822
      %v2847 = vpack.c.bf16 %v2825, %v2824
      %v2848 = vpack.c.bf16 %v2827, %v2826
      %v2849 = vpack.c.bf16 %v2829, %v2828
      %v2850 = vpack.c.bf16 %v2831, %v2830
      %v2851 = vpack.c.bf16 %v2833, %v2832
      %s2852 = scalar_lea.vmem %s1, 64
      %v2853 = vld [vmem:[%s2852] sm:$0xff]
      %v2854 = vpack.c.bf16 %v2853, %v2853
      %v2856 = vsel %vm366, %v2834, 0
      %v2859 = vsel %vm366, %v2835, 0
      %v2862 = vsel %vm366, %v2836, 0
      %v2865 = vsel %vm366, %v2837, 0
      %v2868 = vsel %vm366, %v2838, 0
      %v2871 = vsel %vm366, %v2839, 0
      %v2874 = vsel %vm366, %v2840, 0
      %v2877 = vsel %vm366, %v2841, 0
      %v2880 = vsel %vm366, %v2842, 0
      %v2883 = vsel %vm366, %v2843, 0
      %v2886 = vsel %vm366, %v2844, 0
      %v2889 = vsel %vm366, %v2845, 0
      %v2892 = vsel %vm366, %v2846, 0
      %v2895 = vsel %vm366, %v2847, 0
      %v2898 = vsel %vm366, %v2848, 0
      %v2901 = vsel %vm366, %v2849, 0
      %v2904 = vsel %vm366, %v2850, 0
      %v2907 = vsel %vm366, %v2851, 0
      %v2910 = vsel %vm421, %v2854, 0
      %2912 = vmatprep.subr.bf16.mxu0 0
      %2913 = vmatpush1.bf16.msra.mxu0 0
      %2914 = vmatprep.subr.bf16.mxu0 0
      %2915 = vmatpush1.bf16.msra.mxu0 0
      %2916 = vmatprep.subr.bf16.mxu0 0
      %2917 = vmatpush1.bf16.msra.mxu0 0
      %2918 = vmatprep.subr.bf16.mxu0 0
      %2919 = vmatpush1.bf16.msra.mxu0 0
      %2920 = vmatprep.subr.bf16.mxu0 0
      %2921 = vmatpush1.bf16.msra.mxu0 0
      %2922 = vmatprep.subr.bf16.mxu0 0
      %2923 = vmatpush1.bf16.msra.mxu0 0
      %2924 = vmatprep.subr.bf16.mxu0 0
      %2925 = vmatpush1.bf16.msra.mxu0 0
      %2926 = vmatprep.subr.bf16.mxu0 0
      %2927 = vmatpush1.bf16.msra.mxu0 %v2910
      %2928 = vmatprep.subr.bf16.mxu0 0
      %2929 = vmatpush2.bf16.msra.mxu0 0
      %2930 = vmatprep.subr.bf16.mxu0 0
      %2931 = vmatpush2.bf16.msra.mxu0 0
      %2932 = vmatprep.subr.bf16.mxu0 0
      %2933 = vmatpush2.bf16.msra.mxu0 0
      %2934 = vmatprep.subr.bf16.mxu0 0
      %2935 = vmatpush2.bf16.msra.mxu0 0
      %2936 = vmatprep.subr.bf16.mxu0 0
      %2937 = vmatpush2.bf16.msra.mxu0 0
      %2938 = vmatprep.subr.bf16.mxu0 0
      %2939 = vmatpush2.bf16.msra.mxu0 0
      %2940 = vmatprep.subr.bf16.mxu0 0
      %2941 = vmatpush2.bf16.msra.mxu0 0
      %2942 = vmatprep.subr.bf16.mxu0 0
      %2943 = vmatpush2.bf16.msra.mxu0 0
      %2944 = vmatprep.mubr.bf16.mxu0 0
      %2945 = vmatmul.mubr.bf16.gmra.mxu0 %v2856
      %v2946 = vpop.f32.mrf.mxu0
      %v2947 = vadd.f32 0.0, %v2946
      %v2948 = vpop.f32.mrf.mxu0
      %v2949 = vpop.f32.mrf.mxu0
      %v2950 = vadd.f32 0.0, %v2949
      %v2951 = vpop.f32.mrf.mxu0
      %2952 = vmatprep.mubr.bf16.mxu0 0
      %2953 = vmatmul.mubr.bf16.gmra.mxu0 %v2859
      %v2954 = vpop.f32.mrf.mxu0
      %v2955 = vadd.f32 0.0, %v2954
      %v2956 = vpop.f32.mrf.mxu0
      %v2957 = vpop.f32.mrf.mxu0
      %v2958 = vadd.f32 0.0, %v2957
      %v2959 = vpop.f32.mrf.mxu0
      %2960 = vmatprep.mubr.bf16.mxu0 0
      %2961 = vmatmul.mubr.bf16.gmra.mxu0 %v2862
      %v2962 = vpop.f32.mrf.mxu0
      %v2963 = vadd.f32 0.0, %v2962
      %v2964 = vpop.f32.mrf.mxu0
      %v2965 = vpop.f32.mrf.mxu0
      %v2966 = vadd.f32 0.0, %v2965
      %v2967 = vpop.f32.mrf.mxu0
      %2968 = vmatprep.mubr.bf16.mxu0 0
      %2969 = vmatmul.mubr.bf16.gmra.mxu0 %v2865
      %v2970 = vpop.f32.mrf.mxu0
      %v2971 = vadd.f32 0.0, %v2970
      %v2972 = vpop.f32.mrf.mxu0
      %v2973 = vpop.f32.mrf.mxu0
      %v2974 = vadd.f32 0.0, %v2973
      %v2975 = vpop.f32.mrf.mxu0
      %2976 = vmatprep.mubr.bf16.mxu0 0
      %2977 = vmatmul.mubr.bf16.gmra.mxu0 %v2868
      %v2978 = vpop.f32.mrf.mxu0
      %v2979 = vadd.f32 0.0, %v2978
      %v2980 = vpop.f32.mrf.mxu0
      %v2981 = vpop.f32.mrf.mxu0
      %v2982 = vadd.f32 0.0, %v2981
      %v2983 = vpop.f32.mrf.mxu0
      %2984 = vmatprep.mubr.bf16.mxu0 0
      %2985 = vmatmul.mubr.bf16.gmra.mxu0 %v2871
      %v2986 = vpop.f32.mrf.mxu0
      %v2987 = vadd.f32 0.0, %v2986
      %v2988 = vpop.f32.mrf.mxu0
      %v2989 = vpop.f32.mrf.mxu0
      %v2990 = vadd.f32 0.0, %v2989
      %v2991 = vpop.f32.mrf.mxu0
      %2992 = vmatprep.mubr.bf16.mxu0 0
      %2993 = vmatmul.mubr.bf16.gmra.mxu0 %v2874
      %v2994 = vpop.f32.mrf.mxu0
      %v2995 = vadd.f32 0.0, %v2994
      %v2996 = vpop.f32.mrf.mxu0
      %v2997 = vpop.f32.mrf.mxu0
      %v2998 = vadd.f32 0.0, %v2997
      %v2999 = vpop.f32.mrf.mxu0
      %3000 = vmatprep.mubr.bf16.mxu0 0
      %3001 = vmatmul.mubr.bf16.gmra.mxu0 %v2877
      %v3002 = vpop.f32.mrf.mxu0
      %v3003 = vadd.f32 0.0, %v3002
      %v3004 = vpop.f32.mrf.mxu0
      %v3005 = vpop.f32.mrf.mxu0
      %v3006 = vadd.f32 0.0, %v3005
      %v3007 = vpop.f32.mrf.mxu0
      %3008 = vmatprep.mubr.bf16.mxu0 0
      %3009 = vmatmul.mubr.bf16.gmra.mxu0 %v2880
      %v3010 = vpop.f32.mrf.mxu0
      %v3011 = vadd.f32 0.0, %v3010
      %v3012 = vpop.f32.mrf.mxu0
      %v3013 = vpop.f32.mrf.mxu0
      %v3014 = vadd.f32 0.0, %v3013
      %v3015 = vpop.f32.mrf.mxu0
      %3016 = vmatprep.mubr.bf16.mxu0 0
      %3017 = vmatmul.mubr.bf16.gmra.mxu0 %v2883
      %v3018 = vpop.f32.mrf.mxu0
      %v3019 = vadd.f32 0.0, %v3018
      %v3020 = vpop.f32.mrf.mxu0
      %v3021 = vpop.f32.mrf.mxu0
      %v3022 = vadd.f32 0.0, %v3021
      %v3023 = vpop.f32.mrf.mxu0
      %3024 = vmatprep.mubr.bf16.mxu0 0
      %3025 = vmatmul.mubr.bf16.gmra.mxu0 %v2886
      %v3026 = vpop.f32.mrf.mxu0
      %v3027 = vadd.f32 0.0, %v3026
      %v3028 = vpop.f32.mrf.mxu0
      %v3029 = vpop.f32.mrf.mxu0
      %v3030 = vadd.f32 0.0, %v3029
      %v3031 = vpop.f32.mrf.mxu0
      %3032 = vmatprep.mubr.bf16.mxu0 0
      %3033 = vmatmul.mubr.bf16.gmra.mxu0 %v2889
      %v3034 = vpop.f32.mrf.mxu0
      %v3035 = vadd.f32 0.0, %v3034
      %v3036 = vpop.f32.mrf.mxu0
      %v3037 = vpop.f32.mrf.mxu0
      %v3038 = vadd.f32 0.0, %v3037
      %v3039 = vpop.f32.mrf.mxu0
      %3040 = vmatprep.mubr.bf16.mxu0 0
      %3041 = vmatmul.mubr.bf16.gmra.mxu0 %v2892
      %v3042 = vpop.f32.mrf.mxu0
      %v3043 = vadd.f32 0.0, %v3042
      %v3044 = vpop.f32.mrf.mxu0
      %v3045 = vpop.f32.mrf.mxu0
      %v3046 = vadd.f32 0.0, %v3045
      %v3047 = vpop.f32.mrf.mxu0
      %3048 = vmatprep.mubr.bf16.mxu0 0
      %3049 = vmatmul.mubr.bf16.gmra.mxu0 %v2895
      %v3050 = vpop.f32.mrf.mxu0
      %v3051 = vadd.f32 0.0, %v3050
      %v3052 = vpop.f32.mrf.mxu0
      %v3053 = vpop.f32.mrf.mxu0
      %v3054 = vadd.f32 0.0, %v3053
      %v3055 = vpop.f32.mrf.mxu0
      %3056 = vmatprep.mubr.bf16.mxu0 0
      %3057 = vmatmul.mubr.bf16.gmra.mxu0 %v2898
      %v3058 = vpop.f32.mrf.mxu0
      %v3059 = vadd.f32 0.0, %v3058
      %v3060 = vpop.f32.mrf.mxu0
      %v3061 = vpop.f32.mrf.mxu0
      %v3062 = vadd.f32 0.0, %v3061
      %v3063 = vpop.f32.mrf.mxu0
      %3064 = vmatprep.mubr.bf16.mxu0 0
      %3065 = vmatmul.mubr.bf16.gmra.mxu0 %v2901
      %v3066 = vpop.f32.mrf.mxu0
      %v3067 = vadd.f32 0.0, %v3066
      %v3068 = vpop.f32.mrf.mxu0
      %v3069 = vpop.f32.mrf.mxu0
      %v3070 = vadd.f32 0.0, %v3069
      %v3071 = vpop.f32.mrf.mxu0
      %3072 = vmatprep.mubr.bf16.mxu0 0
      %3073 = vmatmul.mubr.bf16.gmra.mxu0 %v2904
      %v3074 = vpop.f32.mrf.mxu0
      %v3075 = vadd.f32 0.0, %v3074
      %v3076 = vpop.f32.mrf.mxu0
      %v3077 = vpop.f32.mrf.mxu0
      %v3078 = vadd.f32 0.0, %v3077
      %v3079 = vpop.f32.mrf.mxu0
      %3080 = vmatprep.mubr.bf16.mxu0 0
      %3081 = vmatmul.mubr.bf16.gmra.mxu0 %v2907
      %v3082 = vpop.f32.mrf.mxu0
      %v3083 = vadd.f32 0.0, %v3082
      %v3084 = vpop.f32.mrf.mxu0
      %v3085 = vpop.f32.mrf.mxu0
      %v3086 = vadd.f32 0.0, %v3085
      %v3087 = vpop.f32.mrf.mxu0
      %3088 = vdwg.mxu0
      %v3089 = vadd.f32 %v2762, %v2947
      %v3090 = vadd.f32 %v2763, %v2950
      %v3091 = vadd.f32 %v2764, %v2955
      %v3092 = vadd.f32 %v2765, %v2958
      %v3093 = vadd.f32 %v2766, %v2963
      %v3094 = vadd.f32 %v2767, %v2966
      %v3095 = vadd.f32 %v2768, %v2971
      %v3096 = vadd.f32 %v2769, %v2974
      %v3097 = vadd.f32 %v2770, %v2979
      %v3098 = vadd.f32 %v2771, %v2982
      %v3099 = vadd.f32 %v2772, %v2987
      %v3100 = vadd.f32 %v2773, %v2990
      %v3101 = vadd.f32 %v2774, %v2995
      %v3102 = vadd.f32 %v2775, %v2998
      %v3103 = vadd.f32 %v2776, %v3003
      %v3104 = vadd.f32 %v2777, %v3006
      %v3105 = vadd.f32 %v2778, %v3011
      %v3106 = vadd.f32 %v2779, %v3014
      %v3107 = vadd.f32 %v2780, %v3019
      %v3108 = vadd.f32 %v2781, %v3022
      %v3109 = vadd.f32 %v2782, %v3027
      %v3110 = vadd.f32 %v2783, %v3030
      %v3111 = vadd.f32 %v2784, %v3035
      %v3112 = vadd.f32 %v2785, %v3038
      %v3113 = vadd.f32 %v2786, %v3043
      %v3114 = vadd.f32 %v2787, %v3046
      %v3115 = vadd.f32 %v2788, %v3051
      %v3116 = vadd.f32 %v2789, %v3054
      %v3117 = vadd.f32 %v2790, %v3059
      %v3118 = vadd.f32 %v2791, %v3062
      %v3119 = vadd.f32 %v2792, %v3067
      %v3120 = vadd.f32 %v2793, %v3070
      %v3121 = vadd.f32 %v2794, %v3075
      %v3122 = vadd.f32 %v2795, %v3078
      %v3123 = vadd.f32 %v2796, %v3083
      %v3124 = vadd.f32 %v2797, %v3086
      %v3125 = vld [vmem:[%s2] sm:$0x1]
      %v3127 = vlaneseq
      %v3128 = vshrl.u32 %v3127, 7
      %v3129 = vsub.s32 0, %v3128
      %v3130 = vrot.slane %v3125, %v3129
      %v3132 = vadd.f32 %v3089, %v3130
      %v3133 = vadd.f32 %v3090, %v3130
      %v3134 = vadd.f32 %v3091, %v3130
      %v3135 = vadd.f32 %v3092, %v3130
      %v3136 = vadd.f32 %v3093, %v3130
      %v3137 = vadd.f32 %v3094, %v3130
      %v3138 = vadd.f32 %v3095, %v3130
      %v3139 = vadd.f32 %v3096, %v3130
      %v3140 = vadd.f32 %v3097, %v3130
      %v3141 = vadd.f32 %v3098, %v3130
      %v3142 = vadd.f32 %v3099, %v3130
      %v3143 = vadd.f32 %v3100, %v3130
      %v3144 = vadd.f32 %v3101, %v3130
      %v3145 = vadd.f32 %v3102, %v3130
      %v3146 = vadd.f32 %v3103, %v3130
      %v3147 = vadd.f32 %v3104, %v3130
      %v3148 = vadd.f32 %v3105, %v3130
      %v3149 = vadd.f32 %v3106, %v3130
      %v3150 = vadd.f32 %v3107, %v3130
      %v3151 = vadd.f32 %v3108, %v3130
      %v3152 = vadd.f32 %v3109, %v3130
      %v3153 = vadd.f32 %v3110, %v3130
      %v3154 = vadd.f32 %v3111, %v3130
      %v3155 = vadd.f32 %v3112, %v3130
      %v3156 = vadd.f32 %v3113, %v3130
      %v3157 = vadd.f32 %v3114, %v3130
      %v3158 = vadd.f32 %v3115, %v3130
      %v3159 = vadd.f32 %v3116, %v3130
      %v3160 = vadd.f32 %v3117, %v3130
      %v3161 = vadd.f32 %v3118, %v3130
      %v3162 = vadd.f32 %v3119, %v3130
      %v3163 = vadd.f32 %v3120, %v3130
      %v3164 = vadd.f32 %v3121, %v3130
      %v3165 = vadd.f32 %v3122, %v3130
      %v3166 = vadd.f32 %v3123, %v3130
      %v3167 = vadd.f32 %v3124, %v3130
      %v3168 = vmax.f32 %v3132, 0.0
      %v3169 = vmax.f32 %v3133, 0.0
      %v3170 = vmax.f32 %v3134, 0.0
      %v3171 = vmax.f32 %v3135, 0.0
      %v3172 = vmax.f32 %v3136, 0.0
      %v3173 = vmax.f32 %v3137, 0.0
      %v3174 = vmax.f32 %v3138, 0.0
      %v3175 = vmax.f32 %v3139, 0.0
      %v3176 = vmax.f32 %v3140, 0.0
      %v3177 = vmax.f32 %v3141, 0.0
      %v3178 = vmax.f32 %v3142, 0.0
      %v3179 = vmax.f32 %v3143, 0.0
      %v3180 = vmax.f32 %v3144, 0.0
      %v3181 = vmax.f32 %v3145, 0.0
      %v3182 = vmax.f32 %v3146, 0.0
      %v3183 = vmax.f32 %v3147, 0.0
      %v3184 = vmax.f32 %v3148, 0.0
      %v3185 = vmax.f32 %v3149, 0.0
      %v3186 = vmax.f32 %v3150, 0.0
      %v3187 = vmax.f32 %v3151, 0.0
      %v3188 = vmax.f32 %v3152, 0.0
      %v3189 = vmax.f32 %v3153, 0.0
      %v3190 = vmax.f32 %v3154, 0.0
      %v3191 = vmax.f32 %v3155, 0.0
      %v3192 = vmax.f32 %v3156, 0.0
      %v3193 = vmax.f32 %v3157, 0.0
      %v3194 = vmax.f32 %v3158, 0.0
      %v3195 = vmax.f32 %v3159, 0.0
      %v3196 = vmax.f32 %v3160, 0.0
      %v3197 = vmax.f32 %v3161, 0.0
      %v3198 = vmax.f32 %v3162, 0.0
      %v3199 = vmax.f32 %v3163, 0.0
      %v3200 = vmax.f32 %v3164, 0.0
      %v3201 = vmax.f32 %v3165, 0.0
      %v3202 = vmax.f32 %v3166, 0.0
      %v3203 = vmax.f32 %v3167, 0.0
      %v3204 = vld [vmem:[%s5] sm:$0xff]
      %v3205 = vld [vmem:[%s5 + $0x8] sm:$0xff]
      %v3206 = vld [vmem:[%s5 + $0x10] sm:$0xff]
      %v3207 = vld [vmem:[%s5 + $0x18] sm:$0xff]
      %v3208 = vld [vmem:[%s5 + $0x20] sm:$0xff]
      %v3209 = vld [vmem:[%s5 + $0x28] sm:$0xff]
      %v3210 = vld [vmem:[%s5 + $0x30] sm:$0xff]
      %v3211 = vld [vmem:[%s5 + $0x38] sm:$0xff]
      %v3212 = vld [vmem:[%s5 + $0x40] sm:$0xff]
      %v3213 = vld [vmem:[%s5 + $0x48] sm:$0xff]
      %v3214 = vld [vmem:[%s5 + $0x50] sm:$0xff]
      %v3215 = vld [vmem:[%s5 + $0x58] sm:$0xff]
      %v3216 = vld [vmem:[%s5 + $0x60] sm:$0xff]
      %v3217 = vld [vmem:[%s5 + $0x68] sm:$0xff]
      %v3218 = vld [vmem:[%s5 + $0x70] sm:$0xff]
      %v3219 = vld [vmem:[%s5 + $0x78] sm:$0xff]
      %v3220 = vld [vmem:[%s5 + $0x80] sm:$0xff]
      %v3221 = vld [vmem:[%s5 + $0x88] sm:$0xff]
      %v3222 = vld [vmem:[%s5 + $0x90] sm:$0xff]
      %v3223 = vld [vmem:[%s5 + $0x98] sm:$0xff]
      %v3224 = vld [vmem:[%s5 + $0xa0] sm:$0xff]
      %v3225 = vld [vmem:[%s5 + $0xa8] sm:$0xff]
      %v3226 = vld [vmem:[%s5 + $0xb0] sm:$0xff]
      %v3227 = vld [vmem:[%s5 + $0xb8] sm:$0xff]
      %v3228 = vld [vmem:[%s5 + $0xc0] sm:$0xff]
      %v3229 = vld [vmem:[%s5 + $0xc8] sm:$0xff]
      %v3230 = vld [vmem:[%s5 + $0xd0] sm:$0xff]
      %v3231 = vld [vmem:[%s5 + $0xd8] sm:$0xff]
      %v3232 = vld [vmem:[%s5 + $0xe0] sm:$0xff]
      %v3233 = vld [vmem:[%s5 + $0xe8] sm:$0xff]
      %v3234 = vld [vmem:[%s5 + $0xf0] sm:$0xff]
      %v3235 = vld [vmem:[%s5 + $0xf8] sm:$0xff]
      %v3236 = vld [vmem:[%s5 + $0x100] sm:$0xff]
      %v3237 = vld [vmem:[%s5 + $0x108] sm:$0xff]
      %v3238 = vld [vmem:[%s5 + $0x110] sm:$0xff]
      %v3239 = vld [vmem:[%s5 + $0x118] sm:$0xff]
      %3241 = vset.pattern.permute.xlu0 0
      %3242 = vperm.xlu0 %3241, %v3204
      %v3243 = vpop.permute.xlu0 %3242
      %3246 = vset.pattern.permute.xlu0 0
      %3247 = vperm.xlu0 %3246, %v3205
      %v3248 = vpop.permute.xlu0 %3247
      %3251 = vset.pattern.permute.xlu0 0
      %3252 = vperm.xlu0 %3251, %v3206
      %v3253 = vpop.permute.xlu0 %3252
      %3256 = vset.pattern.permute.xlu0 0
      %3257 = vperm.xlu0 %3256, %v3207
      %v3258 = vpop.permute.xlu0 %3257
      %3261 = vset.pattern.permute.xlu0 0
      %3262 = vperm.xlu0 %3261, %v3208
      %v3263 = vpop.permute.xlu0 %3262
      %3266 = vset.pattern.permute.xlu0 0
      %3267 = vperm.xlu0 %3266, %v3209
      %v3268 = vpop.permute.xlu0 %3267
      %3271 = vset.pattern.permute.xlu0 0
      %3272 = vperm.xlu0 %3271, %v3210
      %v3273 = vpop.permute.xlu0 %3272
      %3276 = vset.pattern.permute.xlu0 0
      %3277 = vperm.xlu0 %3276, %v3211
      %v3278 = vpop.permute.xlu0 %3277
      %3281 = vset.pattern.permute.xlu0 0
      %3282 = vperm.xlu0 %3281, %v3212
      %v3283 = vpop.permute.xlu0 %3282
      %3286 = vset.pattern.permute.xlu0 0
      %3287 = vperm.xlu0 %3286, %v3213
      %v3288 = vpop.permute.xlu0 %3287
      %3291 = vset.pattern.permute.xlu0 0
      %3292 = vperm.xlu0 %3291, %v3214
      %v3293 = vpop.permute.xlu0 %3292
      %3296 = vset.pattern.permute.xlu0 0
      %3297 = vperm.xlu0 %3296, %v3215
      %v3298 = vpop.permute.xlu0 %3297
      %3301 = vset.pattern.permute.xlu0 0
      %3302 = vperm.xlu0 %3301, %v3216
      %v3303 = vpop.permute.xlu0 %3302
      %3306 = vset.pattern.permute.xlu0 0
      %3307 = vperm.xlu0 %3306, %v3217
      %v3308 = vpop.permute.xlu0 %3307
      %3311 = vset.pattern.permute.xlu0 0
      %3312 = vperm.xlu0 %3311, %v3218
      %v3313 = vpop.permute.xlu0 %3312
      %3316 = vset.pattern.permute.xlu0 0
      %3317 = vperm.xlu0 %3316, %v3219
      %v3318 = vpop.permute.xlu0 %3317
      %3321 = vset.pattern.permute.xlu0 0
      %3322 = vperm.xlu0 %3321, %v3220
      %v3323 = vpop.permute.xlu0 %3322
      %3326 = vset.pattern.permute.xlu0 0
      %3327 = vperm.xlu0 %3326, %v3221
      %v3328 = vpop.permute.xlu0 %3327
      %3331 = vset.pattern.permute.xlu0 0
      %3332 = vperm.xlu0 %3331, %v3222
      %v3333 = vpop.permute.xlu0 %3332
      %3336 = vset.pattern.permute.xlu0 0
      %3337 = vperm.xlu0 %3336, %v3223
      %v3338 = vpop.permute.xlu0 %3337
      %3341 = vset.pattern.permute.xlu0 0
      %3342 = vperm.xlu0 %3341, %v3224
      %v3343 = vpop.permute.xlu0 %3342
      %3346 = vset.pattern.permute.xlu0 0
      %3347 = vperm.xlu0 %3346, %v3225
      %v3348 = vpop.permute.xlu0 %3347
      %3351 = vset.pattern.permute.xlu0 0
      %3352 = vperm.xlu0 %3351, %v3226
      %v3353 = vpop.permute.xlu0 %3352
      %3356 = vset.pattern.permute.xlu0 0
      %3357 = vperm.xlu0 %3356, %v3227
      %v3358 = vpop.permute.xlu0 %3357
      %3361 = vset.pattern.permute.xlu0 0
      %3362 = vperm.xlu0 %3361, %v3228
      %v3363 = vpop.permute.xlu0 %3362
      %3366 = vset.pattern.permute.xlu0 0
      %3367 = vperm.xlu0 %3366, %v3229
      %v3368 = vpop.permute.xlu0 %3367
      %3371 = vset.pattern.permute.xlu0 0
      %3372 = vperm.xlu0 %3371, %v3230
      %v3373 = vpop.permute.xlu0 %3372
      %3376 = vset.pattern.permute.xlu0 0
      %3377 = vperm.xlu0 %3376, %v3231
      %v3378 = vpop.permute.xlu0 %3377
      %3381 = vset.pattern.permute.xlu0 0
      %3382 = vperm.xlu0 %3381, %v3232
      %v3383 = vpop.permute.xlu0 %3382
      %3386 = vset.pattern.permute.xlu0 0
      %3387 = vperm.xlu0 %3386, %v3233
      %v3388 = vpop.permute.xlu0 %3387
      %3391 = vset.pattern.permute.xlu0 0
      %3392 = vperm.xlu0 %3391, %v3234
      %v3393 = vpop.permute.xlu0 %3392
      %3396 = vset.pattern.permute.xlu0 0
      %3397 = vperm.xlu0 %3396, %v3235
      %v3398 = vpop.permute.xlu0 %3397
      %3401 = vset.pattern.permute.xlu0 0
      %3402 = vperm.xlu0 %3401, %v3236
      %v3403 = vpop.permute.xlu0 %3402
      %3406 = vset.pattern.permute.xlu0 0
      %3407 = vperm.xlu0 %3406, %v3237
      %v3408 = vpop.permute.xlu0 %3407
      %3411 = vset.pattern.permute.xlu0 0
      %3412 = vperm.xlu0 %3411, %v3238
      %v3413 = vpop.permute.xlu0 %3412
      %3416 = vset.pattern.permute.xlu0 0
      %3417 = vperm.xlu0 %3416, %v3239
      %v3418 = vpop.permute.xlu0 %3417
      %v3420 = vmul.f32 %v3168, %v3243
      %v3421 = vmul.f32 %v3169, %v3248
      %v3422 = vmul.f32 %v3170, %v3253
      %v3423 = vmul.f32 %v3171, %v3258
      %v3424 = vmul.f32 %v3172, %v3263
      %v3425 = vmul.f32 %v3173, %v3268
      %v3426 = vmul.f32 %v3174, %v3273
      %v3427 = vmul.f32 %v3175, %v3278
      %v3428 = vmul.f32 %v3176, %v3283
      %v3429 = vmul.f32 %v3177, %v3288
      %v3430 = vmul.f32 %v3178, %v3293
      %v3431 = vmul.f32 %v3179, %v3298
      %v3432 = vmul.f32 %v3180, %v3303
      %v3433 = vmul.f32 %v3181, %v3308
      %v3434 = vmul.f32 %v3182, %v3313
      %v3435 = vmul.f32 %v3183, %v3318
      %v3436 = vmul.f32 %v3184, %v3323
      %v3437 = vmul.f32 %v3185, %v3328
      %v3438 = vmul.f32 %v3186, %v3333
      %v3439 = vmul.f32 %v3187, %v3338
      %v3440 = vmul.f32 %v3188, %v3343
      %v3441 = vmul.f32 %v3189, %v3348
      %v3442 = vmul.f32 %v3190, %v3353
      %v3443 = vmul.f32 %v3191, %v3358
      %v3444 = vmul.f32 %v3192, %v3363
      %v3445 = vmul.f32 %v3193, %v3368
      %v3446 = vmul.f32 %v3194, %v3373
      %v3447 = vmul.f32 %v3195, %v3378
      %v3448 = vmul.f32 %v3196, %v3383
      %v3449 = vmul.f32 %v3197, %v3388
      %v3450 = vmul.f32 %v3198, %v3393
      %v3451 = vmul.f32 %v3199, %v3398
      %v3452 = vmul.f32 %v3200, %v3403
      %v3453 = vmul.f32 %v3201, %v3408
      %v3454 = vmul.f32 %v3202, %v3413
      %v3455 = vmul.f32 %v3203, %v3418
      %3456 = vst [vmem:[#allocation2] sm:$0xff] 0.0
      %3457 = vst [vmem:[#allocation2 + $0x8] sm:$0xff] 0.0
      %3458 = vst [vmem:[#allocation2 + $0x10] sm:$0xff] 0.0
      %3459 = vst [vmem:[#allocation2 + $0x18] sm:$0xff] 0.0
      %3460 = vst [vmem:[#allocation2 + $0x20] sm:$0xff] 0.0
      %3461 = vst [vmem:[#allocation2 + $0x28] sm:$0xff] 0.0
      %3462 = vst [vmem:[#allocation2 + $0x30] sm:$0xff] 0.0
      %3463 = vst [vmem:[#allocation2 + $0x38] sm:$0xff] 0.0
      %3464 = vst [vmem:[#allocation2 + $0x40] sm:$0xff] 0.0
      %3465 = vst [vmem:[#allocation2 + $0x48] sm:$0xff] 0.0
      %3466 = vst [vmem:[#allocation2 + $0x50] sm:$0xff] 0.0
      %3467 = vst [vmem:[#allocation2 + $0x58] sm:$0xff] 0.0
      %3468 = vst [vmem:[#allocation2 + $0x60] sm:$0xff] 0.0
      %3469 = vst [vmem:[#allocation2 + $0x68] sm:$0xff] 0.0
      %3470 = vst [vmem:[#allocation2 + $0x70] sm:$0xff] 0.0
      %3471 = vst [vmem:[#allocation2 + $0x78] sm:$0xff] 0.0
      %3472 = vst [vmem:[#allocation2 + $0x80] sm:$0xff] 0.0
      %3473 = vst [vmem:[#allocation2 + $0x88] sm:$0xff] 0.0
      %3474 = vst [vmem:[#allocation2 + $0x90] sm:$0xff] 0.0
      %3475 = vst [vmem:[#allocation2 + $0x98] sm:$0xff] 0.0
      %3476 = vst [vmem:[#allocation2 + $0xa0] sm:$0xff] 0.0
      %3477 = vst [vmem:[#allocation2 + $0xa8] sm:$0xff] 0.0
      %3478 = vst [vmem:[#allocation2 + $0xb0] sm:$0xff] 0.0
      %3479 = vst [vmem:[#allocation2 + $0xb8] sm:$0xff] 0.0
      %3480 = vst [vmem:[#allocation2 + $0xc0] sm:$0xff] 0.0
      %3481 = vst [vmem:[#allocation2 + $0xc8] sm:$0xff] 0.0
      %3482 = vst [vmem:[#allocation2 + $0xd0] sm:$0xff] 0.0
      %3483 = vst [vmem:[#allocation2 + $0xd8] sm:$0xff] 0.0
      %3484 = vst [vmem:[#allocation2 + $0xe0] sm:$0xff] 0.0
      %3485 = vst [vmem:[#allocation2 + $0xe8] sm:$0xff] 0.0
      %3486 = vst [vmem:[#allocation2 + $0xf0] sm:$0xff] 0.0
      %3487 = vst [vmem:[#allocation2 + $0xf8] sm:$0xff] 0.0
      %3488 = vst [vmem:[#allocation2 + $0x100] sm:$0xff] 0.0
      %3489 = vst [vmem:[#allocation2 + $0x108] sm:$0xff] 0.0
      %3490 = vst [vmem:[#allocation2 + $0x110] sm:$0xff] 0.0
      %3491 = vst [vmem:[#allocation2 + $0x118] sm:$0xff] 0.0
      %3492 = vst [vmem:[#allocation2 + $0x120] sm:$0xff] 0.0
      %3493 = vst [vmem:[#allocation2 + $0x128] sm:$0xff] 0.0
      %3494 = vst [vmem:[#allocation2 + $0x130] sm:$0xff] 0.0
      %3495 = vst [vmem:[#allocation2 + $0x138] sm:$0xff] 0.0
      %3496 = vst [vmem:[#allocation2 + $0x140] sm:$0xff] 0.0
      %3497 = vst [vmem:[#allocation2 + $0x148] sm:$0xff] 0.0
      %3498 = vst [vmem:[#allocation2 + $0x18] sm:$0xff] %v3420
      %3499 = vst [vmem:[#allocation2 + $0x20] sm:$0xff] %v3421
      %3500 = vst [vmem:[#allocation2 + $0x28] sm:$0xff] %v3422
      %3501 = vst [vmem:[#allocation2 + $0x30] sm:$0xff] %v3423
      %3502 = vst [vmem:[#allocation2 + $0x38] sm:$0xff] %v3424
      %3503 = vst [vmem:[#allocation2 + $0x40] sm:$0xff] %v3425
      %3504 = vst [vmem:[#allocation2 + $0x48] sm:$0xff] %v3426
      %3505 = vst [vmem:[#allocation2 + $0x50] sm:$0xff] %v3427
      %3506 = vst [vmem:[#allocation2 + $0x58] sm:$0xff] %v3428
      %3507 = vst [vmem:[#allocation2 + $0x60] sm:$0xff] %v3429
      %3508 = vst [vmem:[#allocation2 + $0x68] sm:$0xff] %v3430
      %3509 = vst [vmem:[#allocation2 + $0x70] sm:$0xff] %v3431
      %3510 = vst [vmem:[#allocation2 + $0x78] sm:$0xff] %v3432
      %3511 = vst [vmem:[#allocation2 + $0x80] sm:$0xff] %v3433
      %3512 = vst [vmem:[#allocation2 + $0x88] sm:$0xff] %v3434
      %3513 = vst [vmem:[#allocation2 + $0x90] sm:$0xff] %v3435
      %3514 = vst [vmem:[#allocation2 + $0x98] sm:$0xff] %v3436
      %3515 = vst [vmem:[#allocation2 + $0xa0] sm:$0xff] %v3437
      %3516 = vst [vmem:[#allocation2 + $0xa8] sm:$0xff] %v3438
      %3517 = vst [vmem:[#allocation2 + $0xb0] sm:$0xff] %v3439
      %3518 = vst [vmem:[#allocation2 + $0xb8] sm:$0xff] %v3440
      %3519 = vst [vmem:[#allocation2 + $0xc0] sm:$0xff] %v3441
      %3520 = vst [vmem:[#allocation2 + $0xc8] sm:$0xff] %v3442
      %3521 = vst [vmem:[#allocation2 + $0xd0] sm:$0xff] %v3443
      %3522 = vst [vmem:[#allocation2 + $0xd8] sm:$0xff] %v3444
      %3523 = vst [vmem:[#allocation2 + $0xe0] sm:$0xff] %v3445
      %3524 = vst [vmem:[#allocation2 + $0xe8] sm:$0xff] %v3446
      %3525 = vst [vmem:[#allocation2 + $0xf0] sm:$0xff] %v3447
      %3526 = vst [vmem:[#allocation2 + $0xf8] sm:$0xff] %v3448
      %3527 = vst [vmem:[#allocation2 + $0x100] sm:$0xff] %v3449
      %3528 = vst [vmem:[#allocation2 + $0x108] sm:$0xff] %v3450
      %3529 = vst [vmem:[#allocation2 + $0x110] sm:$0xff] %v3451
      %3530 = vst [vmem:[#allocation2 + $0x118] sm:$0xff] %v3452
      %3531 = vst [vmem:[#allocation2 + $0x120] sm:$0xff] %v3453
      %3532 = vst [vmem:[#allocation2 + $0x128] sm:$0xff] %v3454
      %3533 = vst [vmem:[#allocation2 + $0x130] sm:$0xff] %v3455
      %v3534 = vld [vmem:[#allocation2 + $0x5] sm:$0xff]
      %v3535 = vld [vmem:[#allocation2 + $0xd] sm:$0xff]
      %v3536 = vld [vmem:[#allocation2 + $0x15] sm:$0xff]
      %v3537 = vld [vmem:[#allocation2 + $0x1d] sm:$0xff]
      %v3538 = vld [vmem:[#allocation2 + $0x25] sm:$0xff]
      %v3539 = vld [vmem:[#allocation2 + $0x2d] sm:$0xff]
      %v3540 = vld [vmem:[#allocation2 + $0x35] sm:$0xff]
      %v3541 = vld [vmem:[#allocation2 + $0x3d] sm:$0xff]
      %v3542 = vld [vmem:[#allocation2 + $0x45] sm:$0xff]
      %v3543 = vld [vmem:[#allocation2 + $0x4d] sm:$0xff]
      %v3544 = vld [vmem:[#allocation2 + $0x55] sm:$0xff]
      %v3545 = vld [vmem:[#allocation2 + $0x5d] sm:$0xff]
      %v3546 = vld [vmem:[#allocation2 + $0x65] sm:$0xff]
      %v3547 = vld [vmem:[#allocation2 + $0x6d] sm:$0xff]
      %v3548 = vld [vmem:[#allocation2 + $0x75] sm:$0xff]
      %v3549 = vld [vmem:[#allocation2 + $0x7d] sm:$0xff]
      %v3550 = vld [vmem:[#allocation2 + $0x85] sm:$0xff]
      %v3551 = vld [vmem:[#allocation2 + $0x8d] sm:$0xff]
      %v3552 = vld [vmem:[#allocation2 + $0x95] sm:$0xff]
      %v3553 = vld [vmem:[#allocation2 + $0x9d] sm:$0xff]
      %v3554 = vld [vmem:[#allocation2 + $0xa5] sm:$0xff]
      %v3555 = vld [vmem:[#allocation2 + $0xad] sm:$0xff]
      %v3556 = vld [vmem:[#allocation2 + $0xb5] sm:$0xff]
      %v3557 = vld [vmem:[#allocation2 + $0xbd] sm:$0xff]
      %v3558 = vld [vmem:[#allocation2 + $0xc5] sm:$0xff]
      %v3559 = vld [vmem:[#allocation2 + $0xcd] sm:$0xff]
      %v3560 = vld [vmem:[#allocation2 + $0xd5] sm:$0xff]
      %v3561 = vld [vmem:[#allocation2 + $0xdd] sm:$0xff]
      %v3562 = vld [vmem:[#allocation2 + $0xe5] sm:$0xff]
      %v3563 = vld [vmem:[#allocation2 + $0xed] sm:$0xff]
      %v3564 = vld [vmem:[#allocation2 + $0xf5] sm:$0xff]
      %v3565 = vld [vmem:[#allocation2 + $0xfd] sm:$0xff]
      %v3566 = vld [vmem:[#allocation2 + $0x105] sm:$0xff]
      %v3567 = vld [vmem:[#allocation2 + $0x10d] sm:$0xff]
      %v3568 = vld [vmem:[#allocation2 + $0x115] sm:$0xff]
      %v3569 = vld [vmem:[#allocation2 + $0x11d] sm:$0xff]
      %v3570 = vpack.c.bf16 %v3535, %v3534
      %v3571 = vpack.c.bf16 %v3537, %v3536
      %v3572 = vpack.c.bf16 %v3539, %v3538
      %v3573 = vpack.c.bf16 %v3541, %v3540
      %v3574 = vpack.c.bf16 %v3543, %v3542
      %v3575 = vpack.c.bf16 %v3545, %v3544
      %v3576 = vpack.c.bf16 %v3547, %v3546
      %v3577 = vpack.c.bf16 %v3549, %v3548
      %v3578 = vpack.c.bf16 %v3551, %v3550
      %v3579 = vpack.c.bf16 %v3553, %v3552
      %v3580 = vpack.c.bf16 %v3555, %v3554
      %v3581 = vpack.c.bf16 %v3557, %v3556
      %v3582 = vpack.c.bf16 %v3559, %v3558
      %v3583 = vpack.c.bf16 %v3561, %v3560
      %v3584 = vpack.c.bf16 %v3563, %v3562
      %v3585 = vpack.c.bf16 %v3565, %v3564
      %v3586 = vpack.c.bf16 %v3567, %v3566
      %v3587 = vpack.c.bf16 %v3569, %v3568
      %v3588 = vld [vmem:[%s3] sm:$0xff]
      %v3589 = vld [vmem:[%s3 + $0x8] sm:$0xff]
      %v3590 = vld [vmem:[%s3 + $0x10] sm:$0xff]
      %v3591 = vld [vmem:[%s3 + $0x18] sm:$0xff]
      %v3592 = vld [vmem:[%s3 + $0x20] sm:$0xff]
      %v3593 = vld [vmem:[%s3 + $0x28] sm:$0xff]
      %v3594 = vld [vmem:[%s3 + $0x30] sm:$0xff]
      %v3595 = vld [vmem:[%s3 + $0x38] sm:$0xff]
      %v3596 = vld [vmem:[%s3 + $0x40] sm:$0xff]
      %v3597 = vld [vmem:[%s3 + $0x48] sm:$0xff]
      %v3598 = vld [vmem:[%s3 + $0x50] sm:$0xff]
      %v3599 = vld [vmem:[%s3 + $0x58] sm:$0xff]
      %v3600 = vld [vmem:[%s3 + $0x60] sm:$0xff]
      %v3601 = vld [vmem:[%s3 + $0x68] sm:$0xff]
      %v3602 = vld [vmem:[%s3 + $0x70] sm:$0xff]
      %v3603 = vld [vmem:[%s3 + $0x78] sm:$0xff]
      %v3604 = vpack.c.bf16 %v3589, %v3588
      %v3605 = vpack.c.bf16 %v3591, %v3590
      %v3606 = vpack.c.bf16 %v3593, %v3592
      %v3607 = vpack.c.bf16 %v3595, %v3594
      %v3608 = vpack.c.bf16 %v3597, %v3596
      %v3609 = vpack.c.bf16 %v3599, %v3598
      %v3610 = vpack.c.bf16 %v3601, %v3600
      %v3611 = vpack.c.bf16 %v3603, %v3602
      %v3612 = vld [vmem:[#allocation2 + $0x6] sm:$0xff]
      %v3613 = vld [vmem:[#allocation2 + $0xe] sm:$0xff]
      %v3614 = vld [vmem:[#allocation2 + $0x16] sm:$0xff]
      %v3615 = vld [vmem:[#allocation2 + $0x1e] sm:$0xff]
      %v3616 = vld [vmem:[#allocation2 + $0x26] sm:$0xff]
      %v3617 = vld [vmem:[#allocation2 + $0x2e] sm:$0xff]
      %v3618 = vld [vmem:[#allocation2 + $0x36] sm:$0xff]
      %v3619 = vld [vmem:[#allocation2 + $0x3e] sm:$0xff]
      %v3620 = vld [vmem:[#allocation2 + $0x46] sm:$0xff]
      %v3621 = vld [vmem:[#allocation2 + $0x4e] sm:$0xff]
      %v3622 = vld [vmem:[#allocation2 + $0x56] sm:$0xff]
      %v3623 = vld [vmem:[#allocation2 + $0x5e] sm:$0xff]
      %v3624 = vld [vmem:[#allocation2 + $0x66] sm:$0xff]
      %v3625 = vld [vmem:[#allocation2 + $0x6e] sm:$0xff]
      %v3626 = vld [vmem:[#allocation2 + $0x76] sm:$0xff]
      %v3627 = vld [vmem:[#allocation2 + $0x7e] sm:$0xff]
      %v3628 = vld [vmem:[#allocation2 + $0x86] sm:$0xff]
      %v3629 = vld [vmem:[#allocation2 + $0x8e] sm:$0xff]
      %v3630 = vld [vmem:[#allocation2 + $0x96] sm:$0xff]
      %v3631 = vld [vmem:[#allocation2 + $0x9e] sm:$0xff]
      %v3632 = vld [vmem:[#allocation2 + $0xa6] sm:$0xff]
      %v3633 = vld [vmem:[#allocation2 + $0xae] sm:$0xff]
      %v3634 = vld [vmem:[#allocation2 + $0xb6] sm:$0xff]
      %v3635 = vld [vmem:[#allocation2 + $0xbe] sm:$0xff]
      %v3636 = vld [vmem:[#allocation2 + $0xc6] sm:$0xff]
      %v3637 = vld [vmem:[#allocation2 + $0xce] sm:$0xff]
      %v3638 = vld [vmem:[#allocation2 + $0xd6] sm:$0xff]
      %v3639 = vld [vmem:[#allocation2 + $0xde] sm:$0xff]
      %v3640 = vld [vmem:[#allocation2 + $0xe6] sm:$0xff]
      %v3641 = vld [vmem:[#allocation2 + $0xee] sm:$0xff]
      %v3642 = vld [vmem:[#allocation2 + $0xf6] sm:$0xff]
      %v3643 = vld [vmem:[#allocation2 + $0xfe] sm:$0xff]
      %v3644 = vld [vmem:[#allocation2 + $0x106] sm:$0xff]
      %v3645 = vld [vmem:[#allocation2 + $0x10e] sm:$0xff]
      %v3646 = vld [vmem:[#allocation2 + $0x116] sm:$0xff]
      %v3647 = vld [vmem:[#allocation2 + $0x11e] sm:$0xff]
      %v3648 = vpack.c.bf16 %v3613, %v3612
      %v3649 = vpack.c.bf16 %v3615, %v3614
      %v3650 = vpack.c.bf16 %v3617, %v3616
      %v3651 = vpack.c.bf16 %v3619, %v3618
      %v3652 = vpack.c.bf16 %v3621, %v3620
      %v3653 = vpack.c.bf16 %v3623, %v3622
      %v3654 = vpack.c.bf16 %v3625, %v3624
      %v3655 = vpack.c.bf16 %v3627, %v3626
      %v3656 = vpack.c.bf16 %v3629, %v3628
      %v3657 = vpack.c.bf16 %v3631, %v3630
      %v3658 = vpack.c.bf16 %v3633, %v3632
      %v3659 = vpack.c.bf16 %v3635, %v3634
      %v3660 = vpack.c.bf16 %v3637, %v3636
      %v3661 = vpack.c.bf16 %v3639, %v3638
      %v3662 = vpack.c.bf16 %v3641, %v3640
      %v3663 = vpack.c.bf16 %v3643, %v3642
      %v3664 = vpack.c.bf16 %v3645, %v3644
      %v3665 = vpack.c.bf16 %v3647, %v3646
      %s3666 = scalar_lea.vmem %s3, 128
      %v3667 = vld [vmem:[%s3666] sm:$0xff]
      %v3668 = vld [vmem:[%s3666 + $0x8] sm:$0xff]
      %v3669 = vld [vmem:[%s3666 + $0x10] sm:$0xff]
      %v3670 = vld [vmem:[%s3666 + $0x18] sm:$0xff]
      %v3671 = vld [vmem:[%s3666 + $0x20] sm:$0xff]
      %v3672 = vld [vmem:[%s3666 + $0x28] sm:$0xff]
      %v3673 = vld [vmem:[%s3666 + $0x30] sm:$0xff]
      %v3674 = vld [vmem:[%s3666 + $0x38] sm:$0xff]
      %v3675 = vld [vmem:[%s3666 + $0x40] sm:$0xff]
      %v3676 = vld [vmem:[%s3666 + $0x48] sm:$0xff]
      %v3677 = vld [vmem:[%s3666 + $0x50] sm:$0xff]
      %v3678 = vld [vmem:[%s3666 + $0x58] sm:$0xff]
      %v3679 = vld [vmem:[%s3666 + $0x60] sm:$0xff]
      %v3680 = vld [vmem:[%s3666 + $0x68] sm:$0xff]
      %v3681 = vld [vmem:[%s3666 + $0x70] sm:$0xff]
      %v3682 = vld [vmem:[%s3666 + $0x78] sm:$0xff]
      %v3683 = vpack.c.bf16 %v3668, %v3667
      %v3684 = vpack.c.bf16 %v3670, %v3669
      %v3685 = vpack.c.bf16 %v3672, %v3671
      %v3686 = vpack.c.bf16 %v3674, %v3673
      %v3687 = vpack.c.bf16 %v3676, %v3675
      %v3688 = vpack.c.bf16 %v3678, %v3677
      %v3689 = vpack.c.bf16 %v3680, %v3679
      %v3690 = vpack.c.bf16 %v3682, %v3681
      %3691 = vmatprep.subr.bf16.mxu0 0
      %3692 = vmatpush1.bf16.msra.mxu0 %v3690
      %3693 = vmatprep.subr.bf16.mxu0 0
      %3694 = vmatpush1.bf16.msra.mxu0 %v3689
      %3695 = vmatprep.subr.bf16.mxu0 0
      %3696 = vmatpush1.bf16.msra.mxu0 %v3688
      %3697 = vmatprep.subr.bf16.mxu0 0
      %3698 = vmatpush1.bf16.msra.mxu0 %v3687
      %3699 = vmatprep.subr.bf16.mxu0 0
      %3700 = vmatpush1.bf16.msra.mxu0 %v3686
      %3701 = vmatprep.subr.bf16.mxu0 0
      %3702 = vmatpush1.bf16.msra.mxu0 %v3685
      %3703 = vmatprep.subr.bf16.mxu0 0
      %3704 = vmatpush1.bf16.msra.mxu0 %v3684
      %3705 = vmatprep.subr.bf16.mxu0 0
      %3706 = vmatpush1.bf16.msra.mxu0 %v3683
      %3707 = vmatprep.subr.bf16.mxu0 0
      %3708 = vmatpush2.bf16.msra.mxu0 0
      %3709 = vmatprep.subr.bf16.mxu0 0
      %3710 = vmatpush2.bf16.msra.mxu0 0
      %3711 = vmatprep.subr.bf16.mxu0 0
      %3712 = vmatpush2.bf16.msra.mxu0 0
      %3713 = vmatprep.subr.bf16.mxu0 0
      %3714 = vmatpush2.bf16.msra.mxu0 0
      %3715 = vmatprep.subr.bf16.mxu0 0
      %3716 = vmatpush2.bf16.msra.mxu0 0
      %3717 = vmatprep.subr.bf16.mxu0 0
      %3718 = vmatpush2.bf16.msra.mxu0 0
      %3719 = vmatprep.subr.bf16.mxu0 0
      %3720 = vmatpush2.bf16.msra.mxu0 0
      %3721 = vmatprep.subr.bf16.mxu0 0
      %3722 = vmatpush2.bf16.msra.mxu0 0
      %3723 = vmatprep.mubr.bf16.mxu0 0
      %3724 = vmatmul.mubr.bf16.gmra.mxu0 %v3648
      %v3725 = vpop.f32.mrf.mxu0
      %v3726 = vadd.f32 0.0, %v3725
      %v3727 = vpop.f32.mrf.mxu0
      %v3728 = vpop.f32.mrf.mxu0
      %v3729 = vadd.f32 0.0, %v3728
      %v3730 = vpop.f32.mrf.mxu0
      %3731 = vmatprep.mubr.bf16.mxu0 0
      %3732 = vmatmul.mubr.bf16.gmra.mxu0 %v3649
      %v3733 = vpop.f32.mrf.mxu0
      %v3734 = vadd.f32 0.0, %v3733
      %v3735 = vpop.f32.mrf.mxu0
      %v3736 = vpop.f32.mrf.mxu0
      %v3737 = vadd.f32 0.0, %v3736
      %v3738 = vpop.f32.mrf.mxu0
      %3739 = vmatprep.mubr.bf16.mxu0 0
      %3740 = vmatmul.mubr.bf16.gmra.mxu0 %v3650
      %v3741 = vpop.f32.mrf.mxu0
      %v3742 = vadd.f32 0.0, %v3741
      %v3743 = vpop.f32.mrf.mxu0
      %v3744 = vpop.f32.mrf.mxu0
      %v3745 = vadd.f32 0.0, %v3744
      %v3746 = vpop.f32.mrf.mxu0
      %3747 = vmatprep.mubr.bf16.mxu0 0
      %3748 = vmatmul.mubr.bf16.gmra.mxu0 %v3651
      %v3749 = vpop.f32.mrf.mxu0
      %v3750 = vadd.f32 0.0, %v3749
      %v3751 = vpop.f32.mrf.mxu0
      %v3752 = vpop.f32.mrf.mxu0
      %v3753 = vadd.f32 0.0, %v3752
      %v3754 = vpop.f32.mrf.mxu0
      %3755 = vmatprep.mubr.bf16.mxu0 0
      %3756 = vmatmul.mubr.bf16.gmra.mxu0 %v3652
      %v3757 = vpop.f32.mrf.mxu0
      %v3758 = vadd.f32 0.0, %v3757
      %v3759 = vpop.f32.mrf.mxu0
      %v3760 = vpop.f32.mrf.mxu0
      %v3761 = vadd.f32 0.0, %v3760
      %v3762 = vpop.f32.mrf.mxu0
      %3763 = vmatprep.mubr.bf16.mxu0 0
      %3764 = vmatmul.mubr.bf16.gmra.mxu0 %v3653
      %v3765 = vpop.f32.mrf.mxu0
      %v3766 = vadd.f32 0.0, %v3765
      %v3767 = vpop.f32.mrf.mxu0
      %v3768 = vpop.f32.mrf.mxu0
      %v3769 = vadd.f32 0.0, %v3768
      %v3770 = vpop.f32.mrf.mxu0
      %3771 = vmatprep.mubr.bf16.mxu0 0
      %3772 = vmatmul.mubr.bf16.gmra.mxu0 %v3654
      %v3773 = vpop.f32.mrf.mxu0
      %v3774 = vadd.f32 0.0, %v3773
      %v3775 = vpop.f32.mrf.mxu0
      %v3776 = vpop.f32.mrf.mxu0
      %v3777 = vadd.f32 0.0, %v3776
      %v3778 = vpop.f32.mrf.mxu0
      %3779 = vmatprep.mubr.bf16.mxu0 0
      %3780 = vmatmul.mubr.bf16.gmra.mxu0 %v3655
      %v3781 = vpop.f32.mrf.mxu0
      %v3782 = vadd.f32 0.0, %v3781
      %v3783 = vpop.f32.mrf.mxu0
      %v3784 = vpop.f32.mrf.mxu0
      %v3785 = vadd.f32 0.0, %v3784
      %v3786 = vpop.f32.mrf.mxu0
      %3787 = vmatprep.mubr.bf16.mxu0 0
      %3788 = vmatmul.mubr.bf16.gmra.mxu0 %v3656
      %v3789 = vpop.f32.mrf.mxu0
      %v3790 = vadd.f32 0.0, %v3789
      %v3791 = vpop.f32.mrf.mxu0
      %v3792 = vpop.f32.mrf.mxu0
      %v3793 = vadd.f32 0.0, %v3792
      %v3794 = vpop.f32.mrf.mxu0
      %3795 = vmatprep.mubr.bf16.mxu0 0
      %3796 = vmatmul.mubr.bf16.gmra.mxu0 %v3657
      %v3797 = vpop.f32.mrf.mxu0
      %v3798 = vadd.f32 0.0, %v3797
      %v3799 = vpop.f32.mrf.mxu0
      %v3800 = vpop.f32.mrf.mxu0
      %v3801 = vadd.f32 0.0, %v3800
      %v3802 = vpop.f32.mrf.mxu0
      %3803 = vmatprep.mubr.bf16.mxu0 0
      %3804 = vmatmul.mubr.bf16.gmra.mxu0 %v3658
      %v3805 = vpop.f32.mrf.mxu0
      %v3806 = vadd.f32 0.0, %v3805
      %v3807 = vpop.f32.mrf.mxu0
      %v3808 = vpop.f32.mrf.mxu0
      %v3809 = vadd.f32 0.0, %v3808
      %v3810 = vpop.f32.mrf.mxu0
      %3811 = vmatprep.mubr.bf16.mxu0 0
      %3812 = vmatmul.mubr.bf16.gmra.mxu0 %v3659
      %v3813 = vpop.f32.mrf.mxu0
      %v3814 = vadd.f32 0.0, %v3813
      %v3815 = vpop.f32.mrf.mxu0
      %v3816 = vpop.f32.mrf.mxu0
      %v3817 = vadd.f32 0.0, %v3816
      %v3818 = vpop.f32.mrf.mxu0
      %3819 = vmatprep.mubr.bf16.mxu0 0
      %3820 = vmatmul.mubr.bf16.gmra.mxu0 %v3660
      %v3821 = vpop.f32.mrf.mxu0
      %v3822 = vadd.f32 0.0, %v3821
      %v3823 = vpop.f32.mrf.mxu0
      %v3824 = vpop.f32.mrf.mxu0
      %v3825 = vadd.f32 0.0, %v3824
      %v3826 = vpop.f32.mrf.mxu0
      %3827 = vmatprep.mubr.bf16.mxu0 0
      %3828 = vmatmul.mubr.bf16.gmra.mxu0 %v3661
      %v3829 = vpop.f32.mrf.mxu0
      %v3830 = vadd.f32 0.0, %v3829
      %v3831 = vpop.f32.mrf.mxu0
      %v3832 = vpop.f32.mrf.mxu0
      %v3833 = vadd.f32 0.0, %v3832
      %v3834 = vpop.f32.mrf.mxu0
      %3835 = vmatprep.mubr.bf16.mxu0 0
      %3836 = vmatmul.mubr.bf16.gmra.mxu0 %v3662
      %v3837 = vpop.f32.mrf.mxu0
      %v3838 = vadd.f32 0.0, %v3837
      %v3839 = vpop.f32.mrf.mxu0
      %v3840 = vpop.f32.mrf.mxu0
      %v3841 = vadd.f32 0.0, %v3840
      %v3842 = vpop.f32.mrf.mxu0
      %3843 = vmatprep.mubr.bf16.mxu0 0
      %3844 = vmatmul.mubr.bf16.gmra.mxu0 %v3663
      %v3845 = vpop.f32.mrf.mxu0
      %v3846 = vadd.f32 0.0, %v3845
      %v3847 = vpop.f32.mrf.mxu0
      %v3848 = vpop.f32.mrf.mxu0
      %v3849 = vadd.f32 0.0, %v3848
      %v3850 = vpop.f32.mrf.mxu0
      %3851 = vmatprep.mubr.bf16.mxu0 0
      %3852 = vmatmul.mubr.bf16.gmra.mxu0 %v3664
      %v3853 = vpop.f32.mrf.mxu0
      %v3854 = vadd.f32 0.0, %v3853
      %v3855 = vpop.f32.mrf.mxu0
      %v3856 = vpop.f32.mrf.mxu0
      %v3857 = vadd.f32 0.0, %v3856
      %v3858 = vpop.f32.mrf.mxu0
      %3859 = vmatprep.mubr.bf16.mxu0 0
      %3860 = vmatmul.mubr.bf16.gmra.mxu0 %v3665
      %v3861 = vpop.f32.mrf.mxu0
      %v3862 = vadd.f32 0.0, %v3861
      %v3863 = vpop.f32.mrf.mxu0
      %v3864 = vpop.f32.mrf.mxu0
      %v3865 = vadd.f32 0.0, %v3864
      %v3866 = vpop.f32.mrf.mxu0
      %3867 = vdwg.mxu0
      %3868 = vmatprep.subr.bf16.mxu0 0
      %3869 = vmatpush1.bf16.msra.mxu0 %v3611
      %3870 = vmatprep.subr.bf16.mxu0 0
      %3871 = vmatpush1.bf16.msra.mxu0 %v3610
      %3872 = vmatprep.subr.bf16.mxu0 0
      %3873 = vmatpush1.bf16.msra.mxu0 %v3609
      %3874 = vmatprep.subr.bf16.mxu0 0
      %3875 = vmatpush1.bf16.msra.mxu0 %v3608
      %3876 = vmatprep.subr.bf16.mxu0 0
      %3877 = vmatpush1.bf16.msra.mxu0 %v3607
      %3878 = vmatprep.subr.bf16.mxu0 0
      %3879 = vmatpush1.bf16.msra.mxu0 %v3606
      %3880 = vmatprep.subr.bf16.mxu0 0
      %3881 = vmatpush1.bf16.msra.mxu0 %v3605
      %3882 = vmatprep.subr.bf16.mxu0 0
      %3883 = vmatpush1.bf16.msra.mxu0 %v3604
      %3884 = vmatprep.subr.bf16.mxu0 0
      %3885 = vmatpush2.bf16.msra.mxu0 0
      %3886 = vmatprep.subr.bf16.mxu0 0
      %3887 = vmatpush2.bf16.msra.mxu0 0
      %3888 = vmatprep.subr.bf16.mxu0 0
      %3889 = vmatpush2.bf16.msra.mxu0 0
      %3890 = vmatprep.subr.bf16.mxu0 0
      %3891 = vmatpush2.bf16.msra.mxu0 0
      %3892 = vmatprep.subr.bf16.mxu0 0
      %3893 = vmatpush2.bf16.msra.mxu0 0
      %3894 = vmatprep.subr.bf16.mxu0 0
      %3895 = vmatpush2.bf16.msra.mxu0 0
      %3896 = vmatprep.subr.bf16.mxu0 0
      %3897 = vmatpush2.bf16.msra.mxu0 0
      %3898 = vmatprep.subr.bf16.mxu0 0
      %3899 = vmatpush2.bf16.msra.mxu0 0
      %3900 = vmatprep.mubr.bf16.mxu0 0
      %3901 = vmatmul.mubr.bf16.gmra.mxu0 %v3570
      %v3902 = vpop.f32.mrf.mxu0
      %v3903 = vadd.f32 %v3726, %v3902
      %v3904 = vpop.f32.mrf.mxu0
      %v3905 = vpop.f32.mrf.mxu0
      %v3906 = vadd.f32 %v3729, %v3905
      %v3907 = vpop.f32.mrf.mxu0
      %3908 = vmatprep.mubr.bf16.mxu0 0
      %3909 = vmatmul.mubr.bf16.gmra.mxu0 %v3571
      %v3910 = vpop.f32.mrf.mxu0
      %v3911 = vadd.f32 %v3734, %v3910
      %v3912 = vpop.f32.mrf.mxu0
      %v3913 = vpop.f32.mrf.mxu0
      %v3914 = vadd.f32 %v3737, %v3913
      %v3915 = vpop.f32.mrf.mxu0
      %3916 = vmatprep.mubr.bf16.mxu0 0
      %3917 = vmatmul.mubr.bf16.gmra.mxu0 %v3572
      %v3918 = vpop.f32.mrf.mxu0
      %v3919 = vadd.f32 %v3742, %v3918
      %v3920 = vpop.f32.mrf.mxu0
      %v3921 = vpop.f32.mrf.mxu0
      %v3922 = vadd.f32 %v3745, %v3921
      %v3923 = vpop.f32.mrf.mxu0
      %3924 = vmatprep.mubr.bf16.mxu0 0
      %3925 = vmatmul.mubr.bf16.gmra.mxu0 %v3573
      %v3926 = vpop.f32.mrf.mxu0
      %v3927 = vadd.f32 %v3750, %v3926
      %v3928 = vpop.f32.mrf.mxu0
      %v3929 = vpop.f32.mrf.mxu0
      %v3930 = vadd.f32 %v3753, %v3929
      %v3931 = vpop.f32.mrf.mxu0
      %3932 = vmatprep.mubr.bf16.mxu0 0
      %3933 = vmatmul.mubr.bf16.gmra.mxu0 %v3574
      %v3934 = vpop.f32.mrf.mxu0
      %v3935 = vadd.f32 %v3758, %v3934
      %v3936 = vpop.f32.mrf.mxu0
      %v3937 = vpop.f32.mrf.mxu0
      %v3938 = vadd.f32 %v3761, %v3937
      %v3939 = vpop.f32.mrf.mxu0
      %3940 = vmatprep.mubr.bf16.mxu0 0
      %3941 = vmatmul.mubr.bf16.gmra.mxu0 %v3575
      %v3942 = vpop.f32.mrf.mxu0
      %v3943 = vadd.f32 %v3766, %v3942
      %v3944 = vpop.f32.mrf.mxu0
      %v3945 = vpop.f32.mrf.mxu0
      %v3946 = vadd.f32 %v3769, %v3945
      %v3947 = vpop.f32.mrf.mxu0
      %3948 = vmatprep.mubr.bf16.mxu0 0
      %3949 = vmatmul.mubr.bf16.gmra.mxu0 %v3576
      %v3950 = vpop.f32.mrf.mxu0
      %v3951 = vadd.f32 %v3774, %v3950
      %v3952 = vpop.f32.mrf.mxu0
      %v3953 = vpop.f32.mrf.mxu0
      %v3954 = vadd.f32 %v3777, %v3953
      %v3955 = vpop.f32.mrf.mxu0
      %3956 = vmatprep.mubr.bf16.mxu0 0
      %3957 = vmatmul.mubr.bf16.gmra.mxu0 %v3577
      %v3958 = vpop.f32.mrf.mxu0
      %v3959 = vadd.f32 %v3782, %v3958
      %v3960 = vpop.f32.mrf.mxu0
      %v3961 = vpop.f32.mrf.mxu0
      %v3962 = vadd.f32 %v3785, %v3961
      %v3963 = vpop.f32.mrf.mxu0
      %3964 = vmatprep.mubr.bf16.mxu0 0
      %3965 = vmatmul.mubr.bf16.gmra.mxu0 %v3578
      %v3966 = vpop.f32.mrf.mxu0
      %v3967 = vadd.f32 %v3790, %v3966
      %v3968 = vpop.f32.mrf.mxu0
      %v3969 = vpop.f32.mrf.mxu0
      %v3970 = vadd.f32 %v3793, %v3969
      %v3971 = vpop.f32.mrf.mxu0
      %3972 = vmatprep.mubr.bf16.mxu0 0
      %3973 = vmatmul.mubr.bf16.gmra.mxu0 %v3579
      %v3974 = vpop.f32.mrf.mxu0
      %v3975 = vadd.f32 %v3798, %v3974
      %v3976 = vpop.f32.mrf.mxu0
      %v3977 = vpop.f32.mrf.mxu0
      %v3978 = vadd.f32 %v3801, %v3977
      %v3979 = vpop.f32.mrf.mxu0
      %3980 = vmatprep.mubr.bf16.mxu0 0
      %3981 = vmatmul.mubr.bf16.gmra.mxu0 %v3580
      %v3982 = vpop.f32.mrf.mxu0
      %v3983 = vadd.f32 %v3806, %v3982
      %v3984 = vpop.f32.mrf.mxu0
      %v3985 = vpop.f32.mrf.mxu0
      %v3986 = vadd.f32 %v3809, %v3985
      %v3987 = vpop.f32.mrf.mxu0
      %3988 = vmatprep.mubr.bf16.mxu0 0
      %3989 = vmatmul.mubr.bf16.gmra.mxu0 %v3581
      %v3990 = vpop.f32.mrf.mxu0
      %v3991 = vadd.f32 %v3814, %v3990
      %v3992 = vpop.f32.mrf.mxu0
      %v3993 = vpop.f32.mrf.mxu0
      %v3994 = vadd.f32 %v3817, %v3993
      %v3995 = vpop.f32.mrf.mxu0
      %3996 = vmatprep.mubr.bf16.mxu0 0
      %3997 = vmatmul.mubr.bf16.gmra.mxu0 %v3582
      %v3998 = vpop.f32.mrf.mxu0
      %v3999 = vadd.f32 %v3822, %v3998
      %v4000 = vpop.f32.mrf.mxu0
      %v4001 = vpop.f32.mrf.mxu0
      %v4002 = vadd.f32 %v3825, %v4001
      %v4003 = vpop.f32.mrf.mxu0
      %4004 = vmatprep.mubr.bf16.mxu0 0
      %4005 = vmatmul.mubr.bf16.gmra.mxu0 %v3583
      %v4006 = vpop.f32.mrf.mxu0
      %v4007 = vadd.f32 %v3830, %v4006
      %v4008 = vpop.f32.mrf.mxu0
      %v4009 = vpop.f32.mrf.mxu0
      %v4010 = vadd.f32 %v3833, %v4009
      %v4011 = vpop.f32.mrf.mxu0
      %4012 = vmatprep.mubr.bf16.mxu0 0
      %4013 = vmatmul.mubr.bf16.gmra.mxu0 %v3584
      %v4014 = vpop.f32.mrf.mxu0
      %v4015 = vadd.f32 %v3838, %v4014
      %v4016 = vpop.f32.mrf.mxu0
      %v4017 = vpop.f32.mrf.mxu0
      %v4018 = vadd.f32 %v3841, %v4017
      %v4019 = vpop.f32.mrf.mxu0
      %4020 = vmatprep.mubr.bf16.mxu0 0
      %4021 = vmatmul.mubr.bf16.gmra.mxu0 %v3585
      %v4022 = vpop.f32.mrf.mxu0
      %v4023 = vadd.f32 %v3846, %v4022
      %v4024 = vpop.f32.mrf.mxu0
      %v4025 = vpop.f32.mrf.mxu0
      %v4026 = vadd.f32 %v3849, %v4025
      %v4027 = vpop.f32.mrf.mxu0
      %4028 = vmatprep.mubr.bf16.mxu0 0
      %4029 = vmatmul.mubr.bf16.gmra.mxu0 %v3586
      %v4030 = vpop.f32.mrf.mxu0
      %v4031 = vadd.f32 %v3854, %v4030
      %v4032 = vpop.f32.mrf.mxu0
      %v4033 = vpop.f32.mrf.mxu0
      %v4034 = vadd.f32 %v3857, %v4033
      %v4035 = vpop.f32.mrf.mxu0
      %4036 = vmatprep.mubr.bf16.mxu0 0
      %4037 = vmatmul.mubr.bf16.gmra.mxu0 %v3587
      %v4038 = vpop.f32.mrf.mxu0
      %v4039 = vadd.f32 %v3862, %v4038
      %v4040 = vpop.f32.mrf.mxu0
      %v4041 = vpop.f32.mrf.mxu0
      %v4042 = vadd.f32 %v3865, %v4041
      %v4043 = vpop.f32.mrf.mxu0
      %4044 = vdwg.mxu0
      %v4045 = vld [vmem:[#allocation2 + $0x7] sm:$0xff]
      %v4046 = vld [vmem:[#allocation2 + $0xf] sm:$0xff]
      %v4047 = vld [vmem:[#allocation2 + $0x17] sm:$0xff]
      %v4048 = vld [vmem:[#allocation2 + $0x1f] sm:$0xff]
      %v4049 = vld [vmem:[#allocation2 + $0x27] sm:$0xff]
      %v4050 = vld [vmem:[#allocation2 + $0x2f] sm:$0xff]
      %v4051 = vld [vmem:[#allocation2 + $0x37] sm:$0xff]
      %v4052 = vld [vmem:[#allocation2 + $0x3f] sm:$0xff]
      %v4053 = vld [vmem:[#allocation2 + $0x47] sm:$0xff]
      %v4054 = vld [vmem:[#allocation2 + $0x4f] sm:$0xff]
      %v4055 = vld [vmem:[#allocation2 + $0x57] sm:$0xff]
      %v4056 = vld [vmem:[#allocation2 + $0x5f] sm:$0xff]
      %v4057 = vld [vmem:[#allocation2 + $0x67] sm:$0xff]
      %v4058 = vld [vmem:[#allocation2 + $0x6f] sm:$0xff]
      %v4059 = vld [vmem:[#allocation2 + $0x77] sm:$0xff]
      %v4060 = vld [vmem:[#allocation2 + $0x7f] sm:$0xff]
      %v4061 = vld [vmem:[#allocation2 + $0x87] sm:$0xff]
      %v4062 = vld [vmem:[#allocation2 + $0x8f] sm:$0xff]
      %v4063 = vld [vmem:[#allocation2 + $0x97] sm:$0xff]
      %v4064 = vld [vmem:[#allocation2 + $0x9f] sm:$0xff]
      %v4065 = vld [vmem:[#allocation2 + $0xa7] sm:$0xff]
      %v4066 = vld [vmem:[#allocation2 + $0xaf] sm:$0xff]
      %v4067 = vld [vmem:[#allocation2 + $0xb7] sm:$0xff]
      %v4068 = vld [vmem:[#allocation2 + $0xbf] sm:$0xff]
      %v4069 = vld [vmem:[#allocation2 + $0xc7] sm:$0xff]
      %v4070 = vld [vmem:[#allocation2 + $0xcf] sm:$0xff]
      %v4071 = vld [vmem:[#allocation2 + $0xd7] sm:$0xff]
      %v4072 = vld [vmem:[#allocation2 + $0xdf] sm:$0xff]
      %v4073 = vld [vmem:[#allocation2 + $0xe7] sm:$0xff]
      %v4074 = vld [vmem:[#allocation2 + $0xef] sm:$0xff]
      %v4075 = vld [vmem:[#allocation2 + $0xf7] sm:$0xff]
      %v4076 = vld [vmem:[#allocation2 + $0xff] sm:$0xff]
      %v4077 = vld [vmem:[#allocation2 + $0x107] sm:$0xff]
      %v4078 = vld [vmem:[#allocation2 + $0x10f] sm:$0xff]
      %v4079 = vld [vmem:[#allocation2 + $0x117] sm:$0xff]
      %v4080 = vld [vmem:[#allocation2 + $0x11f] sm:$0xff]
      %v4081 = vpack.c.bf16 %v4046, %v4045
      %v4082 = vpack.c.bf16 %v4048, %v4047
      %v4083 = vpack.c.bf16 %v4050, %v4049
      %v4084 = vpack.c.bf16 %v4052, %v4051
      %v4085 = vpack.c.bf16 %v4054, %v4053
      %v4086 = vpack.c.bf16 %v4056, %v4055
      %v4087 = vpack.c.bf16 %v4058, %v4057
      %v4088 = vpack.c.bf16 %v4060, %v4059
      %v4089 = vpack.c.bf16 %v4062, %v4061
      %v4090 = vpack.c.bf16 %v4064, %v4063
      %v4091 = vpack.c.bf16 %v4066, %v4065
      %v4092 = vpack.c.bf16 %v4068, %v4067
      %v4093 = vpack.c.bf16 %v4070, %v4069
      %v4094 = vpack.c.bf16 %v4072, %v4071
      %v4095 = vpack.c.bf16 %v4074, %v4073
      %v4096 = vpack.c.bf16 %v4076, %v4075
      %v4097 = vpack.c.bf16 %v4078, %v4077
      %v4098 = vpack.c.bf16 %v4080, %v4079
      %s4099 = scalar_lea.vmem %s3, 256
      %v4100 = vld [vmem:[%s4099] sm:$0xff]
      %v4101 = vld [vmem:[%s4099 + $0x8] sm:$0xff]
      %v4102 = vld [vmem:[%s4099 + $0x10] sm:$0xff]
      %v4103 = vld [vmem:[%s4099 + $0x18] sm:$0xff]
      %v4104 = vld [vmem:[%s4099 + $0x20] sm:$0xff]
      %v4105 = vld [vmem:[%s4099 + $0x28] sm:$0xff]
      %v4106 = vld [vmem:[%s4099 + $0x30] sm:$0xff]
      %v4107 = vld [vmem:[%s4099 + $0x38] sm:$0xff]
      %v4108 = vld [vmem:[%s4099 + $0x40] sm:$0xff]
      %v4109 = vld [vmem:[%s4099 + $0x48] sm:$0xff]
      %v4110 = vld [vmem:[%s4099 + $0x50] sm:$0xff]
      %v4111 = vld [vmem:[%s4099 + $0x58] sm:$0xff]
      %v4112 = vld [vmem:[%s4099 + $0x60] sm:$0xff]
      %v4113 = vld [vmem:[%s4099 + $0x68] sm:$0xff]
      %v4114 = vld [vmem:[%s4099 + $0x70] sm:$0xff]
      %v4115 = vld [vmem:[%s4099 + $0x78] sm:$0xff]
      %v4116 = vpack.c.bf16 %v4101, %v4100
      %v4117 = vpack.c.bf16 %v4103, %v4102
      %v4118 = vpack.c.bf16 %v4105, %v4104
      %v4119 = vpack.c.bf16 %v4107, %v4106
      %v4120 = vpack.c.bf16 %v4109, %v4108
      %v4121 = vpack.c.bf16 %v4111, %v4110
      %v4122 = vpack.c.bf16 %v4113, %v4112
      %v4123 = vpack.c.bf16 %v4115, %v4114
      %4124 = vmatprep.subr.bf16.mxu0 0
      %4125 = vmatpush1.bf16.msra.mxu0 %v4123
      %4126 = vmatprep.subr.bf16.mxu0 0
      %4127 = vmatpush1.bf16.msra.mxu0 %v4122
      %4128 = vmatprep.subr.bf16.mxu0 0
      %4129 = vmatpush1.bf16.msra.mxu0 %v4121
      %4130 = vmatprep.subr.bf16.mxu0 0
      %4131 = vmatpush1.bf16.msra.mxu0 %v4120
      %4132 = vmatprep.subr.bf16.mxu0 0
      %4133 = vmatpush1.bf16.msra.mxu0 %v4119
      %4134 = vmatprep.subr.bf16.mxu0 0
      %4135 = vmatpush1.bf16.msra.mxu0 %v4118
      %4136 = vmatprep.subr.bf16.mxu0 0
      %4137 = vmatpush1.bf16.msra.mxu0 %v4117
      %4138 = vmatprep.subr.bf16.mxu0 0
      %4139 = vmatpush1.bf16.msra.mxu0 %v4116
      %4140 = vmatprep.subr.bf16.mxu0 0
      %4141 = vmatpush2.bf16.msra.mxu0 0
      %4142 = vmatprep.subr.bf16.mxu0 0
      %4143 = vmatpush2.bf16.msra.mxu0 0
      %4144 = vmatprep.subr.bf16.mxu0 0
      %4145 = vmatpush2.bf16.msra.mxu0 0
      %4146 = vmatprep.subr.bf16.mxu0 0
      %4147 = vmatpush2.bf16.msra.mxu0 0
      %4148 = vmatprep.subr.bf16.mxu0 0
      %4149 = vmatpush2.bf16.msra.mxu0 0
      %4150 = vmatprep.subr.bf16.mxu0 0
      %4151 = vmatpush2.bf16.msra.mxu0 0
      %4152 = vmatprep.subr.bf16.mxu0 0
      %4153 = vmatpush2.bf16.msra.mxu0 0
      %4154 = vmatprep.subr.bf16.mxu0 0
      %4155 = vmatpush2.bf16.msra.mxu0 0
      %4156 = vmatprep.mubr.bf16.mxu0 0
      %4157 = vmatmul.mubr.bf16.gmra.mxu0 %v4081
      %v4158 = vpop.f32.mrf.mxu0
      %v4159 = vadd.f32 0.0, %v4158
      %v4160 = vpop.f32.mrf.mxu0
      %v4161 = vpop.f32.mrf.mxu0
      %v4162 = vadd.f32 0.0, %v4161
      %v4163 = vpop.f32.mrf.mxu0
      %4164 = vmatprep.mubr.bf16.mxu0 0
      %4165 = vmatmul.mubr.bf16.gmra.mxu0 %v4082
      %v4166 = vpop.f32.mrf.mxu0
      %v4167 = vadd.f32 0.0, %v4166
      %v4168 = vpop.f32.mrf.mxu0
      %v4169 = vpop.f32.mrf.mxu0
      %v4170 = vadd.f32 0.0, %v4169
      %v4171 = vpop.f32.mrf.mxu0
      %4172 = vmatprep.mubr.bf16.mxu0 0
      %4173 = vmatmul.mubr.bf16.gmra.mxu0 %v4083
      %v4174 = vpop.f32.mrf.mxu0
      %v4175 = vadd.f32 0.0, %v4174
      %v4176 = vpop.f32.mrf.mxu0
      %v4177 = vpop.f32.mrf.mxu0
      %v4178 = vadd.f32 0.0, %v4177
      %v4179 = vpop.f32.mrf.mxu0
      %4180 = vmatprep.mubr.bf16.mxu0 0
      %4181 = vmatmul.mubr.bf16.gmra.mxu0 %v4084
      %v4182 = vpop.f32.mrf.mxu0
      %v4183 = vadd.f32 0.0, %v4182
      %v4184 = vpop.f32.mrf.mxu0
      %v4185 = vpop.f32.mrf.mxu0
      %v4186 = vadd.f32 0.0, %v4185
      %v4187 = vpop.f32.mrf.mxu0
      %4188 = vmatprep.mubr.bf16.mxu0 0
      %4189 = vmatmul.mubr.bf16.gmra.mxu0 %v4085
      %v4190 = vpop.f32.mrf.mxu0
      %v4191 = vadd.f32 0.0, %v4190
      %v4192 = vpop.f32.mrf.mxu0
      %v4193 = vpop.f32.mrf.mxu0
      %v4194 = vadd.f32 0.0, %v4193
      %v4195 = vpop.f32.mrf.mxu0
      %4196 = vmatprep.mubr.bf16.mxu0 0
      %4197 = vmatmul.mubr.bf16.gmra.mxu0 %v4086
      %v4198 = vpop.f32.mrf.mxu0
      %v4199 = vadd.f32 0.0, %v4198
      %v4200 = vpop.f32.mrf.mxu0
      %v4201 = vpop.f32.mrf.mxu0
      %v4202 = vadd.f32 0.0, %v4201
      %v4203 = vpop.f32.mrf.mxu0
      %4204 = vmatprep.mubr.bf16.mxu0 0
      %4205 = vmatmul.mubr.bf16.gmra.mxu0 %v4087
      %v4206 = vpop.f32.mrf.mxu0
      %v4207 = vadd.f32 0.0, %v4206
      %v4208 = vpop.f32.mrf.mxu0
      %v4209 = vpop.f32.mrf.mxu0
      %v4210 = vadd.f32 0.0, %v4209
      %v4211 = vpop.f32.mrf.mxu0
      %4212 = vmatprep.mubr.bf16.mxu0 0
      %4213 = vmatmul.mubr.bf16.gmra.mxu0 %v4088
      %v4214 = vpop.f32.mrf.mxu0
      %v4215 = vadd.f32 0.0, %v4214
      %v4216 = vpop.f32.mrf.mxu0
      %v4217 = vpop.f32.mrf.mxu0
      %v4218 = vadd.f32 0.0, %v4217
      %v4219 = vpop.f32.mrf.mxu0
      %4220 = vmatprep.mubr.bf16.mxu0 0
      %4221 = vmatmul.mubr.bf16.gmra.mxu0 %v4089
      %v4222 = vpop.f32.mrf.mxu0
      %v4223 = vadd.f32 0.0, %v4222
      %v4224 = vpop.f32.mrf.mxu0
      %v4225 = vpop.f32.mrf.mxu0
      %v4226 = vadd.f32 0.0, %v4225
      %v4227 = vpop.f32.mrf.mxu0
      %4228 = vmatprep.mubr.bf16.mxu0 0
      %4229 = vmatmul.mubr.bf16.gmra.mxu0 %v4090
      %v4230 = vpop.f32.mrf.mxu0
      %v4231 = vadd.f32 0.0, %v4230
      %v4232 = vpop.f32.mrf.mxu0
      %v4233 = vpop.f32.mrf.mxu0
      %v4234 = vadd.f32 0.0, %v4233
      %v4235 = vpop.f32.mrf.mxu0
      %4236 = vmatprep.mubr.bf16.mxu0 0
      %4237 = vmatmul.mubr.bf16.gmra.mxu0 %v4091
      %v4238 = vpop.f32.mrf.mxu0
      %v4239 = vadd.f32 0.0, %v4238
      %v4240 = vpop.f32.mrf.mxu0
      %v4241 = vpop.f32.mrf.mxu0
      %v4242 = vadd.f32 0.0, %v4241
      %v4243 = vpop.f32.mrf.mxu0
      %4244 = vmatprep.mubr.bf16.mxu0 0
      %4245 = vmatmul.mubr.bf16.gmra.mxu0 %v4092
      %v4246 = vpop.f32.mrf.mxu0
      %v4247 = vadd.f32 0.0, %v4246
      %v4248 = vpop.f32.mrf.mxu0
      %v4249 = vpop.f32.mrf.mxu0
      %v4250 = vadd.f32 0.0, %v4249
      %v4251 = vpop.f32.mrf.mxu0
      %4252 = vmatprep.mubr.bf16.mxu0 0
      %4253 = vmatmul.mubr.bf16.gmra.mxu0 %v4093
      %v4254 = vpop.f32.mrf.mxu0
      %v4255 = vadd.f32 0.0, %v4254
      %v4256 = vpop.f32.mrf.mxu0
      %v4257 = vpop.f32.mrf.mxu0
      %v4258 = vadd.f32 0.0, %v4257
      %v4259 = vpop.f32.mrf.mxu0
      %4260 = vmatprep.mubr.bf16.mxu0 0
      %4261 = vmatmul.mubr.bf16.gmra.mxu0 %v4094
      %v4262 = vpop.f32.mrf.mxu0
      %v4263 = vadd.f32 0.0, %v4262
      %v4264 = vpop.f32.mrf.mxu0
      %v4265 = vpop.f32.mrf.mxu0
      %v4266 = vadd.f32 0.0, %v4265
      %v4267 = vpop.f32.mrf.mxu0
      %4268 = vmatprep.mubr.bf16.mxu0 0
      %4269 = vmatmul.mubr.bf16.gmra.mxu0 %v4095
      %v4270 = vpop.f32.mrf.mxu0
      %v4271 = vadd.f32 0.0, %v4270
      %v4272 = vpop.f32.mrf.mxu0
      %v4273 = vpop.f32.mrf.mxu0
      %v4274 = vadd.f32 0.0, %v4273
      %v4275 = vpop.f32.mrf.mxu0
      %4276 = vmatprep.mubr.bf16.mxu0 0
      %4277 = vmatmul.mubr.bf16.gmra.mxu0 %v4096
      %v4278 = vpop.f32.mrf.mxu0
      %v4279 = vadd.f32 0.0, %v4278
      %v4280 = vpop.f32.mrf.mxu0
      %v4281 = vpop.f32.mrf.mxu0
      %v4282 = vadd.f32 0.0, %v4281
      %v4283 = vpop.f32.mrf.mxu0
      %4284 = vmatprep.mubr.bf16.mxu0 0
      %4285 = vmatmul.mubr.bf16.gmra.mxu0 %v4097
      %v4286 = vpop.f32.mrf.mxu0
      %v4287 = vadd.f32 0.0, %v4286
      %v4288 = vpop.f32.mrf.mxu0
      %v4289 = vpop.f32.mrf.mxu0
      %v4290 = vadd.f32 0.0, %v4289
      %v4291 = vpop.f32.mrf.mxu0
      %4292 = vmatprep.mubr.bf16.mxu0 0
      %4293 = vmatmul.mubr.bf16.gmra.mxu0 %v4098
      %v4294 = vpop.f32.mrf.mxu0
      %v4295 = vadd.f32 0.0, %v4294
      %v4296 = vpop.f32.mrf.mxu0
      %v4297 = vpop.f32.mrf.mxu0
      %v4298 = vadd.f32 0.0, %v4297
      %v4299 = vpop.f32.mrf.mxu0
      %4300 = vdwg.mxu0
      %v4301 = vadd.f32 %v3903, %v4159
      %v4302 = vadd.f32 %v3906, %v4162
      %v4303 = vadd.f32 %v3911, %v4167
      %v4304 = vadd.f32 %v3914, %v4170
      %v4305 = vadd.f32 %v3919, %v4175
      %v4306 = vadd.f32 %v3922, %v4178
      %v4307 = vadd.f32 %v3927, %v4183
      %v4308 = vadd.f32 %v3930, %v4186
      %v4309 = vadd.f32 %v3935, %v4191
      %v4310 = vadd.f32 %v3938, %v4194
      %v4311 = vadd.f32 %v3943, %v4199
      %v4312 = vadd.f32 %v3946, %v4202
      %v4313 = vadd.f32 %v3951, %v4207
      %v4314 = vadd.f32 %v3954, %v4210
      %v4315 = vadd.f32 %v3959, %v4215
      %v4316 = vadd.f32 %v3962, %v4218
      %v4317 = vadd.f32 %v3967, %v4223
      %v4318 = vadd.f32 %v3970, %v4226
      %v4319 = vadd.f32 %v3975, %v4231
      %v4320 = vadd.f32 %v3978, %v4234
      %v4321 = vadd.f32 %v3983, %v4239
      %v4322 = vadd.f32 %v3986, %v4242
      %v4323 = vadd.f32 %v3991, %v4247
      %v4324 = vadd.f32 %v3994, %v4250
      %v4325 = vadd.f32 %v3999, %v4255
      %v4326 = vadd.f32 %v4002, %v4258
      %v4327 = vadd.f32 %v4007, %v4263
      %v4328 = vadd.f32 %v4010, %v4266
      %v4329 = vadd.f32 %v4015, %v4271
      %v4330 = vadd.f32 %v4018, %v4274
      %v4331 = vadd.f32 %v4023, %v4279
      %v4332 = vadd.f32 %v4026, %v4282
      %v4333 = vadd.f32 %v4031, %v4287
      %v4334 = vadd.f32 %v4034, %v4290
      %v4335 = vadd.f32 %v4039, %v4295
      %v4336 = vadd.f32 %v4042, %v4298
      %v4337 = vld [vmem:[#allocation2 + $0x17] sm:$0xff]
      %v4338 = vld [vmem:[#allocation2 + $0x1f] sm:$0xff]
      %v4339 = vld [vmem:[#allocation2 + $0x27] sm:$0xff]
      %v4340 = vld [vmem:[#allocation2 + $0x2f] sm:$0xff]
      %v4341 = vld [vmem:[#allocation2 + $0x37] sm:$0xff]
      %v4342 = vld [vmem:[#allocation2 + $0x3f] sm:$0xff]
      %v4343 = vld [vmem:[#allocation2 + $0x47] sm:$0xff]
      %v4344 = vld [vmem:[#allocation2 + $0x4f] sm:$0xff]
      %v4345 = vld [vmem:[#allocation2 + $0x57] sm:$0xff]
      %v4346 = vld [vmem:[#allocation2 + $0x5f] sm:$0xff]
      %v4347 = vld [vmem:[#allocation2 + $0x67] sm:$0xff]
      %v4348 = vld [vmem:[#allocation2 + $0x6f] sm:$0xff]
      %v4349 = vld [vmem:[#allocation2 + $0x77] sm:$0xff]
      %v4350 = vld [vmem:[#allocation2 + $0x7f] sm:$0xff]
      %v4351 = vld [vmem:[#allocation2 + $0x87] sm:$0xff]
      %v4352 = vld [vmem:[#allocation2 + $0x8f] sm:$0xff]
      %v4353 = vld [vmem:[#allocation2 + $0x97] sm:$0xff]
      %v4354 = vld [vmem:[#allocation2 + $0x9f] sm:$0xff]
      %v4355 = vld [vmem:[#allocation2 + $0xa7] sm:$0xff]
      %v4356 = vld [vmem:[#allocation2 + $0xaf] sm:$0xff]
      %v4357 = vld [vmem:[#allocation2 + $0xb7] sm:$0xff]
      %v4358 = vld [vmem:[#allocation2 + $0xbf] sm:$0xff]
      %v4359 = vld [vmem:[#allocation2 + $0xc7] sm:$0xff]
      %v4360 = vld [vmem:[#allocation2 + $0xcf] sm:$0xff]
      %v4361 = vld [vmem:[#allocation2 + $0xd7] sm:$0xff]
      %v4362 = vld [vmem:[#allocation2 + $0xdf] sm:$0xff]
      %v4363 = vld [vmem:[#allocation2 + $0xe7] sm:$0xff]
      %v4364 = vld [vmem:[#allocation2 + $0xef] sm:$0xff]
      %v4365 = vld [vmem:[#allocation2 + $0xf7] sm:$0xff]
      %v4366 = vld [vmem:[#allocation2 + $0xff] sm:$0xff]
      %v4367 = vld [vmem:[#allocation2 + $0x107] sm:$0xff]
      %v4368 = vld [vmem:[#allocation2 + $0x10f] sm:$0xff]
      %v4369 = vld [vmem:[#allocation2 + $0x117] sm:$0xff]
      %v4370 = vld [vmem:[#allocation2 + $0x11f] sm:$0xff]
      %v4371 = vld [vmem:[#allocation2 + $0x127] sm:$0xff]
      %v4372 = vld [vmem:[#allocation2 + $0x12f] sm:$0xff]
      %v4373 = vpack.c.bf16 %v4338, %v4337
      %v4374 = vpack.c.bf16 %v4340, %v4339
      %v4375 = vpack.c.bf16 %v4342, %v4341
      %v4376 = vpack.c.bf16 %v4344, %v4343
      %v4377 = vpack.c.bf16 %v4346, %v4345
      %v4378 = vpack.c.bf16 %v4348, %v4347
      %v4379 = vpack.c.bf16 %v4350, %v4349
      %v4380 = vpack.c.bf16 %v4352, %v4351
      %v4381 = vpack.c.bf16 %v4354, %v4353
      %v4382 = vpack.c.bf16 %v4356, %v4355
      %v4383 = vpack.c.bf16 %v4358, %v4357
      %v4384 = vpack.c.bf16 %v4360, %v4359
      %v4385 = vpack.c.bf16 %v4362, %v4361
      %v4386 = vpack.c.bf16 %v4364, %v4363
      %v4387 = vpack.c.bf16 %v4366, %v4365
      %v4388 = vpack.c.bf16 %v4368, %v4367
      %v4389 = vpack.c.bf16 %v4370, %v4369
      %v4390 = vpack.c.bf16 %v4372, %v4371
      %s4391 = scalar_lea.vmem %s3, 384
      %v4392 = vld [vmem:[%s4391] sm:$0xff]
      %v4393 = vld [vmem:[%s4391 + $0x8] sm:$0xff]
      %v4394 = vld [vmem:[%s4391 + $0x10] sm:$0xff]
      %v4395 = vld [vmem:[%s4391 + $0x18] sm:$0xff]
      %v4396 = vld [vmem:[%s4391 + $0x20] sm:$0xff]
      %v4397 = vld [vmem:[%s4391 + $0x28] sm:$0xff]
      %v4398 = vld [vmem:[%s4391 + $0x30] sm:$0xff]
      %v4399 = vld [vmem:[%s4391 + $0x38] sm:$0xff]
      %v4400 = vld [vmem:[%s4391 + $0x40] sm:$0xff]
      %v4401 = vld [vmem:[%s4391 + $0x48] sm:$0xff]
      %v4402 = vld [vmem:[%s4391 + $0x50] sm:$0xff]
      %v4403 = vld [vmem:[%s4391 + $0x58] sm:$0xff]
      %v4404 = vld [vmem:[%s4391 + $0x60] sm:$0xff]
      %v4405 = vld [vmem:[%s4391 + $0x68] sm:$0xff]
      %v4406 = vld [vmem:[%s4391 + $0x70] sm:$0xff]
      %v4407 = vld [vmem:[%s4391 + $0x78] sm:$0xff]
      %v4408 = vpack.c.bf16 %v4393, %v4392
      %v4409 = vpack.c.bf16 %v4395, %v4394
      %v4410 = vpack.c.bf16 %v4397, %v4396
      %v4411 = vpack.c.bf16 %v4399, %v4398
      %v4412 = vpack.c.bf16 %v4401, %v4400
      %v4413 = vpack.c.bf16 %v4403, %v4402
      %v4414 = vpack.c.bf16 %v4405, %v4404
      %v4415 = vpack.c.bf16 %v4407, %v4406
      %4416 = vmatprep.subr.bf16.mxu0 0
      %4417 = vmatpush1.bf16.msra.mxu0 %v4415
      %4418 = vmatprep.subr.bf16.mxu0 0
      %4419 = vmatpush1.bf16.msra.mxu0 %v4414
      %4420 = vmatprep.subr.bf16.mxu0 0
      %4421 = vmatpush1.bf16.msra.mxu0 %v4413
      %4422 = vmatprep.subr.bf16.mxu0 0
      %4423 = vmatpush1.bf16.msra.mxu0 %v4412
      %4424 = vmatprep.subr.bf16.mxu0 0
      %4425 = vmatpush1.bf16.msra.mxu0 %v4411
      %4426 = vmatprep.subr.bf16.mxu0 0
      %4427 = vmatpush1.bf16.msra.mxu0 %v4410
      %4428 = vmatprep.subr.bf16.mxu0 0
      %4429 = vmatpush1.bf16.msra.mxu0 %v4409
      %4430 = vmatprep.subr.bf16.mxu0 0
      %4431 = vmatpush1.bf16.msra.mxu0 %v4408
      %4432 = vmatprep.subr.bf16.mxu0 0
      %4433 = vmatpush2.bf16.msra.mxu0 0
      %4434 = vmatprep.subr.bf16.mxu0 0
      %4435 = vmatpush2.bf16.msra.mxu0 0
      %4436 = vmatprep.subr.bf16.mxu0 0
      %4437 = vmatpush2.bf16.msra.mxu0 0
      %4438 = vmatprep.subr.bf16.mxu0 0
      %4439 = vmatpush2.bf16.msra.mxu0 0
      %4440 = vmatprep.subr.bf16.mxu0 0
      %4441 = vmatpush2.bf16.msra.mxu0 0
      %4442 = vmatprep.subr.bf16.mxu0 0
      %4443 = vmatpush2.bf16.msra.mxu0 0
      %4444 = vmatprep.subr.bf16.mxu0 0
      %4445 = vmatpush2.bf16.msra.mxu0 0
      %4446 = vmatprep.subr.bf16.mxu0 0
      %4447 = vmatpush2.bf16.msra.mxu0 0
      %4448 = vmatprep.mubr.bf16.mxu0 0
      %4449 = vmatmul.mubr.bf16.gmra.mxu0 %v4373
      %v4450 = vpop.f32.mrf.mxu0
      %v4451 = vadd.f32 0.0, %v4450
      %v4452 = vpop.f32.mrf.mxu0
      %v4453 = vpop.f32.mrf.mxu0
      %v4454 = vadd.f32 0.0, %v4453
      %v4455 = vpop.f32.mrf.mxu0
      %4456 = vmatprep.mubr.bf16.mxu0 0
      %4457 = vmatmul.mubr.bf16.gmra.mxu0 %v4374
      %v4458 = vpop.f32.mrf.mxu0
      %v4459 = vadd.f32 0.0, %v4458
      %v4460 = vpop.f32.mrf.mxu0
      %v4461 = vpop.f32.mrf.mxu0
      %v4462 = vadd.f32 0.0, %v4461
      %v4463 = vpop.f32.mrf.mxu0
      %4464 = vmatprep.mubr.bf16.mxu0 0
      %4465 = vmatmul.mubr.bf16.gmra.mxu0 %v4375
      %v4466 = vpop.f32.mrf.mxu0
      %v4467 = vadd.f32 0.0, %v4466
      %v4468 = vpop.f32.mrf.mxu0
      %v4469 = vpop.f32.mrf.mxu0
      %v4470 = vadd.f32 0.0, %v4469
      %v4471 = vpop.f32.mrf.mxu0
      %4472 = vmatprep.mubr.bf16.mxu0 0
      %4473 = vmatmul.mubr.bf16.gmra.mxu0 %v4376
      %v4474 = vpop.f32.mrf.mxu0
      %v4475 = vadd.f32 0.0, %v4474
      %v4476 = vpop.f32.mrf.mxu0
      %v4477 = vpop.f32.mrf.mxu0
      %v4478 = vadd.f32 0.0, %v4477
      %v4479 = vpop.f32.mrf.mxu0
      %4480 = vmatprep.mubr.bf16.mxu0 0
      %4481 = vmatmul.mubr.bf16.gmra.mxu0 %v4377
      %v4482 = vpop.f32.mrf.mxu0
      %v4483 = vadd.f32 0.0, %v4482
      %v4484 = vpop.f32.mrf.mxu0
      %v4485 = vpop.f32.mrf.mxu0
      %v4486 = vadd.f32 0.0, %v4485
      %v4487 = vpop.f32.mrf.mxu0
      %4488 = vmatprep.mubr.bf16.mxu0 0
      %4489 = vmatmul.mubr.bf16.gmra.mxu0 %v4378
      %v4490 = vpop.f32.mrf.mxu0
      %v4491 = vadd.f32 0.0, %v4490
      %v4492 = vpop.f32.mrf.mxu0
      %v4493 = vpop.f32.mrf.mxu0
      %v4494 = vadd.f32 0.0, %v4493
      %v4495 = vpop.f32.mrf.mxu0
      %4496 = vmatprep.mubr.bf16.mxu0 0
      %4497 = vmatmul.mubr.bf16.gmra.mxu0 %v4379
      %v4498 = vpop.f32.mrf.mxu0
      %v4499 = vadd.f32 0.0, %v4498
      %v4500 = vpop.f32.mrf.mxu0
      %v4501 = vpop.f32.mrf.mxu0
      %v4502 = vadd.f32 0.0, %v4501
      %v4503 = vpop.f32.mrf.mxu0
      %4504 = vmatprep.mubr.bf16.mxu0 0
      %4505 = vmatmul.mubr.bf16.gmra.mxu0 %v4380
      %v4506 = vpop.f32.mrf.mxu0
      %v4507 = vadd.f32 0.0, %v4506
      %v4508 = vpop.f32.mrf.mxu0
      %v4509 = vpop.f32.mrf.mxu0
      %v4510 = vadd.f32 0.0, %v4509
      %v4511 = vpop.f32.mrf.mxu0
      %4512 = vmatprep.mubr.bf16.mxu0 0
      %4513 = vmatmul.mubr.bf16.gmra.mxu0 %v4381
      %v4514 = vpop.f32.mrf.mxu0
      %v4515 = vadd.f32 0.0, %v4514
      %v4516 = vpop.f32.mrf.mxu0
      %v4517 = vpop.f32.mrf.mxu0
      %v4518 = vadd.f32 0.0, %v4517
      %v4519 = vpop.f32.mrf.mxu0
      %4520 = vmatprep.mubr.bf16.mxu0 0
      %4521 = vmatmul.mubr.bf16.gmra.mxu0 %v4382
      %v4522 = vpop.f32.mrf.mxu0
      %v4523 = vadd.f32 0.0, %v4522
      %v4524 = vpop.f32.mrf.mxu0
      %v4525 = vpop.f32.mrf.mxu0
      %v4526 = vadd.f32 0.0, %v4525
      %v4527 = vpop.f32.mrf.mxu0
      %4528 = vmatprep.mubr.bf16.mxu0 0
      %4529 = vmatmul.mubr.bf16.gmra.mxu0 %v4383
      %v4530 = vpop.f32.mrf.mxu0
      %v4531 = vadd.f32 0.0, %v4530
      %v4532 = vpop.f32.mrf.mxu0
      %v4533 = vpop.f32.mrf.mxu0
      %v4534 = vadd.f32 0.0, %v4533
      %v4535 = vpop.f32.mrf.mxu0
      %4536 = vmatprep.mubr.bf16.mxu0 0
      %4537 = vmatmul.mubr.bf16.gmra.mxu0 %v4384
      %v4538 = vpop.f32.mrf.mxu0
      %v4539 = vadd.f32 0.0, %v4538
      %v4540 = vpop.f32.mrf.mxu0
      %v4541 = vpop.f32.mrf.mxu0
      %v4542 = vadd.f32 0.0, %v4541
      %v4543 = vpop.f32.mrf.mxu0
      %4544 = vmatprep.mubr.bf16.mxu0 0
      %4545 = vmatmul.mubr.bf16.gmra.mxu0 %v4385
      %v4546 = vpop.f32.mrf.mxu0
      %v4547 = vadd.f32 0.0, %v4546
      %v4548 = vpop.f32.mrf.mxu0
      %v4549 = vpop.f32.mrf.mxu0
      %v4550 = vadd.f32 0.0, %v4549
      %v4551 = vpop.f32.mrf.mxu0
      %4552 = vmatprep.mubr.bf16.mxu0 0
      %4553 = vmatmul.mubr.bf16.gmra.mxu0 %v4386
      %v4554 = vpop.f32.mrf.mxu0
      %v4555 = vadd.f32 0.0, %v4554
      %v4556 = vpop.f32.mrf.mxu0
      %v4557 = vpop.f32.mrf.mxu0
      %v4558 = vadd.f32 0.0, %v4557
      %v4559 = vpop.f32.mrf.mxu0
      %4560 = vmatprep.mubr.bf16.mxu0 0
      %4561 = vmatmul.mubr.bf16.gmra.mxu0 %v4387
      %v4562 = vpop.f32.mrf.mxu0
      %v4563 = vadd.f32 0.0, %v4562
      %v4564 = vpop.f32.mrf.mxu0
      %v4565 = vpop.f32.mrf.mxu0
      %v4566 = vadd.f32 0.0, %v4565
      %v4567 = vpop.f32.mrf.mxu0
      %4568 = vmatprep.mubr.bf16.mxu0 0
      %4569 = vmatmul.mubr.bf16.gmra.mxu0 %v4388
      %v4570 = vpop.f32.mrf.mxu0
      %v4571 = vadd.f32 0.0, %v4570
      %v4572 = vpop.f32.mrf.mxu0
      %v4573 = vpop.f32.mrf.mxu0
      %v4574 = vadd.f32 0.0, %v4573
      %v4575 = vpop.f32.mrf.mxu0
      %4576 = vmatprep.mubr.bf16.mxu0 0
      %4577 = vmatmul.mubr.bf16.gmra.mxu0 %v4389
      %v4578 = vpop.f32.mrf.mxu0
      %v4579 = vadd.f32 0.0, %v4578
      %v4580 = vpop.f32.mrf.mxu0
      %v4581 = vpop.f32.mrf.mxu0
      %v4582 = vadd.f32 0.0, %v4581
      %v4583 = vpop.f32.mrf.mxu0
      %4584 = vmatprep.mubr.bf16.mxu0 0
      %4585 = vmatmul.mubr.bf16.gmra.mxu0 %v4390
      %v4586 = vpop.f32.mrf.mxu0
      %v4587 = vadd.f32 0.0, %v4586
      %v4588 = vpop.f32.mrf.mxu0
      %v4589 = vpop.f32.mrf.mxu0
      %v4590 = vadd.f32 0.0, %v4589
      %v4591 = vpop.f32.mrf.mxu0
      %4592 = vdwg.mxu0
      %v4593 = vadd.f32 %v4301, %v4451
      %v4594 = vadd.f32 %v4302, %v4454
      %v4595 = vadd.f32 %v4303, %v4459
      %v4596 = vadd.f32 %v4304, %v4462
      %v4597 = vadd.f32 %v4305, %v4467
      %v4598 = vadd.f32 %v4306, %v4470
      %v4599 = vadd.f32 %v4307, %v4475
      %v4600 = vadd.f32 %v4308, %v4478
      %v4601 = vadd.f32 %v4309, %v4483
      %v4602 = vadd.f32 %v4310, %v4486
      %v4603 = vadd.f32 %v4311, %v4491
      %v4604 = vadd.f32 %v4312, %v4494
      %v4605 = vadd.f32 %v4313, %v4499
      %v4606 = vadd.f32 %v4314, %v4502
      %v4607 = vadd.f32 %v4315, %v4507
      %v4608 = vadd.f32 %v4316, %v4510
      %v4609 = vadd.f32 %v4317, %v4515
      %v4610 = vadd.f32 %v4318, %v4518
      %v4611 = vadd.f32 %v4319, %v4523
      %v4612 = vadd.f32 %v4320, %v4526
      %v4613 = vadd.f32 %v4321, %v4531
      %v4614 = vadd.f32 %v4322, %v4534
      %v4615 = vadd.f32 %v4323, %v4539
      %v4616 = vadd.f32 %v4324, %v4542
      %v4617 = vadd.f32 %v4325, %v4547
      %v4618 = vadd.f32 %v4326, %v4550
      %v4619 = vadd.f32 %v4327, %v4555
      %v4620 = vadd.f32 %v4328, %v4558
      %v4621 = vadd.f32 %v4329, %v4563
      %v4622 = vadd.f32 %v4330, %v4566
      %v4623 = vadd.f32 %v4331, %v4571
      %v4624 = vadd.f32 %v4332, %v4574
      %v4625 = vadd.f32 %v4333, %v4579
      %v4626 = vadd.f32 %v4334, %v4582
      %v4627 = vadd.f32 %v4335, %v4587
      %v4628 = vadd.f32 %v4336, %v4590
      %v4629 = vld [vmem:[#allocation2 + $0x18] sm:$0xff]
      %v4630 = vld [vmem:[#allocation2 + $0x20] sm:$0xff]
      %v4631 = vld [vmem:[#allocation2 + $0x28] sm:$0xff]
      %v4632 = vld [vmem:[#allocation2 + $0x30] sm:$0xff]
      %v4633 = vld [vmem:[#allocation2 + $0x38] sm:$0xff]
      %v4634 = vld [vmem:[#allocation2 + $0x40] sm:$0xff]
      %v4635 = vld [vmem:[#allocation2 + $0x48] sm:$0xff]
      %v4636 = vld [vmem:[#allocation2 + $0x50] sm:$0xff]
      %v4637 = vld [vmem:[#allocation2 + $0x58] sm:$0xff]
      %v4638 = vld [vmem:[#allocation2 + $0x60] sm:$0xff]
      %v4639 = vld [vmem:[#allocation2 + $0x68] sm:$0xff]
      %v4640 = vld [vmem:[#allocation2 + $0x70] sm:$0xff]
      %v4641 = vld [vmem:[#allocation2 + $0x78] sm:$0xff]
      %v4642 = vld [vmem:[#allocation2 + $0x80] sm:$0xff]
      %v4643 = vld [vmem:[#allocation2 + $0x88] sm:$0xff]
      %v4644 = vld [vmem:[#allocation2 + $0x90] sm:$0xff]
      %v4645 = vld [vmem:[#allocation2 + $0x98] sm:$0xff]
      %v4646 = vld [vmem:[#allocation2 + $0xa0] sm:$0xff]
      %v4647 = vld [vmem:[#allocation2 + $0xa8] sm:$0xff]
      %v4648 = vld [vmem:[#allocation2 + $0xb0] sm:$0xff]
      %v4649 = vld [vmem:[#allocation2 + $0xb8] sm:$0xff]
      %v4650 = vld [vmem:[#allocation2 + $0xc0] sm:$0xff]
      %v4651 = vld [vmem:[#allocation2 + $0xc8] sm:$0xff]
      %v4652 = vld [vmem:[#allocation2 + $0xd0] sm:$0xff]
      %v4653 = vld [vmem:[#allocation2 + $0xd8] sm:$0xff]
      %v4654 = vld [vmem:[#allocation2 + $0xe0] sm:$0xff]
      %v4655 = vld [vmem:[#allocation2 + $0xe8] sm:$0xff]
      %v4656 = vld [vmem:[#allocation2 + $0xf0] sm:$0xff]
      %v4657 = vld [vmem:[#allocation2 + $0xf8] sm:$0xff]
      %v4658 = vld [vmem:[#allocation2 + $0x100] sm:$0xff]
      %v4659 = vld [vmem:[#allocation2 + $0x108] sm:$0xff]
      %v4660 = vld [vmem:[#allocation2 + $0x110] sm:$0xff]
      %v4661 = vld [vmem:[#allocation2 + $0x118] sm:$0xff]
      %v4662 = vld [vmem:[#allocation2 + $0x120] sm:$0xff]
      %v4663 = vld [vmem:[#allocation2 + $0x128] sm:$0xff]
      %v4664 = vld [vmem:[#allocation2 + $0x130] sm:$0xff]
      %v4665 = vpack.c.bf16 %v4630, %v4629
      %v4666 = vpack.c.bf16 %v4632, %v4631
      %v4667 = vpack.c.bf16 %v4634, %v4633
      %v4668 = vpack.c.bf16 %v4636, %v4635
      %v4669 = vpack.c.bf16 %v4638, %v4637
      %v4670 = vpack.c.bf16 %v4640, %v4639
      %v4671 = vpack.c.bf16 %v4642, %v4641
      %v4672 = vpack.c.bf16 %v4644, %v4643
      %v4673 = vpack.c.bf16 %v4646, %v4645
      %v4674 = vpack.c.bf16 %v4648, %v4647
      %v4675 = vpack.c.bf16 %v4650, %v4649
      %v4676 = vpack.c.bf16 %v4652, %v4651
      %v4677 = vpack.c.bf16 %v4654, %v4653
      %v4678 = vpack.c.bf16 %v4656, %v4655
      %v4679 = vpack.c.bf16 %v4658, %v4657
      %v4680 = vpack.c.bf16 %v4660, %v4659
      %v4681 = vpack.c.bf16 %v4662, %v4661
      %v4682 = vpack.c.bf16 %v4664, %v4663
      %s4683 = scalar_lea.vmem %s3, 512
      %v4684 = vld [vmem:[%s4683] sm:$0xff]
      %v4685 = vld [vmem:[%s4683 + $0x8] sm:$0xff]
      %v4686 = vld [vmem:[%s4683 + $0x10] sm:$0xff]
      %v4687 = vld [vmem:[%s4683 + $0x18] sm:$0xff]
      %v4688 = vld [vmem:[%s4683 + $0x20] sm:$0xff]
      %v4689 = vld [vmem:[%s4683 + $0x28] sm:$0xff]
      %v4690 = vld [vmem:[%s4683 + $0x30] sm:$0xff]
      %v4691 = vld [vmem:[%s4683 + $0x38] sm:$0xff]
      %v4692 = vld [vmem:[%s4683 + $0x40] sm:$0xff]
      %v4693 = vld [vmem:[%s4683 + $0x48] sm:$0xff]
      %v4694 = vld [vmem:[%s4683 + $0x50] sm:$0xff]
      %v4695 = vld [vmem:[%s4683 + $0x58] sm:$0xff]
      %v4696 = vld [vmem:[%s4683 + $0x60] sm:$0xff]
      %v4697 = vld [vmem:[%s4683 + $0x68] sm:$0xff]
      %v4698 = vld [vmem:[%s4683 + $0x70] sm:$0xff]
      %v4699 = vld [vmem:[%s4683 + $0x78] sm:$0xff]
      %v4700 = vpack.c.bf16 %v4685, %v4684
      %v4701 = vpack.c.bf16 %v4687, %v4686
      %v4702 = vpack.c.bf16 %v4689, %v4688
      %v4703 = vpack.c.bf16 %v4691, %v4690
      %v4704 = vpack.c.bf16 %v4693, %v4692
      %v4705 = vpack.c.bf16 %v4695, %v4694
      %v4706 = vpack.c.bf16 %v4697, %v4696
      %v4707 = vpack.c.bf16 %v4699, %v4698
      %4708 = vmatprep.subr.bf16.mxu0 0
      %4709 = vmatpush1.bf16.msra.mxu0 %v4707
      %4710 = vmatprep.subr.bf16.mxu0 0
      %4711 = vmatpush1.bf16.msra.mxu0 %v4706
      %4712 = vmatprep.subr.bf16.mxu0 0
      %4713 = vmatpush1.bf16.msra.mxu0 %v4705
      %4714 = vmatprep.subr.bf16.mxu0 0
      %4715 = vmatpush1.bf16.msra.mxu0 %v4704
      %4716 = vmatprep.subr.bf16.mxu0 0
      %4717 = vmatpush1.bf16.msra.mxu0 %v4703
      %4718 = vmatprep.subr.bf16.mxu0 0
      %4719 = vmatpush1.bf16.msra.mxu0 %v4702
      %4720 = vmatprep.subr.bf16.mxu0 0
      %4721 = vmatpush1.bf16.msra.mxu0 %v4701
      %4722 = vmatprep.subr.bf16.mxu0 0
      %4723 = vmatpush1.bf16.msra.mxu0 %v4700
      %4724 = vmatprep.subr.bf16.mxu0 0
      %4725 = vmatpush2.bf16.msra.mxu0 0
      %4726 = vmatprep.subr.bf16.mxu0 0
      %4727 = vmatpush2.bf16.msra.mxu0 0
      %4728 = vmatprep.subr.bf16.mxu0 0
      %4729 = vmatpush2.bf16.msra.mxu0 0
      %4730 = vmatprep.subr.bf16.mxu0 0
      %4731 = vmatpush2.bf16.msra.mxu0 0
      %4732 = vmatprep.subr.bf16.mxu0 0
      %4733 = vmatpush2.bf16.msra.mxu0 0
      %4734 = vmatprep.subr.bf16.mxu0 0
      %4735 = vmatpush2.bf16.msra.mxu0 0
      %4736 = vmatprep.subr.bf16.mxu0 0
      %4737 = vmatpush2.bf16.msra.mxu0 0
      %4738 = vmatprep.subr.bf16.mxu0 0
      %4739 = vmatpush2.bf16.msra.mxu0 0
      %4740 = vmatprep.mubr.bf16.mxu0 0
      %4741 = vmatmul.mubr.bf16.gmra.mxu0 %v4665
      %v4742 = vpop.f32.mrf.mxu0
      %v4743 = vadd.f32 0.0, %v4742
      %v4744 = vpop.f32.mrf.mxu0
      %v4745 = vpop.f32.mrf.mxu0
      %v4746 = vadd.f32 0.0, %v4745
      %v4747 = vpop.f32.mrf.mxu0
      %4748 = vmatprep.mubr.bf16.mxu0 0
      %4749 = vmatmul.mubr.bf16.gmra.mxu0 %v4666
      %v4750 = vpop.f32.mrf.mxu0
      %v4751 = vadd.f32 0.0, %v4750
      %v4752 = vpop.f32.mrf.mxu0
      %v4753 = vpop.f32.mrf.mxu0
      %v4754 = vadd.f32 0.0, %v4753
      %v4755 = vpop.f32.mrf.mxu0
      %4756 = vmatprep.mubr.bf16.mxu0 0
      %4757 = vmatmul.mubr.bf16.gmra.mxu0 %v4667
      %v4758 = vpop.f32.mrf.mxu0
      %v4759 = vadd.f32 0.0, %v4758
      %v4760 = vpop.f32.mrf.mxu0
      %v4761 = vpop.f32.mrf.mxu0
      %v4762 = vadd.f32 0.0, %v4761
      %v4763 = vpop.f32.mrf.mxu0
      %4764 = vmatprep.mubr.bf16.mxu0 0
      %4765 = vmatmul.mubr.bf16.gmra.mxu0 %v4668
      %v4766 = vpop.f32.mrf.mxu0
      %v4767 = vadd.f32 0.0, %v4766
      %v4768 = vpop.f32.mrf.mxu0
      %v4769 = vpop.f32.mrf.mxu0
      %v4770 = vadd.f32 0.0, %v4769
      %v4771 = vpop.f32.mrf.mxu0
      %4772 = vmatprep.mubr.bf16.mxu0 0
      %4773 = vmatmul.mubr.bf16.gmra.mxu0 %v4669
      %v4774 = vpop.f32.mrf.mxu0
      %v4775 = vadd.f32 0.0, %v4774
      %v4776 = vpop.f32.mrf.mxu0
      %v4777 = vpop.f32.mrf.mxu0
      %v4778 = vadd.f32 0.0, %v4777
      %v4779 = vpop.f32.mrf.mxu0
      %4780 = vmatprep.mubr.bf16.mxu0 0
      %4781 = vmatmul.mubr.bf16.gmra.mxu0 %v4670
      %v4782 = vpop.f32.mrf.mxu0
      %v4783 = vadd.f32 0.0, %v4782
      %v4784 = vpop.f32.mrf.mxu0
      %v4785 = vpop.f32.mrf.mxu0
      %v4786 = vadd.f32 0.0, %v4785
      %v4787 = vpop.f32.mrf.mxu0
      %4788 = vmatprep.mubr.bf16.mxu0 0
      %4789 = vmatmul.mubr.bf16.gmra.mxu0 %v4671
      %v4790 = vpop.f32.mrf.mxu0
      %v4791 = vadd.f32 0.0, %v4790
      %v4792 = vpop.f32.mrf.mxu0
      %v4793 = vpop.f32.mrf.mxu0
      %v4794 = vadd.f32 0.0, %v4793
      %v4795 = vpop.f32.mrf.mxu0
      %4796 = vmatprep.mubr.bf16.mxu0 0
      %4797 = vmatmul.mubr.bf16.gmra.mxu0 %v4672
      %v4798 = vpop.f32.mrf.mxu0
      %v4799 = vadd.f32 0.0, %v4798
      %v4800 = vpop.f32.mrf.mxu0
      %v4801 = vpop.f32.mrf.mxu0
      %v4802 = vadd.f32 0.0, %v4801
      %v4803 = vpop.f32.mrf.mxu0
      %4804 = vmatprep.mubr.bf16.mxu0 0
      %4805 = vmatmul.mubr.bf16.gmra.mxu0 %v4673
      %v4806 = vpop.f32.mrf.mxu0
      %v4807 = vadd.f32 0.0, %v4806
      %v4808 = vpop.f32.mrf.mxu0
      %v4809 = vpop.f32.mrf.mxu0
      %v4810 = vadd.f32 0.0, %v4809
      %v4811 = vpop.f32.mrf.mxu0
      %4812 = vmatprep.mubr.bf16.mxu0 0
      %4813 = vmatmul.mubr.bf16.gmra.mxu0 %v4674
      %v4814 = vpop.f32.mrf.mxu0
      %v4815 = vadd.f32 0.0, %v4814
      %v4816 = vpop.f32.mrf.mxu0
      %v4817 = vpop.f32.mrf.mxu0
      %v4818 = vadd.f32 0.0, %v4817
      %v4819 = vpop.f32.mrf.mxu0
      %4820 = vmatprep.mubr.bf16.mxu0 0
      %4821 = vmatmul.mubr.bf16.gmra.mxu0 %v4675
      %v4822 = vpop.f32.mrf.mxu0
      %v4823 = vadd.f32 0.0, %v4822
      %v4824 = vpop.f32.mrf.mxu0
      %v4825 = vpop.f32.mrf.mxu0
      %v4826 = vadd.f32 0.0, %v4825
      %v4827 = vpop.f32.mrf.mxu0
      %4828 = vmatprep.mubr.bf16.mxu0 0
      %4829 = vmatmul.mubr.bf16.gmra.mxu0 %v4676
      %v4830 = vpop.f32.mrf.mxu0
      %v4831 = vadd.f32 0.0, %v4830
      %v4832 = vpop.f32.mrf.mxu0
      %v4833 = vpop.f32.mrf.mxu0
      %v4834 = vadd.f32 0.0, %v4833
      %v4835 = vpop.f32.mrf.mxu0
      %4836 = vmatprep.mubr.bf16.mxu0 0
      %4837 = vmatmul.mubr.bf16.gmra.mxu0 %v4677
      %v4838 = vpop.f32.mrf.mxu0
      %v4839 = vadd.f32 0.0, %v4838
      %v4840 = vpop.f32.mrf.mxu0
      %v4841 = vpop.f32.mrf.mxu0
      %v4842 = vadd.f32 0.0, %v4841
      %v4843 = vpop.f32.mrf.mxu0
      %4844 = vmatprep.mubr.bf16.mxu0 0
      %4845 = vmatmul.mubr.bf16.gmra.mxu0 %v4678
      %v4846 = vpop.f32.mrf.mxu0
      %v4847 = vadd.f32 0.0, %v4846
      %v4848 = vpop.f32.mrf.mxu0
      %v4849 = vpop.f32.mrf.mxu0
      %v4850 = vadd.f32 0.0, %v4849
      %v4851 = vpop.f32.mrf.mxu0
      %4852 = vmatprep.mubr.bf16.mxu0 0
      %4853 = vmatmul.mubr.bf16.gmra.mxu0 %v4679
      %v4854 = vpop.f32.mrf.mxu0
      %v4855 = vadd.f32 0.0, %v4854
      %v4856 = vpop.f32.mrf.mxu0
      %v4857 = vpop.f32.mrf.mxu0
      %v4858 = vadd.f32 0.0, %v4857
      %v4859 = vpop.f32.mrf.mxu0
      %4860 = vmatprep.mubr.bf16.mxu0 0
      %4861 = vmatmul.mubr.bf16.gmra.mxu0 %v4680
      %v4862 = vpop.f32.mrf.mxu0
      %v4863 = vadd.f32 0.0, %v4862
      %v4864 = vpop.f32.mrf.mxu0
      %v4865 = vpop.f32.mrf.mxu0
      %v4866 = vadd.f32 0.0, %v4865
      %v4867 = vpop.f32.mrf.mxu0
      %4868 = vmatprep.mubr.bf16.mxu0 0
      %4869 = vmatmul.mubr.bf16.gmra.mxu0 %v4681
      %v4870 = vpop.f32.mrf.mxu0
      %v4871 = vadd.f32 0.0, %v4870
      %v4872 = vpop.f32.mrf.mxu0
      %v4873 = vpop.f32.mrf.mxu0
      %v4874 = vadd.f32 0.0, %v4873
      %v4875 = vpop.f32.mrf.mxu0
      %4876 = vmatprep.mubr.bf16.mxu0 0
      %4877 = vmatmul.mubr.bf16.gmra.mxu0 %v4682
      %v4878 = vpop.f32.mrf.mxu0
      %v4879 = vadd.f32 0.0, %v4878
      %v4880 = vpop.f32.mrf.mxu0
      %v4881 = vpop.f32.mrf.mxu0
      %v4882 = vadd.f32 0.0, %v4881
      %v4883 = vpop.f32.mrf.mxu0
      %4884 = vdwg.mxu0
      %v4885 = vadd.f32 %v4593, %v4743
      %v4886 = vadd.f32 %v4594, %v4746
      %v4887 = vadd.f32 %v4595, %v4751
      %v4888 = vadd.f32 %v4596, %v4754
      %v4889 = vadd.f32 %v4597, %v4759
      %v4890 = vadd.f32 %v4598, %v4762
      %v4891 = vadd.f32 %v4599, %v4767
      %v4892 = vadd.f32 %v4600, %v4770
      %v4893 = vadd.f32 %v4601, %v4775
      %v4894 = vadd.f32 %v4602, %v4778
      %v4895 = vadd.f32 %v4603, %v4783
      %v4896 = vadd.f32 %v4604, %v4786
      %v4897 = vadd.f32 %v4605, %v4791
      %v4898 = vadd.f32 %v4606, %v4794
      %v4899 = vadd.f32 %v4607, %v4799
      %v4900 = vadd.f32 %v4608, %v4802
      %v4901 = vadd.f32 %v4609, %v4807
      %v4902 = vadd.f32 %v4610, %v4810
      %v4903 = vadd.f32 %v4611, %v4815
      %v4904 = vadd.f32 %v4612, %v4818
      %v4905 = vadd.f32 %v4613, %v4823
      %v4906 = vadd.f32 %v4614, %v4826
      %v4907 = vadd.f32 %v4615, %v4831
      %v4908 = vadd.f32 %v4616, %v4834
      %v4909 = vadd.f32 %v4617, %v4839
      %v4910 = vadd.f32 %v4618, %v4842
      %v4911 = vadd.f32 %v4619, %v4847
      %v4912 = vadd.f32 %v4620, %v4850
      %v4913 = vadd.f32 %v4621, %v4855
      %v4914 = vadd.f32 %v4622, %v4858
      %v4915 = vadd.f32 %v4623, %v4863
      %v4916 = vadd.f32 %v4624, %v4866
      %v4917 = vadd.f32 %v4625, %v4871
      %v4918 = vadd.f32 %v4626, %v4874
      %v4919 = vadd.f32 %v4627, %v4879
      %v4920 = vadd.f32 %v4628, %v4882
      %v4921 = vld [vmem:[#allocation2 + $0x19] sm:$0xff]
      %v4922 = vld [vmem:[#allocation2 + $0x21] sm:$0xff]
      %v4923 = vld [vmem:[#allocation2 + $0x29] sm:$0xff]
      %v4924 = vld [vmem:[#allocation2 + $0x31] sm:$0xff]
      %v4925 = vld [vmem:[#allocation2 + $0x39] sm:$0xff]
      %v4926 = vld [vmem:[#allocation2 + $0x41] sm:$0xff]
      %v4927 = vld [vmem:[#allocation2 + $0x49] sm:$0xff]
      %v4928 = vld [vmem:[#allocation2 + $0x51] sm:$0xff]
      %v4929 = vld [vmem:[#allocation2 + $0x59] sm:$0xff]
      %v4930 = vld [vmem:[#allocation2 + $0x61] sm:$0xff]
      %v4931 = vld [vmem:[#allocation2 + $0x69] sm:$0xff]
      %v4932 = vld [vmem:[#allocation2 + $0x71] sm:$0xff]
      %v4933 = vld [vmem:[#allocation2 + $0x79] sm:$0xff]
      %v4934 = vld [vmem:[#allocation2 + $0x81] sm:$0xff]
      %v4935 = vld [vmem:[#allocation2 + $0x89] sm:$0xff]
      %v4936 = vld [vmem:[#allocation2 + $0x91] sm:$0xff]
      %v4937 = vld [vmem:[#allocation2 + $0x99] sm:$0xff]
      %v4938 = vld [vmem:[#allocation2 + $0xa1] sm:$0xff]
      %v4939 = vld [vmem:[#allocation2 + $0xa9] sm:$0xff]
      %v4940 = vld [vmem:[#allocation2 + $0xb1] sm:$0xff]
      %v4941 = vld [vmem:[#allocation2 + $0xb9] sm:$0xff]
      %v4942 = vld [vmem:[#allocation2 + $0xc1] sm:$0xff]
      %v4943 = vld [vmem:[#allocation2 + $0xc9] sm:$0xff]
      %v4944 = vld [vmem:[#allocation2 + $0xd1] sm:$0xff]
      %v4945 = vld [vmem:[#allocation2 + $0xd9] sm:$0xff]
      %v4946 = vld [vmem:[#allocation2 + $0xe1] sm:$0xff]
      %v4947 = vld [vmem:[#allocation2 + $0xe9] sm:$0xff]
      %v4948 = vld [vmem:[#allocation2 + $0xf1] sm:$0xff]
      %v4949 = vld [vmem:[#allocation2 + $0xf9] sm:$0xff]
      %v4950 = vld [vmem:[#allocation2 + $0x101] sm:$0xff]
      %v4951 = vld [vmem:[#allocation2 + $0x109] sm:$0xff]
      %v4952 = vld [vmem:[#allocation2 + $0x111] sm:$0xff]
      %v4953 = vld [vmem:[#allocation2 + $0x119] sm:$0xff]
      %v4954 = vld [vmem:[#allocation2 + $0x121] sm:$0xff]
      %v4955 = vld [vmem:[#allocation2 + $0x129] sm:$0xff]
      %v4956 = vld [vmem:[#allocation2 + $0x131] sm:$0xff]
      %v4957 = vpack.c.bf16 %v4922, %v4921
      %v4958 = vpack.c.bf16 %v4924, %v4923
      %v4959 = vpack.c.bf16 %v4926, %v4925
      %v4960 = vpack.c.bf16 %v4928, %v4927
      %v4961 = vpack.c.bf16 %v4930, %v4929
      %v4962 = vpack.c.bf16 %v4932, %v4931
      %v4963 = vpack.c.bf16 %v4934, %v4933
      %v4964 = vpack.c.bf16 %v4936, %v4935
      %v4965 = vpack.c.bf16 %v4938, %v4937
      %v4966 = vpack.c.bf16 %v4940, %v4939
      %v4967 = vpack.c.bf16 %v4942, %v4941
      %v4968 = vpack.c.bf16 %v4944, %v4943
      %v4969 = vpack.c.bf16 %v4946, %v4945
      %v4970 = vpack.c.bf16 %v4948, %v4947
      %v4971 = vpack.c.bf16 %v4950, %v4949
      %v4972 = vpack.c.bf16 %v4952, %v4951
      %v4973 = vpack.c.bf16 %v4954, %v4953
      %v4974 = vpack.c.bf16 %v4956, %v4955
      %s4975 = scalar_lea.vmem %s3, 640
      %v4976 = vld [vmem:[%s4975] sm:$0xff]
      %v4977 = vld [vmem:[%s4975 + $0x8] sm:$0xff]
      %v4978 = vld [vmem:[%s4975 + $0x10] sm:$0xff]
      %v4979 = vld [vmem:[%s4975 + $0x18] sm:$0xff]
      %v4980 = vld [vmem:[%s4975 + $0x20] sm:$0xff]
      %v4981 = vld [vmem:[%s4975 + $0x28] sm:$0xff]
      %v4982 = vld [vmem:[%s4975 + $0x30] sm:$0xff]
      %v4983 = vld [vmem:[%s4975 + $0x38] sm:$0xff]
      %v4984 = vld [vmem:[%s4975 + $0x40] sm:$0xff]
      %v4985 = vld [vmem:[%s4975 + $0x48] sm:$0xff]
      %v4986 = vld [vmem:[%s4975 + $0x50] sm:$0xff]
      %v4987 = vld [vmem:[%s4975 + $0x58] sm:$0xff]
      %v4988 = vld [vmem:[%s4975 + $0x60] sm:$0xff]
      %v4989 = vld [vmem:[%s4975 + $0x68] sm:$0xff]
      %v4990 = vld [vmem:[%s4975 + $0x70] sm:$0xff]
      %v4991 = vld [vmem:[%s4975 + $0x78] sm:$0xff]
      %v4992 = vpack.c.bf16 %v4977, %v4976
      %v4993 = vpack.c.bf16 %v4979, %v4978
      %v4994 = vpack.c.bf16 %v4981, %v4980
      %v4995 = vpack.c.bf16 %v4983, %v4982
      %v4996 = vpack.c.bf16 %v4985, %v4984
      %v4997 = vpack.c.bf16 %v4987, %v4986
      %v4998 = vpack.c.bf16 %v4989, %v4988
      %v4999 = vpack.c.bf16 %v4991, %v4990
      %5000 = vmatprep.subr.bf16.mxu0 0
      %5001 = vmatpush1.bf16.msra.mxu0 %v4999
      %5002 = vmatprep.subr.bf16.mxu0 0
      %5003 = vmatpush1.bf16.msra.mxu0 %v4998
      %5004 = vmatprep.subr.bf16.mxu0 0
      %5005 = vmatpush1.bf16.msra.mxu0 %v4997
      %5006 = vmatprep.subr.bf16.mxu0 0
      %5007 = vmatpush1.bf16.msra.mxu0 %v4996
      %5008 = vmatprep.subr.bf16.mxu0 0
      %5009 = vmatpush1.bf16.msra.mxu0 %v4995
      %5010 = vmatprep.subr.bf16.mxu0 0
      %5011 = vmatpush1.bf16.msra.mxu0 %v4994
      %5012 = vmatprep.subr.bf16.mxu0 0
      %5013 = vmatpush1.bf16.msra.mxu0 %v4993
      %5014 = vmatprep.subr.bf16.mxu0 0
      %5015 = vmatpush1.bf16.msra.mxu0 %v4992
      %5016 = vmatprep.subr.bf16.mxu0 0
      %5017 = vmatpush2.bf16.msra.mxu0 0
      %5018 = vmatprep.subr.bf16.mxu0 0
      %5019 = vmatpush2.bf16.msra.mxu0 0
      %5020 = vmatprep.subr.bf16.mxu0 0
      %5021 = vmatpush2.bf16.msra.mxu0 0
      %5022 = vmatprep.subr.bf16.mxu0 0
      %5023 = vmatpush2.bf16.msra.mxu0 0
      %5024 = vmatprep.subr.bf16.mxu0 0
      %5025 = vmatpush2.bf16.msra.mxu0 0
      %5026 = vmatprep.subr.bf16.mxu0 0
      %5027 = vmatpush2.bf16.msra.mxu0 0
      %5028 = vmatprep.subr.bf16.mxu0 0
      %5029 = vmatpush2.bf16.msra.mxu0 0
      %5030 = vmatprep.subr.bf16.mxu0 0
      %5031 = vmatpush2.bf16.msra.mxu0 0
      %5032 = vmatprep.mubr.bf16.mxu0 0
      %5033 = vmatmul.mubr.bf16.gmra.mxu0 %v4957
      %v5034 = vpop.f32.mrf.mxu0
      %v5035 = vadd.f32 0.0, %v5034
      %v5036 = vpop.f32.mrf.mxu0
      %v5037 = vpop.f32.mrf.mxu0
      %v5038 = vadd.f32 0.0, %v5037
      %v5039 = vpop.f32.mrf.mxu0
      %5040 = vmatprep.mubr.bf16.mxu0 0
      %5041 = vmatmul.mubr.bf16.gmra.mxu0 %v4958
      %v5042 = vpop.f32.mrf.mxu0
      %v5043 = vadd.f32 0.0, %v5042
      %v5044 = vpop.f32.mrf.mxu0
      %v5045 = vpop.f32.mrf.mxu0
      %v5046 = vadd.f32 0.0, %v5045
      %v5047 = vpop.f32.mrf.mxu0
      %5048 = vmatprep.mubr.bf16.mxu0 0
      %5049 = vmatmul.mubr.bf16.gmra.mxu0 %v4959
      %v5050 = vpop.f32.mrf.mxu0
      %v5051 = vadd.f32 0.0, %v5050
      %v5052 = vpop.f32.mrf.mxu0
      %v5053 = vpop.f32.mrf.mxu0
      %v5054 = vadd.f32 0.0, %v5053
      %v5055 = vpop.f32.mrf.mxu0
      %5056 = vmatprep.mubr.bf16.mxu0 0
      %5057 = vmatmul.mubr.bf16.gmra.mxu0 %v4960
      %v5058 = vpop.f32.mrf.mxu0
      %v5059 = vadd.f32 0.0, %v5058
      %v5060 = vpop.f32.mrf.mxu0
      %v5061 = vpop.f32.mrf.mxu0
      %v5062 = vadd.f32 0.0, %v5061
      %v5063 = vpop.f32.mrf.mxu0
      %5064 = vmatprep.mubr.bf16.mxu0 0
      %5065 = vmatmul.mubr.bf16.gmra.mxu0 %v4961
      %v5066 = vpop.f32.mrf.mxu0
      %v5067 = vadd.f32 0.0, %v5066
      %v5068 = vpop.f32.mrf.mxu0
      %v5069 = vpop.f32.mrf.mxu0
      %v5070 = vadd.f32 0.0, %v5069
      %v5071 = vpop.f32.mrf.mxu0
      %5072 = vmatprep.mubr.bf16.mxu0 0
      %5073 = vmatmul.mubr.bf16.gmra.mxu0 %v4962
      %v5074 = vpop.f32.mrf.mxu0
      %v5075 = vadd.f32 0.0, %v5074
      %v5076 = vpop.f32.mrf.mxu0
      %v5077 = vpop.f32.mrf.mxu0
      %v5078 = vadd.f32 0.0, %v5077
      %v5079 = vpop.f32.mrf.mxu0
      %5080 = vmatprep.mubr.bf16.mxu0 0
      %5081 = vmatmul.mubr.bf16.gmra.mxu0 %v4963
      %v5082 = vpop.f32.mrf.mxu0
      %v5083 = vadd.f32 0.0, %v5082
      %v5084 = vpop.f32.mrf.mxu0
      %v5085 = vpop.f32.mrf.mxu0
      %v5086 = vadd.f32 0.0, %v5085
      %v5087 = vpop.f32.mrf.mxu0
      %5088 = vmatprep.mubr.bf16.mxu0 0
      %5089 = vmatmul.mubr.bf16.gmra.mxu0 %v4964
      %v5090 = vpop.f32.mrf.mxu0
      %v5091 = vadd.f32 0.0, %v5090
      %v5092 = vpop.f32.mrf.mxu0
      %v5093 = vpop.f32.mrf.mxu0
      %v5094 = vadd.f32 0.0, %v5093
      %v5095 = vpop.f32.mrf.mxu0
      %5096 = vmatprep.mubr.bf16.mxu0 0
      %5097 = vmatmul.mubr.bf16.gmra.mxu0 %v4965
      %v5098 = vpop.f32.mrf.mxu0
      %v5099 = vadd.f32 0.0, %v5098
      %v5100 = vpop.f32.mrf.mxu0
      %v5101 = vpop.f32.mrf.mxu0
      %v5102 = vadd.f32 0.0, %v5101
      %v5103 = vpop.f32.mrf.mxu0
      %5104 = vmatprep.mubr.bf16.mxu0 0
      %5105 = vmatmul.mubr.bf16.gmra.mxu0 %v4966
      %v5106 = vpop.f32.mrf.mxu0
      %v5107 = vadd.f32 0.0, %v5106
      %v5108 = vpop.f32.mrf.mxu0
      %v5109 = vpop.f32.mrf.mxu0
      %v5110 = vadd.f32 0.0, %v5109
      %v5111 = vpop.f32.mrf.mxu0
      %5112 = vmatprep.mubr.bf16.mxu0 0
      %5113 = vmatmul.mubr.bf16.gmra.mxu0 %v4967
      %v5114 = vpop.f32.mrf.mxu0
      %v5115 = vadd.f32 0.0, %v5114
      %v5116 = vpop.f32.mrf.mxu0
      %v5117 = vpop.f32.mrf.mxu0
      %v5118 = vadd.f32 0.0, %v5117
      %v5119 = vpop.f32.mrf.mxu0
      %5120 = vmatprep.mubr.bf16.mxu0 0
      %5121 = vmatmul.mubr.bf16.gmra.mxu0 %v4968
      %v5122 = vpop.f32.mrf.mxu0
      %v5123 = vadd.f32 0.0, %v5122
      %v5124 = vpop.f32.mrf.mxu0
      %v5125 = vpop.f32.mrf.mxu0
      %v5126 = vadd.f32 0.0, %v5125
      %v5127 = vpop.f32.mrf.mxu0
      %5128 = vmatprep.mubr.bf16.mxu0 0
      %5129 = vmatmul.mubr.bf16.gmra.mxu0 %v4969
      %v5130 = vpop.f32.mrf.mxu0
      %v5131 = vadd.f32 0.0, %v5130
      %v5132 = vpop.f32.mrf.mxu0
      %v5133 = vpop.f32.mrf.mxu0
      %v5134 = vadd.f32 0.0, %v5133
      %v5135 = vpop.f32.mrf.mxu0
      %5136 = vmatprep.mubr.bf16.mxu0 0
      %5137 = vmatmul.mubr.bf16.gmra.mxu0 %v4970
      %v5138 = vpop.f32.mrf.mxu0
      %v5139 = vadd.f32 0.0, %v5138
      %v5140 = vpop.f32.mrf.mxu0
      %v5141 = vpop.f32.mrf.mxu0
      %v5142 = vadd.f32 0.0, %v5141
      %v5143 = vpop.f32.mrf.mxu0
      %5144 = vmatprep.mubr.bf16.mxu0 0
      %5145 = vmatmul.mubr.bf16.gmra.mxu0 %v4971
      %v5146 = vpop.f32.mrf.mxu0
      %v5147 = vadd.f32 0.0, %v5146
      %v5148 = vpop.f32.mrf.mxu0
      %v5149 = vpop.f32.mrf.mxu0
      %v5150 = vadd.f32 0.0, %v5149
      %v5151 = vpop.f32.mrf.mxu0
      %5152 = vmatprep.mubr.bf16.mxu0 0
      %5153 = vmatmul.mubr.bf16.gmra.mxu0 %v4972
      %v5154 = vpop.f32.mrf.mxu0
      %v5155 = vadd.f32 0.0, %v5154
      %v5156 = vpop.f32.mrf.mxu0
      %v5157 = vpop.f32.mrf.mxu0
      %v5158 = vadd.f32 0.0, %v5157
      %v5159 = vpop.f32.mrf.mxu0
      %5160 = vmatprep.mubr.bf16.mxu0 0
      %5161 = vmatmul.mubr.bf16.gmra.mxu0 %v4973
      %v5162 = vpop.f32.mrf.mxu0
      %v5163 = vadd.f32 0.0, %v5162
      %v5164 = vpop.f32.mrf.mxu0
      %v5165 = vpop.f32.mrf.mxu0
      %v5166 = vadd.f32 0.0, %v5165
      %v5167 = vpop.f32.mrf.mxu0
      %5168 = vmatprep.mubr.bf16.mxu0 0
      %5169 = vmatmul.mubr.bf16.gmra.mxu0 %v4974
      %v5170 = vpop.f32.mrf.mxu0
      %v5171 = vadd.f32 0.0, %v5170
      %v5172 = vpop.f32.mrf.mxu0
      %v5173 = vpop.f32.mrf.mxu0
      %v5174 = vadd.f32 0.0, %v5173
      %v5175 = vpop.f32.mrf.mxu0
      %5176 = vdwg.mxu0
      %v5177 = vadd.f32 %v4885, %v5035
      %v5178 = vadd.f32 %v4886, %v5038
      %v5179 = vadd.f32 %v4887, %v5043
      %v5180 = vadd.f32 %v4888, %v5046
      %v5181 = vadd.f32 %v4889, %v5051
      %v5182 = vadd.f32 %v4890, %v5054
      %v5183 = vadd.f32 %v4891, %v5059
      %v5184 = vadd.f32 %v4892, %v5062
      %v5185 = vadd.f32 %v4893, %v5067
      %v5186 = vadd.f32 %v4894, %v5070
      %v5187 = vadd.f32 %v4895, %v5075
      %v5188 = vadd.f32 %v4896, %v5078
      %v5189 = vadd.f32 %v4897, %v5083
      %v5190 = vadd.f32 %v4898, %v5086
      %v5191 = vadd.f32 %v4899, %v5091
      %v5192 = vadd.f32 %v4900, %v5094
      %v5193 = vadd.f32 %v4901, %v5099
      %v5194 = vadd.f32 %v4902, %v5102
      %v5195 = vadd.f32 %v4903, %v5107
      %v5196 = vadd.f32 %v4904, %v5110
      %v5197 = vadd.f32 %v4905, %v5115
      %v5198 = vadd.f32 %v4906, %v5118
      %v5199 = vadd.f32 %v4907, %v5123
      %v5200 = vadd.f32 %v4908, %v5126
      %v5201 = vadd.f32 %v4909, %v5131
      %v5202 = vadd.f32 %v4910, %v5134
      %v5203 = vadd.f32 %v4911, %v5139
      %v5204 = vadd.f32 %v4912, %v5142
      %v5205 = vadd.f32 %v4913, %v5147
      %v5206 = vadd.f32 %v4914, %v5150
      %v5207 = vadd.f32 %v4915, %v5155
      %v5208 = vadd.f32 %v4916, %v5158
      %v5209 = vadd.f32 %v4917, %v5163
      %v5210 = vadd.f32 %v4918, %v5166
      %v5211 = vadd.f32 %v4919, %v5171
      %v5212 = vadd.f32 %v4920, %v5174
      %v5213 = vld [vmem:[#allocation2 + $0x29] sm:$0xff]
      %v5214 = vld [vmem:[#allocation2 + $0x31] sm:$0xff]
      %v5215 = vld [vmem:[#allocation2 + $0x39] sm:$0xff]
      %v5216 = vld [vmem:[#allocation2 + $0x41] sm:$0xff]
      %v5217 = vld [vmem:[#allocation2 + $0x49] sm:$0xff]
      %v5218 = vld [vmem:[#allocation2 + $0x51] sm:$0xff]
      %v5219 = vld [vmem:[#allocation2 + $0x59] sm:$0xff]
      %v5220 = vld [vmem:[#allocation2 + $0x61] sm:$0xff]
      %v5221 = vld [vmem:[#allocation2 + $0x69] sm:$0xff]
      %v5222 = vld [vmem:[#allocation2 + $0x71] sm:$0xff]
      %v5223 = vld [vmem:[#allocation2 + $0x79] sm:$0xff]
      %v5224 = vld [vmem:[#allocation2 + $0x81] sm:$0xff]
      %v5225 = vld [vmem:[#allocation2 + $0x89] sm:$0xff]
      %v5226 = vld [vmem:[#allocation2 + $0x91] sm:$0xff]
      %v5227 = vld [vmem:[#allocation2 + $0x99] sm:$0xff]
      %v5228 = vld [vmem:[#allocation2 + $0xa1] sm:$0xff]
      %v5229 = vld [vmem:[#allocation2 + $0xa9] sm:$0xff]
      %v5230 = vld [vmem:[#allocation2 + $0xb1] sm:$0xff]
      %v5231 = vld [vmem:[#allocation2 + $0xb9] sm:$0xff]
      %v5232 = vld [vmem:[#allocation2 + $0xc1] sm:$0xff]
      %v5233 = vld [vmem:[#allocation2 + $0xc9] sm:$0xff]
      %v5234 = vld [vmem:[#allocation2 + $0xd1] sm:$0xff]
      %v5235 = vld [vmem:[#allocation2 + $0xd9] sm:$0xff]
      %v5236 = vld [vmem:[#allocation2 + $0xe1] sm:$0xff]
      %v5237 = vld [vmem:[#allocation2 + $0xe9] sm:$0xff]
      %v5238 = vld [vmem:[#allocation2 + $0xf1] sm:$0xff]
      %v5239 = vld [vmem:[#allocation2 + $0xf9] sm:$0xff]
      %v5240 = vld [vmem:[#allocation2 + $0x101] sm:$0xff]
      %v5241 = vld [vmem:[#allocation2 + $0x109] sm:$0xff]
      %v5242 = vld [vmem:[#allocation2 + $0x111] sm:$0xff]
      %v5243 = vld [vmem:[#allocation2 + $0x119] sm:$0xff]
      %v5244 = vld [vmem:[#allocation2 + $0x121] sm:$0xff]
      %v5245 = vld [vmem:[#allocation2 + $0x129] sm:$0xff]
      %v5246 = vld [vmem:[#allocation2 + $0x131] sm:$0xff]
      %v5247 = vld [vmem:[#allocation2 + $0x139] sm:$0xff]
      %v5248 = vld [vmem:[#allocation2 + $0x141] sm:$0xff]
      %v5249 = vpack.c.bf16 %v5214, %v5213
      %v5250 = vpack.c.bf16 %v5216, %v5215
      %v5251 = vpack.c.bf16 %v5218, %v5217
      %v5252 = vpack.c.bf16 %v5220, %v5219
      %v5253 = vpack.c.bf16 %v5222, %v5221
      %v5254 = vpack.c.bf16 %v5224, %v5223
      %v5255 = vpack.c.bf16 %v5226, %v5225
      %v5256 = vpack.c.bf16 %v5228, %v5227
      %v5257 = vpack.c.bf16 %v5230, %v5229
      %v5258 = vpack.c.bf16 %v5232, %v5231
      %v5259 = vpack.c.bf16 %v5234, %v5233
      %v5260 = vpack.c.bf16 %v5236, %v5235
      %v5261 = vpack.c.bf16 %v5238, %v5237
      %v5262 = vpack.c.bf16 %v5240, %v5239
      %v5263 = vpack.c.bf16 %v5242, %v5241
      %v5264 = vpack.c.bf16 %v5244, %v5243
      %v5265 = vpack.c.bf16 %v5246, %v5245
      %v5266 = vpack.c.bf16 %v5248, %v5247
      %s5267 = scalar_lea.vmem %s3, 768
      %v5268 = vld [vmem:[%s5267] sm:$0xff]
      %v5269 = vld [vmem:[%s5267 + $0x8] sm:$0xff]
      %v5270 = vld [vmem:[%s5267 + $0x10] sm:$0xff]
      %v5271 = vld [vmem:[%s5267 + $0x18] sm:$0xff]
      %v5272 = vld [vmem:[%s5267 + $0x20] sm:$0xff]
      %v5273 = vld [vmem:[%s5267 + $0x28] sm:$0xff]
      %v5274 = vld [vmem:[%s5267 + $0x30] sm:$0xff]
      %v5275 = vld [vmem:[%s5267 + $0x38] sm:$0xff]
      %v5276 = vld [vmem:[%s5267 + $0x40] sm:$0xff]
      %v5277 = vld [vmem:[%s5267 + $0x48] sm:$0xff]
      %v5278 = vld [vmem:[%s5267 + $0x50] sm:$0xff]
      %v5279 = vld [vmem:[%s5267 + $0x58] sm:$0xff]
      %v5280 = vld [vmem:[%s5267 + $0x60] sm:$0xff]
      %v5281 = vld [vmem:[%s5267 + $0x68] sm:$0xff]
      %v5282 = vld [vmem:[%s5267 + $0x70] sm:$0xff]
      %v5283 = vld [vmem:[%s5267 + $0x78] sm:$0xff]
      %v5284 = vpack.c.bf16 %v5269, %v5268
      %v5285 = vpack.c.bf16 %v5271, %v5270
      %v5286 = vpack.c.bf16 %v5273, %v5272
      %v5287 = vpack.c.bf16 %v5275, %v5274
      %v5288 = vpack.c.bf16 %v5277, %v5276
      %v5289 = vpack.c.bf16 %v5279, %v5278
      %v5290 = vpack.c.bf16 %v5281, %v5280
      %v5291 = vpack.c.bf16 %v5283, %v5282
      %5292 = vmatprep.subr.bf16.mxu0 0
      %5293 = vmatpush1.bf16.msra.mxu0 %v5291
      %5294 = vmatprep.subr.bf16.mxu0 0
      %5295 = vmatpush1.bf16.msra.mxu0 %v5290
      %5296 = vmatprep.subr.bf16.mxu0 0
      %5297 = vmatpush1.bf16.msra.mxu0 %v5289
      %5298 = vmatprep.subr.bf16.mxu0 0
      %5299 = vmatpush1.bf16.msra.mxu0 %v5288
      %5300 = vmatprep.subr.bf16.mxu0 0
      %5301 = vmatpush1.bf16.msra.mxu0 %v5287
      %5302 = vmatprep.subr.bf16.mxu0 0
      %5303 = vmatpush1.bf16.msra.mxu0 %v5286
      %5304 = vmatprep.subr.bf16.mxu0 0
      %5305 = vmatpush1.bf16.msra.mxu0 %v5285
      %5306 = vmatprep.subr.bf16.mxu0 0
      %5307 = vmatpush1.bf16.msra.mxu0 %v5284
      %5308 = vmatprep.subr.bf16.mxu0 0
      %5309 = vmatpush2.bf16.msra.mxu0 0
      %5310 = vmatprep.subr.bf16.mxu0 0
      %5311 = vmatpush2.bf16.msra.mxu0 0
      %5312 = vmatprep.subr.bf16.mxu0 0
      %5313 = vmatpush2.bf16.msra.mxu0 0
      %5314 = vmatprep.subr.bf16.mxu0 0
      %5315 = vmatpush2.bf16.msra.mxu0 0
      %5316 = vmatprep.subr.bf16.mxu0 0
      %5317 = vmatpush2.bf16.msra.mxu0 0
      %5318 = vmatprep.subr.bf16.mxu0 0
      %5319 = vmatpush2.bf16.msra.mxu0 0
      %5320 = vmatprep.subr.bf16.mxu0 0
      %5321 = vmatpush2.bf16.msra.mxu0 0
      %5322 = vmatprep.subr.bf16.mxu0 0
      %5323 = vmatpush2.bf16.msra.mxu0 0
      %5324 = vmatprep.mubr.bf16.mxu0 0
      %5325 = vmatmul.mubr.bf16.gmra.mxu0 %v5249
      %v5326 = vpop.f32.mrf.mxu0
      %v5327 = vadd.f32 0.0, %v5326
      %v5328 = vpop.f32.mrf.mxu0
      %v5329 = vpop.f32.mrf.mxu0
      %v5330 = vadd.f32 0.0, %v5329
      %v5331 = vpop.f32.mrf.mxu0
      %5332 = vmatprep.mubr.bf16.mxu0 0
      %5333 = vmatmul.mubr.bf16.gmra.mxu0 %v5250
      %v5334 = vpop.f32.mrf.mxu0
      %v5335 = vadd.f32 0.0, %v5334
      %v5336 = vpop.f32.mrf.mxu0
      %v5337 = vpop.f32.mrf.mxu0
      %v5338 = vadd.f32 0.0, %v5337
      %v5339 = vpop.f32.mrf.mxu0
      %5340 = vmatprep.mubr.bf16.mxu0 0
      %5341 = vmatmul.mubr.bf16.gmra.mxu0 %v5251
      %v5342 = vpop.f32.mrf.mxu0
      %v5343 = vadd.f32 0.0, %v5342
      %v5344 = vpop.f32.mrf.mxu0
      %v5345 = vpop.f32.mrf.mxu0
      %v5346 = vadd.f32 0.0, %v5345
      %v5347 = vpop.f32.mrf.mxu0
      %5348 = vmatprep.mubr.bf16.mxu0 0
      %5349 = vmatmul.mubr.bf16.gmra.mxu0 %v5252
      %v5350 = vpop.f32.mrf.mxu0
      %v5351 = vadd.f32 0.0, %v5350
      %v5352 = vpop.f32.mrf.mxu0
      %v5353 = vpop.f32.mrf.mxu0
      %v5354 = vadd.f32 0.0, %v5353
      %v5355 = vpop.f32.mrf.mxu0
      %5356 = vmatprep.mubr.bf16.mxu0 0
      %5357 = vmatmul.mubr.bf16.gmra.mxu0 %v5253
      %v5358 = vpop.f32.mrf.mxu0
      %v5359 = vadd.f32 0.0, %v5358
      %v5360 = vpop.f32.mrf.mxu0
      %v5361 = vpop.f32.mrf.mxu0
      %v5362 = vadd.f32 0.0, %v5361
      %v5363 = vpop.f32.mrf.mxu0
      %5364 = vmatprep.mubr.bf16.mxu0 0
      %5365 = vmatmul.mubr.bf16.gmra.mxu0 %v5254
      %v5366 = vpop.f32.mrf.mxu0
      %v5367 = vadd.f32 0.0, %v5366
      %v5368 = vpop.f32.mrf.mxu0
      %v5369 = vpop.f32.mrf.mxu0
      %v5370 = vadd.f32 0.0, %v5369
      %v5371 = vpop.f32.mrf.mxu0
      %5372 = vmatprep.mubr.bf16.mxu0 0
      %5373 = vmatmul.mubr.bf16.gmra.mxu0 %v5255
      %v5374 = vpop.f32.mrf.mxu0
      %v5375 = vadd.f32 0.0, %v5374
      %v5376 = vpop.f32.mrf.mxu0
      %v5377 = vpop.f32.mrf.mxu0
      %v5378 = vadd.f32 0.0, %v5377
      %v5379 = vpop.f32.mrf.mxu0
      %5380 = vmatprep.mubr.bf16.mxu0 0
      %5381 = vmatmul.mubr.bf16.gmra.mxu0 %v5256
      %v5382 = vpop.f32.mrf.mxu0
      %v5383 = vadd.f32 0.0, %v5382
      %v5384 = vpop.f32.mrf.mxu0
      %v5385 = vpop.f32.mrf.mxu0
      %v5386 = vadd.f32 0.0, %v5385
      %v5387 = vpop.f32.mrf.mxu0
      %5388 = vmatprep.mubr.bf16.mxu0 0
      %5389 = vmatmul.mubr.bf16.gmra.mxu0 %v5257
      %v5390 = vpop.f32.mrf.mxu0
      %v5391 = vadd.f32 0.0, %v5390
      %v5392 = vpop.f32.mrf.mxu0
      %v5393 = vpop.f32.mrf.mxu0
      %v5394 = vadd.f32 0.0, %v5393
      %v5395 = vpop.f32.mrf.mxu0
      %5396 = vmatprep.mubr.bf16.mxu0 0
      %5397 = vmatmul.mubr.bf16.gmra.mxu0 %v5258
      %v5398 = vpop.f32.mrf.mxu0
      %v5399 = vadd.f32 0.0, %v5398
      %v5400 = vpop.f32.mrf.mxu0
      %v5401 = vpop.f32.mrf.mxu0
      %v5402 = vadd.f32 0.0, %v5401
      %v5403 = vpop.f32.mrf.mxu0
      %5404 = vmatprep.mubr.bf16.mxu0 0
      %5405 = vmatmul.mubr.bf16.gmra.mxu0 %v5259
      %v5406 = vpop.f32.mrf.mxu0
      %v5407 = vadd.f32 0.0, %v5406
      %v5408 = vpop.f32.mrf.mxu0
      %v5409 = vpop.f32.mrf.mxu0
      %v5410 = vadd.f32 0.0, %v5409
      %v5411 = vpop.f32.mrf.mxu0
      %5412 = vmatprep.mubr.bf16.mxu0 0
      %5413 = vmatmul.mubr.bf16.gmra.mxu0 %v5260
      %v5414 = vpop.f32.mrf.mxu0
      %v5415 = vadd.f32 0.0, %v5414
      %v5416 = vpop.f32.mrf.mxu0
      %v5417 = vpop.f32.mrf.mxu0
      %v5418 = vadd.f32 0.0, %v5417
      %v5419 = vpop.f32.mrf.mxu0
      %5420 = vmatprep.mubr.bf16.mxu0 0
      %5421 = vmatmul.mubr.bf16.gmra.mxu0 %v5261
      %v5422 = vpop.f32.mrf.mxu0
      %v5423 = vadd.f32 0.0, %v5422
      %v5424 = vpop.f32.mrf.mxu0
      %v5425 = vpop.f32.mrf.mxu0
      %v5426 = vadd.f32 0.0, %v5425
      %v5427 = vpop.f32.mrf.mxu0
      %5428 = vmatprep.mubr.bf16.mxu0 0
      %5429 = vmatmul.mubr.bf16.gmra.mxu0 %v5262
      %v5430 = vpop.f32.mrf.mxu0
      %v5431 = vadd.f32 0.0, %v5430
      %v5432 = vpop.f32.mrf.mxu0
      %v5433 = vpop.f32.mrf.mxu0
      %v5434 = vadd.f32 0.0, %v5433
      %v5435 = vpop.f32.mrf.mxu0
      %5436 = vmatprep.mubr.bf16.mxu0 0
      %5437 = vmatmul.mubr.bf16.gmra.mxu0 %v5263
      %v5438 = vpop.f32.mrf.mxu0
      %v5439 = vadd.f32 0.0, %v5438
      %v5440 = vpop.f32.mrf.mxu0
      %v5441 = vpop.f32.mrf.mxu0
      %v5442 = vadd.f32 0.0, %v5441
      %v5443 = vpop.f32.mrf.mxu0
      %5444 = vmatprep.mubr.bf16.mxu0 0
      %5445 = vmatmul.mubr.bf16.gmra.mxu0 %v5264
      %v5446 = vpop.f32.mrf.mxu0
      %v5447 = vadd.f32 0.0, %v5446
      %v5448 = vpop.f32.mrf.mxu0
      %v5449 = vpop.f32.mrf.mxu0
      %v5450 = vadd.f32 0.0, %v5449
      %v5451 = vpop.f32.mrf.mxu0
      %5452 = vmatprep.mubr.bf16.mxu0 0
      %5453 = vmatmul.mubr.bf16.gmra.mxu0 %v5265
      %v5454 = vpop.f32.mrf.mxu0
      %v5455 = vadd.f32 0.0, %v5454
      %v5456 = vpop.f32.mrf.mxu0
      %v5457 = vpop.f32.mrf.mxu0
      %v5458 = vadd.f32 0.0, %v5457
      %v5459 = vpop.f32.mrf.mxu0
      %5460 = vmatprep.mubr.bf16.mxu0 0
      %5461 = vmatmul.mubr.bf16.gmra.mxu0 %v5266
      %v5462 = vpop.f32.mrf.mxu0
      %v5463 = vadd.f32 0.0, %v5462
      %v5464 = vpop.f32.mrf.mxu0
      %v5465 = vpop.f32.mrf.mxu0
      %v5466 = vadd.f32 0.0, %v5465
      %v5467 = vpop.f32.mrf.mxu0
      %5468 = vdwg.mxu0
      %v5469 = vadd.f32 %v5177, %v5327
      %v5470 = vadd.f32 %v5178, %v5330
      %v5471 = vadd.f32 %v5179, %v5335
      %v5472 = vadd.f32 %v5180, %v5338
      %v5473 = vadd.f32 %v5181, %v5343
      %v5474 = vadd.f32 %v5182, %v5346
      %v5475 = vadd.f32 %v5183, %v5351
      %v5476 = vadd.f32 %v5184, %v5354
      %v5477 = vadd.f32 %v5185, %v5359
      %v5478 = vadd.f32 %v5186, %v5362
      %v5479 = vadd.f32 %v5187, %v5367
      %v5480 = vadd.f32 %v5188, %v5370
      %v5481 = vadd.f32 %v5189, %v5375
      %v5482 = vadd.f32 %v5190, %v5378
      %v5483 = vadd.f32 %v5191, %v5383
      %v5484 = vadd.f32 %v5192, %v5386
      %v5485 = vadd.f32 %v5193, %v5391
      %v5486 = vadd.f32 %v5194, %v5394
      %v5487 = vadd.f32 %v5195, %v5399
      %v5488 = vadd.f32 %v5196, %v5402
      %v5489 = vadd.f32 %v5197, %v5407
      %v5490 = vadd.f32 %v5198, %v5410
      %v5491 = vadd.f32 %v5199, %v5415
      %v5492 = vadd.f32 %v5200, %v5418
      %v5493 = vadd.f32 %v5201, %v5423
      %v5494 = vadd.f32 %v5202, %v5426
      %v5495 = vadd.f32 %v5203, %v5431
      %v5496 = vadd.f32 %v5204, %v5434
      %v5497 = vadd.f32 %v5205, %v5439
      %v5498 = vadd.f32 %v5206, %v5442
      %v5499 = vadd.f32 %v5207, %v5447
      %v5500 = vadd.f32 %v5208, %v5450
      %v5501 = vadd.f32 %v5209, %v5455
      %v5502 = vadd.f32 %v5210, %v5458
      %v5503 = vadd.f32 %v5211, %v5463
      %v5504 = vadd.f32 %v5212, %v5466
      %v5505 = vld [vmem:[#allocation2 + $0x2a] sm:$0xff]
      %v5506 = vld [vmem:[#allocation2 + $0x32] sm:$0xff]
      %v5507 = vld [vmem:[#allocation2 + $0x3a] sm:$0xff]
      %v5508 = vld [vmem:[#allocation2 + $0x42] sm:$0xff]
      %v5509 = vld [vmem:[#allocation2 + $0x4a] sm:$0xff]
      %v5510 = vld [vmem:[#allocation2 + $0x52] sm:$0xff]
      %v5511 = vld [vmem:[#allocation2 + $0x5a] sm:$0xff]
      %v5512 = vld [vmem:[#allocation2 + $0x62] sm:$0xff]
      %v5513 = vld [vmem:[#allocation2 + $0x6a] sm:$0xff]
      %v5514 = vld [vmem:[#allocation2 + $0x72] sm:$0xff]
      %v5515 = vld [vmem:[#allocation2 + $0x7a] sm:$0xff]
      %v5516 = vld [vmem:[#allocation2 + $0x82] sm:$0xff]
      %v5517 = vld [vmem:[#allocation2 + $0x8a] sm:$0xff]
      %v5518 = vld [vmem:[#allocation2 + $0x92] sm:$0xff]
      %v5519 = vld [vmem:[#allocation2 + $0x9a] sm:$0xff]
      %v5520 = vld [vmem:[#allocation2 + $0xa2] sm:$0xff]
      %v5521 = vld [vmem:[#allocation2 + $0xaa] sm:$0xff]
      %v5522 = vld [vmem:[#allocation2 + $0xb2] sm:$0xff]
      %v5523 = vld [vmem:[#allocation2 + $0xba] sm:$0xff]
      %v5524 = vld [vmem:[#allocation2 + $0xc2] sm:$0xff]
      %v5525 = vld [vmem:[#allocation2 + $0xca] sm:$0xff]
      %v5526 = vld [vmem:[#allocation2 + $0xd2] sm:$0xff]
      %v5527 = vld [vmem:[#allocation2 + $0xda] sm:$0xff]
      %v5528 = vld [vmem:[#allocation2 + $0xe2] sm:$0xff]
      %v5529 = vld [vmem:[#allocation2 + $0xea] sm:$0xff]
      %v5530 = vld [vmem:[#allocation2 + $0xf2] sm:$0xff]
      %v5531 = vld [vmem:[#allocation2 + $0xfa] sm:$0xff]
      %v5532 = vld [vmem:[#allocation2 + $0x102] sm:$0xff]
      %v5533 = vld [vmem:[#allocation2 + $0x10a] sm:$0xff]
      %v5534 = vld [vmem:[#allocation2 + $0x112] sm:$0xff]
      %v5535 = vld [vmem:[#allocation2 + $0x11a] sm:$0xff]
      %v5536 = vld [vmem:[#allocation2 + $0x122] sm:$0xff]
      %v5537 = vld [vmem:[#allocation2 + $0x12a] sm:$0xff]
      %v5538 = vld [vmem:[#allocation2 + $0x132] sm:$0xff]
      %v5539 = vld [vmem:[#allocation2 + $0x13a] sm:$0xff]
      %v5540 = vld [vmem:[#allocation2 + $0x142] sm:$0xff]
      %v5541 = vpack.c.bf16 %v5506, %v5505
      %v5542 = vpack.c.bf16 %v5508, %v5507
      %v5543 = vpack.c.bf16 %v5510, %v5509
      %v5544 = vpack.c.bf16 %v5512, %v5511
      %v5545 = vpack.c.bf16 %v5514, %v5513
      %v5546 = vpack.c.bf16 %v5516, %v5515
      %v5547 = vpack.c.bf16 %v5518, %v5517
      %v5548 = vpack.c.bf16 %v5520, %v5519
      %v5549 = vpack.c.bf16 %v5522, %v5521
      %v5550 = vpack.c.bf16 %v5524, %v5523
      %v5551 = vpack.c.bf16 %v5526, %v5525
      %v5552 = vpack.c.bf16 %v5528, %v5527
      %v5553 = vpack.c.bf16 %v5530, %v5529
      %v5554 = vpack.c.bf16 %v5532, %v5531
      %v5555 = vpack.c.bf16 %v5534, %v5533
      %v5556 = vpack.c.bf16 %v5536, %v5535
      %v5557 = vpack.c.bf16 %v5538, %v5537
      %v5558 = vpack.c.bf16 %v5540, %v5539
      %s5559 = scalar_lea.vmem %s3, 896
      %v5560 = vld [vmem:[%s5559] sm:$0xff]
      %v5561 = vld [vmem:[%s5559 + $0x8] sm:$0xff]
      %v5562 = vld [vmem:[%s5559 + $0x10] sm:$0xff]
      %v5563 = vld [vmem:[%s5559 + $0x18] sm:$0xff]
      %v5564 = vld [vmem:[%s5559 + $0x20] sm:$0xff]
      %v5565 = vld [vmem:[%s5559 + $0x28] sm:$0xff]
      %v5566 = vld [vmem:[%s5559 + $0x30] sm:$0xff]
      %v5567 = vld [vmem:[%s5559 + $0x38] sm:$0xff]
      %v5568 = vld [vmem:[%s5559 + $0x40] sm:$0xff]
      %v5569 = vld [vmem:[%s5559 + $0x48] sm:$0xff]
      %v5570 = vld [vmem:[%s5559 + $0x50] sm:$0xff]
      %v5571 = vld [vmem:[%s5559 + $0x58] sm:$0xff]
      %v5572 = vld [vmem:[%s5559 + $0x60] sm:$0xff]
      %v5573 = vld [vmem:[%s5559 + $0x68] sm:$0xff]
      %v5574 = vld [vmem:[%s5559 + $0x70] sm:$0xff]
      %v5575 = vld [vmem:[%s5559 + $0x78] sm:$0xff]
      %v5576 = vpack.c.bf16 %v5561, %v5560
      %v5577 = vpack.c.bf16 %v5563, %v5562
      %v5578 = vpack.c.bf16 %v5565, %v5564
      %v5579 = vpack.c.bf16 %v5567, %v5566
      %v5580 = vpack.c.bf16 %v5569, %v5568
      %v5581 = vpack.c.bf16 %v5571, %v5570
      %v5582 = vpack.c.bf16 %v5573, %v5572
      %v5583 = vpack.c.bf16 %v5575, %v5574
      %5584 = vmatprep.subr.bf16.mxu0 0
      %5585 = vmatpush1.bf16.msra.mxu0 %v5583
      %5586 = vmatprep.subr.bf16.mxu0 0
      %5587 = vmatpush1.bf16.msra.mxu0 %v5582
      %5588 = vmatprep.subr.bf16.mxu0 0
      %5589 = vmatpush1.bf16.msra.mxu0 %v5581
      %5590 = vmatprep.subr.bf16.mxu0 0
      %5591 = vmatpush1.bf16.msra.mxu0 %v5580
      %5592 = vmatprep.subr.bf16.mxu0 0
      %5593 = vmatpush1.bf16.msra.mxu0 %v5579
      %5594 = vmatprep.subr.bf16.mxu0 0
      %5595 = vmatpush1.bf16.msra.mxu0 %v5578
      %5596 = vmatprep.subr.bf16.mxu0 0
      %5597 = vmatpush1.bf16.msra.mxu0 %v5577
      %5598 = vmatprep.subr.bf16.mxu0 0
      %5599 = vmatpush1.bf16.msra.mxu0 %v5576
      %5600 = vmatprep.subr.bf16.mxu0 0
      %5601 = vmatpush2.bf16.msra.mxu0 0
      %5602 = vmatprep.subr.bf16.mxu0 0
      %5603 = vmatpush2.bf16.msra.mxu0 0
      %5604 = vmatprep.subr.bf16.mxu0 0
      %5605 = vmatpush2.bf16.msra.mxu0 0
      %5606 = vmatprep.subr.bf16.mxu0 0
      %5607 = vmatpush2.bf16.msra.mxu0 0
      %5608 = vmatprep.subr.bf16.mxu0 0
      %5609 = vmatpush2.bf16.msra.mxu0 0
      %5610 = vmatprep.subr.bf16.mxu0 0
      %5611 = vmatpush2.bf16.msra.mxu0 0
      %5612 = vmatprep.subr.bf16.mxu0 0
      %5613 = vmatpush2.bf16.msra.mxu0 0
      %5614 = vmatprep.subr.bf16.mxu0 0
      %5615 = vmatpush2.bf16.msra.mxu0 0
      %5616 = vmatprep.mubr.bf16.mxu0 0
      %5617 = vmatmul.mubr.bf16.gmra.mxu0 %v5541
      %v5618 = vpop.f32.mrf.mxu0
      %v5619 = vadd.f32 0.0, %v5618
      %v5620 = vpop.f32.mrf.mxu0
      %v5621 = vpop.f32.mrf.mxu0
      %v5622 = vadd.f32 0.0, %v5621
      %v5623 = vpop.f32.mrf.mxu0
      %5624 = vmatprep.mubr.bf16.mxu0 0
      %5625 = vmatmul.mubr.bf16.gmra.mxu0 %v5542
      %v5626 = vpop.f32.mrf.mxu0
      %v5627 = vadd.f32 0.0, %v5626
      %v5628 = vpop.f32.mrf.mxu0
      %v5629 = vpop.f32.mrf.mxu0
      %v5630 = vadd.f32 0.0, %v5629
      %v5631 = vpop.f32.mrf.mxu0
      %5632 = vmatprep.mubr.bf16.mxu0 0
      %5633 = vmatmul.mubr.bf16.gmra.mxu0 %v5543
      %v5634 = vpop.f32.mrf.mxu0
      %v5635 = vadd.f32 0.0, %v5634
      %v5636 = vpop.f32.mrf.mxu0
      %v5637 = vpop.f32.mrf.mxu0
      %v5638 = vadd.f32 0.0, %v5637
      %v5639 = vpop.f32.mrf.mxu0
      %5640 = vmatprep.mubr.bf16.mxu0 0
      %5641 = vmatmul.mubr.bf16.gmra.mxu0 %v5544
      %v5642 = vpop.f32.mrf.mxu0
      %v5643 = vadd.f32 0.0, %v5642
      %v5644 = vpop.f32.mrf.mxu0
      %v5645 = vpop.f32.mrf.mxu0
      %v5646 = vadd.f32 0.0, %v5645
      %v5647 = vpop.f32.mrf.mxu0
      %5648 = vmatprep.mubr.bf16.mxu0 0
      %5649 = vmatmul.mubr.bf16.gmra.mxu0 %v5545
      %v5650 = vpop.f32.mrf.mxu0
      %v5651 = vadd.f32 0.0, %v5650
      %v5652 = vpop.f32.mrf.mxu0
      %v5653 = vpop.f32.mrf.mxu0
      %v5654 = vadd.f32 0.0, %v5653
      %v5655 = vpop.f32.mrf.mxu0
      %5656 = vmatprep.mubr.bf16.mxu0 0
      %5657 = vmatmul.mubr.bf16.gmra.mxu0 %v5546
      %v5658 = vpop.f32.mrf.mxu0
      %v5659 = vadd.f32 0.0, %v5658
      %v5660 = vpop.f32.mrf.mxu0
      %v5661 = vpop.f32.mrf.mxu0
      %v5662 = vadd.f32 0.0, %v5661
      %v5663 = vpop.f32.mrf.mxu0
      %5664 = vmatprep.mubr.bf16.mxu0 0
      %5665 = vmatmul.mubr.bf16.gmra.mxu0 %v5547
      %v5666 = vpop.f32.mrf.mxu0
      %v5667 = vadd.f32 0.0, %v5666
      %v5668 = vpop.f32.mrf.mxu0
      %v5669 = vpop.f32.mrf.mxu0
      %v5670 = vadd.f32 0.0, %v5669
      %v5671 = vpop.f32.mrf.mxu0
      %5672 = vmatprep.mubr.bf16.mxu0 0
      %5673 = vmatmul.mubr.bf16.gmra.mxu0 %v5548
      %v5674 = vpop.f32.mrf.mxu0
      %v5675 = vadd.f32 0.0, %v5674
      %v5676 = vpop.f32.mrf.mxu0
      %v5677 = vpop.f32.mrf.mxu0
      %v5678 = vadd.f32 0.0, %v5677
      %v5679 = vpop.f32.mrf.mxu0
      %5680 = vmatprep.mubr.bf16.mxu0 0
      %5681 = vmatmul.mubr.bf16.gmra.mxu0 %v5549
      %v5682 = vpop.f32.mrf.mxu0
      %v5683 = vadd.f32 0.0, %v5682
      %v5684 = vpop.f32.mrf.mxu0
      %v5685 = vpop.f32.mrf.mxu0
      %v5686 = vadd.f32 0.0, %v5685
      %v5687 = vpop.f32.mrf.mxu0
      %5688 = vmatprep.mubr.bf16.mxu0 0
      %5689 = vmatmul.mubr.bf16.gmra.mxu0 %v5550
      %v5690 = vpop.f32.mrf.mxu0
      %v5691 = vadd.f32 0.0, %v5690
      %v5692 = vpop.f32.mrf.mxu0
      %v5693 = vpop.f32.mrf.mxu0
      %v5694 = vadd.f32 0.0, %v5693
      %v5695 = vpop.f32.mrf.mxu0
      %5696 = vmatprep.mubr.bf16.mxu0 0
      %5697 = vmatmul.mubr.bf16.gmra.mxu0 %v5551
      %v5698 = vpop.f32.mrf.mxu0
      %v5699 = vadd.f32 0.0, %v5698
      %v5700 = vpop.f32.mrf.mxu0
      %v5701 = vpop.f32.mrf.mxu0
      %v5702 = vadd.f32 0.0, %v5701
      %v5703 = vpop.f32.mrf.mxu0
      %5704 = vmatprep.mubr.bf16.mxu0 0
      %5705 = vmatmul.mubr.bf16.gmra.mxu0 %v5552
      %v5706 = vpop.f32.mrf.mxu0
      %v5707 = vadd.f32 0.0, %v5706
      %v5708 = vpop.f32.mrf.mxu0
      %v5709 = vpop.f32.mrf.mxu0
      %v5710 = vadd.f32 0.0, %v5709
      %v5711 = vpop.f32.mrf.mxu0
      %5712 = vmatprep.mubr.bf16.mxu0 0
      %5713 = vmatmul.mubr.bf16.gmra.mxu0 %v5553
      %v5714 = vpop.f32.mrf.mxu0
      %v5715 = vadd.f32 0.0, %v5714
      %v5716 = vpop.f32.mrf.mxu0
      %v5717 = vpop.f32.mrf.mxu0
      %v5718 = vadd.f32 0.0, %v5717
      %v5719 = vpop.f32.mrf.mxu0
      %5720 = vmatprep.mubr.bf16.mxu0 0
      %5721 = vmatmul.mubr.bf16.gmra.mxu0 %v5554
      %v5722 = vpop.f32.mrf.mxu0
      %v5723 = vadd.f32 0.0, %v5722
      %v5724 = vpop.f32.mrf.mxu0
      %v5725 = vpop.f32.mrf.mxu0
      %v5726 = vadd.f32 0.0, %v5725
      %v5727 = vpop.f32.mrf.mxu0
      %5728 = vmatprep.mubr.bf16.mxu0 0
      %5729 = vmatmul.mubr.bf16.gmra.mxu0 %v5555
      %v5730 = vpop.f32.mrf.mxu0
      %v5731 = vadd.f32 0.0, %v5730
      %v5732 = vpop.f32.mrf.mxu0
      %v5733 = vpop.f32.mrf.mxu0
      %v5734 = vadd.f32 0.0, %v5733
      %v5735 = vpop.f32.mrf.mxu0
      %5736 = vmatprep.mubr.bf16.mxu0 0
      %5737 = vmatmul.mubr.bf16.gmra.mxu0 %v5556
      %v5738 = vpop.f32.mrf.mxu0
      %v5739 = vadd.f32 0.0, %v5738
      %v5740 = vpop.f32.mrf.mxu0
      %v5741 = vpop.f32.mrf.mxu0
      %v5742 = vadd.f32 0.0, %v5741
      %v5743 = vpop.f32.mrf.mxu0
      %5744 = vmatprep.mubr.bf16.mxu0 0
      %5745 = vmatmul.mubr.bf16.gmra.mxu0 %v5557
      %v5746 = vpop.f32.mrf.mxu0
      %v5747 = vadd.f32 0.0, %v5746
      %v5748 = vpop.f32.mrf.mxu0
      %v5749 = vpop.f32.mrf.mxu0
      %v5750 = vadd.f32 0.0, %v5749
      %v5751 = vpop.f32.mrf.mxu0
      %5752 = vmatprep.mubr.bf16.mxu0 0
      %5753 = vmatmul.mubr.bf16.gmra.mxu0 %v5558
      %v5754 = vpop.f32.mrf.mxu0
      %v5755 = vadd.f32 0.0, %v5754
      %v5756 = vpop.f32.mrf.mxu0
      %v5757 = vpop.f32.mrf.mxu0
      %v5758 = vadd.f32 0.0, %v5757
      %v5759 = vpop.f32.mrf.mxu0
      %5760 = vdwg.mxu0
      %v5761 = vadd.f32 %v5469, %v5619
      %v5762 = vadd.f32 %v5470, %v5622
      %v5763 = vadd.f32 %v5471, %v5627
      %v5764 = vadd.f32 %v5472, %v5630
      %v5765 = vadd.f32 %v5473, %v5635
      %v5766 = vadd.f32 %v5474, %v5638
      %v5767 = vadd.f32 %v5475, %v5643
      %v5768 = vadd.f32 %v5476, %v5646
      %v5769 = vadd.f32 %v5477, %v5651
      %v5770 = vadd.f32 %v5478, %v5654
      %v5771 = vadd.f32 %v5479, %v5659
      %v5772 = vadd.f32 %v5480, %v5662
      %v5773 = vadd.f32 %v5481, %v5667
      %v5774 = vadd.f32 %v5482, %v5670
      %v5775 = vadd.f32 %v5483, %v5675
      %v5776 = vadd.f32 %v5484, %v5678
      %v5777 = vadd.f32 %v5485, %v5683
      %v5778 = vadd.f32 %v5486, %v5686
      %v5779 = vadd.f32 %v5487, %v5691
      %v5780 = vadd.f32 %v5488, %v5694
      %v5781 = vadd.f32 %v5489, %v5699
      %v5782 = vadd.f32 %v5490, %v5702
      %v5783 = vadd.f32 %v5491, %v5707
      %v5784 = vadd.f32 %v5492, %v5710
      %v5785 = vadd.f32 %v5493, %v5715
      %v5786 = vadd.f32 %v5494, %v5718
      %v5787 = vadd.f32 %v5495, %v5723
      %v5788 = vadd.f32 %v5496, %v5726
      %v5789 = vadd.f32 %v5497, %v5731
      %v5790 = vadd.f32 %v5498, %v5734
      %v5791 = vadd.f32 %v5499, %v5739
      %v5792 = vadd.f32 %v5500, %v5742
      %v5793 = vadd.f32 %v5501, %v5747
      %v5794 = vadd.f32 %v5502, %v5750
      %v5795 = vadd.f32 %v5503, %v5755
      %v5796 = vadd.f32 %v5504, %v5758
      %v5797 = vld [vmem:[#allocation2 + $0x2b] sm:$0xff]
      %v5798 = vld [vmem:[#allocation2 + $0x33] sm:$0xff]
      %v5799 = vld [vmem:[#allocation2 + $0x3b] sm:$0xff]
      %v5800 = vld [vmem:[#allocation2 + $0x43] sm:$0xff]
      %v5801 = vld [vmem:[#allocation2 + $0x4b] sm:$0xff]
      %v5802 = vld [vmem:[#allocation2 + $0x53] sm:$0xff]
      %v5803 = vld [vmem:[#allocation2 + $0x5b] sm:$0xff]
      %v5804 = vld [vmem:[#allocation2 + $0x63] sm:$0xff]
      %v5805 = vld [vmem:[#allocation2 + $0x6b] sm:$0xff]
      %v5806 = vld [vmem:[#allocation2 + $0x73] sm:$0xff]
      %v5807 = vld [vmem:[#allocation2 + $0x7b] sm:$0xff]
      %v5808 = vld [vmem:[#allocation2 + $0x83] sm:$0xff]
      %v5809 = vld [vmem:[#allocation2 + $0x8b] sm:$0xff]
      %v5810 = vld [vmem:[#allocation2 + $0x93] sm:$0xff]
      %v5811 = vld [vmem:[#allocation2 + $0x9b] sm:$0xff]
      %v5812 = vld [vmem:[#allocation2 + $0xa3] sm:$0xff]
      %v5813 = vld [vmem:[#allocation2 + $0xab] sm:$0xff]
      %v5814 = vld [vmem:[#allocation2 + $0xb3] sm:$0xff]
      %v5815 = vld [vmem:[#allocation2 + $0xbb] sm:$0xff]
      %v5816 = vld [vmem:[#allocation2 + $0xc3] sm:$0xff]
      %v5817 = vld [vmem:[#allocation2 + $0xcb] sm:$0xff]
      %v5818 = vld [vmem:[#allocation2 + $0xd3] sm:$0xff]
      %v5819 = vld [vmem:[#allocation2 + $0xdb] sm:$0xff]
      %v5820 = vld [vmem:[#allocation2 + $0xe3] sm:$0xff]
      %v5821 = vld [vmem:[#allocation2 + $0xeb] sm:$0xff]
      %v5822 = vld [vmem:[#allocation2 + $0xf3] sm:$0xff]
      %v5823 = vld [vmem:[#allocation2 + $0xfb] sm:$0xff]
      %v5824 = vld [vmem:[#allocation2 + $0x103] sm:$0xff]
      %v5825 = vld [vmem:[#allocation2 + $0x10b] sm:$0xff]
      %v5826 = vld [vmem:[#allocation2 + $0x113] sm:$0xff]
      %v5827 = vld [vmem:[#allocation2 + $0x11b] sm:$0xff]
      %v5828 = vld [vmem:[#allocation2 + $0x123] sm:$0xff]
      %v5829 = vld [vmem:[#allocation2 + $0x12b] sm:$0xff]
      %v5830 = vld [vmem:[#allocation2 + $0x133] sm:$0xff]
      %v5831 = vld [vmem:[#allocation2 + $0x13b] sm:$0xff]
      %v5832 = vld [vmem:[#allocation2 + $0x143] sm:$0xff]
      %v5833 = vpack.c.bf16 %v5798, %v5797
      %v5834 = vpack.c.bf16 %v5800, %v5799
      %v5835 = vpack.c.bf16 %v5802, %v5801
      %v5836 = vpack.c.bf16 %v5804, %v5803
      %v5837 = vpack.c.bf16 %v5806, %v5805
      %v5838 = vpack.c.bf16 %v5808, %v5807
      %v5839 = vpack.c.bf16 %v5810, %v5809
      %v5840 = vpack.c.bf16 %v5812, %v5811
      %v5841 = vpack.c.bf16 %v5814, %v5813
      %v5842 = vpack.c.bf16 %v5816, %v5815
      %v5843 = vpack.c.bf16 %v5818, %v5817
      %v5844 = vpack.c.bf16 %v5820, %v5819
      %v5845 = vpack.c.bf16 %v5822, %v5821
      %v5846 = vpack.c.bf16 %v5824, %v5823
      %v5847 = vpack.c.bf16 %v5826, %v5825
      %v5848 = vpack.c.bf16 %v5828, %v5827
      %v5849 = vpack.c.bf16 %v5830, %v5829
      %v5850 = vpack.c.bf16 %v5832, %v5831
      %s5851 = scalar_lea.vmem %s3, 1024
      %v5852 = vld [vmem:[%s5851] sm:$0xff]
      %v5853 = vld [vmem:[%s5851 + $0x8] sm:$0xff]
      %v5854 = vld [vmem:[%s5851 + $0x10] sm:$0xff]
      %v5855 = vld [vmem:[%s5851 + $0x18] sm:$0xff]
      %v5856 = vld [vmem:[%s5851 + $0x20] sm:$0xff]
      %v5857 = vld [vmem:[%s5851 + $0x28] sm:$0xff]
      %v5858 = vld [vmem:[%s5851 + $0x30] sm:$0xff]
      %v5859 = vld [vmem:[%s5851 + $0x38] sm:$0xff]
      %v5860 = vld [vmem:[%s5851 + $0x40] sm:$0xff]
      %v5861 = vld [vmem:[%s5851 + $0x48] sm:$0xff]
      %v5862 = vld [vmem:[%s5851 + $0x50] sm:$0xff]
      %v5863 = vld [vmem:[%s5851 + $0x58] sm:$0xff]
      %v5864 = vld [vmem:[%s5851 + $0x60] sm:$0xff]
      %v5865 = vld [vmem:[%s5851 + $0x68] sm:$0xff]
      %v5866 = vld [vmem:[%s5851 + $0x70] sm:$0xff]
      %v5867 = vld [vmem:[%s5851 + $0x78] sm:$0xff]
      %v5868 = vpack.c.bf16 %v5853, %v5852
      %v5869 = vpack.c.bf16 %v5855, %v5854
      %v5870 = vpack.c.bf16 %v5857, %v5856
      %v5871 = vpack.c.bf16 %v5859, %v5858
      %v5872 = vpack.c.bf16 %v5861, %v5860
      %v5873 = vpack.c.bf16 %v5863, %v5862
      %v5874 = vpack.c.bf16 %v5865, %v5864
      %v5875 = vpack.c.bf16 %v5867, %v5866
      %5876 = vmatprep.subr.bf16.mxu0 0
      %5877 = vmatpush1.bf16.msra.mxu0 %v5875
      %5878 = vmatprep.subr.bf16.mxu0 0
      %5879 = vmatpush1.bf16.msra.mxu0 %v5874
      %5880 = vmatprep.subr.bf16.mxu0 0
      %5881 = vmatpush1.bf16.msra.mxu0 %v5873
      %5882 = vmatprep.subr.bf16.mxu0 0
      %5883 = vmatpush1.bf16.msra.mxu0 %v5872
      %5884 = vmatprep.subr.bf16.mxu0 0
      %5885 = vmatpush1.bf16.msra.mxu0 %v5871
      %5886 = vmatprep.subr.bf16.mxu0 0
      %5887 = vmatpush1.bf16.msra.mxu0 %v5870
      %5888 = vmatprep.subr.bf16.mxu0 0
      %5889 = vmatpush1.bf16.msra.mxu0 %v5869
      %5890 = vmatprep.subr.bf16.mxu0 0
      %5891 = vmatpush1.bf16.msra.mxu0 %v5868
      %5892 = vmatprep.subr.bf16.mxu0 0
      %5893 = vmatpush2.bf16.msra.mxu0 0
      %5894 = vmatprep.subr.bf16.mxu0 0
      %5895 = vmatpush2.bf16.msra.mxu0 0
      %5896 = vmatprep.subr.bf16.mxu0 0
      %5897 = vmatpush2.bf16.msra.mxu0 0
      %5898 = vmatprep.subr.bf16.mxu0 0
      %5899 = vmatpush2.bf16.msra.mxu0 0
      %5900 = vmatprep.subr.bf16.mxu0 0
      %5901 = vmatpush2.bf16.msra.mxu0 0
      %5902 = vmatprep.subr.bf16.mxu0 0
      %5903 = vmatpush2.bf16.msra.mxu0 0
      %5904 = vmatprep.subr.bf16.mxu0 0
      %5905 = vmatpush2.bf16.msra.mxu0 0
      %5906 = vmatprep.subr.bf16.mxu0 0
      %5907 = vmatpush2.bf16.msra.mxu0 0
      %5908 = vmatprep.mubr.bf16.mxu0 0
      %5909 = vmatmul.mubr.bf16.gmra.mxu0 %v5833
      %v5910 = vpop.f32.mrf.mxu0
      %v5911 = vadd.f32 0.0, %v5910
      %v5912 = vpop.f32.mrf.mxu0
      %v5913 = vpop.f32.mrf.mxu0
      %v5914 = vadd.f32 0.0, %v5913
      %v5915 = vpop.f32.mrf.mxu0
      %5916 = vmatprep.mubr.bf16.mxu0 0
      %5917 = vmatmul.mubr.bf16.gmra.mxu0 %v5834
      %v5918 = vpop.f32.mrf.mxu0
      %v5919 = vadd.f32 0.0, %v5918
      %v5920 = vpop.f32.mrf.mxu0
      %v5921 = vpop.f32.mrf.mxu0
      %v5922 = vadd.f32 0.0, %v5921
      %v5923 = vpop.f32.mrf.mxu0
      %5924 = vmatprep.mubr.bf16.mxu0 0
      %5925 = vmatmul.mubr.bf16.gmra.mxu0 %v5835
      %v5926 = vpop.f32.mrf.mxu0
      %v5927 = vadd.f32 0.0, %v5926
      %v5928 = vpop.f32.mrf.mxu0
      %v5929 = vpop.f32.mrf.mxu0
      %v5930 = vadd.f32 0.0, %v5929
      %v5931 = vpop.f32.mrf.mxu0
      %5932 = vmatprep.mubr.bf16.mxu0 0
      %5933 = vmatmul.mubr.bf16.gmra.mxu0 %v5836
      %v5934 = vpop.f32.mrf.mxu0
      %v5935 = vadd.f32 0.0, %v5934
      %v5936 = vpop.f32.mrf.mxu0
      %v5937 = vpop.f32.mrf.mxu0
      %v5938 = vadd.f32 0.0, %v5937
      %v5939 = vpop.f32.mrf.mxu0
      %5940 = vmatprep.mubr.bf16.mxu0 0
      %5941 = vmatmul.mubr.bf16.gmra.mxu0 %v5837
      %v5942 = vpop.f32.mrf.mxu0
      %v5943 = vadd.f32 0.0, %v5942
      %v5944 = vpop.f32.mrf.mxu0
      %v5945 = vpop.f32.mrf.mxu0
      %v5946 = vadd.f32 0.0, %v5945
      %v5947 = vpop.f32.mrf.mxu0
      %5948 = vmatprep.mubr.bf16.mxu0 0
      %5949 = vmatmul.mubr.bf16.gmra.mxu0 %v5838
      %v5950 = vpop.f32.mrf.mxu0
      %v5951 = vadd.f32 0.0, %v5950
      %v5952 = vpop.f32.mrf.mxu0
      %v5953 = vpop.f32.mrf.mxu0
      %v5954 = vadd.f32 0.0, %v5953
      %v5955 = vpop.f32.mrf.mxu0
      %5956 = vmatprep.mubr.bf16.mxu0 0
      %5957 = vmatmul.mubr.bf16.gmra.mxu0 %v5839
      %v5958 = vpop.f32.mrf.mxu0
      %v5959 = vadd.f32 0.0, %v5958
      %v5960 = vpop.f32.mrf.mxu0
      %v5961 = vpop.f32.mrf.mxu0
      %v5962 = vadd.f32 0.0, %v5961
      %v5963 = vpop.f32.mrf.mxu0
      %5964 = vmatprep.mubr.bf16.mxu0 0
      %5965 = vmatmul.mubr.bf16.gmra.mxu0 %v5840
      %v5966 = vpop.f32.mrf.mxu0
      %v5967 = vadd.f32 0.0, %v5966
      %v5968 = vpop.f32.mrf.mxu0
      %v5969 = vpop.f32.mrf.mxu0
      %v5970 = vadd.f32 0.0, %v5969
      %v5971 = vpop.f32.mrf.mxu0
      %5972 = vmatprep.mubr.bf16.mxu0 0
      %5973 = vmatmul.mubr.bf16.gmra.mxu0 %v5841
      %v5974 = vpop.f32.mrf.mxu0
      %v5975 = vadd.f32 0.0, %v5974
      %v5976 = vpop.f32.mrf.mxu0
      %v5977 = vpop.f32.mrf.mxu0
      %v5978 = vadd.f32 0.0, %v5977
      %v5979 = vpop.f32.mrf.mxu0
      %5980 = vmatprep.mubr.bf16.mxu0 0
      %5981 = vmatmul.mubr.bf16.gmra.mxu0 %v5842
      %v5982 = vpop.f32.mrf.mxu0
      %v5983 = vadd.f32 0.0, %v5982
      %v5984 = vpop.f32.mrf.mxu0
      %v5985 = vpop.f32.mrf.mxu0
      %v5986 = vadd.f32 0.0, %v5985
      %v5987 = vpop.f32.mrf.mxu0
      %5988 = vmatprep.mubr.bf16.mxu0 0
      %5989 = vmatmul.mubr.bf16.gmra.mxu0 %v5843
      %v5990 = vpop.f32.mrf.mxu0
      %v5991 = vadd.f32 0.0, %v5990
      %v5992 = vpop.f32.mrf.mxu0
      %v5993 = vpop.f32.mrf.mxu0
      %v5994 = vadd.f32 0.0, %v5993
      %v5995 = vpop.f32.mrf.mxu0
      %5996 = vmatprep.mubr.bf16.mxu0 0
      %5997 = vmatmul.mubr.bf16.gmra.mxu0 %v5844
      %v5998 = vpop.f32.mrf.mxu0
      %v5999 = vadd.f32 0.0, %v5998
      %v6000 = vpop.f32.mrf.mxu0
      %v6001 = vpop.f32.mrf.mxu0
      %v6002 = vadd.f32 0.0, %v6001
      %v6003 = vpop.f32.mrf.mxu0
      %6004 = vmatprep.mubr.bf16.mxu0 0
      %6005 = vmatmul.mubr.bf16.gmra.mxu0 %v5845
      %v6006 = vpop.f32.mrf.mxu0
      %v6007 = vadd.f32 0.0, %v6006
      %v6008 = vpop.f32.mrf.mxu0
      %v6009 = vpop.f32.mrf.mxu0
      %v6010 = vadd.f32 0.0, %v6009
      %v6011 = vpop.f32.mrf.mxu0
      %6012 = vmatprep.mubr.bf16.mxu0 0
      %6013 = vmatmul.mubr.bf16.gmra.mxu0 %v5846
      %v6014 = vpop.f32.mrf.mxu0
      %v6015 = vadd.f32 0.0, %v6014
      %v6016 = vpop.f32.mrf.mxu0
      %v6017 = vpop.f32.mrf.mxu0
      %v6018 = vadd.f32 0.0, %v6017
      %v6019 = vpop.f32.mrf.mxu0
      %6020 = vmatprep.mubr.bf16.mxu0 0
      %6021 = vmatmul.mubr.bf16.gmra.mxu0 %v5847
      %v6022 = vpop.f32.mrf.mxu0
      %v6023 = vadd.f32 0.0, %v6022
      %v6024 = vpop.f32.mrf.mxu0
      %v6025 = vpop.f32.mrf.mxu0
      %v6026 = vadd.f32 0.0, %v6025
      %v6027 = vpop.f32.mrf.mxu0
      %6028 = vmatprep.mubr.bf16.mxu0 0
      %6029 = vmatmul.mubr.bf16.gmra.mxu0 %v5848
      %v6030 = vpop.f32.mrf.mxu0
      %v6031 = vadd.f32 0.0, %v6030
      %v6032 = vpop.f32.mrf.mxu0
      %v6033 = vpop.f32.mrf.mxu0
      %v6034 = vadd.f32 0.0, %v6033
      %v6035 = vpop.f32.mrf.mxu0
      %6036 = vmatprep.mubr.bf16.mxu0 0
      %6037 = vmatmul.mubr.bf16.gmra.mxu0 %v5849
      %v6038 = vpop.f32.mrf.mxu0
      %v6039 = vadd.f32 0.0, %v6038
      %v6040 = vpop.f32.mrf.mxu0
      %v6041 = vpop.f32.mrf.mxu0
      %v6042 = vadd.f32 0.0, %v6041
      %v6043 = vpop.f32.mrf.mxu0
      %6044 = vmatprep.mubr.bf16.mxu0 0
      %6045 = vmatmul.mubr.bf16.gmra.mxu0 %v5850
      %v6046 = vpop.f32.mrf.mxu0
      %v6047 = vadd.f32 0.0, %v6046
      %v6048 = vpop.f32.mrf.mxu0
      %v6049 = vpop.f32.mrf.mxu0
      %v6050 = vadd.f32 0.0, %v6049
      %v6051 = vpop.f32.mrf.mxu0
      %6052 = vdwg.mxu0
      %v6053 = vadd.f32 %v5761, %v5911
      %v6054 = vadd.f32 %v5762, %v5914
      %v6055 = vadd.f32 %v5763, %v5919
      %v6056 = vadd.f32 %v5764, %v5922
      %v6057 = vadd.f32 %v5765, %v5927
      %v6058 = vadd.f32 %v5766, %v5930
      %v6059 = vadd.f32 %v5767, %v5935
      %v6060 = vadd.f32 %v5768, %v5938
      %v6061 = vadd.f32 %v5769, %v5943
      %v6062 = vadd.f32 %v5770, %v5946
      %v6063 = vadd.f32 %v5771, %v5951
      %v6064 = vadd.f32 %v5772, %v5954
      %v6065 = vadd.f32 %v5773, %v5959
      %v6066 = vadd.f32 %v5774, %v5962
      %v6067 = vadd.f32 %v5775, %v5967
      %v6068 = vadd.f32 %v5776, %v5970
      %v6069 = vadd.f32 %v5777, %v5975
      %v6070 = vadd.f32 %v5778, %v5978
      %v6071 = vadd.f32 %v5779, %v5983
      %v6072 = vadd.f32 %v5780, %v5986
      %v6073 = vadd.f32 %v5781, %v5991
      %v6074 = vadd.f32 %v5782, %v5994
      %v6075 = vadd.f32 %v5783, %v5999
      %v6076 = vadd.f32 %v5784, %v6002
      %v6077 = vadd.f32 %v5785, %v6007
      %v6078 = vadd.f32 %v5786, %v6010
      %v6079 = vadd.f32 %v5787, %v6015
      %v6080 = vadd.f32 %v5788, %v6018
      %v6081 = vadd.f32 %v5789, %v6023
      %v6082 = vadd.f32 %v5790, %v6026
      %v6083 = vadd.f32 %v5791, %v6031
      %v6084 = vadd.f32 %v5792, %v6034
      %v6085 = vadd.f32 %v5793, %v6039
      %v6086 = vadd.f32 %v5794, %v6042
      %v6087 = vadd.f32 %v5795, %v6047
      %v6088 = vadd.f32 %v5796, %v6050
      %v6089 = vld [vmem:[%s4] sm:$0x1]
      %v6091 = vlaneseq
      %v6092 = vshrl.u32 %v6091, 7
      %v6093 = vsub.s32 0, %v6092
      %v6094 = vrot.slane %v6089, %v6093
      %v6096 = vadd.f32 %v6053, %v6094
      %v6097 = vadd.f32 %v6054, %v6094
      %v6098 = vadd.f32 %v6055, %v6094
      %v6099 = vadd.f32 %v6056, %v6094
      %v6100 = vadd.f32 %v6057, %v6094
      %v6101 = vadd.f32 %v6058, %v6094
      %v6102 = vadd.f32 %v6059, %v6094
      %v6103 = vadd.f32 %v6060, %v6094
      %v6104 = vadd.f32 %v6061, %v6094
      %v6105 = vadd.f32 %v6062, %v6094
      %v6106 = vadd.f32 %v6063, %v6094
      %v6107 = vadd.f32 %v6064, %v6094
      %v6108 = vadd.f32 %v6065, %v6094
      %v6109 = vadd.f32 %v6066, %v6094
      %v6110 = vadd.f32 %v6067, %v6094
      %v6111 = vadd.f32 %v6068, %v6094
      %v6112 = vadd.f32 %v6069, %v6094
      %v6113 = vadd.f32 %v6070, %v6094
      %v6114 = vadd.f32 %v6071, %v6094
      %v6115 = vadd.f32 %v6072, %v6094
      %v6116 = vadd.f32 %v6073, %v6094
      %v6117 = vadd.f32 %v6074, %v6094
      %v6118 = vadd.f32 %v6075, %v6094
      %v6119 = vadd.f32 %v6076, %v6094
      %v6120 = vadd.f32 %v6077, %v6094
      %v6121 = vadd.f32 %v6078, %v6094
      %v6122 = vadd.f32 %v6079, %v6094
      %v6123 = vadd.f32 %v6080, %v6094
      %v6124 = vadd.f32 %v6081, %v6094
      %v6125 = vadd.f32 %v6082, %v6094
      %v6126 = vadd.f32 %v6083, %v6094
      %v6127 = vadd.f32 %v6084, %v6094
      %v6128 = vadd.f32 %v6085, %v6094
      %v6129 = vadd.f32 %v6086, %v6094
      %v6130 = vadd.f32 %v6087, %v6094
      %v6131 = vadd.f32 %v6088, %v6094
      %v6132 = vmax.f32 %v6096, 0.0
      %v6133 = vmax.f32 %v6097, 0.0
      %v6134 = vmax.f32 %v6098, 0.0
      %v6135 = vmax.f32 %v6099, 0.0
      %v6136 = vmax.f32 %v6100, 0.0
      %v6137 = vmax.f32 %v6101, 0.0
      %v6138 = vmax.f32 %v6102, 0.0
      %v6139 = vmax.f32 %v6103, 0.0
      %v6140 = vmax.f32 %v6104, 0.0
      %v6141 = vmax.f32 %v6105, 0.0
      %v6142 = vmax.f32 %v6106, 0.0
      %v6143 = vmax.f32 %v6107, 0.0
      %v6144 = vmax.f32 %v6108, 0.0
      %v6145 = vmax.f32 %v6109, 0.0
      %v6146 = vmax.f32 %v6110, 0.0
      %v6147 = vmax.f32 %v6111, 0.0
      %v6148 = vmax.f32 %v6112, 0.0
      %v6149 = vmax.f32 %v6113, 0.0
      %v6150 = vmax.f32 %v6114, 0.0
      %v6151 = vmax.f32 %v6115, 0.0
      %v6152 = vmax.f32 %v6116, 0.0
      %v6153 = vmax.f32 %v6117, 0.0
      %v6154 = vmax.f32 %v6118, 0.0
      %v6155 = vmax.f32 %v6119, 0.0
      %v6156 = vmax.f32 %v6120, 0.0
      %v6157 = vmax.f32 %v6121, 0.0
      %v6158 = vmax.f32 %v6122, 0.0
      %v6159 = vmax.f32 %v6123, 0.0
      %v6160 = vmax.f32 %v6124, 0.0
      %v6161 = vmax.f32 %v6125, 0.0
      %v6162 = vmax.f32 %v6126, 0.0
      %v6163 = vmax.f32 %v6127, 0.0
      %v6164 = vmax.f32 %v6128, 0.0
      %v6165 = vmax.f32 %v6129, 0.0
      %v6166 = vmax.f32 %v6130, 0.0
      %v6167 = vmax.f32 %v6131, 0.0
      %6168 = vst [vmem:[%s251] sm:$0xff] %v6132
      %6169 = vst [vmem:[%s251 + $0x8] sm:$0xff] %v6133
      %6170 = vst [vmem:[%s251 + $0x10] sm:$0xff] %v6134
      %6171 = vst [vmem:[%s251 + $0x18] sm:$0xff] %v6135
      %6172 = vst [vmem:[%s251 + $0x20] sm:$0xff] %v6136
      %6173 = vst [vmem:[%s251 + $0x28] sm:$0xff] %v6137
      %6174 = vst [vmem:[%s251 + $0x30] sm:$0xff] %v6138
      %6175 = vst [vmem:[%s251 + $0x38] sm:$0xff] %v6139
      %6176 = vst [vmem:[%s251 + $0x40] sm:$0xff] %v6140
      %6177 = vst [vmem:[%s251 + $0x48] sm:$0xff] %v6141
      %6178 = vst [vmem:[%s251 + $0x50] sm:$0xff] %v6142
      %6179 = vst [vmem:[%s251 + $0x58] sm:$0xff] %v6143
      %6180 = vst [vmem:[%s251 + $0x60] sm:$0xff] %v6144
      %6181 = vst [vmem:[%s251 + $0x68] sm:$0xff] %v6145
      %6182 = vst [vmem:[%s251 + $0x70] sm:$0xff] %v6146
      %6183 = vst [vmem:[%s251 + $0x78] sm:$0xff] %v6147
      %6184 = vst [vmem:[%s251 + $0x80] sm:$0xff] %v6148
      %6185 = vst [vmem:[%s251 + $0x88] sm:$0xff] %v6149
      %6186 = vst [vmem:[%s251 + $0x90] sm:$0xff] %v6150
      %6187 = vst [vmem:[%s251 + $0x98] sm:$0xff] %v6151
      %6188 = vst [vmem:[%s251 + $0xa0] sm:$0xff] %v6152
      %6189 = vst [vmem:[%s251 + $0xa8] sm:$0xff] %v6153
      %6190 = vst [vmem:[%s251 + $0xb0] sm:$0xff] %v6154
      %6191 = vst [vmem:[%s251 + $0xb8] sm:$0xff] %v6155
      %6192 = vst [vmem:[%s251 + $0xc0] sm:$0xff] %v6156
      %6193 = vst [vmem:[%s251 + $0xc8] sm:$0xff] %v6157
      %6194 = vst [vmem:[%s251 + $0xd0] sm:$0xff] %v6158
      %6195 = vst [vmem:[%s251 + $0xd8] sm:$0xff] %v6159
      %6196 = vst [vmem:[%s251 + $0xe0] sm:$0xff] %v6160
      %6197 = vst [vmem:[%s251 + $0xe8] sm:$0xff] %v6161
      %6198 = vst [vmem:[%s251 + $0xf0] sm:$0xff] %v6162
      %6199 = vst [vmem:[%s251 + $0xf8] sm:$0xff] %v6163
      %6200 = vst [vmem:[%s251 + $0x100] sm:$0xff] %v6164
      %6201 = vst [vmem:[%s251 + $0x108] sm:$0xff] %v6165
      %6202 = vst [vmem:[%s251 + $0x110] sm:$0xff] %v6166
      %6203 = vst [vmem:[%s251 + $0x118] sm:$0xff] %v6167
      %p6204 = scmp.lt.s32.totalorder %s17, 1
      %s6205 = scalar_select %p6204, %s17, 1
      %s6206 = smul.addr %s6205, 36
      %s6207 = smul.addr %s6206, 8
      %s6208 = scalar_lea.vmem %s6, %s6207
      // Predicated region
      $region45: #{unet_block_forward.1} parent=43 // pred_check
        %p6209 = pneg %p166
      $region46: #{unet_block_forward.1} parent=43 // pred_check_branch
        %6211 = sbr.rel (%p6209) target = $region48
      $region47: #{unet_block_forward.1} parent=43 // pred_region
        _
      $region48: #{unet_block_forward.1} parent=43 // pred_fallthru
        _
    $region44: #{unet_block_forward.1} parent=5 // pred_fallthru
      _
    %p6212 = scmp.le.s32.totalorder 2, %s12
    // Predicated region
    $region49: #{unet_block_forward.1} parent=5 // pred_check
      %p6213 = pneg %p6212
    $region50: #{unet_block_forward.1} parent=5 // pred_check_branch
      %6215 = sbr.rel (%p6213) target = $region52
    $region51: #{unet_block_forward.1} parent=5 // pred_region
      %s6216 = ssub.s32 %s12, 2
      // Predicated region
      $region53: #{unet_block_forward.1} parent=51 // pred_check
        %p6217 = pneg %p172
      $region54: #{unet_block_forward.1} parent=51 // pred_check_branch
        %6219 = sbr.rel (%p6217) target = $region56
      $region55: #{unet_block_forward.1} parent=51 // pred_region
        %p6220 = scmp.lt.s32.totalorder %s18, 1
        %s6221 = scalar_select %p6220, %s18, 1
        %s6222 = smul.addr %s6221, 36
        %s6223 = smul.addr %s6222, 8
        %s6224 = scalar_lea.vmem %s6, %s6223
      $region56: #{unet_block_forward.1} parent=51 // pred_fallthru
        _
    $region52: #{unet_block_forward.1} parent=5 // pred_fallthru
      _
  $region6: #{unet_block_forward.1} parent=0 // loop_footer
    %s16 = sadd.s32 1, %s12
  $region7: #{unet_block_forward.1} parent=0 // loop_footer_branch
    %11 = sbr.rel target = $region3
  $region8: #{unet_block_forward.1} parent=0 // loop_exit
    _

</llo_original>
